<compile_context>
chip_gen: v5e
topology: v5e:2x2
jax: 0.10.0
libtpu: 0.0.40
codegen_flags: <defaults>
</compile_context>

<pallas_src>
import numpy as np
import jax
import jax.numpy as jnp
from jax.experimental import pallas as pl
from jax.experimental.pallas import tpu as pltpu

_EPS = 1e-5


# ----------------------------------------------------------------------------
# Host-side constant matrices (exact 0 / 1 / 0.25 entries, bf16-representable).
# ----------------------------------------------------------------------------
def _flat_rows(H, W):
    """Rows of the flattened zero-padded activation buffer for spatial (H, W)."""
    return (H + 2) * (W + 2) + 2            # +2: one guard row at each end


def _input_scatter(H, W):
    """(flat_rows, H*W): scatter a row-major image into the padded-flat layout."""
    m = np.zeros((_flat_rows(H, W), H * W), np.float32)
    for h in range(H):
        for w in range(W):
            m[1 + (h + 1) * (W + 2) + (w + 1), h * W + w] = 1.0
    return m


def _pool_scatter(H, W):
    """(flat_rows(H/2,W/2), H*(W+2)): AvgPool2d(2) of the extended conv output,
    scattered straight into the next layer's padded-flat input (halo rows = 0)."""
    Hh, Wh = H // 2, W // 2
    m = np.zeros((_flat_rows(Hh, Wh), H * (W + 2)), np.float32)
    for i in range(Hh):
        for j in range(Wh):
            dst = 1 + (i + 1) * (Wh + 2) + (j + 1)
            for di in range(2):
                for dj in range(2):
                    m[dst, (2 * i + di) * (W + 2) + (2 * j + dj + 1)] = 0.25
    return m


def _valid_select(H, W):
    """(H*W, H*(W+2)): pick the valid pixels out of the extended conv output."""
    m = np.zeros((H * W, H * (W + 2)), np.float32)
    for h in range(H):
        for w in range(W):
            m[h * W + w, h * (W + 2) + (w + 1)] = 1.0
    return m


# ----------------------------------------------------------------------------
# Fused encoder kernel: grid=(N,), one batch element per grid step.
# ----------------------------------------------------------------------------
def _make_encoder_kernel(spatial, chans):
    """spatial: [(H_i, W_i)] per conv layer; chans: [(Cin_i, Cout_i)] per layer."""
    L = len(spatial)

    def kernel(*refs):
        x_ref, scat0_ref = refs[0], refs[1]
        pos = 2
        wsb = []
        for _ in range(L):
            wsb.append((refs[pos], refs[pos + 1], refs[pos + 2]))
            pos += 3
        pool_refs = [refs[pos + i] for i in range(L - 1)]
        pos += L - 1
        sel_ref = refs[pos]; pos += 1
        o_ref = refs[pos]; pos += 1
        f_refs = refs[pos:pos + L]          # per-layer padded-flat activations

        # Layer-1 padded-flat input (R0, C0) <- scatter of the raw image.
        # (Scatter matrix has zero rows at all halo/guard positions.)
        f_refs[0][...] = jnp.dot(
            scat0_ref[...], x_ref[0],
            preferred_element_type=jnp.float32).astype(jnp.bfloat16)

        def conv_bn_relu(i):
            H, W = spatial[i]
            Cin, Cout = chans[i]
            Wp = W + 2
            M = H * Wp                       # extended output rows (incl. garbage cols)
            w_ref, s_ref, b_ref = wsb[i]
            f_ref = f_refs[i]
            acc = jnp.zeros((M, Cout), jnp.float32)
            for dy in range(3):
                for dx in range(3):
                    # Each 3x3 tap is one contiguous sublane-offset slice of the
                    # flattened padded activation -> one whole-image MXU matmul.
                    lhs = f_ref[pl.ds(dy * Wp + dx, M), :]          # (M, Cin) bf16
                    acc = acc + jnp.dot(lhs, w_ref[dy * 3 + dx],
                                        preferred_element_type=jnp.float32)
            # folded BatchNorm (eval) + ReLU in f32
            return jnp.maximum(acc * s_ref[...] + b_ref[...], 0.0)   # (M, Cout) f32

        y = None
        for i in range(L):
            y = conv_bn_relu(i)
            if i < L - 1:
                # Fused AvgPool2d(2) + zero-halo scatter into the next layer's
                # padded-flat input, as one small constant matmul.
                f_refs[i + 1][...] = jnp.dot(
                    pool_refs[i][...], y.astype(jnp.bfloat16),
                    preferred_element_type=jnp.float32).astype(jnp.bfloat16)

        # Final valid-pixel extraction (drops the garbage columns), f32 output.
        o_ref[0] = jnp.dot(sel_ref[...], y, preferred_element_type=jnp.float32)

    return kernel


# ----------------------------------------------------------------------------
# Parameters (deterministic, synthetic) and model forward.
# ----------------------------------------------------------------------------
def init_params(key, n_channels, out_channels):
    # channel plan from CNNEncoder2.__init__ (scale=1): in->64->128->256->out
    plan = [(n_channels, 64), (64, 128), (128, 256), (256, out_channels)]
    params = []
    for i, (cin, cout) in enumerate(plan):
        kw, kg, kb = jax.random.split(jax.random.fold_in(key, i), 3)
        fan_in = 9 * cin
        w = jax.random.normal(kw, (3, 3, cin, cout), jnp.float32) / jnp.sqrt(fan_in)
        gamma = 1.0 + 0.1 * jax.random.normal(kg, (cout,), jnp.float32)
        beta = 0.1 * jax.random.normal(kb, (cout,), jnp.float32)
        run_mean = jnp.zeros((cout,), jnp.float32)   # PyTorch BN default running stats
        run_var = jnp.ones((cout,), jnp.float32)
        params.append(dict(w=w, gamma=gamma, beta=beta, mean=run_mean, var=run_var))
    return params


def _fold_bn(p):
    scale = p["gamma"] / jnp.sqrt(p["var"] + _EPS)
    bias = p["beta"] - p["mean"] * scale
    return scale, bias


def cnn_encoder2_forward(x_nchw, params):
    """CNNEncoder2.forward: inc -> down1 -> down2 -> down3 (NCHW in / NCHW out)."""
    N, C0, H, W = x_nchw.shape
    L = len(params)
    chans = [(p["w"].shape[2], p["w"].shape[3]) for p in params]
    spatial = [(H >> i, W >> i) for i in range(L)]
    for i in range(L - 1):
        assert spatial[i][0] % 2 == 0 and spatial[i][1] % 2 == 0
    Hout, Wout = spatial[-1]
    Cout_last = chans[-1][1]

    # NCHW -> row-major flattened NHWC image (N, H*W, C0), bf16 for the MXU.
    x_flat = jnp.transpose(x_nchw, (0, 2, 3, 1)).reshape(N, H * W, C0)
    x_flat = x_flat.astype(jnp.bfloat16)

    # Constant pool / scatter / select matrices.
    scat0 = jnp.asarray(_input_scatter(H, W), jnp.bfloat16)
    pools = [jnp.asarray(_pool_scatter(*spatial[i]), jnp.bfloat16)
             for i in range(L - 1)]
    sel = jnp.asarray(_valid_select(Hout, Wout), jnp.float32)

    # Weights (3,3,Cin,Cout) -> (9,Cin,Cout) bf16; folded BN scale/bias in f32.
    ws, ss, bs = [], [], []
    for p in params:
        cin, cout = p["w"].shape[2], p["w"].shape[3]
        ws.append(p["w"].reshape(9, cin, cout).astype(jnp.bfloat16))
        s, b = _fold_bn(p)
        ss.append(s.reshape(1, cout).astype(jnp.float32))
        bs.append(b.reshape(1, cout).astype(jnp.float32))

    def const_spec(arr):
        if arr.ndim == 2:
            return pl.BlockSpec(arr.shape, lambda n: (0, 0))
        return pl.BlockSpec(arr.shape, lambda n: (0, 0, 0))

    operands = [x_flat, scat0]
    in_specs = [pl.BlockSpec((1, H * W, C0), lambda n: (n, 0, 0)),
                const_spec(scat0)]
    for i in range(L):
        operands += [ws[i], ss[i], bs[i]]
        in_specs += [const_spec(ws[i]), const_spec(ss[i]), const_spec(bs[i])]
    for m in pools:
        operands.append(m)
        in_specs.append(const_spec(m))
    operands.append(sel)
    in_specs.append(const_spec(sel))

    # Per-layer padded-flat activation buffers (bf16) — everything stays in VMEM.
    scratch = [pltpu.VMEM((_flat_rows(*spatial[i]), chans[i][0]), jnp.bfloat16)
               for i in range(L)]

    out = pl.pallas_call(
        _make_encoder_kernel(spatial, chans),
        out_shape=jax.ShapeDtypeStruct((N, Hout * Wout, Cout_last), jnp.float32),
        grid_spec=pltpu.PrefetchScalarGridSpec(
            num_scalar_prefetch=0,
            grid=(N,),
            in_specs=in_specs,
            out_specs=pl.BlockSpec((1, Hout * Wout, Cout_last),
                                   lambda n: (n, 0, 0)),
            scratch_shapes=scratch,
        ),
        compiler_params=pltpu.CompilerParams(
            dimension_semantics=("parallel",)),
    )(*operands)

    # (N, Hout*Wout, Cout) -> NCHW
    return jnp.transpose(out.reshape(N, Hout, Wout, Cout_last), (0, 3, 1, 2))


# ----------------------------------------------------------------------------
# Pure-JAX reference (for a silent correctness check).
# ----------------------------------------------------------------------------
def _ref_forward(x_nchw, params):
    x = jnp.transpose(x_nchw, (0, 2, 3, 1)).astype(jnp.float32)

    def conv_bn_relu(x, p):
        y = jax.lax.conv_general_dilated(
            x, p["w"], window_strides=(1, 1), padding="SAME",
            dimension_numbers=("NHWC", "HWIO", "NHWC"),
            precision=jax.lax.Precision.HIGHEST)
        s, b = _fold_bn(p)
        return jnp.maximum(y * s + b, 0.0)

    def pool(x):
        N, H, W, C = x.shape
        return x.reshape(N, H // 2, 2, W // 2, 2, C).mean(axis=(2, 4))

    x = conv_bn_relu(x, params[0])
    for p in params[1:]:
        x = conv_bn_relu(pool(x), p)
    return jnp.transpose(x, (0, 3, 1, 2))


if __name__ == "__main__":
    key = jax.random.PRNGKey(0)
    k_x, k_p = jax.random.split(key)

    N, n_channels, H, W = 2, 4, 16, 16
    out_channels = 32

    x = jax.random.normal(k_x, (N, n_channels, H, W), jnp.float32)   # NCHW, as in PyTorch
    params = init_params(k_p, n_channels, out_channels)

    out = jax.block_until_ready(cnn_encoder2_forward(x, params))

    # sanity: shape (N, out_channels, H/8, W/8) and numerical agreement with reference
    assert out.shape == (N, out_channels, H // 8, W // 8), out.shape
    ref = jax.block_until_ready(_ref_forward(x, params))
    assert bool(jnp.all(jnp.isfinite(out)))
    assert bool(jnp.allclose(out, ref, rtol=5e-2, atol=5e-2)), float(
        jnp.max(jnp.abs(out - ref)))

    print("KERNEL_OK")
</pallas_src>

<mosaic_0001>
module attributes {stable_mosaic.version = 11 : i64} {
  func.func @kernel(%arg0: i32, %arg1: memref<1x256x4xbf16, #tpu.memory_space<vmem>>, %arg2: memref<326x256xbf16, #tpu.memory_space<vmem>>, %arg3: memref<9x4x64xbf16, #tpu.memory_space<vmem>>, %arg4: memref<1x64xf32, #tpu.memory_space<vmem>>, %arg5: memref<1x64xf32, #tpu.memory_space<vmem>>, %arg6: memref<9x64x128xbf16, #tpu.memory_space<vmem>>, %arg7: memref<1x128xf32, #tpu.memory_space<vmem>>, %arg8: memref<1x128xf32, #tpu.memory_space<vmem>>, %arg9: memref<9x128x256xbf16, #tpu.memory_space<vmem>>, %arg10: memref<1x256xf32, #tpu.memory_space<vmem>>, %arg11: memref<1x256xf32, #tpu.memory_space<vmem>>, %arg12: memref<9x256x32xbf16, #tpu.memory_space<vmem>>, %arg13: memref<1x32xf32, #tpu.memory_space<vmem>>, %arg14: memref<1x32xf32, #tpu.memory_space<vmem>>, %arg15: memref<102x288xbf16, #tpu.memory_space<vmem>>, %arg16: memref<38x80xbf16, #tpu.memory_space<vmem>>, %arg17: memref<18x24xbf16, #tpu.memory_space<vmem>>, %arg18: memref<4x8xf32, #tpu.memory_space<vmem>>, %arg19: memref<1x4x32xf32, #tpu.memory_space<vmem>>, %arg20: memref<326x4xbf16, #tpu.memory_space<vmem>>, %arg21: memref<102x64xbf16, #tpu.memory_space<vmem>>, %arg22: memref<38x128xbf16, #tpu.memory_space<vmem>>, %arg23: memref<18x256xbf16, #tpu.memory_space<vmem>>) attributes {dimension_semantics = [#tpu.dimension_semantics<parallel>], iteration_bounds = array<i64: 2>, scalar_prefetch = 0 : i64, scratch_operands = 4 : i64, tpu.core_type = #tpu.core_type<tc>, window_params = [{transform_indices = @transform_0, window_bounds = array<i64: 1, 256, 4>}, {pipeline_mode = #tpu.pipeline_mode<synchronous>, transform_indices = @transform_1, window_bounds = array<i64: 326, 256>}, {pipeline_mode = #tpu.pipeline_mode<synchronous>, transform_indices = @transform_2, window_bounds = array<i64: 9, 4, 64>}, {pipeline_mode = #tpu.pipeline_mode<synchronous>, transform_indices = @transform_3, window_bounds = array<i64: 1, 64>}, {pipeline_mode = #tpu.pipeline_mode<synchronous>, transform_indices = @transform_4, window_bounds = array<i64: 1, 64>}, {pipeline_mode = #tpu.pipeline_mode<synchronous>, transform_indices = @transform_5, window_bounds = array<i64: 9, 64, 128>}, {pipeline_mode = #tpu.pipeline_mode<synchronous>, transform_indices = @transform_6, window_bounds = array<i64: 1, 128>}, {pipeline_mode = #tpu.pipeline_mode<synchronous>, transform_indices = @transform_7, window_bounds = array<i64: 1, 128>}, {pipeline_mode = #tpu.pipeline_mode<synchronous>, transform_indices = @transform_8, window_bounds = array<i64: 9, 128, 256>}, {pipeline_mode = #tpu.pipeline_mode<synchronous>, transform_indices = @transform_9, window_bounds = array<i64: 1, 256>}, {pipeline_mode = #tpu.pipeline_mode<synchronous>, transform_indices = @transform_10, window_bounds = array<i64: 1, 256>}, {pipeline_mode = #tpu.pipeline_mode<synchronous>, transform_indices = @transform_11, window_bounds = array<i64: 9, 256, 32>}, {pipeline_mode = #tpu.pipeline_mode<synchronous>, transform_indices = @transform_12, window_bounds = array<i64: 1, 32>}, {pipeline_mode = #tpu.pipeline_mode<synchronous>, transform_indices = @transform_13, window_bounds = array<i64: 1, 32>}, {pipeline_mode = #tpu.pipeline_mode<synchronous>, transform_indices = @transform_14, window_bounds = array<i64: 102, 288>}, {pipeline_mode = #tpu.pipeline_mode<synchronous>, transform_indices = @transform_15, window_bounds = array<i64: 38, 80>}, {pipeline_mode = #tpu.pipeline_mode<synchronous>, transform_indices = @transform_16, window_bounds = array<i64: 18, 24>}, {pipeline_mode = #tpu.pipeline_mode<synchronous>, transform_indices = @transform_17, window_bounds = array<i64: 4, 8>}, {transform_indices = @transform_18, window_bounds = array<i64: 1, 4, 32>}]} {
    %c0 = arith.constant 0 : index
    %c0_0 = arith.constant 0 : index
    %0 = vector.load %arg2[%c0, %c0_0] : memref<326x256xbf16, #tpu.memory_space<vmem>>, vector<326x256xbf16>
    %c0_1 = arith.constant 0 : index
    %c0_2 = arith.constant 0 : index
    %c0_3 = arith.constant 0 : index
    %1 = vector.load %arg1[%c0_1, %c0_2, %c0_3] : memref<1x256x4xbf16, #tpu.memory_space<vmem>>, vector<1x256x4xbf16>
    %2 = vector.shape_cast %1 : vector<1x256x4xbf16> to vector<256x4xbf16>
    %cst = arith.constant dense<0.000000e+00> : vector<326x4xf32>
    %3 = tpu.matmul %0, %2, %cst {dimension_numbers = #tpu.dot_dimension_numbers<[1], [0], [0], [1], [0, 0, 1, 1], [], []>} : vector<326x256xbf16>, vector<256x4xbf16>, vector<326x4xf32> -> vector<326x4xf32>
    %4 = arith.truncf %3 : vector<326x4xf32> to vector<326x4xbf16>
    %c0_4 = arith.constant 0 : index
    %c0_5 = arith.constant 0 : index
    %5 = vector.load %arg20[%c0_4, %c0_5] : memref<326x4xbf16, #tpu.memory_space<vmem>>, vector<326x4xbf16>
    tpu.vector_store %arg20[%c0_4, %c0_5], %4 {strides = array<i32>} : memref<326x4xbf16, #tpu.memory_space<vmem>>, vector<326x4xbf16>,
    %cst_6 = arith.constant 0.000000e+00 : f32
    %6 = vector.broadcast %cst_6 : f32 to vector<288x64xf32>
    %c0_7 = arith.constant 0 : index
    %c0_8 = arith.constant 0 : index
    %7 = vector.load %arg20[%c0_7, %c0_8] : memref<326x4xbf16, #tpu.memory_space<vmem>>, vector<288x4xbf16>
    %c0_9 = arith.constant 0 : index
    %c0_10 = arith.constant 0 : index
    %c0_11 = arith.constant 0 : index
    %8 = vector.load %arg3[%c0_9, %c0_10, %c0_11] : memref<9x4x64xbf16, #tpu.memory_space<vmem>>, vector<1x4x64xbf16>
    %9 = vector.shape_cast %8 : vector<1x4x64xbf16> to vector<4x64xbf16>
    %cst_12 = arith.constant dense<0.000000e+00> : vector<288x64xf32>
    %10 = tpu.matmul %7, %9, %cst_12 {dimension_numbers = #tpu.dot_dimension_numbers<[1], [0], [0], [1], [0, 0, 1, 1], [], []>} : vector<288x4xbf16>, vector<4x64xbf16>, vector<288x64xf32> -> vector<288x64xf32>
    %11 = arith.addf %6, %10 : vector<288x64xf32>
    %c1 = arith.constant 1 : index
    %c0_13 = arith.constant 0 : index
    %12 = vector.load %arg20[%c1, %c0_13] : memref<326x4xbf16, #tpu.memory_space<vmem>>, vector<288x4xbf16>
    %c1_14 = arith.constant 1 : index
    %c0_15 = arith.constant 0 : index
    %c0_16 = arith.constant 0 : index
    %13 = vector.load %arg3[%c1_14, %c0_15, %c0_16] : memref<9x4x64xbf16, #tpu.memory_space<vmem>>, vector<1x4x64xbf16>
    %14 = vector.shape_cast %13 : vector<1x4x64xbf16> to vector<4x64xbf16>
    %cst_17 = arith.constant dense<0.000000e+00> : vector<288x64xf32>
    %15 = tpu.matmul %12, %14, %cst_17 {dimension_numbers = #tpu.dot_dimension_numbers<[1], [0], [0], [1], [0, 0, 1, 1], [], []>} : vector<288x4xbf16>, vector<4x64xbf16>, vector<288x64xf32> -> vector<288x64xf32>
    %16 = arith.addf %11, %15 : vector<288x64xf32>
    %c2 = arith.constant 2 : index
    %c0_18 = arith.constant 0 : index
    %17 = vector.load %arg20[%c2, %c0_18] : memref<326x4xbf16, #tpu.memory_space<vmem>>, vector<288x4xbf16>
    %c2_19 = arith.constant 2 : index
    %c0_20 = arith.constant 0 : index
    %c0_21 = arith.constant 0 : index
    %18 = vector.load %arg3[%c2_19, %c0_20, %c0_21] : memref<9x4x64xbf16, #tpu.memory_space<vmem>>, vector<1x4x64xbf16>
    %19 = vector.shape_cast %18 : vector<1x4x64xbf16> to vector<4x64xbf16>
    %cst_22 = arith.constant dense<0.000000e+00> : vector<288x64xf32>
    %20 = tpu.matmul %17, %19, %cst_22 {dimension_numbers = #tpu.dot_dimension_numbers<[1], [0], [0], [1], [0, 0, 1, 1], [], []>} : vector<288x4xbf16>, vector<4x64xbf16>, vector<288x64xf32> -> vector<288x64xf32>
    %21 = arith.addf %16, %20 : vector<288x64xf32>
    %c18 = arith.constant 18 : index
    %c0_23 = arith.constant 0 : index
    %22 = vector.load %arg20[%c18, %c0_23] : memref<326x4xbf16, #tpu.memory_space<vmem>>, vector<288x4xbf16>
    %c3 = arith.constant 3 : index
    %c0_24 = arith.constant 0 : index
    %c0_25 = arith.constant 0 : index
    %23 = vector.load %arg3[%c3, %c0_24, %c0_25] : memref<9x4x64xbf16, #tpu.memory_space<vmem>>, vector<1x4x64xbf16>
    %24 = vector.shape_cast %23 : vector<1x4x64xbf16> to vector<4x64xbf16>
    %cst_26 = arith.constant dense<0.000000e+00> : vector<288x64xf32>
    %25 = tpu.matmul %22, %24, %cst_26 {dimension_numbers = #tpu.dot_dimension_numbers<[1], [0], [0], [1], [0, 0, 1, 1], [], []>} : vector<288x4xbf16>, vector<4x64xbf16>, vector<288x64xf32> -> vector<288x64xf32>
    %26 = arith.addf %21, %25 : vector<288x64xf32>
    %c19 = arith.constant 19 : index
    %c0_27 = arith.constant 0 : index
    %27 = vector.load %arg20[%c19, %c0_27] : memref<326x4xbf16, #tpu.memory_space<vmem>>, vector<288x4xbf16>
    %c4 = arith.constant 4 : index
    %c0_28 = arith.constant 0 : index
    %c0_29 = arith.constant 0 : index
    %28 = vector.load %arg3[%c4, %c0_28, %c0_29] : memref<9x4x64xbf16, #tpu.memory_space<vmem>>, vector<1x4x64xbf16>
    %29 = vector.shape_cast %28 : vector<1x4x64xbf16> to vector<4x64xbf16>
    %cst_30 = arith.constant dense<0.000000e+00> : vector<288x64xf32>
    %30 = tpu.matmul %27, %29, %cst_30 {dimension_numbers = #tpu.dot_dimension_numbers<[1], [0], [0], [1], [0, 0, 1, 1], [], []>} : vector<288x4xbf16>, vector<4x64xbf16>, vector<288x64xf32> -> vector<288x64xf32>
    %31 = arith.addf %26, %30 : vector<288x64xf32>
    %c20 = arith.constant 20 : index
    %c0_31 = arith.constant 0 : index
    %32 = vector.load %arg20[%c20, %c0_31] : memref<326x4xbf16, #tpu.memory_space<vmem>>, vector<288x4xbf16>
    %c5 = arith.constant 5 : index
    %c0_32 = arith.constant 0 : index
    %c0_33 = arith.constant 0 : index
    %33 = vector.load %arg3[%c5, %c0_32, %c0_33] : memref<9x4x64xbf16, #tpu.memory_space<vmem>>, vector<1x4x64xbf16>
    %34 = vector.shape_cast %33 : vector<1x4x64xbf16> to vector<4x64xbf16>
    %cst_34 = arith.constant dense<0.000000e+00> : vector<288x64xf32>
    %35 = tpu.matmul %32, %34, %cst_34 {dimension_numbers = #tpu.dot_dimension_numbers<[1], [0], [0], [1], [0, 0, 1, 1], [], []>} : vector<288x4xbf16>, vector<4x64xbf16>, vector<288x64xf32> -> vector<288x64xf32>
    %36 = arith.addf %31, %35 : vector<288x64xf32>
    %c36 = arith.constant 36 : index
    %c0_35 = arith.constant 0 : index
    %37 = vector.load %arg20[%c36, %c0_35] : memref<326x4xbf16, #tpu.memory_space<vmem>>, vector<288x4xbf16>
    %c6 = arith.constant 6 : index
    %c0_36 = arith.constant 0 : index
    %c0_37 = arith.constant 0 : index
    %38 = vector.load %arg3[%c6, %c0_36, %c0_37] : memref<9x4x64xbf16, #tpu.memory_space<vmem>>, vector<1x4x64xbf16>
    %39 = vector.shape_cast %38 : vector<1x4x64xbf16> to vector<4x64xbf16>
    %cst_38 = arith.constant dense<0.000000e+00> : vector<288x64xf32>
    %40 = tpu.matmul %37, %39, %cst_38 {dimension_numbers = #tpu.dot_dimension_numbers<[1], [0], [0], [1], [0, 0, 1, 1], [], []>} : vector<288x4xbf16>, vector<4x64xbf16>, vector<288x64xf32> -> vector<288x64xf32>
    %41 = arith.addf %36, %40 : vector<288x64xf32>
    %c37 = arith.constant 37 : index
    %c0_39 = arith.constant 0 : index
    %42 = vector.load %arg20[%c37, %c0_39] : memref<326x4xbf16, #tpu.memory_space<vmem>>, vector<288x4xbf16>
    %c7 = arith.constant 7 : index
    %c0_40 = arith.constant 0 : index
    %c0_41 = arith.constant 0 : index
    %43 = vector.load %arg3[%c7, %c0_40, %c0_41] : memref<9x4x64xbf16, #tpu.memory_space<vmem>>, vector<1x4x64xbf16>
    %44 = vector.shape_cast %43 : vector<1x4x64xbf16> to vector<4x64xbf16>
    %cst_42 = arith.constant dense<0.000000e+00> : vector<288x64xf32>
    %45 = tpu.matmul %42, %44, %cst_42 {dimension_numbers = #tpu.dot_dimension_numbers<[1], [0], [0], [1], [0, 0, 1, 1], [], []>} : vector<288x4xbf16>, vector<4x64xbf16>, vector<288x64xf32> -> vector<288x64xf32>
    %46 = arith.addf %41, %45 : vector<288x64xf32>
    %c38 = arith.constant 38 : index
    %c0_43 = arith.constant 0 : index
    %47 = vector.load %arg20[%c38, %c0_43] : memref<326x4xbf16, #tpu.memory_space<vmem>>, vector<288x4xbf16>
    %c8 = arith.constant 8 : index
    %c0_44 = arith.constant 0 : index
    %c0_45 = arith.constant 0 : index
    %48 = vector.load %arg3[%c8, %c0_44, %c0_45] : memref<9x4x64xbf16, #tpu.memory_space<vmem>>, vector<1x4x64xbf16>
    %49 = vector.shape_cast %48 : vector<1x4x64xbf16> to vector<4x64xbf16>
    %cst_46 = arith.constant dense<0.000000e+00> : vector<288x64xf32>
    %50 = tpu.matmul %47, %49, %cst_46 {dimension_numbers = #tpu.dot_dimension_numbers<[1], [0], [0], [1], [0, 0, 1, 1], [], []>} : vector<288x4xbf16>, vector<4x64xbf16>, vector<288x64xf32> -> vector<288x64xf32>
    %51 = arith.addf %46, %50 : vector<288x64xf32>
    %c0_47 = arith.constant 0 : index
    %c0_48 = arith.constant 0 : index
    %52 = vector.load %arg4[%c0_47, %c0_48] : memref<1x64xf32, #tpu.memory_space<vmem>>, vector<1x64xf32>
    %53 = vector.broadcast %52 : vector<1x64xf32> to vector<288x64xf32>
    %54 = arith.mulf %51, %53 : vector<288x64xf32>
    %c0_49 = arith.constant 0 : index
    %c0_50 = arith.constant 0 : index
    %55 = vector.load %arg5[%c0_49, %c0_50] : memref<1x64xf32, #tpu.memory_space<vmem>>, vector<1x64xf32>
    %56 = vector.broadcast %55 : vector<1x64xf32> to vector<288x64xf32>
    %57 = arith.addf %54, %56 : vector<288x64xf32>
    %cst_51 = arith.constant 0.000000e+00 : f32
    %58 = vector.broadcast %cst_51 : f32 to vector<288x64xf32>
    %59 = arith.maximumf %57, %58 : vector<288x64xf32>
    %c0_52 = arith.constant 0 : index
    %c0_53 = arith.constant 0 : index
    %60 = vector.load %arg15[%c0_52, %c0_53] : memref<102x288xbf16, #tpu.memory_space<vmem>>, vector<102x288xbf16>
    %61 = arith.truncf %59 : vector<288x64xf32> to vector<288x64xbf16>
    %cst_54 = arith.constant dense<0.000000e+00> : vector<102x64xf32>
    %62 = tpu.matmul %60, %61, %cst_54 {dimension_numbers = #tpu.dot_dimension_numbers<[1], [0], [0], [1], [0, 0, 1, 1], [], []>} : vector<102x288xbf16>, vector<288x64xbf16>, vector<102x64xf32> -> vector<102x64xf32>
    %63 = arith.truncf %62 : vector<102x64xf32> to vector<102x64xbf16>
    %c0_55 = arith.constant 0 : index
    %c0_56 = arith.constant 0 : index
    %64 = vector.load %arg21[%c0_55, %c0_56] : memref<102x64xbf16, #tpu.memory_space<vmem>>, vector<102x64xbf16>
    tpu.vector_store %arg21[%c0_55, %c0_56], %63 {strides = array<i32>} : memref<102x64xbf16, #tpu.memory_space<vmem>>, vector<102x64xbf16>,
    %cst_57 = arith.constant 0.000000e+00 : f32
    %65 = vector.broadcast %cst_57 : f32 to vector<80x128xf32>
    %c0_58 = arith.constant 0 : index
    %c0_59 = arith.constant 0 : index
    %66 = vector.load %arg21[%c0_58, %c0_59] : memref<102x64xbf16, #tpu.memory_space<vmem>>, vector<80x64xbf16>
    %c0_60 = arith.constant 0 : index
    %c0_61 = arith.constant 0 : index
    %c0_62 = arith.constant 0 : index
    %67 = vector.load %arg6[%c0_60, %c0_61, %c0_62] : memref<9x64x128xbf16, #tpu.memory_space<vmem>>, vector<1x64x128xbf16>
    %68 = vector.shape_cast %67 : vector<1x64x128xbf16> to vector<64x128xbf16>
    %cst_63 = arith.constant dense<0.000000e+00> : vector<80x128xf32>
    %69 = tpu.matmul %66, %68, %cst_63 {dimension_numbers = #tpu.dot_dimension_numbers<[1], [0], [0], [1], [0, 0, 1, 1], [], []>} : vector<80x64xbf16>, vector<64x128xbf16>, vector<80x128xf32> -> vector<80x128xf32>
    %70 = arith.addf %65, %69 : vector<80x128xf32>
    %c1_64 = arith.constant 1 : index
    %c0_65 = arith.constant 0 : index
    %71 = vector.load %arg21[%c1_64, %c0_65] : memref<102x64xbf16, #tpu.memory_space<vmem>>, vector<80x64xbf16>
    %c1_66 = arith.constant 1 : index
    %c0_67 = arith.constant 0 : index
    %c0_68 = arith.constant 0 : index
    %72 = vector.load %arg6[%c1_66, %c0_67, %c0_68] : memref<9x64x128xbf16, #tpu.memory_space<vmem>>, vector<1x64x128xbf16>
    %73 = vector.shape_cast %72 : vector<1x64x128xbf16> to vector<64x128xbf16>
    %cst_69 = arith.constant dense<0.000000e+00> : vector<80x128xf32>
    %74 = tpu.matmul %71, %73, %cst_69 {dimension_numbers = #tpu.dot_dimension_numbers<[1], [0], [0], [1], [0, 0, 1, 1], [], []>} : vector<80x64xbf16>, vector<64x128xbf16>, vector<80x128xf32> -> vector<80x128xf32>
    %75 = arith.addf %70, %74 : vector<80x128xf32>
    %c2_70 = arith.constant 2 : index
    %c0_71 = arith.constant 0 : index
    %76 = vector.load %arg21[%c2_70, %c0_71] : memref<102x64xbf16, #tpu.memory_space<vmem>>, vector<80x64xbf16>
    %c2_72 = arith.constant 2 : index
    %c0_73 = arith.constant 0 : index
    %c0_74 = arith.constant 0 : index
    %77 = vector.load %arg6[%c2_72, %c0_73, %c0_74] : memref<9x64x128xbf16, #tpu.memory_space<vmem>>, vector<1x64x128xbf16>
    %78 = vector.shape_cast %77 : vector<1x64x128xbf16> to vector<64x128xbf16>
    %cst_75 = arith.constant dense<0.000000e+00> : vector<80x128xf32>
    %79 = tpu.matmul %76, %78, %cst_75 {dimension_numbers = #tpu.dot_dimension_numbers<[1], [0], [0], [1], [0, 0, 1, 1], [], []>} : vector<80x64xbf16>, vector<64x128xbf16>, vector<80x128xf32> -> vector<80x128xf32>
    %80 = arith.addf %75, %79 : vector<80x128xf32>
    %c10 = arith.constant 10 : index
    %c0_76 = arith.constant 0 : index
    %81 = vector.load %arg21[%c10, %c0_76] : memref<102x64xbf16, #tpu.memory_space<vmem>>, vector<80x64xbf16>
    %c3_77 = arith.constant 3 : index
    %c0_78 = arith.constant 0 : index
    %c0_79 = arith.constant 0 : index
    %82 = vector.load %arg6[%c3_77, %c0_78, %c0_79] : memref<9x64x128xbf16, #tpu.memory_space<vmem>>, vector<1x64x128xbf16>
    %83 = vector.shape_cast %82 : vector<1x64x128xbf16> to vector<64x128xbf16>
    %cst_80 = arith.constant dense<0.000000e+00> : vector<80x128xf32>
    %84 = tpu.matmul %81, %83, %cst_80 {dimension_numbers = #tpu.dot_dimension_numbers<[1], [0], [0], [1], [0, 0, 1, 1], [], []>} : vector<80x64xbf16>, vector<64x128xbf16>, vector<80x128xf32> -> vector<80x128xf32>
    %85 = arith.addf %80, %84 : vector<80x128xf32>
    %c11 = arith.constant 11 : index
    %c0_81 = arith.constant 0 : index
    %86 = vector.load %arg21[%c11, %c0_81] : memref<102x64xbf16, #tpu.memory_space<vmem>>, vector<80x64xbf16>
    %c4_82 = arith.constant 4 : index
    %c0_83 = arith.constant 0 : index
    %c0_84 = arith.constant 0 : index
    %87 = vector.load %arg6[%c4_82, %c0_83, %c0_84] : memref<9x64x128xbf16, #tpu.memory_space<vmem>>, vector<1x64x128xbf16>
    %88 = vector.shape_cast %87 : vector<1x64x128xbf16> to vector<64x128xbf16>
    %cst_85 = arith.constant dense<0.000000e+00> : vector<80x128xf32>
    %89 = tpu.matmul %86, %88, %cst_85 {dimension_numbers = #tpu.dot_dimension_numbers<[1], [0], [0], [1], [0, 0, 1, 1], [], []>} : vector<80x64xbf16>, vector<64x128xbf16>, vector<80x128xf32> -> vector<80x128xf32>
    %90 = arith.addf %85, %89 : vector<80x128xf32>
    %c12 = arith.constant 12 : index
    %c0_86 = arith.constant 0 : index
    %91 = vector.load %arg21[%c12, %c0_86] : memref<102x64xbf16, #tpu.memory_space<vmem>>, vector<80x64xbf16>
    %c5_87 = arith.constant 5 : index
    %c0_88 = arith.constant 0 : index
    %c0_89 = arith.constant 0 : index
    %92 = vector.load %arg6[%c5_87, %c0_88, %c0_89] : memref<9x64x128xbf16, #tpu.memory_space<vmem>>, vector<1x64x128xbf16>
    %93 = vector.shape_cast %92 : vector<1x64x128xbf16> to vector<64x128xbf16>
    %cst_90 = arith.constant dense<0.000000e+00> : vector<80x128xf32>
    %94 = tpu.matmul %91, %93, %cst_90 {dimension_numbers = #tpu.dot_dimension_numbers<[1], [0], [0], [1], [0, 0, 1, 1], [], []>} : vector<80x64xbf16>, vector<64x128xbf16>, vector<80x128xf32> -> vector<80x128xf32>
    %95 = arith.addf %90, %94 : vector<80x128xf32>
    %c20_91 = arith.constant 20 : index
    %c0_92 = arith.constant 0 : index
    %96 = vector.load %arg21[%c20_91, %c0_92] : memref<102x64xbf16, #tpu.memory_space<vmem>>, vector<80x64xbf16>
    %c6_93 = arith.constant 6 : index
    %c0_94 = arith.constant 0 : index
    %c0_95 = arith.constant 0 : index
    %97 = vector.load %arg6[%c6_93, %c0_94, %c0_95] : memref<9x64x128xbf16, #tpu.memory_space<vmem>>, vector<1x64x128xbf16>
    %98 = vector.shape_cast %97 : vector<1x64x128xbf16> to vector<64x128xbf16>
    %cst_96 = arith.constant dense<0.000000e+00> : vector<80x128xf32>
    %99 = tpu.matmul %96, %98, %cst_96 {dimension_numbers = #tpu.dot_dimension_numbers<[1], [0], [0], [1], [0, 0, 1, 1], [], []>} : vector<80x64xbf16>, vector<64x128xbf16>, vector<80x128xf32> -> vector<80x128xf32>
    %100 = arith.addf %95, %99 : vector<80x128xf32>
    %c21 = arith.constant 21 : index
    %c0_97 = arith.constant 0 : index
    %101 = vector.load %arg21[%c21, %c0_97] : memref<102x64xbf16, #tpu.memory_space<vmem>>, vector<80x64xbf16>
    %c7_98 = arith.constant 7 : index
    %c0_99 = arith.constant 0 : index
    %c0_100 = arith.constant 0 : index
    %102 = vector.load %arg6[%c7_98, %c0_99, %c0_100] : memref<9x64x128xbf16, #tpu.memory_space<vmem>>, vector<1x64x128xbf16>
    %103 = vector.shape_cast %102 : vector<1x64x128xbf16> to vector<64x128xbf16>
    %cst_101 = arith.constant dense<0.000000e+00> : vector<80x128xf32>
    %104 = tpu.matmul %101, %103, %cst_101 {dimension_numbers = #tpu.dot_dimension_numbers<[1], [0], [0], [1], [0, 0, 1, 1], [], []>} : vector<80x64xbf16>, vector<64x128xbf16>, vector<80x128xf32> -> vector<80x128xf32>
    %105 = arith.addf %100, %104 : vector<80x128xf32>
    %c22 = arith.constant 22 : index
    %c0_102 = arith.constant 0 : index
    %106 = vector.load %arg21[%c22, %c0_102] : memref<102x64xbf16, #tpu.memory_space<vmem>>, vector<80x64xbf16>
    %c8_103 = arith.constant 8 : index
    %c0_104 = arith.constant 0 : index
    %c0_105 = arith.constant 0 : index
    %107 = vector.load %arg6[%c8_103, %c0_104, %c0_105] : memref<9x64x128xbf16, #tpu.memory_space<vmem>>, vector<1x64x128xbf16>
    %108 = vector.shape_cast %107 : vector<1x64x128xbf16> to vector<64x128xbf16>
    %cst_106 = arith.constant dense<0.000000e+00> : vector<80x128xf32>
    %109 = tpu.matmul %106, %108, %cst_106 {dimension_numbers = #tpu.dot_dimension_numbers<[1], [0], [0], [1], [0, 0, 1, 1], [], []>} : vector<80x64xbf16>, vector<64x128xbf16>, vector<80x128xf32> -> vector<80x128xf32>
    %110 = arith.addf %105, %109 : vector<80x128xf32>
    %c0_107 = arith.constant 0 : index
    %c0_108 = arith.constant 0 : index
    %111 = vector.load %arg7[%c0_107, %c0_108] : memref<1x128xf32, #tpu.memory_space<vmem>>, vector<1x128xf32>
    %112 = vector.broadcast %111 : vector<1x128xf32> to vector<80x128xf32>
    %113 = arith.mulf %110, %112 : vector<80x128xf32>
    %c0_109 = arith.constant 0 : index
    %c0_110 = arith.constant 0 : index
    %114 = vector.load %arg8[%c0_109, %c0_110] : memref<1x128xf32, #tpu.memory_space<vmem>>, vector<1x128xf32>
    %115 = vector.broadcast %114 : vector<1x128xf32> to vector<80x128xf32>
    %116 = arith.addf %113, %115 : vector<80x128xf32>
    %cst_111 = arith.constant 0.000000e+00 : f32
    %117 = vector.broadcast %cst_111 : f32 to vector<80x128xf32>
    %118 = arith.maximumf %116, %117 : vector<80x128xf32>
    %c0_112 = arith.constant 0 : index
    %c0_113 = arith.constant 0 : index
    %119 = vector.load %arg16[%c0_112, %c0_113] : memref<38x80xbf16, #tpu.memory_space<vmem>>, vector<38x80xbf16>
    %120 = arith.truncf %118 : vector<80x128xf32> to vector<80x128xbf16>
    %cst_114 = arith.constant dense<0.000000e+00> : vector<38x128xf32>
    %121 = tpu.matmul %119, %120, %cst_114 {dimension_numbers = #tpu.dot_dimension_numbers<[1], [0], [0], [1], [0, 0, 1, 1], [], []>} : vector<38x80xbf16>, vector<80x128xbf16>, vector<38x128xf32> -> vector<38x128xf32>
    %122 = arith.truncf %121 : vector<38x128xf32> to vector<38x128xbf16>
    %c0_115 = arith.constant 0 : index
    %c0_116 = arith.constant 0 : index
    %123 = vector.load %arg22[%c0_115, %c0_116] : memref<38x128xbf16, #tpu.memory_space<vmem>>, vector<38x128xbf16>
    tpu.vector_store %arg22[%c0_115, %c0_116], %122 {strides = array<i32>} : memref<38x128xbf16, #tpu.memory_space<vmem>>, vector<38x128xbf16>,
    %cst_117 = arith.constant 0.000000e+00 : f32
    %124 = vector.broadcast %cst_117 : f32 to vector<24x256xf32>
    %c0_118 = arith.constant 0 : index
    %c0_119 = arith.constant 0 : index
    %125 = vector.load %arg22[%c0_118, %c0_119] : memref<38x128xbf16, #tpu.memory_space<vmem>>, vector<24x128xbf16>
    %c0_120 = arith.constant 0 : index
    %c0_121 = arith.constant 0 : index
    %c0_122 = arith.constant 0 : index
    %126 = vector.load %arg9[%c0_120, %c0_121, %c0_122] : memref<9x128x256xbf16, #tpu.memory_space<vmem>>, vector<1x128x256xbf16>
    %127 = vector.shape_cast %126 : vector<1x128x256xbf16> to vector<128x256xbf16>
    %cst_123 = arith.constant dense<0.000000e+00> : vector<24x256xf32>
    %128 = tpu.matmul %125, %127, %cst_123 {dimension_numbers = #tpu.dot_dimension_numbers<[1], [0], [0], [1], [0, 0, 1, 1], [], []>} : vector<24x128xbf16>, vector<128x256xbf16>, vector<24x256xf32> -> vector<24x256xf32>
    %129 = arith.addf %124, %128 : vector<24x256xf32>
    %c1_124 = arith.constant 1 : index
    %c0_125 = arith.constant 0 : index
    %130 = vector.load %arg22[%c1_124, %c0_125] : memref<38x128xbf16, #tpu.memory_space<vmem>>, vector<24x128xbf16>
    %c1_126 = arith.constant 1 : index
    %c0_127 = arith.constant 0 : index
    %c0_128 = arith.constant 0 : index
    %131 = vector.load %arg9[%c1_126, %c0_127, %c0_128] : memref<9x128x256xbf16, #tpu.memory_space<vmem>>, vector<1x128x256xbf16>
    %132 = vector.shape_cast %131 : vector<1x128x256xbf16> to vector<128x256xbf16>
    %cst_129 = arith.constant dense<0.000000e+00> : vector<24x256xf32>
    %133 = tpu.matmul %130, %132, %cst_129 {dimension_numbers = #tpu.dot_dimension_numbers<[1], [0], [0], [1], [0, 0, 1, 1], [], []>} : vector<24x128xbf16>, vector<128x256xbf16>, vector<24x256xf32> -> vector<24x256xf32>
    %134 = arith.addf %129, %133 : vector<24x256xf32>
    %c2_130 = arith.constant 2 : index
    %c0_131 = arith.constant 0 : index
    %135 = vector.load %arg22[%c2_130, %c0_131] : memref<38x128xbf16, #tpu.memory_space<vmem>>, vector<24x128xbf16>
    %c2_132 = arith.constant 2 : index
    %c0_133 = arith.constant 0 : index
    %c0_134 = arith.constant 0 : index
    %136 = vector.load %arg9[%c2_132, %c0_133, %c0_134] : memref<9x128x256xbf16, #tpu.memory_space<vmem>>, vector<1x128x256xbf16>
    %137 = vector.shape_cast %136 : vector<1x128x256xbf16> to vector<128x256xbf16>
    %cst_135 = arith.constant dense<0.000000e+00> : vector<24x256xf32>
    %138 = tpu.matmul %135, %137, %cst_135 {dimension_numbers = #tpu.dot_dimension_numbers<[1], [0], [0], [1], [0, 0, 1, 1], [], []>} : vector<24x128xbf16>, vector<128x256xbf16>, vector<24x256xf32> -> vector<24x256xf32>
    %139 = arith.addf %134, %138 : vector<24x256xf32>
    %c6_136 = arith.constant 6 : index
    %c0_137 = arith.constant 0 : index
    %140 = vector.load %arg22[%c6_136, %c0_137] : memref<38x128xbf16, #tpu.memory_space<vmem>>, vector<24x128xbf16>
    %c3_138 = arith.constant 3 : index
    %c0_139 = arith.constant 0 : index
    %c0_140 = arith.constant 0 : index
    %141 = vector.load %arg9[%c3_138, %c0_139, %c0_140] : memref<9x128x256xbf16, #tpu.memory_space<vmem>>, vector<1x128x256xbf16>
    %142 = vector.shape_cast %141 : vector<1x128x256xbf16> to vector<128x256xbf16>
    %cst_141 = arith.constant dense<0.000000e+00> : vector<24x256xf32>
    %143 = tpu.matmul %140, %142, %cst_141 {dimension_numbers = #tpu.dot_dimension_numbers<[1], [0], [0], [1], [0, 0, 1, 1], [], []>} : vector<24x128xbf16>, vector<128x256xbf16>, vector<24x256xf32> -> vector<24x256xf32>
    %144 = arith.addf %139, %143 : vector<24x256xf32>
    %c7_142 = arith.constant 7 : index
    %c0_143 = arith.constant 0 : index
    %145 = vector.load %arg22[%c7_142, %c0_143] : memref<38x128xbf16, #tpu.memory_space<vmem>>, vector<24x128xbf16>
    %c4_144 = arith.constant 4 : index
    %c0_145 = arith.constant 0 : index
    %c0_146 = arith.constant 0 : index
    %146 = vector.load %arg9[%c4_144, %c0_145, %c0_146] : memref<9x128x256xbf16, #tpu.memory_space<vmem>>, vector<1x128x256xbf16>
    %147 = vector.shape_cast %146 : vector<1x128x256xbf16> to vector<128x256xbf16>
    %cst_147 = arith.constant dense<0.000000e+00> : vector<24x256xf32>
    %148 = tpu.matmul %145, %147, %cst_147 {dimension_numbers = #tpu.dot_dimension_numbers<[1], [0], [0], [1], [0, 0, 1, 1], [], []>} : vector<24x128xbf16>, vector<128x256xbf16>, vector<24x256xf32> -> vector<24x256xf32>
    %149 = arith.addf %144, %148 : vector<24x256xf32>
    %c8_148 = arith.constant 8 : index
    %c0_149 = arith.constant 0 : index
    %150 = vector.load %arg22[%c8_148, %c0_149] : memref<38x128xbf16, #tpu.memory_space<vmem>>, vector<24x128xbf16>
    %c5_150 = arith.constant 5 : index
    %c0_151 = arith.constant 0 : index
    %c0_152 = arith.constant 0 : index
    %151 = vector.load %arg9[%c5_150, %c0_151, %c0_152] : memref<9x128x256xbf16, #tpu.memory_space<vmem>>, vector<1x128x256xbf16>
    %152 = vector.shape_cast %151 : vector<1x128x256xbf16> to vector<128x256xbf16>
    %cst_153 = arith.constant dense<0.000000e+00> : vector<24x256xf32>
    %153 = tpu.matmul %150, %152, %cst_153 {dimension_numbers = #tpu.dot_dimension_numbers<[1], [0], [0], [1], [0, 0, 1, 1], [], []>} : vector<24x128xbf16>, vector<128x256xbf16>, vector<24x256xf32> -> vector<24x256xf32>
    %154 = arith.addf %149, %153 : vector<24x256xf32>
    %c12_154 = arith.constant 12 : index
    %c0_155 = arith.constant 0 : index
    %155 = vector.load %arg22[%c12_154, %c0_155] : memref<38x128xbf16, #tpu.memory_space<vmem>>, vector<24x128xbf16>
    %c6_156 = arith.constant 6 : index
    %c0_157 = arith.constant 0 : index
    %c0_158 = arith.constant 0 : index
    %156 = vector.load %arg9[%c6_156, %c0_157, %c0_158] : memref<9x128x256xbf16, #tpu.memory_space<vmem>>, vector<1x128x256xbf16>
    %157 = vector.shape_cast %156 : vector<1x128x256xbf16> to vector<128x256xbf16>
    %cst_159 = arith.constant dense<0.000000e+00> : vector<24x256xf32>
    %158 = tpu.matmul %155, %157, %cst_159 {dimension_numbers = #tpu.dot_dimension_numbers<[1], [0], [0], [1], [0, 0, 1, 1], [], []>} : vector<24x128xbf16>, vector<128x256xbf16>, vector<24x256xf32> -> vector<24x256xf32>
    %159 = arith.addf %154, %158 : vector<24x256xf32>
    %c13 = arith.constant 13 : index
    %c0_160 = arith.constant 0 : index
    %160 = vector.load %arg22[%c13, %c0_160] : memref<38x128xbf16, #tpu.memory_space<vmem>>, vector<24x128xbf16>
    %c7_161 = arith.constant 7 : index
    %c0_162 = arith.constant 0 : index
    %c0_163 = arith.constant 0 : index
    %161 = vector.load %arg9[%c7_161, %c0_162, %c0_163] : memref<9x128x256xbf16, #tpu.memory_space<vmem>>, vector<1x128x256xbf16>
    %162 = vector.shape_cast %161 : vector<1x128x256xbf16> to vector<128x256xbf16>
    %cst_164 = arith.constant dense<0.000000e+00> : vector<24x256xf32>
    %163 = tpu.matmul %160, %162, %cst_164 {dimension_numbers = #tpu.dot_dimension_numbers<[1], [0], [0], [1], [0, 0, 1, 1], [], []>} : vector<24x128xbf16>, vector<128x256xbf16>, vector<24x256xf32> -> vector<24x256xf32>
    %164 = arith.addf %159, %163 : vector<24x256xf32>
    %c14 = arith.constant 14 : index
    %c0_165 = arith.constant 0 : index
    %165 = vector.load %arg22[%c14, %c0_165] : memref<38x128xbf16, #tpu.memory_space<vmem>>, vector<24x128xbf16>
    %c8_166 = arith.constant 8 : index
    %c0_167 = arith.constant 0 : index
    %c0_168 = arith.constant 0 : index
    %166 = vector.load %arg9[%c8_166, %c0_167, %c0_168] : memref<9x128x256xbf16, #tpu.memory_space<vmem>>, vector<1x128x256xbf16>
    %167 = vector.shape_cast %166 : vector<1x128x256xbf16> to vector<128x256xbf16>
    %cst_169 = arith.constant dense<0.000000e+00> : vector<24x256xf32>
    %168 = tpu.matmul %165, %167, %cst_169 {dimension_numbers = #tpu.dot_dimension_numbers<[1], [0], [0], [1], [0, 0, 1, 1], [], []>} : vector<24x128xbf16>, vector<128x256xbf16>, vector<24x256xf32> -> vector<24x256xf32>
    %169 = arith.addf %164, %168 : vector<24x256xf32>
    %c0_170 = arith.constant 0 : index
    %c0_171 = arith.constant 0 : index
    %170 = vector.load %arg10[%c0_170, %c0_171] : memref<1x256xf32, #tpu.memory_space<vmem>>, vector<1x256xf32>
    %171 = vector.broadcast %170 : vector<1x256xf32> to vector<24x256xf32>
    %172 = arith.mulf %169, %171 : vector<24x256xf32>
    %c0_172 = arith.constant 0 : index
    %c0_173 = arith.constant 0 : index
    %173 = vector.load %arg11[%c0_172, %c0_173] : memref<1x256xf32, #tpu.memory_space<vmem>>, vector<1x256xf32>
    %174 = vector.broadcast %173 : vector<1x256xf32> to vector<24x256xf32>
    %175 = arith.addf %172, %174 : vector<24x256xf32>
    %cst_174 = arith.constant 0.000000e+00 : f32
    %176 = vector.broadcast %cst_174 : f32 to vector<24x256xf32>
    %177 = arith.maximumf %175, %176 : vector<24x256xf32>
    %c0_175 = arith.constant 0 : index
    %c0_176 = arith.constant 0 : index
    %178 = vector.load %arg17[%c0_175, %c0_176] : memref<18x24xbf16, #tpu.memory_space<vmem>>, vector<18x24xbf16>
    %179 = arith.truncf %177 : vector<24x256xf32> to vector<24x256xbf16>
    %cst_177 = arith.constant dense<0.000000e+00> : vector<18x256xf32>
    %180 = tpu.matmul %178, %179, %cst_177 {dimension_numbers = #tpu.dot_dimension_numbers<[1], [0], [0], [1], [0, 0, 1, 1], [], []>} : vector<18x24xbf16>, vector<24x256xbf16>, vector<18x256xf32> -> vector<18x256xf32>
    %181 = arith.truncf %180 : vector<18x256xf32> to vector<18x256xbf16>
    %c0_178 = arith.constant 0 : index
    %c0_179 = arith.constant 0 : index
    %182 = vector.load %arg23[%c0_178, %c0_179] : memref<18x256xbf16, #tpu.memory_space<vmem>>, vector<18x256xbf16>
    tpu.vector_store %arg23[%c0_178, %c0_179], %181 {strides = array<i32>} : memref<18x256xbf16, #tpu.memory_space<vmem>>, vector<18x256xbf16>,
    %cst_180 = arith.constant 0.000000e+00 : f32
    %183 = vector.broadcast %cst_180 : f32 to vector<8x32xf32>
    %c0_181 = arith.constant 0 : index
    %c0_182 = arith.constant 0 : index
    %184 = vector.load %arg23[%c0_181, %c0_182] : memref<18x256xbf16, #tpu.memory_space<vmem>>, vector<8x256xbf16>
    %c0_183 = arith.constant 0 : index
    %c0_184 = arith.constant 0 : index
    %c0_185 = arith.constant 0 : index
    %185 = vector.load %arg12[%c0_183, %c0_184, %c0_185] : memref<9x256x32xbf16, #tpu.memory_space<vmem>>, vector<1x256x32xbf16>
    %186 = vector.shape_cast %185 : vector<1x256x32xbf16> to vector<256x32xbf16>
    %cst_186 = arith.constant dense<0.000000e+00> : vector<8x32xf32>
    %187 = tpu.matmul %184, %186, %cst_186 {dimension_numbers = #tpu.dot_dimension_numbers<[1], [0], [0], [1], [0, 0, 1, 1], [], []>} : vector<8x256xbf16>, vector<256x32xbf16>, vector<8x32xf32> -> vector<8x32xf32>
    %188 = arith.addf %183, %187 : vector<8x32xf32>
    %c1_187 = arith.constant 1 : index
    %c0_188 = arith.constant 0 : index
    %189 = vector.load %arg23[%c1_187, %c0_188] : memref<18x256xbf16, #tpu.memory_space<vmem>>, vector<8x256xbf16>
    %c1_189 = arith.constant 1 : index
    %c0_190 = arith.constant 0 : index
    %c0_191 = arith.constant 0 : index
    %190 = vector.load %arg12[%c1_189, %c0_190, %c0_191] : memref<9x256x32xbf16, #tpu.memory_space<vmem>>, vector<1x256x32xbf16>
    %191 = vector.shape_cast %190 : vector<1x256x32xbf16> to vector<256x32xbf16>
    %cst_192 = arith.constant dense<0.000000e+00> : vector<8x32xf32>
    %192 = tpu.matmul %189, %191, %cst_192 {dimension_numbers = #tpu.dot_dimension_numbers<[1], [0], [0], [1], [0, 0, 1, 1], [], []>} : vector<8x256xbf16>, vector<256x32xbf16>, vector<8x32xf32> -> vector<8x32xf32>
    %193 = arith.addf %188, %192 : vector<8x32xf32>
    %c2_193 = arith.constant 2 : index
    %c0_194 = arith.constant 0 : index
    %194 = vector.load %arg23[%c2_193, %c0_194] : memref<18x256xbf16, #tpu.memory_space<vmem>>, vector<8x256xbf16>
    %c2_195 = arith.constant 2 : index
    %c0_196 = arith.constant 0 : index
    %c0_197 = arith.constant 0 : index
    %195 = vector.load %arg12[%c2_195, %c0_196, %c0_197] : memref<9x256x32xbf16, #tpu.memory_space<vmem>>, vector<1x256x32xbf16>
    %196 = vector.shape_cast %195 : vector<1x256x32xbf16> to vector<256x32xbf16>
    %cst_198 = arith.constant dense<0.000000e+00> : vector<8x32xf32>
    %197 = tpu.matmul %194, %196, %cst_198 {dimension_numbers = #tpu.dot_dimension_numbers<[1], [0], [0], [1], [0, 0, 1, 1], [], []>} : vector<8x256xbf16>, vector<256x32xbf16>, vector<8x32xf32> -> vector<8x32xf32>
    %198 = arith.addf %193, %197 : vector<8x32xf32>
    %c4_199 = arith.constant 4 : index
    %c0_200 = arith.constant 0 : index
    %199 = vector.load %arg23[%c4_199, %c0_200] : memref<18x256xbf16, #tpu.memory_space<vmem>>, vector<8x256xbf16>
    %c3_201 = arith.constant 3 : index
    %c0_202 = arith.constant 0 : index
    %c0_203 = arith.constant 0 : index
    %200 = vector.load %arg12[%c3_201, %c0_202, %c0_203] : memref<9x256x32xbf16, #tpu.memory_space<vmem>>, vector<1x256x32xbf16>
    %201 = vector.shape_cast %200 : vector<1x256x32xbf16> to vector<256x32xbf16>
    %cst_204 = arith.constant dense<0.000000e+00> : vector<8x32xf32>
    %202 = tpu.matmul %199, %201, %cst_204 {dimension_numbers = #tpu.dot_dimension_numbers<[1], [0], [0], [1], [0, 0, 1, 1], [], []>} : vector<8x256xbf16>, vector<256x32xbf16>, vector<8x32xf32> -> vector<8x32xf32>
    %203 = arith.addf %198, %202 : vector<8x32xf32>
    %c5_205 = arith.constant 5 : index
    %c0_206 = arith.constant 0 : index
    %204 = vector.load %arg23[%c5_205, %c0_206] : memref<18x256xbf16, #tpu.memory_space<vmem>>, vector<8x256xbf16>
    %c4_207 = arith.constant 4 : index
    %c0_208 = arith.constant 0 : index
    %c0_209 = arith.constant 0 : index
    %205 = vector.load %arg12[%c4_207, %c0_208, %c0_209] : memref<9x256x32xbf16, #tpu.memory_space<vmem>>, vector<1x256x32xbf16>
    %206 = vector.shape_cast %205 : vector<1x256x32xbf16> to vector<256x32xbf16>
    %cst_210 = arith.constant dense<0.000000e+00> : vector<8x32xf32>
    %207 = tpu.matmul %204, %206, %cst_210 {dimension_numbers = #tpu.dot_dimension_numbers<[1], [0], [0], [1], [0, 0, 1, 1], [], []>} : vector<8x256xbf16>, vector<256x32xbf16>, vector<8x32xf32> -> vector<8x32xf32>
    %208 = arith.addf %203, %207 : vector<8x32xf32>
    %c6_211 = arith.constant 6 : index
    %c0_212 = arith.constant 0 : index
    %209 = vector.load %arg23[%c6_211, %c0_212] : memref<18x256xbf16, #tpu.memory_space<vmem>>, vector<8x256xbf16>
    %c5_213 = arith.constant 5 : index
    %c0_214 = arith.constant 0 : index
    %c0_215 = arith.constant 0 : index
    %210 = vector.load %arg12[%c5_213, %c0_214, %c0_215] : memref<9x256x32xbf16, #tpu.memory_space<vmem>>, vector<1x256x32xbf16>
    %211 = vector.shape_cast %210 : vector<1x256x32xbf16> to vector<256x32xbf16>
    %cst_216 = arith.constant dense<0.000000e+00> : vector<8x32xf32>
    %212 = tpu.matmul %209, %211, %cst_216 {dimension_numbers = #tpu.dot_dimension_numbers<[1], [0], [0], [1], [0, 0, 1, 1], [], []>} : vector<8x256xbf16>, vector<256x32xbf16>, vector<8x32xf32> -> vector<8x32xf32>
    %213 = arith.addf %208, %212 : vector<8x32xf32>
    %c8_217 = arith.constant 8 : index
    %c0_218 = arith.constant 0 : index
    %214 = vector.load %arg23[%c8_217, %c0_218] : memref<18x256xbf16, #tpu.memory_space<vmem>>, vector<8x256xbf16>
    %c6_219 = arith.constant 6 : index
    %c0_220 = arith.constant 0 : index
    %c0_221 = arith.constant 0 : index
    %215 = vector.load %arg12[%c6_219, %c0_220, %c0_221] : memref<9x256x32xbf16, #tpu.memory_space<vmem>>, vector<1x256x32xbf16>
    %216 = vector.shape_cast %215 : vector<1x256x32xbf16> to vector<256x32xbf16>
    %cst_222 = arith.constant dense<0.000000e+00> : vector<8x32xf32>
    %217 = tpu.matmul %214, %216, %cst_222 {dimension_numbers = #tpu.dot_dimension_numbers<[1], [0], [0], [1], [0, 0, 1, 1], [], []>} : vector<8x256xbf16>, vector<256x32xbf16>, vector<8x32xf32> -> vector<8x32xf32>
    %218 = arith.addf %213, %217 : vector<8x32xf32>
    %c9 = arith.constant 9 : index
    %c0_223 = arith.constant 0 : index
    %219 = vector.load %arg23[%c9, %c0_223] : memref<18x256xbf16, #tpu.memory_space<vmem>>, vector<8x256xbf16>
    %c7_224 = arith.constant 7 : index
    %c0_225 = arith.constant 0 : index
    %c0_226 = arith.constant 0 : index
    %220 = vector.load %arg12[%c7_224, %c0_225, %c0_226] : memref<9x256x32xbf16, #tpu.memory_space<vmem>>, vector<1x256x32xbf16>
    %221 = vector.shape_cast %220 : vector<1x256x32xbf16> to vector<256x32xbf16>
    %cst_227 = arith.constant dense<0.000000e+00> : vector<8x32xf32>
    %222 = tpu.matmul %219, %221, %cst_227 {dimension_numbers = #tpu.dot_dimension_numbers<[1], [0], [0], [1], [0, 0, 1, 1], [], []>} : vector<8x256xbf16>, vector<256x32xbf16>, vector<8x32xf32> -> vector<8x32xf32>
    %223 = arith.addf %218, %222 : vector<8x32xf32>
    %c10_228 = arith.constant 10 : index
    %c0_229 = arith.constant 0 : index
    %224 = vector.load %arg23[%c10_228, %c0_229] : memref<18x256xbf16, #tpu.memory_space<vmem>>, vector<8x256xbf16>
    %c8_230 = arith.constant 8 : index
    %c0_231 = arith.constant 0 : index
    %c0_232 = arith.constant 0 : index
    %225 = vector.load %arg12[%c8_230, %c0_231, %c0_232] : memref<9x256x32xbf16, #tpu.memory_space<vmem>>, vector<1x256x32xbf16>
    %226 = vector.shape_cast %225 : vector<1x256x32xbf16> to vector<256x32xbf16>
    %cst_233 = arith.constant dense<0.000000e+00> : vector<8x32xf32>
    %227 = tpu.matmul %224, %226, %cst_233 {dimension_numbers = #tpu.dot_dimension_numbers<[1], [0], [0], [1], [0, 0, 1, 1], [], []>} : vector<8x256xbf16>, vector<256x32xbf16>, vector<8x32xf32> -> vector<8x32xf32>
    %228 = arith.addf %223, %227 : vector<8x32xf32>
    %c0_234 = arith.constant 0 : index
    %c0_235 = arith.constant 0 : index
    %229 = vector.load %arg13[%c0_234, %c0_235] : memref<1x32xf32, #tpu.memory_space<vmem>>, vector<1x32xf32>
    %230 = vector.broadcast %229 : vector<1x32xf32> to vector<8x32xf32>
    %231 = arith.mulf %228, %230 : vector<8x32xf32>
    %c0_236 = arith.constant 0 : index
    %c0_237 = arith.constant 0 : index
    %232 = vector.load %arg14[%c0_236, %c0_237] : memref<1x32xf32, #tpu.memory_space<vmem>>, vector<1x32xf32>
    %233 = vector.broadcast %232 : vector<1x32xf32> to vector<8x32xf32>
    %234 = arith.addf %231, %233 : vector<8x32xf32>
    %cst_238 = arith.constant 0.000000e+00 : f32
    %235 = vector.broadcast %cst_238 : f32 to vector<8x32xf32>
    %236 = arith.maximumf %234, %235 : vector<8x32xf32>
    %c0_239 = arith.constant 0 : index
    %c0_240 = arith.constant 0 : index
    %237 = vector.load %arg18[%c0_239, %c0_240] : memref<4x8xf32, #tpu.memory_space<vmem>>, vector<4x8xf32>
    %cst_241 = arith.constant dense<0.000000e+00> : vector<4x32xf32>
    %238 = tpu.matmul %237, %236, %cst_241 {dimension_numbers = #tpu.dot_dimension_numbers<[1], [0], [0], [1], [0, 0, 1, 1], [], []>} : vector<4x8xf32>, vector<8x32xf32>, vector<4x32xf32> -> vector<4x32xf32>
    %c0_242 = arith.constant 0 : index
    %c0_243 = arith.constant 0 : index
    %c0_244 = arith.constant 0 : index
    %239 = vector.load %arg19[%c0_242, %c0_243, %c0_244] : memref<1x4x32xf32, #tpu.memory_space<vmem>>, vector<1x4x32xf32>
    %240 = vector.shape_cast %239 : vector<1x4x32xf32> to vector<4x32xf32>
    %241 = vector.shape_cast %238 : vector<4x32xf32> to vector<1x4x32xf32>
    tpu.vector_store %arg19[%c0_242, %c0_243, %c0_244], %241 {strides = array<i32>} : memref<1x4x32xf32, #tpu.memory_space<vmem>>, vector<1x4x32xf32>,
    return
  }
  func.func @transform_0(%arg0: i32) -> (i32, i32, i32) {
    %c0_i32 = arith.constant 0 : i32
    %c0_i32_0 = arith.constant 0 : i32
    %c0_i32_1 = arith.constant 0 : i32
    return %arg0, %c0_i32, %c0_i32_0 : i32, i32, i32
  }
  func.func @transform_1(%arg0: i32) -> (i32, i32) {
    %c0_i32 = arith.constant 0 : i32
    %c0_i32_0 = arith.constant 0 : i32
    %c0_i32_1 = arith.constant 0 : i32
    return %c0_i32, %c0_i32_0 : i32, i32
  }
  func.func @transform_2(%arg0: i32) -> (i32, i32, i32) {
    %c0_i32 = arith.constant 0 : i32
    %c0_i32_0 = arith.constant 0 : i32
    %c0_i32_1 = arith.constant 0 : i32
    %c0_i32_2 = arith.constant 0 : i32
    return %c0_i32, %c0_i32_0, %c0_i32_1 : i32, i32, i32
  }
  func.func @transform_3(%arg0: i32) -> (i32, i32) {
    %c0_i32 = arith.constant 0 : i32
    %c0_i32_0 = arith.constant 0 : i32
    %c0_i32_1 = arith.constant 0 : i32
    return %c0_i32, %c0_i32_0 : i32, i32
  }
  func.func @transform_4(%arg0: i32) -> (i32, i32) {
    %c0_i32 = arith.constant 0 : i32
    %c0_i32_0 = arith.constant 0 : i32
    %c0_i32_1 = arith.constant 0 : i32
    return %c0_i32, %c0_i32_0 : i32, i32
  }
  func.func @transform_5(%arg0: i32) -> (i32, i32, i32) {
    %c0_i32 = arith.constant 0 : i32
    %c0_i32_0 = arith.constant 0 : i32
    %c0_i32_1 = arith.constant 0 : i32
    %c0_i32_2 = arith.constant 0 : i32
    return %c0_i32, %c0_i32_0, %c0_i32_1 : i32, i32, i32
  }
  func.func @transform_6(%arg0: i32) -> (i32, i32) {
    %c0_i32 = arith.constant 0 : i32
    %c0_i32_0 = arith.constant 0 : i32
    %c0_i32_1 = arith.constant 0 : i32
    return %c0_i32, %c0_i32_0 : i32, i32
  }
  func.func @transform_7(%arg0: i32) -> (i32, i32) {
    %c0_i32 = arith.constant 0 : i32
    %c0_i32_0 = arith.constant 0 : i32
    %c0_i32_1 = arith.constant 0 : i32
    return %c0_i32, %c0_i32_0 : i32, i32
  }
  func.func @transform_8(%arg0: i32) -> (i32, i32, i32) {
    %c0_i32 = arith.constant 0 : i32
    %c0_i32_0 = arith.constant 0 : i32
    %c0_i32_1 = arith.constant 0 : i32
    %c0_i32_2 = arith.constant 0 : i32
    return %c0_i32, %c0_i32_0, %c0_i32_1 : i32, i32, i32
  }
  func.func @transform_9(%arg0: i32) -> (i32, i32) {
    %c0_i32 = arith.constant 0 : i32
    %c0_i32_0 = arith.constant 0 : i32
    %c0_i32_1 = arith.constant 0 : i32
    return %c0_i32, %c0_i32_0 : i32, i32
  }
  func.func @transform_10(%arg0: i32) -> (i32, i32) {
    %c0_i32 = arith.constant 0 : i32
    %c0_i32_0 = arith.constant 0 : i32
    %c0_i32_1 = arith.constant 0 : i32
    return %c0_i32, %c0_i32_0 : i32, i32
  }
  func.func @transform_11(%arg0: i32) -> (i32, i32, i32) {
    %c0_i32 = arith.constant 0 : i32
    %c0_i32_0 = arith.constant 0 : i32
    %c0_i32_1 = arith.constant 0 : i32
    %c0_i32_2 = arith.constant 0 : i32
    return %c0_i32, %c0_i32_0, %c0_i32_1 : i32, i32, i32
  }
  func.func @transform_12(%arg0: i32) -> (i32, i32) {
    %c0_i32 = arith.constant 0 : i32
    %c0_i32_0 = arith.constant 0 : i32
    %c0_i32_1 = arith.constant 0 : i32
    return %c0_i32, %c0_i32_0 : i32, i32
  }
  func.func @transform_13(%arg0: i32) -> (i32, i32) {
    %c0_i32 = arith.constant 0 : i32
    %c0_i32_0 = arith.constant 0 : i32
    %c0_i32_1 = arith.constant 0 : i32
    return %c0_i32, %c0_i32_0 : i32, i32
  }
  func.func @transform_14(%arg0: i32) -> (i32, i32) {
    %c0_i32 = arith.constant 0 : i32
    %c0_i32_0 = arith.constant 0 : i32
    %c0_i32_1 = arith.constant 0 : i32
    return %c0_i32, %c0_i32_0 : i32, i32
  }
  func.func @transform_15(%arg0: i32) -> (i32, i32) {
    %c0_i32 = arith.constant 0 : i32
    %c0_i32_0 = arith.constant 0 : i32
    %c0_i32_1 = arith.constant 0 : i32
    return %c0_i32, %c0_i32_0 : i32, i32
  }
  func.func @transform_16(%arg0: i32) -> (i32, i32) {
    %c0_i32 = arith.constant 0 : i32
    %c0_i32_0 = arith.constant 0 : i32
    %c0_i32_1 = arith.constant 0 : i32
    return %c0_i32, %c0_i32_0 : i32, i32
  }
  func.func @transform_17(%arg0: i32) -> (i32, i32) {
    %c0_i32 = arith.constant 0 : i32
    %c0_i32_0 = arith.constant 0 : i32
    %c0_i32_1 = arith.constant 0 : i32
    return %c0_i32, %c0_i32_0 : i32, i32
  }
  func.func @transform_18(%arg0: i32) -> (i32, i32, i32) {
    %c0_i32 = arith.constant 0 : i32
    %c0_i32_0 = arith.constant 0 : i32
    %c0_i32_1 = arith.constant 0 : i32
    return %arg0, %c0_i32, %c0_i32_0 : i32, i32, i32
  }
}

</mosaic_0001>

<llo_original>
// kernel: tpu_custom_call.1
$region0: #{tpu_custom_call.1}
  #allocation0 [shape = 'u32[]', space=smem, size = 0x4, offset = 0x4, fixed_abs, tag = 'smem constant byte address 0x4 - core index']
  #allocation1 [shape = 'u32[72,128]{1,0:T(1,128)}', space=vmem, size = 0x9000, scoped, tag = 'internal scratch']
  #allocation2 [shape = 'bf16[326,4]{1,0:T(8,128)(2,1)}', space=vmem, size = 0x14800, scoped, tag = 'scratch operand']
  #allocation3 [shape = 'bf16[102,64]{1,0:T(8,128)(2,1)}', space=vmem, size = 0x6800, scoped, tag = 'scratch operand']
  #allocation4 [shape = 'bf16[38,128]{1,0:T(8,128)(2,1)}', space=vmem, size = 0x2800, scoped, tag = 'scratch operand']
  #allocation5 [shape = 'bf16[18,256]{1,0:T(8,128)(2,1)}', space=vmem, size = 0x3000, scoped, tag = 'scratch operand']
  %s0 = inlined_call_operand.vmem [shape: bf16[2,256,4], index: 0, kind: input, shape index: {}]
  %s1 = inlined_call_operand.vmem [shape: bf16[326,256], index: 1, kind: input, shape index: {}]
  %s2 = inlined_call_operand.vmem [shape: bf16[9,4,64], index: 2, kind: input, shape index: {}]
  %s3 = inlined_call_operand.vmem [shape: f32[1,64], index: 3, kind: input, shape index: {}]
  %s4 = inlined_call_operand.vmem [shape: f32[1,64], index: 4, kind: input, shape index: {}]
  %s5 = inlined_call_operand.hbm [shape: bf16[9,64,128], index: 5, kind: input, shape index: {}]
  %s6 = inlined_call_operand.vmem [shape: f32[1,128], index: 6, kind: input, shape index: {}]
  %s7 = inlined_call_operand.vmem [shape: f32[1,128], index: 7, kind: input, shape index: {}]
  %s8 = inlined_call_operand.vmem [shape: bf16[9,128,256], index: 8, kind: input, shape index: {}]
  %s9 = inlined_call_operand.vmem [shape: f32[1,256], index: 9, kind: input, shape index: {}]
  %s10 = inlined_call_operand.vmem [shape: f32[1,256], index: 10, kind: input, shape index: {}]
  %s11 = inlined_call_operand.vmem [shape: bf16[9,256,32], index: 11, kind: input, shape index: {}]
  %s12 = inlined_call_operand.vmem [shape: f32[1,32], index: 12, kind: input, shape index: {}]
  %s13 = inlined_call_operand.vmem [shape: f32[1,32], index: 13, kind: input, shape index: {}]
  %s14 = inlined_call_operand.vmem [shape: bf16[102,288], index: 14, kind: input, shape index: {}]
  %s15 = inlined_call_operand.vmem [shape: bf16[38,80], index: 15, kind: input, shape index: {}]
  %s16 = inlined_call_operand.vmem [shape: bf16[18,24], index: 16, kind: input, shape index: {}]
  %s17 = inlined_call_operand.vmem [shape: f32[4,8], index: 17, kind: input, shape index: {}]
  %s18 = inlined_call_operand.hbm [shape: f32[2,4,32], index: 18, kind: output, shape index: {}]
  %s19 = sld [smem:[#allocation0]]
  $region109: #{tpu_custom_call.1} parent=0
    _
  %s21 = ssub.s32 1, %s19
  %s22 = scalar_select 0, %s21, %s19
  $region1: #{tpu_custom_call.1} parent=0
    #allocation6 [shape = 'u8[147456]{0}', space=vmem, size = 0x24000, scoped, tag = 'input window, operand 5, single buffered']
    #allocation7 [shape = 's32[2]{0}', space=sflag, size = 0x8, scoped, tag = 'scoped memory for tpu_custom_call.1']
    #allocation8 [shape = 's32[2]{0}', space=sflag, size = 0x8, scoped, tag = 'scoped memory for tpu_custom_call.1']
    #allocation9 [shape = 'u8[4096]{0}', space=vmem, size = 0x1000, scoped, tag = 'output window, operand 0']
    %23 = vsyncpa [#allocation7], 0
    %24 = vsyncpa [#allocation8], 0
    %s25 = scalar_lea.sflag [#allocation8], 1
    %26 = vsyncpa %s25, 0
    loop: start=0, step=1, limit=4
    $region2: #{tpu_custom_call.1} parent=1 // loop_pre_header
      _
    $region3: #{tpu_custom_call.1} parent=1 // loop_header
      %s28 = sphi 0, %s32
      %p29 = scmp.ge.s32.totalorder %s28, 4
      %s38 = sphi 0, %s40
      %s41 = sphi 0, %s38
      %s42 = sphi 0, %s41
      %s58 = sphi 0, %s42
      %s62 = sphi 0, %s62
      %s64 = sphi 0, %s62
      %s65 = sphi 0, %s64
      %s79 = sphi 0, %s65
      %s83 = sphi 0, %s83
      %s85 = sphi 0, %s83
      %s86 = sphi 0, %s85
      %s100 = sphi 0, %s86
      %s104 = sphi 0, %s104
      %s106 = sphi 0, %s104
      %s107 = sphi 0, %s106
      %s121 = sphi 0, %s107
      %s125 = sphi 0, %s125
      %s127 = sphi 0, %s125
      %s128 = sphi 0, %s127
      %s142 = sphi 0, %s128
      %s146 = sphi 0, %s146
      %s148 = sphi 0, %s146
      %s149 = sphi 0, %s148
      %s163 = sphi 0, %s149
      %s167 = sphi 0, %s167
      %s169 = sphi 0, %s167
      %s170 = sphi 0, %s169
      %s184 = sphi 0, %s170
      %s188 = sphi 0, %s188
      %s190 = sphi 0, %s188
      %s191 = sphi 0, %s190
      %s205 = sphi 0, %s191
      %s209 = sphi 0, %s209
      %s211 = sphi 0, %s209
      %s212 = sphi 0, %s211
      %s226 = sphi 0, %s212
      %s230 = sphi 0, %s230
      %s232 = sphi 0, %s230
      %s233 = sphi 0, %s232
      %s247 = sphi 0, %s233
      %s251 = sphi 0, %s251
      %s253 = sphi 0, %s251
      %s254 = sphi 0, %s253
      %s268 = sphi 0, %s254
      %s272 = sphi 0, %s272
      %s274 = sphi 0, %s272
      %s275 = sphi 0, %s274
      %s289 = sphi 0, %s275
      %s293 = sphi 0, %s293
      %s295 = sphi 0, %s293
      %s296 = sphi 0, %s295
      %s310 = sphi 0, %s296
      %s314 = sphi 0, %s314
      %s316 = sphi 0, %s314
      %s317 = sphi 0, %s316
      %s331 = sphi 0, %s317
      %s335 = sphi 0, %s335
      %s337 = sphi 0, %s335
      %s338 = sphi 0, %s337
      %s352 = sphi 0, %s338
      %s356 = sphi 0, %s356
      %s358 = sphi 0, %s356
      %s359 = sphi 0, %s358
      %s373 = sphi 0, %s359
      %s377 = sphi 0, %s377
      %s379 = sphi 0, %s377
      %s380 = sphi 0, %s379
      %s394 = sphi 0, %s380
      %s398 = sphi 0, %s398
      %s400 = sphi 0, %s398
      %s401 = sphi 0, %s400
      %s415 = sphi 0, %s401
      %s421 = sphi 0, %s423
      %s424 = sphi 0, %s421
      %s425 = sphi 0, %s424
      %s441 = sphi 0, %s425
    $region4: #{tpu_custom_call.1} parent=1 // loop_header_branch
      %31 = sbr.rel (%p29) target = $region8
    $region5: #{tpu_custom_call.1} parent=1 // loop_body
      %s33 = ssub.s32 %s28, 1
      %s34 = ssub.s32 %s28, 2
      %s35 = sadd.s32 %s28, 1
      %s36 = ssub.s32 %s28, %s35
      %p37 = scmp.eq.s32.totalorder %s36, 0
      %s39 = sadd.s32 %s38, 1
      %s40 = scalar_select %p37, %s38, %s39
      %p43 = pneg %p37
      %p44 = scmp.eq.s32.totalorder %s28, 1
      %p45 = por %p43, %p44
      %p46 = scmp.ne.s32.totalorder %s38, %s41
      %p47 = scmp.eq.s32.totalorder %s28, 0
      %p48 = por %p46, %p47
      %p49 = scmp.ne.s32.totalorder %s38, %s41
      %p50 = scmp.eq.s32.totalorder %s33, 1
      %p51 = por %p49, %p50
      %p52 = scmp.ne.s32.totalorder %s41, %s42
      %p53 = scmp.eq.s32.totalorder %s33, 0
      %p54 = por %p52, %p53
      %p55 = scmp.ne.s32.totalorder %s41, %s42
      %p56 = scmp.eq.s32.totalorder %s34, 1
      %p57 = por %p55, %p56
      %p59 = scmp.ne.s32.totalorder %s42, %s58
      %p60 = scmp.eq.s32.totalorder %s34, 0
      %p61 = por %p59, %p60
      %s63 = sadd.s32 %s62, 1
      %p66 = scmp.eq.s32.totalorder %s28, 1
      %p67 = scmp.ne.s32.totalorder %s62, %s64
      %p68 = scmp.eq.s32.totalorder %s28, 0
      %p69 = por %p67, %p68
      %p70 = scmp.ne.s32.totalorder %s62, %s64
      %p71 = scmp.eq.s32.totalorder %s33, 1
      %p72 = por %p70, %p71
      %p73 = scmp.ne.s32.totalorder %s64, %s65
      %p74 = scmp.eq.s32.totalorder %s33, 0
      %p75 = por %p73, %p74
      %p76 = scmp.ne.s32.totalorder %s64, %s65
      %p77 = scmp.eq.s32.totalorder %s34, 1
      %p78 = por %p76, %p77
      %p80 = scmp.ne.s32.totalorder %s65, %s79
      %p81 = scmp.eq.s32.totalorder %s34, 0
      %p82 = por %p80, %p81
      %s84 = sadd.s32 %s83, 1
      %p87 = scmp.eq.s32.totalorder %s28, 1
      %p88 = scmp.ne.s32.totalorder %s83, %s85
      %p89 = scmp.eq.s32.totalorder %s28, 0
      %p90 = por %p88, %p89
      %p91 = scmp.ne.s32.totalorder %s83, %s85
      %p92 = scmp.eq.s32.totalorder %s33, 1
      %p93 = por %p91, %p92
      %p94 = scmp.ne.s32.totalorder %s85, %s86
      %p95 = scmp.eq.s32.totalorder %s33, 0
      %p96 = por %p94, %p95
      %p97 = scmp.ne.s32.totalorder %s85, %s86
      %p98 = scmp.eq.s32.totalorder %s34, 1
      %p99 = por %p97, %p98
      %p101 = scmp.ne.s32.totalorder %s86, %s100
      %p102 = scmp.eq.s32.totalorder %s34, 0
      %p103 = por %p101, %p102
      %s105 = sadd.s32 %s104, 1
      %p108 = scmp.eq.s32.totalorder %s28, 1
      %p109 = scmp.ne.s32.totalorder %s104, %s106
      %p110 = scmp.eq.s32.totalorder %s28, 0
      %p111 = por %p109, %p110
      %p112 = scmp.ne.s32.totalorder %s104, %s106
      %p113 = scmp.eq.s32.totalorder %s33, 1
      %p114 = por %p112, %p113
      %p115 = scmp.ne.s32.totalorder %s106, %s107
      %p116 = scmp.eq.s32.totalorder %s33, 0
      %p117 = por %p115, %p116
      %p118 = scmp.ne.s32.totalorder %s106, %s107
      %p119 = scmp.eq.s32.totalorder %s34, 1
      %p120 = por %p118, %p119
      %p122 = scmp.ne.s32.totalorder %s107, %s121
      %p123 = scmp.eq.s32.totalorder %s34, 0
      %p124 = por %p122, %p123
      %s126 = sadd.s32 %s125, 1
      %p129 = scmp.eq.s32.totalorder %s28, 1
      %p130 = scmp.ne.s32.totalorder %s125, %s127
      %p131 = scmp.eq.s32.totalorder %s28, 0
      %p132 = por %p130, %p131
      %p133 = scmp.ne.s32.totalorder %s125, %s127
      %p134 = scmp.eq.s32.totalorder %s33, 1
      %p135 = por %p133, %p134
      %p136 = scmp.ne.s32.totalorder %s127, %s128
      %p137 = scmp.eq.s32.totalorder %s33, 0
      %p138 = por %p136, %p137
      %p139 = scmp.ne.s32.totalorder %s127, %s128
      %p140 = scmp.eq.s32.totalorder %s34, 1
      %p141 = por %p139, %p140
      %p143 = scmp.ne.s32.totalorder %s128, %s142
      %p144 = scmp.eq.s32.totalorder %s34, 0
      %p145 = por %p143, %p144
      %s147 = sadd.s32 %s146, 1
      %p150 = scmp.eq.s32.totalorder %s28, 1
      %p151 = scmp.ne.s32.totalorder %s146, %s148
      %p152 = scmp.eq.s32.totalorder %s28, 0
      %p153 = por %p151, %p152
      %p154 = scmp.ne.s32.totalorder %s146, %s148
      %p155 = scmp.eq.s32.totalorder %s33, 1
      %p156 = por %p154, %p155
      %p157 = scmp.ne.s32.totalorder %s148, %s149
      %p158 = scmp.eq.s32.totalorder %s33, 0
      %p159 = por %p157, %p158
      %p160 = scmp.ne.s32.totalorder %s148, %s149
      %p161 = scmp.eq.s32.totalorder %s34, 1
      %p162 = por %p160, %p161
      %p164 = scmp.ne.s32.totalorder %s149, %s163
      %p165 = scmp.eq.s32.totalorder %s34, 0
      %p166 = por %p164, %p165
      %s168 = sadd.s32 %s167, 1
      %p171 = scmp.eq.s32.totalorder %s28, 1
      %p172 = scmp.ne.s32.totalorder %s167, %s169
      %p173 = scmp.eq.s32.totalorder %s28, 0
      %p174 = por %p172, %p173
      %p175 = scmp.ne.s32.totalorder %s167, %s169
      %p176 = scmp.eq.s32.totalorder %s33, 1
      %p177 = por %p175, %p176
      %p178 = scmp.ne.s32.totalorder %s169, %s170
      %p179 = scmp.eq.s32.totalorder %s33, 0
      %p180 = por %p178, %p179
      %p181 = scmp.ne.s32.totalorder %s169, %s170
      %p182 = scmp.eq.s32.totalorder %s34, 1
      %p183 = por %p181, %p182
      %p185 = scmp.ne.s32.totalorder %s170, %s184
      %p186 = scmp.eq.s32.totalorder %s34, 0
      %p187 = por %p185, %p186
      %s189 = sadd.s32 %s188, 1
      %p192 = scmp.eq.s32.totalorder %s28, 1
      %p193 = scmp.ne.s32.totalorder %s188, %s190
      %p194 = scmp.eq.s32.totalorder %s28, 0
      %p195 = por %p193, %p194
      %p196 = scmp.ne.s32.totalorder %s188, %s190
      %p197 = scmp.eq.s32.totalorder %s33, 1
      %p198 = por %p196, %p197
      %p199 = scmp.ne.s32.totalorder %s190, %s191
      %p200 = scmp.eq.s32.totalorder %s33, 0
      %p201 = por %p199, %p200
      %p202 = scmp.ne.s32.totalorder %s190, %s191
      %p203 = scmp.eq.s32.totalorder %s34, 1
      %p204 = por %p202, %p203
      %p206 = scmp.ne.s32.totalorder %s191, %s205
      %p207 = scmp.eq.s32.totalorder %s34, 0
      %p208 = por %p206, %p207
      %s210 = sadd.s32 %s209, 1
      %p213 = scmp.eq.s32.totalorder %s28, 1
      %p214 = scmp.ne.s32.totalorder %s209, %s211
      %p215 = scmp.eq.s32.totalorder %s28, 0
      %p216 = por %p214, %p215
      %p217 = scmp.ne.s32.totalorder %s209, %s211
      %p218 = scmp.eq.s32.totalorder %s33, 1
      %p219 = por %p217, %p218
      %p220 = scmp.ne.s32.totalorder %s211, %s212
      %p221 = scmp.eq.s32.totalorder %s33, 0
      %p222 = por %p220, %p221
      %p223 = scmp.ne.s32.totalorder %s211, %s212
      %p224 = scmp.eq.s32.totalorder %s34, 1
      %p225 = por %p223, %p224
      %p227 = scmp.ne.s32.totalorder %s212, %s226
      %p228 = scmp.eq.s32.totalorder %s34, 0
      %p229 = por %p227, %p228
      %s231 = sadd.s32 %s230, 1
      %p234 = scmp.eq.s32.totalorder %s28, 1
      %p235 = scmp.ne.s32.totalorder %s230, %s232
      %p236 = scmp.eq.s32.totalorder %s28, 0
      %p237 = por %p235, %p236
      %p238 = scmp.ne.s32.totalorder %s230, %s232
      %p239 = scmp.eq.s32.totalorder %s33, 1
      %p240 = por %p238, %p239
      %p241 = scmp.ne.s32.totalorder %s232, %s233
      %p242 = scmp.eq.s32.totalorder %s33, 0
      %p243 = por %p241, %p242
      %p244 = scmp.ne.s32.totalorder %s232, %s233
      %p245 = scmp.eq.s32.totalorder %s34, 1
      %p246 = por %p244, %p245
      %p248 = scmp.ne.s32.totalorder %s233, %s247
      %p249 = scmp.eq.s32.totalorder %s34, 0
      %p250 = por %p248, %p249
      %s252 = sadd.s32 %s251, 1
      %p255 = scmp.eq.s32.totalorder %s28, 1
      %p256 = scmp.ne.s32.totalorder %s251, %s253
      %p257 = scmp.eq.s32.totalorder %s28, 0
      %p258 = por %p256, %p257
      %p259 = scmp.ne.s32.totalorder %s251, %s253
      %p260 = scmp.eq.s32.totalorder %s33, 1
      %p261 = por %p259, %p260
      %p262 = scmp.ne.s32.totalorder %s253, %s254
      %p263 = scmp.eq.s32.totalorder %s33, 0
      %p264 = por %p262, %p263
      %p265 = scmp.ne.s32.totalorder %s253, %s254
      %p266 = scmp.eq.s32.totalorder %s34, 1
      %p267 = por %p265, %p266
      %p269 = scmp.ne.s32.totalorder %s254, %s268
      %p270 = scmp.eq.s32.totalorder %s34, 0
      %p271 = por %p269, %p270
      %s273 = sadd.s32 %s272, 1
      %p276 = scmp.eq.s32.totalorder %s28, 1
      %p277 = scmp.ne.s32.totalorder %s272, %s274
      %p278 = scmp.eq.s32.totalorder %s28, 0
      %p279 = por %p277, %p278
      %p280 = scmp.ne.s32.totalorder %s272, %s274
      %p281 = scmp.eq.s32.totalorder %s33, 1
      %p282 = por %p280, %p281
      %p283 = scmp.ne.s32.totalorder %s274, %s275
      %p284 = scmp.eq.s32.totalorder %s33, 0
      %p285 = por %p283, %p284
      %p286 = scmp.ne.s32.totalorder %s274, %s275
      %p287 = scmp.eq.s32.totalorder %s34, 1
      %p288 = por %p286, %p287
      %p290 = scmp.ne.s32.totalorder %s275, %s289
      %p291 = scmp.eq.s32.totalorder %s34, 0
      %p292 = por %p290, %p291
      %s294 = sadd.s32 %s293, 1
      %p297 = scmp.eq.s32.totalorder %s28, 1
      %p298 = scmp.ne.s32.totalorder %s293, %s295
      %p299 = scmp.eq.s32.totalorder %s28, 0
      %p300 = por %p298, %p299
      %p301 = scmp.ne.s32.totalorder %s293, %s295
      %p302 = scmp.eq.s32.totalorder %s33, 1
      %p303 = por %p301, %p302
      %p304 = scmp.ne.s32.totalorder %s295, %s296
      %p305 = scmp.eq.s32.totalorder %s33, 0
      %p306 = por %p304, %p305
      %p307 = scmp.ne.s32.totalorder %s295, %s296
      %p308 = scmp.eq.s32.totalorder %s34, 1
      %p309 = por %p307, %p308
      %p311 = scmp.ne.s32.totalorder %s296, %s310
      %p312 = scmp.eq.s32.totalorder %s34, 0
      %p313 = por %p311, %p312
      %s315 = sadd.s32 %s314, 1
      %p318 = scmp.eq.s32.totalorder %s28, 1
      %p319 = scmp.ne.s32.totalorder %s314, %s316
      %p320 = scmp.eq.s32.totalorder %s28, 0
      %p321 = por %p319, %p320
      %p322 = scmp.ne.s32.totalorder %s314, %s316
      %p323 = scmp.eq.s32.totalorder %s33, 1
      %p324 = por %p322, %p323
      %p325 = scmp.ne.s32.totalorder %s316, %s317
      %p326 = scmp.eq.s32.totalorder %s33, 0
      %p327 = por %p325, %p326
      %p328 = scmp.ne.s32.totalorder %s316, %s317
      %p329 = scmp.eq.s32.totalorder %s34, 1
      %p330 = por %p328, %p329
      %p332 = scmp.ne.s32.totalorder %s317, %s331
      %p333 = scmp.eq.s32.totalorder %s34, 0
      %p334 = por %p332, %p333
      %s336 = sadd.s32 %s335, 1
      %p339 = scmp.eq.s32.totalorder %s28, 1
      %p340 = scmp.ne.s32.totalorder %s335, %s337
      %p341 = scmp.eq.s32.totalorder %s28, 0
      %p342 = por %p340, %p341
      %p343 = scmp.ne.s32.totalorder %s335, %s337
      %p344 = scmp.eq.s32.totalorder %s33, 1
      %p345 = por %p343, %p344
      %p346 = scmp.ne.s32.totalorder %s337, %s338
      %p347 = scmp.eq.s32.totalorder %s33, 0
      %p348 = por %p346, %p347
      %p349 = scmp.ne.s32.totalorder %s337, %s338
      %p350 = scmp.eq.s32.totalorder %s34, 1
      %p351 = por %p349, %p350
      %p353 = scmp.ne.s32.totalorder %s338, %s352
      %p354 = scmp.eq.s32.totalorder %s34, 0
      %p355 = por %p353, %p354
      %s357 = sadd.s32 %s356, 1
      %p360 = scmp.eq.s32.totalorder %s28, 1
      %p361 = scmp.ne.s32.totalorder %s356, %s358
      %p362 = scmp.eq.s32.totalorder %s28, 0
      %p363 = por %p361, %p362
      %p364 = scmp.ne.s32.totalorder %s356, %s358
      %p365 = scmp.eq.s32.totalorder %s33, 1
      %p366 = por %p364, %p365
      %p367 = scmp.ne.s32.totalorder %s358, %s359
      %p368 = scmp.eq.s32.totalorder %s33, 0
      %p369 = por %p367, %p368
      %p370 = scmp.ne.s32.totalorder %s358, %s359
      %p371 = scmp.eq.s32.totalorder %s34, 1
      %p372 = por %p370, %p371
      %p374 = scmp.ne.s32.totalorder %s359, %s373
      %p375 = scmp.eq.s32.totalorder %s34, 0
      %p376 = por %p374, %p375
      %s378 = sadd.s32 %s377, 1
      %p381 = scmp.eq.s32.totalorder %s28, 1
      %p382 = scmp.ne.s32.totalorder %s377, %s379
      %p383 = scmp.eq.s32.totalorder %s28, 0
      %p384 = por %p382, %p383
      %p385 = scmp.ne.s32.totalorder %s377, %s379
      %p386 = scmp.eq.s32.totalorder %s33, 1
      %p387 = por %p385, %p386
      %p388 = scmp.ne.s32.totalorder %s379, %s380
      %p389 = scmp.eq.s32.totalorder %s33, 0
      %p390 = por %p388, %p389
      %p391 = scmp.ne.s32.totalorder %s379, %s380
      %p392 = scmp.eq.s32.totalorder %s34, 1
      %p393 = por %p391, %p392
      %p395 = scmp.ne.s32.totalorder %s380, %s394
      %p396 = scmp.eq.s32.totalorder %s34, 0
      %p397 = por %p395, %p396
      %s399 = sadd.s32 %s398, 1
      %p402 = scmp.eq.s32.totalorder %s28, 1
      %p403 = scmp.ne.s32.totalorder %s398, %s400
      %p404 = scmp.eq.s32.totalorder %s28, 0
      %p405 = por %p403, %p404
      %p406 = scmp.ne.s32.totalorder %s398, %s400
      %p407 = scmp.eq.s32.totalorder %s33, 1
      %p408 = por %p406, %p407
      %p409 = scmp.ne.s32.totalorder %s400, %s401
      %p410 = scmp.eq.s32.totalorder %s33, 0
      %p411 = por %p409, %p410
      %p412 = scmp.ne.s32.totalorder %s400, %s401
      %p413 = scmp.eq.s32.totalorder %s34, 1
      %p414 = por %p412, %p413
      %p416 = scmp.ne.s32.totalorder %s401, %s415
      %p417 = scmp.eq.s32.totalorder %s34, 0
      %p418 = por %p416, %p417
      %s419 = ssub.s32 %s28, %s35
      %p420 = scmp.eq.s32.totalorder %s419, 0
      %s422 = sadd.s32 %s421, 1
      %s423 = scalar_select %p420, %s421, %s422
      %p426 = pneg %p420
      %p427 = scmp.eq.s32.totalorder %s28, 1
      %p428 = por %p426, %p427
      %p429 = scmp.ne.s32.totalorder %s421, %s424
      %p430 = scmp.eq.s32.totalorder %s28, 0
      %p431 = por %p429, %p430
      %p432 = scmp.ne.s32.totalorder %s421, %s424
      %p433 = scmp.eq.s32.totalorder %s33, 1
      %p434 = por %p432, %p433
      %p435 = scmp.ne.s32.totalorder %s424, %s425
      %p436 = scmp.eq.s32.totalorder %s33, 0
      %p437 = por %p435, %p436
      %p438 = scmp.ne.s32.totalorder %s424, %s425
      %p439 = scmp.eq.s32.totalorder %s34, 1
      %p440 = por %p438, %p439
      %p442 = scmp.ne.s32.totalorder %s425, %s441
      %p443 = scmp.eq.s32.totalorder %s34, 0
      %p444 = por %p442, %p443
      %p445 = scmp.le.s32.totalorder 1, %s28
      %p446 = scmp.lt.s32.totalorder %s28, 3
      %p447 = pnand %p445, %p446
      %p448 = pneg %p447
      // Predicated region
      $region9: #{tpu_custom_call.1} parent=5 // pred_check
        _
      $region10: #{tpu_custom_call.1} parent=5 // pred_check_branch
        %450 = sbr.rel (%p447) target = $region12
      $region11: #{tpu_custom_call.1} parent=5 // pred_region
        %s451 = ssub.s32 %s28, 1
        // Predicated region
        $region13: #{tpu_custom_call.1} parent=11 // pred_check
          %p452 = pneg %p75
        $region14: #{tpu_custom_call.1} parent=11 // pred_check_branch
          %454 = sbr.rel (%p452) target = $region16
        $region15: #{tpu_custom_call.1} parent=11 // pred_region
          _
        $region16: #{tpu_custom_call.1} parent=11 // pred_fallthru
          _
        // Predicated region
        $region17: #{tpu_custom_call.1} parent=11 // pred_check
          %p455 = pneg %p96
        $region18: #{tpu_custom_call.1} parent=11 // pred_check_branch
          %457 = sbr.rel (%p455) target = $region20
        $region19: #{tpu_custom_call.1} parent=11 // pred_region
          _
        $region20: #{tpu_custom_call.1} parent=11 // pred_fallthru
          _
        // Predicated region
        $region21: #{tpu_custom_call.1} parent=11 // pred_check
          %p458 = pneg %p117
        $region22: #{tpu_custom_call.1} parent=11 // pred_check_branch
          %460 = sbr.rel (%p458) target = $region24
        $region23: #{tpu_custom_call.1} parent=11 // pred_region
          _
        $region24: #{tpu_custom_call.1} parent=11 // pred_fallthru
          _
        // Predicated region
        $region25: #{tpu_custom_call.1} parent=11 // pred_check
          %p461 = pneg %p138
        $region26: #{tpu_custom_call.1} parent=11 // pred_check_branch
          %463 = sbr.rel (%p461) target = $region28
        $region27: #{tpu_custom_call.1} parent=11 // pred_region
          _
        $region28: #{tpu_custom_call.1} parent=11 // pred_fallthru
          _
        // Predicated region
        $region29: #{tpu_custom_call.1} parent=11 // pred_check
          %p464 = pneg %p159
        $region30: #{tpu_custom_call.1} parent=11 // pred_check_branch
          %466 = sbr.rel (%p464) target = $region32
        $region31: #{tpu_custom_call.1} parent=11 // pred_region
          %468 = vsyncadd [#allocation7], 0
          %s469 = sshll.u32 %s5, 4
          %s470 = int_to_ptr.hbm [resolvable:$true] %s469
          %s471 = sshll.u32 [#allocation6], 4
          %s472 = int_to_ptr.vmem [resolvable:$true] %s471
          %477 = dma.hbm_to_vmem [thread:$0]  %s470, 4608, %s472, [#allocation7], 64, 64, 4
        $region32: #{tpu_custom_call.1} parent=11 // pred_fallthru
          _
        // Predicated region
        $region33: #{tpu_custom_call.1} parent=11 // pred_check
          %p478 = pneg %p180
        $region34: #{tpu_custom_call.1} parent=11 // pred_check_branch
          %480 = sbr.rel (%p478) target = $region36
        $region35: #{tpu_custom_call.1} parent=11 // pred_region
          _
        $region36: #{tpu_custom_call.1} parent=11 // pred_fallthru
          _
        // Predicated region
        $region37: #{tpu_custom_call.1} parent=11 // pred_check
          %p481 = pneg %p201
        $region38: #{tpu_custom_call.1} parent=11 // pred_check_branch
          %483 = sbr.rel (%p481) target = $region40
        $region39: #{tpu_custom_call.1} parent=11 // pred_region
          _
        $region40: #{tpu_custom_call.1} parent=11 // pred_fallthru
          _
        // Predicated region
        $region41: #{tpu_custom_call.1} parent=11 // pred_check
          %p484 = pneg %p222
        $region42: #{tpu_custom_call.1} parent=11 // pred_check_branch
          %486 = sbr.rel (%p484) target = $region44
        $region43: #{tpu_custom_call.1} parent=11 // pred_region
          _
        $region44: #{tpu_custom_call.1} parent=11 // pred_fallthru
          _
        // Predicated region
        $region45: #{tpu_custom_call.1} parent=11 // pred_check
          %p487 = pneg %p243
        $region46: #{tpu_custom_call.1} parent=11 // pred_check_branch
          %489 = sbr.rel (%p487) target = $region48
        $region47: #{tpu_custom_call.1} parent=11 // pred_region
          _
        $region48: #{tpu_custom_call.1} parent=11 // pred_fallthru
          _
        // Predicated region
        $region49: #{tpu_custom_call.1} parent=11 // pred_check
          %p490 = pneg %p264
        $region50: #{tpu_custom_call.1} parent=11 // pred_check_branch
          %492 = sbr.rel (%p490) target = $region52
        $region51: #{tpu_custom_call.1} parent=11 // pred_region
          _
        $region52: #{tpu_custom_call.1} parent=11 // pred_fallthru
          _
        // Predicated region
        $region53: #{tpu_custom_call.1} parent=11 // pred_check
          %p493 = pneg %p285
        $region54: #{tpu_custom_call.1} parent=11 // pred_check_branch
          %495 = sbr.rel (%p493) target = $region56
        $region55: #{tpu_custom_call.1} parent=11 // pred_region
          _
        $region56: #{tpu_custom_call.1} parent=11 // pred_fallthru
          _
        // Predicated region
        $region57: #{tpu_custom_call.1} parent=11 // pred_check
          %p496 = pneg %p306
        $region58: #{tpu_custom_call.1} parent=11 // pred_check_branch
          %498 = sbr.rel (%p496) target = $region60
        $region59: #{tpu_custom_call.1} parent=11 // pred_region
          _
        $region60: #{tpu_custom_call.1} parent=11 // pred_fallthru
          _
        // Predicated region
        $region61: #{tpu_custom_call.1} parent=11 // pred_check
          %p499 = pneg %p327
        $region62: #{tpu_custom_call.1} parent=11 // pred_check_branch
          %501 = sbr.rel (%p499) target = $region64
        $region63: #{tpu_custom_call.1} parent=11 // pred_region
          _
        $region64: #{tpu_custom_call.1} parent=11 // pred_fallthru
          _
        // Predicated region
        $region65: #{tpu_custom_call.1} parent=11 // pred_check
          %p502 = pneg %p348
        $region66: #{tpu_custom_call.1} parent=11 // pred_check_branch
          %504 = sbr.rel (%p502) target = $region68
        $region67: #{tpu_custom_call.1} parent=11 // pred_region
          _
        $region68: #{tpu_custom_call.1} parent=11 // pred_fallthru
          _
        // Predicated region
        $region69: #{tpu_custom_call.1} parent=11 // pred_check
          %p505 = pneg %p369
        $region70: #{tpu_custom_call.1} parent=11 // pred_check_branch
          %507 = sbr.rel (%p505) target = $region72
        $region71: #{tpu_custom_call.1} parent=11 // pred_region
          _
        $region72: #{tpu_custom_call.1} parent=11 // pred_fallthru
          _
        // Predicated region
        $region73: #{tpu_custom_call.1} parent=11 // pred_check
          %p508 = pneg %p390
        $region74: #{tpu_custom_call.1} parent=11 // pred_check_branch
          %510 = sbr.rel (%p508) target = $region76
        $region75: #{tpu_custom_call.1} parent=11 // pred_region
          _
        $region76: #{tpu_custom_call.1} parent=11 // pred_fallthru
          _
        // Predicated region
        $region77: #{tpu_custom_call.1} parent=11 // pred_check
          %p511 = pneg %p411
        $region78: #{tpu_custom_call.1} parent=11 // pred_check_branch
          %513 = sbr.rel (%p511) target = $region80
        $region79: #{tpu_custom_call.1} parent=11 // pred_region
          _
        $region80: #{tpu_custom_call.1} parent=11 // pred_fallthru
          _
      $region12: #{tpu_custom_call.1} parent=5 // pred_fallthru
        _
      %p514 = scmp.lt.s32.totalorder %s28, 2
      // Predicated region
      $region81: #{tpu_custom_call.1} parent=5 // pred_check
        %p515 = pneg %p514
      $region82: #{tpu_custom_call.1} parent=5 // pred_check_branch
        %517 = sbr.rel (%p515) target = $region84
      $region83: #{tpu_custom_call.1} parent=5 // pred_region
        // Predicated region
        $region85: #{tpu_custom_call.1} parent=83 // pred_check
          %p518 = pneg %p48
        $region86: #{tpu_custom_call.1} parent=83 // pred_check_branch
          %520 = sbr.rel (%p518) target = $region88
        $region87: #{tpu_custom_call.1} parent=83 // pred_region
          %p521 = scmp.lt.s32.totalorder %s28, 1
          %s522 = scalar_select %p521, %s28, 1
          %s523 = smul.addr %s522, 32
          %s524 = smul.addr %s523, 4
          %s525 = scalar_lea.vmem %s0, %s524
        $region88: #{tpu_custom_call.1} parent=83 // pred_fallthru
          _
      $region84: #{tpu_custom_call.1} parent=5 // pred_fallthru
        _
      %p526 = scmp.le.s32.totalorder 1, %s28
      %p527 = scmp.lt.s32.totalorder %s28, 3
      %p528 = pnand %p526, %p527
      %p529 = pneg %p528
      // Predicated region
      $region89: #{tpu_custom_call.1} parent=5 // pred_check
        _
      $region90: #{tpu_custom_call.1} parent=5 // pred_check_branch
        %531 = sbr.rel (%p528) target = $region92
      $region91: #{tpu_custom_call.1} parent=5 // pred_region
        %s532 = ssub.s32 %s28, 1
        // Predicated region
        $region93: #{tpu_custom_call.1} parent=91 // pred_check
          %p533 = pneg %p159
        $region94: #{tpu_custom_call.1} parent=91 // pred_check_branch
          %535 = sbr.rel (%p533) target = $region96
        $region95: #{tpu_custom_call.1} parent=91 // pred_region
          %537 = dma.done [#allocation7], 4608
        $region96: #{tpu_custom_call.1} parent=91 // pred_fallthru
          _
        %p538 = scmp.lt.s32.totalorder %s33, 1
        %s539 = scalar_select %p538, %s33, 1
        %s540 = smul.addr %s539, 32
        %s541 = smul.addr %s540, 4
        %s542 = scalar_lea.vmem %s0, %s541
        %p543 = pneg %p54
        %p544 = pneg %p51
        %p545 = pneg %p75
        %p546 = pneg %p72
        %p547 = pneg %p96
        %p548 = pneg %p93
        %p549 = pneg %p117
        %p550 = pneg %p114
        %p551 = pneg %p138
        %p552 = pneg %p135
        %p553 = pneg %p159
        %p554 = pneg %p156
        %p555 = pneg %p180
        %p556 = pneg %p177
        %p557 = pneg %p201
        %p558 = pneg %p198
        %p559 = pneg %p222
        %p560 = pneg %p219
        %p561 = pneg %p243
        %p562 = pneg %p240
        %p563 = pneg %p264
        %p564 = pneg %p261
        %p565 = pneg %p285
        %p566 = pneg %p282
        %p567 = pneg %p306
        %p568 = pneg %p303
        %p569 = pneg %p327
        %p570 = pneg %p324
        %p571 = pneg %p348
        %p572 = pneg %p345
        %p573 = pneg %p369
        %p574 = pneg %p366
        %p575 = pneg %p390
        %p576 = pneg %p387
        %p577 = pneg %p411
        %p578 = pneg %p408
        %p579 = pneg %p437
        %p580 = pneg %p434
        %s581 = sand.u32 %s424, 1
        %s582 = scalar_lea.sflag [#allocation8], %s581
        %s583 = sand.u32 %s424, 1
        %s584 = smul.addr %s583, 4
        %s585 = scalar_lea.vmem [#allocation9], %s584
        %p586 = scmp.lt.s32.totalorder %s33, 1
        %s587 = scalar_select %p586, %s33, 1
        %s588 = smul.addr %s587, 32
        %s589 = smul.addr %s588, 4
        %s590 = scalar_lea.vmem %s0, %s589
        %v592 = vld [vmem:[%s1] sm:$0xff]
        %v593 = vld [vmem:[%s1 + $0x8] sm:$0xff]
        %v594 = vld [vmem:[%s1 + $0x10] sm:$0xff]
        %v595 = vld [vmem:[%s1 + $0x18] sm:$0xff]
        %v596 = vld [vmem:[%s1 + $0x20] sm:$0xff]
        %v597 = vld [vmem:[%s1 + $0x28] sm:$0xff]
        %v598 = vld [vmem:[%s1 + $0x30] sm:$0xff]
        %v599 = vld [vmem:[%s1 + $0x38] sm:$0xff]
        %v600 = vld [vmem:[%s1 + $0x40] sm:$0xff]
        %v601 = vld [vmem:[%s1 + $0x48] sm:$0xff]
        %v602 = vld [vmem:[%s1 + $0x50] sm:$0xff]
        %v603 = vld [vmem:[%s1 + $0x58] sm:$0xff]
        %v604 = vld [vmem:[%s1 + $0x60] sm:$0xff]
        %v605 = vld [vmem:[%s1 + $0x68] sm:$0xff]
        %v606 = vld [vmem:[%s1 + $0x70] sm:$0xff]
        %v607 = vld [vmem:[%s1 + $0x78] sm:$0xff]
        %v608 = vld [vmem:[%s1 + $0x80] sm:$0xff]
        %v609 = vld [vmem:[%s1 + $0x88] sm:$0xff]
        %v610 = vld [vmem:[%s1 + $0x90] sm:$0xff]
        %v611 = vld [vmem:[%s1 + $0x98] sm:$0xff]
        %v612 = vld [vmem:[%s1 + $0xa0] sm:$0xff]
        %v613 = vld [vmem:[%s1 + $0xa8] sm:$0xff]
        %v614 = vld [vmem:[%s1 + $0xb0] sm:$0xff]
        %v615 = vld [vmem:[%s1 + $0xb8] sm:$0xff]
        %v616 = vld [vmem:[%s1 + $0xc0] sm:$0xff]
        %v617 = vld [vmem:[%s1 + $0xc8] sm:$0xff]
        %v618 = vld [vmem:[%s1 + $0xd0] sm:$0xff]
        %v619 = vld [vmem:[%s1 + $0xd8] sm:$0xff]
        %v620 = vld [vmem:[%s1 + $0xe0] sm:$0xff]
        %v621 = vld [vmem:[%s1 + $0xe8] sm:$0xff]
        %v622 = vld [vmem:[%s1 + $0xf0] sm:$0xff]
        %v623 = vld [vmem:[%s1 + $0xf8] sm:$0xff]
        %v624 = vld [vmem:[%s1 + $0x100] sm:$0xff]
        %v625 = vld [vmem:[%s1 + $0x108] sm:$0xff]
        %v626 = vld [vmem:[%s1 + $0x110] sm:$0xff]
        %v627 = vld [vmem:[%s1 + $0x118] sm:$0xff]
        %v628 = vld [vmem:[%s1 + $0x120] sm:$0xff]
        %v629 = vld [vmem:[%s1 + $0x128] sm:$0xff]
        %v630 = vld [vmem:[%s1 + $0x130] sm:$0xff]
        %v631 = vld [vmem:[%s1 + $0x138] sm:$0xff]
        %v632 = vld [vmem:[%s1 + $0x140] sm:$0x77]
        %v633 = vld [vmem:[%s590] sm:$0xf]
        %v634 = vld [vmem:[%s590 + $0x4] sm:$0xf]
        %v635 = vld [vmem:[%s590 + $0x8] sm:$0xf]
        %v636 = vld [vmem:[%s590 + $0xc] sm:$0xf]
        %v637 = vld [vmem:[%s590 + $0x10] sm:$0xf]
        %v638 = vld [vmem:[%s590 + $0x14] sm:$0xf]
        %v639 = vld [vmem:[%s590 + $0x18] sm:$0xf]
        %v640 = vld [vmem:[%s590 + $0x1c] sm:$0xf]
        %v641 = vld [vmem:[%s590 + $0x20] sm:$0xf]
        %v642 = vld [vmem:[%s590 + $0x24] sm:$0xf]
        %v643 = vld [vmem:[%s590 + $0x28] sm:$0xf]
        %v644 = vld [vmem:[%s590 + $0x2c] sm:$0xf]
        %v645 = vld [vmem:[%s590 + $0x30] sm:$0xf]
        %v646 = vld [vmem:[%s590 + $0x34] sm:$0xf]
        %v647 = vld [vmem:[%s590 + $0x38] sm:$0xf]
        %v648 = vld [vmem:[%s590 + $0x3c] sm:$0xf]
        %v649 = vld [vmem:[%s590 + $0x40] sm:$0xf]
        %v650 = vld [vmem:[%s590 + $0x44] sm:$0xf]
        %v651 = vld [vmem:[%s590 + $0x48] sm:$0xf]
        %v652 = vld [vmem:[%s590 + $0x4c] sm:$0xf]
        %v653 = vld [vmem:[%s590 + $0x50] sm:$0xf]
        %v654 = vld [vmem:[%s590 + $0x54] sm:$0xf]
        %v655 = vld [vmem:[%s590 + $0x58] sm:$0xf]
        %v656 = vld [vmem:[%s590 + $0x5c] sm:$0xf]
        %v657 = vld [vmem:[%s590 + $0x60] sm:$0xf]
        %v658 = vld [vmem:[%s590 + $0x64] sm:$0xf]
        %v659 = vld [vmem:[%s590 + $0x68] sm:$0xf]
        %v660 = vld [vmem:[%s590 + $0x6c] sm:$0xf]
        %v661 = vld [vmem:[%s590 + $0x70] sm:$0xf]
        %v662 = vld [vmem:[%s590 + $0x74] sm:$0xf]
        %v663 = vld [vmem:[%s590 + $0x78] sm:$0xf]
        %v664 = vld [vmem:[%s590 + $0x7c] sm:$0xf]
        %v706 = vunpack.c.l.b16 %v592
        %v707 = vunpack.c.h.b16 %v592
        %v708 = vunpack.c.l.b16 %v593
        %v709 = vunpack.c.h.b16 %v593
        %v710 = vunpack.c.l.b16 %v594
        %v711 = vunpack.c.h.b16 %v594
        %v712 = vunpack.c.l.b16 %v595
        %v713 = vunpack.c.h.b16 %v595
        %v714 = vunpack.c.l.b16 %v596
        %v715 = vunpack.c.h.b16 %v596
        %v716 = vunpack.c.l.b16 %v597
        %v717 = vunpack.c.h.b16 %v597
        %v718 = vunpack.c.l.b16 %v598
        %v719 = vunpack.c.h.b16 %v598
        %v720 = vunpack.c.l.b16 %v599
        %v721 = vunpack.c.h.b16 %v599
        %v722 = vunpack.c.l.b16 %v600
        %v723 = vunpack.c.h.b16 %v600
        %v724 = vunpack.c.l.b16 %v601
        %v725 = vunpack.c.h.b16 %v601
        %v726 = vunpack.c.l.b16 %v602
        %v727 = vunpack.c.h.b16 %v602
        %v728 = vunpack.c.l.b16 %v603
        %v729 = vunpack.c.h.b16 %v603
        %v730 = vunpack.c.l.b16 %v604
        %v731 = vunpack.c.h.b16 %v604
        %v732 = vunpack.c.l.b16 %v605
        %v733 = vunpack.c.h.b16 %v605
        %v734 = vunpack.c.l.b16 %v606
        %v735 = vunpack.c.h.b16 %v606
        %v736 = vunpack.c.l.b16 %v607
        %v737 = vunpack.c.h.b16 %v607
        %v738 = vunpack.c.l.b16 %v608
        %v739 = vunpack.c.h.b16 %v608
        %v740 = vunpack.c.l.b16 %v609
        %v741 = vunpack.c.h.b16 %v609
        %v742 = vunpack.c.l.b16 %v610
        %v743 = vunpack.c.h.b16 %v610
        %v744 = vunpack.c.l.b16 %v611
        %v745 = vunpack.c.h.b16 %v611
        %v746 = vunpack.c.l.b16 %v612
        %v747 = vunpack.c.h.b16 %v612
        %v748 = vunpack.c.l.b16 %v613
        %v749 = vunpack.c.h.b16 %v613
        %v750 = vunpack.c.l.b16 %v614
        %v751 = vunpack.c.h.b16 %v614
        %v752 = vunpack.c.l.b16 %v615
        %v753 = vunpack.c.h.b16 %v615
        %v754 = vunpack.c.l.b16 %v616
        %v755 = vunpack.c.h.b16 %v616
        %v756 = vunpack.c.l.b16 %v617
        %v757 = vunpack.c.h.b16 %v617
        %v758 = vunpack.c.l.b16 %v618
        %v759 = vunpack.c.h.b16 %v618
        %v760 = vunpack.c.l.b16 %v619
        %v761 = vunpack.c.h.b16 %v619
        %v762 = vunpack.c.l.b16 %v620
        %v763 = vunpack.c.h.b16 %v620
        %v764 = vunpack.c.l.b16 %v621
        %v765 = vunpack.c.h.b16 %v621
        %v766 = vunpack.c.l.b16 %v622
        %v767 = vunpack.c.h.b16 %v622
        %v768 = vunpack.c.l.b16 %v623
        %v769 = vunpack.c.h.b16 %v623
        %v770 = vunpack.c.l.b16 %v624
        %v771 = vunpack.c.h.b16 %v624
        %v772 = vunpack.c.l.b16 %v625
        %v773 = vunpack.c.h.b16 %v625
        %v774 = vunpack.c.l.b16 %v626
        %v775 = vunpack.c.h.b16 %v626
        %v776 = vunpack.c.l.b16 %v627
        %v777 = vunpack.c.h.b16 %v627
        %v778 = vunpack.c.l.b16 %v628
        %v779 = vunpack.c.h.b16 %v628
        %v780 = vunpack.c.l.b16 %v629
        %v781 = vunpack.c.h.b16 %v629
        %v782 = vunpack.c.l.b16 %v630
        %v783 = vunpack.c.h.b16 %v630
        %v784 = vunpack.c.l.b16 %v631
        %v785 = vunpack.c.h.b16 %v631
        %v786 = vunpack.c.l.b16 %v632
        %v787 = vunpack.c.h.b16 %v632
        %v788 = vpack.c.b16 %v708, %v706
        %v789 = vpack.c.b16 %v709, %v707
        %v790 = vpack.c.b16 %v712, %v710
        %v791 = vpack.c.b16 %v713, %v711
        %v792 = vpack.c.b16 %v716, %v714
        %v793 = vpack.c.b16 %v717, %v715
        %v794 = vpack.c.b16 %v720, %v718
        %v795 = vpack.c.b16 %v721, %v719
        %v796 = vpack.c.b16 %v724, %v722
        %v797 = vpack.c.b16 %v725, %v723
        %v798 = vpack.c.b16 %v728, %v726
        %v799 = vpack.c.b16 %v729, %v727
        %v800 = vpack.c.b16 %v732, %v730
        %v801 = vpack.c.b16 %v733, %v731
        %v802 = vpack.c.b16 %v736, %v734
        %v803 = vpack.c.b16 %v737, %v735
        %v804 = vpack.c.b16 %v740, %v738
        %v805 = vpack.c.b16 %v741, %v739
        %v806 = vpack.c.b16 %v744, %v742
        %v807 = vpack.c.b16 %v745, %v743
        %v808 = vpack.c.b16 %v748, %v746
        %v809 = vpack.c.b16 %v749, %v747
        %v810 = vpack.c.b16 %v752, %v750
        %v811 = vpack.c.b16 %v753, %v751
        %v812 = vpack.c.b16 %v756, %v754
        %v813 = vpack.c.b16 %v757, %v755
        %v814 = vpack.c.b16 %v760, %v758
        %v815 = vpack.c.b16 %v761, %v759
        %v816 = vpack.c.b16 %v764, %v762
        %v817 = vpack.c.b16 %v765, %v763
        %v818 = vpack.c.b16 %v768, %v766
        %v819 = vpack.c.b16 %v769, %v767
        %v820 = vpack.c.b16 %v772, %v770
        %v821 = vpack.c.b16 %v773, %v771
        %v822 = vpack.c.b16 %v776, %v774
        %v823 = vpack.c.b16 %v777, %v775
        %v824 = vpack.c.b16 %v780, %v778
        %v825 = vpack.c.b16 %v781, %v779
        %v826 = vpack.c.b16 %v784, %v782
        %v827 = vpack.c.b16 %v785, %v783
        %v828 = vpack.c.b16 %v786, %v786
        %v829 = vpack.c.b16 %v787, %v787
        %v904 = vunpack.c.l.b16 %v633
        %v905 = vunpack.c.l.b16 %v634
        %v906 = vunpack.c.l.b16 %v635
        %v907 = vunpack.c.l.b16 %v636
        %v908 = vunpack.c.l.b16 %v637
        %v909 = vunpack.c.l.b16 %v638
        %v910 = vunpack.c.l.b16 %v639
        %v911 = vunpack.c.l.b16 %v640
        %v912 = vunpack.c.l.b16 %v641
        %v913 = vunpack.c.l.b16 %v642
        %v914 = vunpack.c.l.b16 %v643
        %v915 = vunpack.c.l.b16 %v644
        %v916 = vunpack.c.l.b16 %v645
        %v917 = vunpack.c.l.b16 %v646
        %v918 = vunpack.c.l.b16 %v647
        %v919 = vunpack.c.l.b16 %v648
        %v920 = vunpack.c.l.b16 %v649
        %v921 = vunpack.c.l.b16 %v650
        %v922 = vunpack.c.l.b16 %v651
        %v923 = vunpack.c.l.b16 %v652
        %v924 = vunpack.c.l.b16 %v653
        %v925 = vunpack.c.l.b16 %v654
        %v926 = vunpack.c.l.b16 %v655
        %v927 = vunpack.c.l.b16 %v656
        %v928 = vunpack.c.l.b16 %v657
        %v929 = vunpack.c.l.b16 %v658
        %v930 = vunpack.c.l.b16 %v659
        %v931 = vunpack.c.l.b16 %v660
        %v932 = vunpack.c.l.b16 %v661
        %v933 = vunpack.c.l.b16 %v662
        %v934 = vunpack.c.l.b16 %v663
        %v935 = vunpack.c.l.b16 %v664
        %v936 = vpack.c.b16 %v905, %v904
        %v937 = vpack.c.b16 %v907, %v906
        %v938 = vpack.c.b16 %v909, %v908
        %v939 = vpack.c.b16 %v911, %v910
        %v940 = vpack.c.b16 %v913, %v912
        %v941 = vpack.c.b16 %v915, %v914
        %v942 = vpack.c.b16 %v917, %v916
        %v943 = vpack.c.b16 %v919, %v918
        %v944 = vpack.c.b16 %v921, %v920
        %v945 = vpack.c.b16 %v923, %v922
        %v946 = vpack.c.b16 %v925, %v924
        %v947 = vpack.c.b16 %v927, %v926
        %v948 = vpack.c.b16 %v929, %v928
        %v949 = vpack.c.b16 %v931, %v930
        %v950 = vpack.c.b16 %v933, %v932
        %v951 = vpack.c.b16 %v935, %v934
        %968 = vmatpush.bf16.msra.mxu0 %v943
        %969 = vmatpush.bf16.msra.mxu0 %v942
        %970 = vmatpush.bf16.msra.mxu0 %v941
        %971 = vmatpush.bf16.msra.mxu0 %v940
        %972 = vmatpush.bf16.msra.mxu0 %v939
        %973 = vmatpush.bf16.msra.mxu0 %v938
        %974 = vmatpush.bf16.msra.mxu0 %v937
        %975 = vmatpush.bf16.msra.mxu0 %v936
        %976 = vmatmul.bf16.gmra.mxu0 %v788
        %v977 = vpop.f32.mrf.mxu0
        %v978 = vadd.f32 0.0, %v977
        %v979 = vpop.f32.mrf.mxu0
        %v980 = vadd.f32 0.0, %v979
        %981 = vmatmul.bf16.gmra.mxu0 %v790
        %v982 = vpop.f32.mrf.mxu0
        %v983 = vadd.f32 0.0, %v982
        %v984 = vpop.f32.mrf.mxu0
        %v985 = vadd.f32 0.0, %v984
        %986 = vmatmul.bf16.gmra.mxu0 %v792
        %v987 = vpop.f32.mrf.mxu0
        %v988 = vadd.f32 0.0, %v987
        %v989 = vpop.f32.mrf.mxu0
        %v990 = vadd.f32 0.0, %v989
        %991 = vmatmul.bf16.gmra.mxu0 %v794
        %v992 = vpop.f32.mrf.mxu0
        %v993 = vadd.f32 0.0, %v992
        %v994 = vpop.f32.mrf.mxu0
        %v995 = vadd.f32 0.0, %v994
        %996 = vmatmul.bf16.gmra.mxu0 %v796
        %v997 = vpop.f32.mrf.mxu0
        %v998 = vadd.f32 0.0, %v997
        %v999 = vpop.f32.mrf.mxu0
        %v1000 = vadd.f32 0.0, %v999
        %1001 = vmatmul.bf16.gmra.mxu0 %v798
        %v1002 = vpop.f32.mrf.mxu0
        %v1003 = vadd.f32 0.0, %v1002
        %v1004 = vpop.f32.mrf.mxu0
        %v1005 = vadd.f32 0.0, %v1004
        %1006 = vmatmul.bf16.gmra.mxu0 %v800
        %v1007 = vpop.f32.mrf.mxu0
        %v1008 = vadd.f32 0.0, %v1007
        %v1009 = vpop.f32.mrf.mxu0
        %v1010 = vadd.f32 0.0, %v1009
        %1011 = vmatmul.bf16.gmra.mxu0 %v802
        %v1012 = vpop.f32.mrf.mxu0
        %v1013 = vadd.f32 0.0, %v1012
        %v1014 = vpop.f32.mrf.mxu0
        %v1015 = vadd.f32 0.0, %v1014
        %1016 = vmatmul.bf16.gmra.mxu0 %v804
        %v1017 = vpop.f32.mrf.mxu0
        %v1018 = vadd.f32 0.0, %v1017
        %v1019 = vpop.f32.mrf.mxu0
        %v1020 = vadd.f32 0.0, %v1019
        %1021 = vmatmul.bf16.gmra.mxu0 %v806
        %v1022 = vpop.f32.mrf.mxu0
        %v1023 = vadd.f32 0.0, %v1022
        %v1024 = vpop.f32.mrf.mxu0
        %v1025 = vadd.f32 0.0, %v1024
        %1026 = vmatmul.bf16.gmra.mxu0 %v808
        %v1027 = vpop.f32.mrf.mxu0
        %v1028 = vadd.f32 0.0, %v1027
        %v1029 = vpop.f32.mrf.mxu0
        %v1030 = vadd.f32 0.0, %v1029
        %1031 = vmatmul.bf16.gmra.mxu0 %v810
        %v1032 = vpop.f32.mrf.mxu0
        %v1033 = vadd.f32 0.0, %v1032
        %v1034 = vpop.f32.mrf.mxu0
        %v1035 = vadd.f32 0.0, %v1034
        %1036 = vmatmul.bf16.gmra.mxu0 %v812
        %v1037 = vpop.f32.mrf.mxu0
        %v1038 = vadd.f32 0.0, %v1037
        %v1039 = vpop.f32.mrf.mxu0
        %v1040 = vadd.f32 0.0, %v1039
        %1041 = vmatmul.bf16.gmra.mxu0 %v814
        %v1042 = vpop.f32.mrf.mxu0
        %v1043 = vadd.f32 0.0, %v1042
        %v1044 = vpop.f32.mrf.mxu0
        %v1045 = vadd.f32 0.0, %v1044
        %1046 = vmatmul.bf16.gmra.mxu0 %v816
        %v1047 = vpop.f32.mrf.mxu0
        %v1048 = vadd.f32 0.0, %v1047
        %v1049 = vpop.f32.mrf.mxu0
        %v1050 = vadd.f32 0.0, %v1049
        %1051 = vmatmul.bf16.gmra.mxu0 %v818
        %v1052 = vpop.f32.mrf.mxu0
        %v1053 = vadd.f32 0.0, %v1052
        %v1054 = vpop.f32.mrf.mxu0
        %v1055 = vadd.f32 0.0, %v1054
        %1056 = vmatmul.bf16.gmra.mxu0 %v820
        %v1057 = vpop.f32.mrf.mxu0
        %v1058 = vadd.f32 0.0, %v1057
        %v1059 = vpop.f32.mrf.mxu0
        %v1060 = vadd.f32 0.0, %v1059
        %1061 = vmatmul.bf16.gmra.mxu0 %v822
        %v1062 = vpop.f32.mrf.mxu0
        %v1063 = vadd.f32 0.0, %v1062
        %v1064 = vpop.f32.mrf.mxu0
        %v1065 = vadd.f32 0.0, %v1064
        %1066 = vmatmul.bf16.gmra.mxu0 %v824
        %v1067 = vpop.f32.mrf.mxu0
        %v1068 = vadd.f32 0.0, %v1067
        %v1069 = vpop.f32.mrf.mxu0
        %v1070 = vadd.f32 0.0, %v1069
        %1071 = vmatmul.bf16.gmra.mxu0 %v826
        %v1072 = vpop.f32.mrf.mxu0
        %v1073 = vadd.f32 0.0, %v1072
        %v1074 = vpop.f32.mrf.mxu0
        %v1075 = vadd.f32 0.0, %v1074
        %1076 = vmatmul.bf16.gmra.mxu0 %v828
        %v1077 = vpop.f32.mrf.mxu0
        %v1078 = vadd.f32 0.0, %v1077
        %v1079 = vpop.f32.mrf.mxu0
        %1080 = vdwg.mxu0
        %1081 = vmatpush.bf16.msra.mxu0 %v951
        %1082 = vmatpush.bf16.msra.mxu0 %v950
        %1083 = vmatpush.bf16.msra.mxu0 %v949
        %1084 = vmatpush.bf16.msra.mxu0 %v948
        %1085 = vmatpush.bf16.msra.mxu0 %v947
        %1086 = vmatpush.bf16.msra.mxu0 %v946
        %1087 = vmatpush.bf16.msra.mxu0 %v945
        %1088 = vmatpush.bf16.msra.mxu0 %v944
        %1089 = vmatmul.bf16.gmra.mxu0 %v789
        %v1090 = vpop.f32.mrf.mxu0
        %v1091 = vadd.f32 %v978, %v1090
        %v1092 = vpop.f32.mrf.mxu0
        %v1093 = vadd.f32 %v980, %v1092
        %1094 = vmatmul.bf16.gmra.mxu0 %v791
        %v1095 = vpop.f32.mrf.mxu0
        %v1096 = vadd.f32 %v983, %v1095
        %v1097 = vpop.f32.mrf.mxu0
        %v1098 = vadd.f32 %v985, %v1097
        %1099 = vmatmul.bf16.gmra.mxu0 %v793
        %v1100 = vpop.f32.mrf.mxu0
        %v1101 = vadd.f32 %v988, %v1100
        %v1102 = vpop.f32.mrf.mxu0
        %v1103 = vadd.f32 %v990, %v1102
        %1104 = vmatmul.bf16.gmra.mxu0 %v795
        %v1105 = vpop.f32.mrf.mxu0
        %v1106 = vadd.f32 %v993, %v1105
        %v1107 = vpop.f32.mrf.mxu0
        %v1108 = vadd.f32 %v995, %v1107
        %1109 = vmatmul.bf16.gmra.mxu0 %v797
        %v1110 = vpop.f32.mrf.mxu0
        %v1111 = vadd.f32 %v998, %v1110
        %v1112 = vpop.f32.mrf.mxu0
        %v1113 = vadd.f32 %v1000, %v1112
        %1114 = vmatmul.bf16.gmra.mxu0 %v799
        %v1115 = vpop.f32.mrf.mxu0
        %v1116 = vadd.f32 %v1003, %v1115
        %v1117 = vpop.f32.mrf.mxu0
        %v1118 = vadd.f32 %v1005, %v1117
        %1119 = vmatmul.bf16.gmra.mxu0 %v801
        %v1120 = vpop.f32.mrf.mxu0
        %v1121 = vadd.f32 %v1008, %v1120
        %v1122 = vpop.f32.mrf.mxu0
        %v1123 = vadd.f32 %v1010, %v1122
        %1124 = vmatmul.bf16.gmra.mxu0 %v803
        %v1125 = vpop.f32.mrf.mxu0
        %v1126 = vadd.f32 %v1013, %v1125
        %v1127 = vpop.f32.mrf.mxu0
        %v1128 = vadd.f32 %v1015, %v1127
        %1129 = vmatmul.bf16.gmra.mxu0 %v805
        %v1130 = vpop.f32.mrf.mxu0
        %v1131 = vadd.f32 %v1018, %v1130
        %v1132 = vpop.f32.mrf.mxu0
        %v1133 = vadd.f32 %v1020, %v1132
        %1134 = vmatmul.bf16.gmra.mxu0 %v807
        %v1135 = vpop.f32.mrf.mxu0
        %v1136 = vadd.f32 %v1023, %v1135
        %v1137 = vpop.f32.mrf.mxu0
        %v1138 = vadd.f32 %v1025, %v1137
        %1139 = vmatmul.bf16.gmra.mxu0 %v809
        %v1140 = vpop.f32.mrf.mxu0
        %v1141 = vadd.f32 %v1028, %v1140
        %v1142 = vpop.f32.mrf.mxu0
        %v1143 = vadd.f32 %v1030, %v1142
        %1144 = vmatmul.bf16.gmra.mxu0 %v811
        %v1145 = vpop.f32.mrf.mxu0
        %v1146 = vadd.f32 %v1033, %v1145
        %v1147 = vpop.f32.mrf.mxu0
        %v1148 = vadd.f32 %v1035, %v1147
        %1149 = vmatmul.bf16.gmra.mxu0 %v813
        %v1150 = vpop.f32.mrf.mxu0
        %v1151 = vadd.f32 %v1038, %v1150
        %v1152 = vpop.f32.mrf.mxu0
        %v1153 = vadd.f32 %v1040, %v1152
        %1154 = vmatmul.bf16.gmra.mxu0 %v815
        %v1155 = vpop.f32.mrf.mxu0
        %v1156 = vadd.f32 %v1043, %v1155
        %v1157 = vpop.f32.mrf.mxu0
        %v1158 = vadd.f32 %v1045, %v1157
        %1159 = vmatmul.bf16.gmra.mxu0 %v817
        %v1160 = vpop.f32.mrf.mxu0
        %v1161 = vadd.f32 %v1048, %v1160
        %v1162 = vpop.f32.mrf.mxu0
        %v1163 = vadd.f32 %v1050, %v1162
        %1164 = vmatmul.bf16.gmra.mxu0 %v819
        %v1165 = vpop.f32.mrf.mxu0
        %v1166 = vadd.f32 %v1053, %v1165
        %v1167 = vpop.f32.mrf.mxu0
        %v1168 = vadd.f32 %v1055, %v1167
        %1169 = vmatmul.bf16.gmra.mxu0 %v821
        %v1170 = vpop.f32.mrf.mxu0
        %v1171 = vadd.f32 %v1058, %v1170
        %v1172 = vpop.f32.mrf.mxu0
        %v1173 = vadd.f32 %v1060, %v1172
        %1174 = vmatmul.bf16.gmra.mxu0 %v823
        %v1175 = vpop.f32.mrf.mxu0
        %v1176 = vadd.f32 %v1063, %v1175
        %v1177 = vpop.f32.mrf.mxu0
        %v1178 = vadd.f32 %v1065, %v1177
        %1179 = vmatmul.bf16.gmra.mxu0 %v825
        %v1180 = vpop.f32.mrf.mxu0
        %v1181 = vadd.f32 %v1068, %v1180
        %v1182 = vpop.f32.mrf.mxu0
        %v1183 = vadd.f32 %v1070, %v1182
        %1184 = vmatmul.bf16.gmra.mxu0 %v827
        %v1185 = vpop.f32.mrf.mxu0
        %v1186 = vadd.f32 %v1073, %v1185
        %v1187 = vpop.f32.mrf.mxu0
        %v1188 = vadd.f32 %v1075, %v1187
        %1189 = vmatmul.bf16.gmra.mxu0 %v829
        %v1190 = vpop.f32.mrf.mxu0
        %v1191 = vadd.f32 %v1078, %v1190
        %v1192 = vpop.f32.mrf.mxu0
        %1193 = vdwg.mxu0
        %v1194 = vpack.c.bf16 %v1091, %v1091
        %v1195 = vpack.c.bf16 %v1093, %v1093
        %v1196 = vpack.c.bf16 %v1096, %v1096
        %v1197 = vpack.c.bf16 %v1098, %v1098
        %v1198 = vpack.c.bf16 %v1101, %v1101
        %v1199 = vpack.c.bf16 %v1103, %v1103
        %v1200 = vpack.c.bf16 %v1106, %v1106
        %v1201 = vpack.c.bf16 %v1108, %v1108
        %v1202 = vpack.c.bf16 %v1111, %v1111
        %v1203 = vpack.c.bf16 %v1113, %v1113
        %v1204 = vpack.c.bf16 %v1116, %v1116
        %v1205 = vpack.c.bf16 %v1118, %v1118
        %v1206 = vpack.c.bf16 %v1121, %v1121
        %v1207 = vpack.c.bf16 %v1123, %v1123
        %v1208 = vpack.c.bf16 %v1126, %v1126
        %v1209 = vpack.c.bf16 %v1128, %v1128
        %v1210 = vpack.c.bf16 %v1131, %v1131
        %v1211 = vpack.c.bf16 %v1133, %v1133
        %v1212 = vpack.c.bf16 %v1136, %v1136
        %v1213 = vpack.c.bf16 %v1138, %v1138
        %v1214 = vpack.c.bf16 %v1141, %v1141
        %v1215 = vpack.c.bf16 %v1143, %v1143
        %v1216 = vpack.c.bf16 %v1146, %v1146
        %v1217 = vpack.c.bf16 %v1148, %v1148
        %v1218 = vpack.c.bf16 %v1151, %v1151
        %v1219 = vpack.c.bf16 %v1153, %v1153
        %v1220 = vpack.c.bf16 %v1156, %v1156
        %v1221 = vpack.c.bf16 %v1158, %v1158
        %v1222 = vpack.c.bf16 %v1161, %v1161
        %v1223 = vpack.c.bf16 %v1163, %v1163
        %v1224 = vpack.c.bf16 %v1166, %v1166
        %v1225 = vpack.c.bf16 %v1168, %v1168
        %v1226 = vpack.c.bf16 %v1171, %v1171
        %v1227 = vpack.c.bf16 %v1173, %v1173
        %v1228 = vpack.c.bf16 %v1176, %v1176
        %v1229 = vpack.c.bf16 %v1178, %v1178
        %v1230 = vpack.c.bf16 %v1181, %v1181
        %v1231 = vpack.c.bf16 %v1183, %v1183
        %v1232 = vpack.c.bf16 %v1186, %v1186
        %v1233 = vpack.c.bf16 %v1188, %v1188
        %v1234 = vpack.c.bf16 %v1191, %v1191
        %vm1235 = vcmask 27648
        %1236 = vst.msk [vmem:[#allocation2] sm:$0xf] %vm1235, %v1194
        %1237 = vst.msk [vmem:[#allocation2 + $0x4] sm:$0xf] %vm1235, %v1195
        %1238 = vst.msk [vmem:[#allocation2 + $0x8] sm:$0xf] %vm1235, %v1196
        %1239 = vst.msk [vmem:[#allocation2 + $0xc] sm:$0xf] %vm1235, %v1197
        %1240 = vst.msk [vmem:[#allocation2 + $0x10] sm:$0xf] %vm1235, %v1198
        %1241 = vst.msk [vmem:[#allocation2 + $0x14] sm:$0xf] %vm1235, %v1199
        %1242 = vst.msk [vmem:[#allocation2 + $0x18] sm:$0xf] %vm1235, %v1200
        %1243 = vst.msk [vmem:[#allocation2 + $0x1c] sm:$0xf] %vm1235, %v1201
        %1244 = vst.msk [vmem:[#allocation2 + $0x20] sm:$0xf] %vm1235, %v1202
        %1245 = vst.msk [vmem:[#allocation2 + $0x24] sm:$0xf] %vm1235, %v1203
        %1246 = vst.msk [vmem:[#allocation2 + $0x28] sm:$0xf] %vm1235, %v1204
        %1247 = vst.msk [vmem:[#allocation2 + $0x2c] sm:$0xf] %vm1235, %v1205
        %1248 = vst.msk [vmem:[#allocation2 + $0x30] sm:$0xf] %vm1235, %v1206
        %1249 = vst.msk [vmem:[#allocation2 + $0x34] sm:$0xf] %vm1235, %v1207
        %1250 = vst.msk [vmem:[#allocation2 + $0x38] sm:$0xf] %vm1235, %v1208
        %1251 = vst.msk [vmem:[#allocation2 + $0x3c] sm:$0xf] %vm1235, %v1209
        %1252 = vst.msk [vmem:[#allocation2 + $0x40] sm:$0xf] %vm1235, %v1210
        %1253 = vst.msk [vmem:[#allocation2 + $0x44] sm:$0xf] %vm1235, %v1211
        %1254 = vst.msk [vmem:[#allocation2 + $0x48] sm:$0xf] %vm1235, %v1212
        %1255 = vst.msk [vmem:[#allocation2 + $0x4c] sm:$0xf] %vm1235, %v1213
        %1256 = vst.msk [vmem:[#allocation2 + $0x50] sm:$0xf] %vm1235, %v1214
        %1257 = vst.msk [vmem:[#allocation2 + $0x54] sm:$0xf] %vm1235, %v1215
        %1258 = vst.msk [vmem:[#allocation2 + $0x58] sm:$0xf] %vm1235, %v1216
        %1259 = vst.msk [vmem:[#allocation2 + $0x5c] sm:$0xf] %vm1235, %v1217
        %1260 = vst.msk [vmem:[#allocation2 + $0x60] sm:$0xf] %vm1235, %v1218
        %1261 = vst.msk [vmem:[#allocation2 + $0x64] sm:$0xf] %vm1235, %v1219
        %1262 = vst.msk [vmem:[#allocation2 + $0x68] sm:$0xf] %vm1235, %v1220
        %1263 = vst.msk [vmem:[#allocation2 + $0x6c] sm:$0xf] %vm1235, %v1221
        %1264 = vst.msk [vmem:[#allocation2 + $0x70] sm:$0xf] %vm1235, %v1222
        %1265 = vst.msk [vmem:[#allocation2 + $0x74] sm:$0xf] %vm1235, %v1223
        %1266 = vst.msk [vmem:[#allocation2 + $0x78] sm:$0xf] %vm1235, %v1224
        %1267 = vst.msk [vmem:[#allocation2 + $0x7c] sm:$0xf] %vm1235, %v1225
        %1268 = vst.msk [vmem:[#allocation2 + $0x80] sm:$0xf] %vm1235, %v1226
        %1269 = vst.msk [vmem:[#allocation2 + $0x84] sm:$0xf] %vm1235, %v1227
        %1270 = vst.msk [vmem:[#allocation2 + $0x88] sm:$0xf] %vm1235, %v1228
        %1271 = vst.msk [vmem:[#allocation2 + $0x8c] sm:$0xf] %vm1235, %v1229
        %1272 = vst.msk [vmem:[#allocation2 + $0x90] sm:$0xf] %vm1235, %v1230
        %1273 = vst.msk [vmem:[#allocation2 + $0x94] sm:$0xf] %vm1235, %v1231
        %1274 = vst.msk [vmem:[#allocation2 + $0x98] sm:$0xf] %vm1235, %v1232
        %1275 = vst.msk [vmem:[#allocation2 + $0x9c] sm:$0xf] %vm1235, %v1233
        %vm1276 = vcmask 26624
        %1277 = vst.msk [vmem:[#allocation2 + $0xa0] sm:$0x7] %vm1276, %v1234
        %v1278 = vld [vmem:[#allocation2] sm:$0xf]
        %v1279 = vld [vmem:[#allocation2 + $0x4] sm:$0xf]
        %v1280 = vld [vmem:[#allocation2 + $0x8] sm:$0xf]
        %v1281 = vld [vmem:[#allocation2 + $0xc] sm:$0xf]
        %v1282 = vld [vmem:[#allocation2 + $0x10] sm:$0xf]
        %v1283 = vld [vmem:[#allocation2 + $0x14] sm:$0xf]
        %v1284 = vld [vmem:[#allocation2 + $0x18] sm:$0xf]
        %v1285 = vld [vmem:[#allocation2 + $0x1c] sm:$0xf]
        %v1286 = vld [vmem:[#allocation2 + $0x20] sm:$0xf]
        %v1287 = vld [vmem:[#allocation2 + $0x24] sm:$0xf]
        %v1288 = vld [vmem:[#allocation2 + $0x28] sm:$0xf]
        %v1289 = vld [vmem:[#allocation2 + $0x2c] sm:$0xf]
        %v1290 = vld [vmem:[#allocation2 + $0x30] sm:$0xf]
        %v1291 = vld [vmem:[#allocation2 + $0x34] sm:$0xf]
        %v1292 = vld [vmem:[#allocation2 + $0x38] sm:$0xf]
        %v1293 = vld [vmem:[#allocation2 + $0x3c] sm:$0xf]
        %v1294 = vld [vmem:[#allocation2 + $0x40] sm:$0xf]
        %v1295 = vld [vmem:[#allocation2 + $0x44] sm:$0xf]
        %v1296 = vld [vmem:[#allocation2 + $0x48] sm:$0xf]
        %v1297 = vld [vmem:[#allocation2 + $0x4c] sm:$0xf]
        %v1298 = vld [vmem:[#allocation2 + $0x50] sm:$0xf]
        %v1299 = vld [vmem:[#allocation2 + $0x54] sm:$0xf]
        %v1300 = vld [vmem:[#allocation2 + $0x58] sm:$0xf]
        %v1301 = vld [vmem:[#allocation2 + $0x5c] sm:$0xf]
        %v1302 = vld [vmem:[#allocation2 + $0x60] sm:$0xf]
        %v1303 = vld [vmem:[#allocation2 + $0x64] sm:$0xf]
        %v1304 = vld [vmem:[#allocation2 + $0x68] sm:$0xf]
        %v1305 = vld [vmem:[#allocation2 + $0x6c] sm:$0xf]
        %v1306 = vld [vmem:[#allocation2 + $0x70] sm:$0xf]
        %v1307 = vld [vmem:[#allocation2 + $0x74] sm:$0xf]
        %v1308 = vld [vmem:[#allocation2 + $0x78] sm:$0xf]
        %v1309 = vld [vmem:[#allocation2 + $0x7c] sm:$0xf]
        %v1310 = vld [vmem:[#allocation2 + $0x80] sm:$0xf]
        %v1311 = vld [vmem:[#allocation2 + $0x84] sm:$0xf]
        %v1312 = vld [vmem:[#allocation2 + $0x88] sm:$0xf]
        %v1313 = vld [vmem:[#allocation2 + $0x8c] sm:$0xf]
        %v1314 = vld [vmem:[%s2] sm:$0x3]
        %v1315 = vld [vmem:[#allocation2 + $0x90] sm:$0x1]
        %s1316 = scalar_lea.vmem %s2, 2
        %v1317 = vld [vmem:[%s1316] sm:$0x3]
        %v1355 = vunpack.c.l.b16 %v1278
        %v1356 = vunpack.c.l.b16 %v1279
        %v1357 = vunpack.c.l.b16 %v1280
        %v1358 = vunpack.c.l.b16 %v1281
        %v1359 = vunpack.c.l.b16 %v1282
        %v1360 = vunpack.c.l.b16 %v1283
        %v1361 = vunpack.c.l.b16 %v1284
        %v1362 = vunpack.c.l.b16 %v1285
        %v1363 = vunpack.c.l.b16 %v1286
        %v1364 = vunpack.c.l.b16 %v1287
        %v1365 = vunpack.c.l.b16 %v1288
        %v1366 = vunpack.c.l.b16 %v1289
        %v1367 = vunpack.c.l.b16 %v1290
        %v1368 = vunpack.c.l.b16 %v1291
        %v1369 = vunpack.c.l.b16 %v1292
        %v1370 = vunpack.c.l.b16 %v1293
        %v1371 = vunpack.c.l.b16 %v1294
        %v1372 = vunpack.c.l.b16 %v1295
        %v1373 = vunpack.c.l.b16 %v1296
        %v1374 = vunpack.c.l.b16 %v1297
        %v1375 = vunpack.c.l.b16 %v1298
        %v1376 = vunpack.c.l.b16 %v1299
        %v1377 = vunpack.c.l.b16 %v1300
        %v1378 = vunpack.c.l.b16 %v1301
        %v1379 = vunpack.c.l.b16 %v1302
        %v1380 = vunpack.c.l.b16 %v1303
        %v1381 = vunpack.c.l.b16 %v1304
        %v1382 = vunpack.c.l.b16 %v1305
        %v1383 = vunpack.c.l.b16 %v1306
        %v1384 = vunpack.c.l.b16 %v1307
        %v1385 = vunpack.c.l.b16 %v1308
        %v1386 = vunpack.c.l.b16 %v1309
        %v1387 = vunpack.c.l.b16 %v1310
        %v1388 = vunpack.c.l.b16 %v1311
        %v1389 = vunpack.c.l.b16 %v1312
        %v1390 = vunpack.c.l.b16 %v1313
        %v1391 = vunpack.c.l.b16 %v1315
        %v1392 = vpack.c.b16 %v1356, %v1355
        %v1393 = vpack.c.b16 %v1358, %v1357
        %v1394 = vpack.c.b16 %v1360, %v1359
        %v1395 = vpack.c.b16 %v1362, %v1361
        %v1396 = vpack.c.b16 %v1364, %v1363
        %v1397 = vpack.c.b16 %v1366, %v1365
        %v1398 = vpack.c.b16 %v1368, %v1367
        %v1399 = vpack.c.b16 %v1370, %v1369
        %v1400 = vpack.c.b16 %v1372, %v1371
        %v1401 = vpack.c.b16 %v1374, %v1373
        %v1402 = vpack.c.b16 %v1376, %v1375
        %v1403 = vpack.c.b16 %v1378, %v1377
        %v1404 = vpack.c.b16 %v1380, %v1379
        %v1405 = vpack.c.b16 %v1382, %v1381
        %v1406 = vpack.c.b16 %v1384, %v1383
        %v1407 = vpack.c.b16 %v1386, %v1385
        %v1408 = vpack.c.b16 %v1388, %v1387
        %v1409 = vpack.c.b16 %v1390, %v1389
        %v1410 = vpack.c.b16 %v1391, %v1391
        %vm1411 = vsmask.f32 7424
        %v1413 = vshrl.u32 %v1392, 16
        %v1415 = vshll.u32 %v1392, 16
        %v1417 = vrot.slane %v1415, 1
        %v1418 = vor.u32 %v1413, %v1417
        %v1420 = vshll.u32 %v1393, 16
        %v1422 = vrot.slane %v1420, 1
        %v1423 = vsel %vm1411, %v1418, %v1422
        %v1424 = vshrl.u32 %v1393, 16
        %v1426 = vor.u32 %v1424, %v1422
        %v1428 = vshll.u32 %v1394, 16
        %v1430 = vrot.slane %v1428, 1
        %v1431 = vsel %vm1411, %v1426, %v1430
        %v1432 = vshrl.u32 %v1394, 16
        %v1434 = vor.u32 %v1432, %v1430
        %v1436 = vshll.u32 %v1395, 16
        %v1438 = vrot.slane %v1436, 1
        %v1439 = vsel %vm1411, %v1434, %v1438
        %v1440 = vshrl.u32 %v1395, 16
        %v1442 = vor.u32 %v1440, %v1438
        %v1444 = vshll.u32 %v1396, 16
        %v1446 = vrot.slane %v1444, 1
        %v1447 = vsel %vm1411, %v1442, %v1446
        %v1448 = vshrl.u32 %v1396, 16
        %v1450 = vor.u32 %v1448, %v1446
        %v1452 = vshll.u32 %v1397, 16
        %v1454 = vrot.slane %v1452, 1
        %v1455 = vsel %vm1411, %v1450, %v1454
        %v1456 = vshrl.u32 %v1397, 16
        %v1458 = vor.u32 %v1456, %v1454
        %v1460 = vshll.u32 %v1398, 16
        %v1462 = vrot.slane %v1460, 1
        %v1463 = vsel %vm1411, %v1458, %v1462
        %v1464 = vshrl.u32 %v1398, 16
        %v1466 = vor.u32 %v1464, %v1462
        %v1468 = vshll.u32 %v1399, 16
        %v1470 = vrot.slane %v1468, 1
        %v1471 = vsel %vm1411, %v1466, %v1470
        %v1472 = vshrl.u32 %v1399, 16
        %v1474 = vor.u32 %v1472, %v1470
        %v1476 = vshll.u32 %v1400, 16
        %v1478 = vrot.slane %v1476, 1
        %v1479 = vsel %vm1411, %v1474, %v1478
        %v1480 = vshrl.u32 %v1400, 16
        %v1482 = vor.u32 %v1480, %v1478
        %v1484 = vshll.u32 %v1401, 16
        %v1486 = vrot.slane %v1484, 1
        %v1487 = vsel %vm1411, %v1482, %v1486
        %v1488 = vshrl.u32 %v1401, 16
        %v1490 = vor.u32 %v1488, %v1486
        %v1492 = vshll.u32 %v1402, 16
        %v1494 = vrot.slane %v1492, 1
        %v1495 = vsel %vm1411, %v1490, %v1494
        %v1496 = vshrl.u32 %v1402, 16
        %v1498 = vor.u32 %v1496, %v1494
        %v1500 = vshll.u32 %v1403, 16
        %v1502 = vrot.slane %v1500, 1
        %v1503 = vsel %vm1411, %v1498, %v1502
        %v1504 = vshrl.u32 %v1403, 16
        %v1506 = vor.u32 %v1504, %v1502
        %v1508 = vshll.u32 %v1404, 16
        %v1510 = vrot.slane %v1508, 1
        %v1511 = vsel %vm1411, %v1506, %v1510
        %v1512 = vshrl.u32 %v1404, 16
        %v1514 = vor.u32 %v1512, %v1510
        %v1516 = vshll.u32 %v1405, 16
        %v1518 = vrot.slane %v1516, 1
        %v1519 = vsel %vm1411, %v1514, %v1518
        %v1520 = vshrl.u32 %v1405, 16
        %v1522 = vor.u32 %v1520, %v1518
        %v1524 = vshll.u32 %v1406, 16
        %v1526 = vrot.slane %v1524, 1
        %v1527 = vsel %vm1411, %v1522, %v1526
        %v1528 = vshrl.u32 %v1406, 16
        %v1530 = vor.u32 %v1528, %v1526
        %v1532 = vshll.u32 %v1407, 16
        %v1534 = vrot.slane %v1532, 1
        %v1535 = vsel %vm1411, %v1530, %v1534
        %v1536 = vshrl.u32 %v1407, 16
        %v1538 = vor.u32 %v1536, %v1534
        %v1540 = vshll.u32 %v1408, 16
        %v1542 = vrot.slane %v1540, 1
        %v1543 = vsel %vm1411, %v1538, %v1542
        %v1544 = vshrl.u32 %v1408, 16
        %v1546 = vor.u32 %v1544, %v1542
        %v1548 = vshll.u32 %v1409, 16
        %v1550 = vrot.slane %v1548, 1
        %v1551 = vsel %vm1411, %v1546, %v1550
        %v1552 = vshrl.u32 %v1409, 16
        %v1554 = vor.u32 %v1552, %v1550
        %v1556 = vshll.u32 %v1410, 16
        %v1558 = vrot.slane %v1556, 1
        %v1559 = vsel %vm1411, %v1554, %v1558
        %vm1560 = vcmask 31744
        %v1562 = vsel %vm1560, %v1423, 0
        %v1565 = vsel %vm1560, %v1431, 0
        %v1568 = vsel %vm1560, %v1439, 0
        %v1571 = vsel %vm1560, %v1447, 0
        %v1574 = vsel %vm1560, %v1455, 0
        %v1577 = vsel %vm1560, %v1463, 0
        %v1580 = vsel %vm1560, %v1471, 0
        %v1583 = vsel %vm1560, %v1479, 0
        %v1586 = vsel %vm1560, %v1487, 0
        %v1589 = vsel %vm1560, %v1495, 0
        %v1592 = vsel %vm1560, %v1503, 0
        %v1595 = vsel %vm1560, %v1511, 0
        %v1598 = vsel %vm1560, %v1519, 0
        %v1601 = vsel %vm1560, %v1527, 0
        %v1604 = vsel %vm1560, %v1535, 0
        %v1607 = vsel %vm1560, %v1543, 0
        %v1610 = vsel %vm1560, %v1551, 0
        %v1613 = vsel %vm1560, %v1559, 0
        %vm1615 = vcmask 1041408
        %v1617 = vsel %vm1615, %v1317, 0
        %1619 = vmatpush.bf16.msra.mxu0 0
        %1620 = vmatpush.bf16.msra.mxu0 0
        %1621 = vmatpush.bf16.msra.mxu0 0
        %1622 = vmatpush.bf16.msra.mxu0 0
        %1623 = vmatpush.bf16.msra.mxu0 0
        %1624 = vmatpush.bf16.msra.mxu0 0
        %1625 = vmatpush.bf16.msra.mxu0 0
        %1626 = vmatpush.bf16.msra.mxu0 %v1617
        %1627 = vmatmul.bf16.gmra.mxu0 %v1562
        %v1628 = vpop.f32.mrf.mxu0
        %v1629 = vadd.f32 0.0, %v1628
        %v1630 = vpop.f32.mrf.mxu0
        %v1631 = vadd.f32 0.0, %v1630
        %1632 = vmatmul.bf16.gmra.mxu0 %v1565
        %v1633 = vpop.f32.mrf.mxu0
        %v1634 = vadd.f32 0.0, %v1633
        %v1635 = vpop.f32.mrf.mxu0
        %v1636 = vadd.f32 0.0, %v1635
        %1637 = vmatmul.bf16.gmra.mxu0 %v1568
        %v1638 = vpop.f32.mrf.mxu0
        %v1639 = vadd.f32 0.0, %v1638
        %v1640 = vpop.f32.mrf.mxu0
        %v1641 = vadd.f32 0.0, %v1640
        %1642 = vmatmul.bf16.gmra.mxu0 %v1571
        %v1643 = vpop.f32.mrf.mxu0
        %v1644 = vadd.f32 0.0, %v1643
        %v1645 = vpop.f32.mrf.mxu0
        %v1646 = vadd.f32 0.0, %v1645
        %1647 = vmatmul.bf16.gmra.mxu0 %v1574
        %v1648 = vpop.f32.mrf.mxu0
        %v1649 = vadd.f32 0.0, %v1648
        %v1650 = vpop.f32.mrf.mxu0
        %v1651 = vadd.f32 0.0, %v1650
        %1652 = vmatmul.bf16.gmra.mxu0 %v1577
        %v1653 = vpop.f32.mrf.mxu0
        %v1654 = vadd.f32 0.0, %v1653
        %v1655 = vpop.f32.mrf.mxu0
        %v1656 = vadd.f32 0.0, %v1655
        %1657 = vmatmul.bf16.gmra.mxu0 %v1580
        %v1658 = vpop.f32.mrf.mxu0
        %v1659 = vadd.f32 0.0, %v1658
        %v1660 = vpop.f32.mrf.mxu0
        %v1661 = vadd.f32 0.0, %v1660
        %1662 = vmatmul.bf16.gmra.mxu0 %v1583
        %v1663 = vpop.f32.mrf.mxu0
        %v1664 = vadd.f32 0.0, %v1663
        %v1665 = vpop.f32.mrf.mxu0
        %v1666 = vadd.f32 0.0, %v1665
        %1667 = vmatmul.bf16.gmra.mxu0 %v1586
        %v1668 = vpop.f32.mrf.mxu0
        %v1669 = vadd.f32 0.0, %v1668
        %v1670 = vpop.f32.mrf.mxu0
        %v1671 = vadd.f32 0.0, %v1670
        %1672 = vmatmul.bf16.gmra.mxu0 %v1589
        %v1673 = vpop.f32.mrf.mxu0
        %v1674 = vadd.f32 0.0, %v1673
        %v1675 = vpop.f32.mrf.mxu0
        %v1676 = vadd.f32 0.0, %v1675
        %1677 = vmatmul.bf16.gmra.mxu0 %v1592
        %v1678 = vpop.f32.mrf.mxu0
        %v1679 = vadd.f32 0.0, %v1678
        %v1680 = vpop.f32.mrf.mxu0
        %v1681 = vadd.f32 0.0, %v1680
        %1682 = vmatmul.bf16.gmra.mxu0 %v1595
        %v1683 = vpop.f32.mrf.mxu0
        %v1684 = vadd.f32 0.0, %v1683
        %v1685 = vpop.f32.mrf.mxu0
        %v1686 = vadd.f32 0.0, %v1685
        %1687 = vmatmul.bf16.gmra.mxu0 %v1598
        %v1688 = vpop.f32.mrf.mxu0
        %v1689 = vadd.f32 0.0, %v1688
        %v1690 = vpop.f32.mrf.mxu0
        %v1691 = vadd.f32 0.0, %v1690
        %1692 = vmatmul.bf16.gmra.mxu0 %v1601
        %v1693 = vpop.f32.mrf.mxu0
        %v1694 = vadd.f32 0.0, %v1693
        %v1695 = vpop.f32.mrf.mxu0
        %v1696 = vadd.f32 0.0, %v1695
        %1697 = vmatmul.bf16.gmra.mxu0 %v1604
        %v1698 = vpop.f32.mrf.mxu0
        %v1699 = vadd.f32 0.0, %v1698
        %v1700 = vpop.f32.mrf.mxu0
        %v1701 = vadd.f32 0.0, %v1700
        %1702 = vmatmul.bf16.gmra.mxu0 %v1607
        %v1703 = vpop.f32.mrf.mxu0
        %v1704 = vadd.f32 0.0, %v1703
        %v1705 = vpop.f32.mrf.mxu0
        %v1706 = vadd.f32 0.0, %v1705
        %1707 = vmatmul.bf16.gmra.mxu0 %v1610
        %v1708 = vpop.f32.mrf.mxu0
        %v1709 = vadd.f32 0.0, %v1708
        %v1710 = vpop.f32.mrf.mxu0
        %v1711 = vadd.f32 0.0, %v1710
        %1712 = vmatmul.bf16.gmra.mxu0 %v1613
        %v1713 = vpop.f32.mrf.mxu0
        %v1714 = vadd.f32 0.0, %v1713
        %v1715 = vpop.f32.mrf.mxu0
        %v1716 = vadd.f32 0.0, %v1715
        %1717 = vdwg.mxu0
        %v1718 = vsel %vm1560, %v1392, 0
        %v1720 = vsel %vm1560, %v1393, 0
        %v1722 = vsel %vm1560, %v1394, 0
        %v1724 = vsel %vm1560, %v1395, 0
        %v1726 = vsel %vm1560, %v1396, 0
        %v1728 = vsel %vm1560, %v1397, 0
        %v1730 = vsel %vm1560, %v1398, 0
        %v1732 = vsel %vm1560, %v1399, 0
        %v1734 = vsel %vm1560, %v1400, 0
        %v1736 = vsel %vm1560, %v1401, 0
        %v1738 = vsel %vm1560, %v1402, 0
        %v1740 = vsel %vm1560, %v1403, 0
        %v1742 = vsel %vm1560, %v1404, 0
        %v1744 = vsel %vm1560, %v1405, 0
        %v1746 = vsel %vm1560, %v1406, 0
        %v1748 = vsel %vm1560, %v1407, 0
        %v1750 = vsel %vm1560, %v1408, 0
        %v1752 = vsel %vm1560, %v1409, 0
        %v1755 = vsel %vm1615, %v1314, 0
        %1757 = vmatpush.bf16.msra.mxu0 0
        %1758 = vmatpush.bf16.msra.mxu0 0
        %1759 = vmatpush.bf16.msra.mxu0 0
        %1760 = vmatpush.bf16.msra.mxu0 0
        %1761 = vmatpush.bf16.msra.mxu0 0
        %1762 = vmatpush.bf16.msra.mxu0 0
        %1763 = vmatpush.bf16.msra.mxu0 0
        %1764 = vmatpush.bf16.msra.mxu0 %v1755
        %1765 = vmatmul.bf16.gmra.mxu0 %v1718
        %v1766 = vpop.f32.mrf.mxu0
        %v1767 = vadd.f32 %v1629, %v1766
        %v1768 = vpop.f32.mrf.mxu0
        %v1769 = vadd.f32 %v1631, %v1768
        %1770 = vmatmul.bf16.gmra.mxu0 %v1720
        %v1771 = vpop.f32.mrf.mxu0
        %v1772 = vadd.f32 %v1634, %v1771
        %v1773 = vpop.f32.mrf.mxu0
        %v1774 = vadd.f32 %v1636, %v1773
        %1775 = vmatmul.bf16.gmra.mxu0 %v1722
        %v1776 = vpop.f32.mrf.mxu0
        %v1777 = vadd.f32 %v1639, %v1776
        %v1778 = vpop.f32.mrf.mxu0
        %v1779 = vadd.f32 %v1641, %v1778
        %1780 = vmatmul.bf16.gmra.mxu0 %v1724
        %v1781 = vpop.f32.mrf.mxu0
        %v1782 = vadd.f32 %v1644, %v1781
        %v1783 = vpop.f32.mrf.mxu0
        %v1784 = vadd.f32 %v1646, %v1783
        %1785 = vmatmul.bf16.gmra.mxu0 %v1726
        %v1786 = vpop.f32.mrf.mxu0
        %v1787 = vadd.f32 %v1649, %v1786
        %v1788 = vpop.f32.mrf.mxu0
        %v1789 = vadd.f32 %v1651, %v1788
        %1790 = vmatmul.bf16.gmra.mxu0 %v1728
        %v1791 = vpop.f32.mrf.mxu0
        %v1792 = vadd.f32 %v1654, %v1791
        %v1793 = vpop.f32.mrf.mxu0
        %v1794 = vadd.f32 %v1656, %v1793
        %1795 = vmatmul.bf16.gmra.mxu0 %v1730
        %v1796 = vpop.f32.mrf.mxu0
        %v1797 = vadd.f32 %v1659, %v1796
        %v1798 = vpop.f32.mrf.mxu0
        %v1799 = vadd.f32 %v1661, %v1798
        %1800 = vmatmul.bf16.gmra.mxu0 %v1732
        %v1801 = vpop.f32.mrf.mxu0
        %v1802 = vadd.f32 %v1664, %v1801
        %v1803 = vpop.f32.mrf.mxu0
        %v1804 = vadd.f32 %v1666, %v1803
        %1805 = vmatmul.bf16.gmra.mxu0 %v1734
        %v1806 = vpop.f32.mrf.mxu0
        %v1807 = vadd.f32 %v1669, %v1806
        %v1808 = vpop.f32.mrf.mxu0
        %v1809 = vadd.f32 %v1671, %v1808
        %1810 = vmatmul.bf16.gmra.mxu0 %v1736
        %v1811 = vpop.f32.mrf.mxu0
        %v1812 = vadd.f32 %v1674, %v1811
        %v1813 = vpop.f32.mrf.mxu0
        %v1814 = vadd.f32 %v1676, %v1813
        %1815 = vmatmul.bf16.gmra.mxu0 %v1738
        %v1816 = vpop.f32.mrf.mxu0
        %v1817 = vadd.f32 %v1679, %v1816
        %v1818 = vpop.f32.mrf.mxu0
        %v1819 = vadd.f32 %v1681, %v1818
        %1820 = vmatmul.bf16.gmra.mxu0 %v1740
        %v1821 = vpop.f32.mrf.mxu0
        %v1822 = vadd.f32 %v1684, %v1821
        %v1823 = vpop.f32.mrf.mxu0
        %v1824 = vadd.f32 %v1686, %v1823
        %1825 = vmatmul.bf16.gmra.mxu0 %v1742
        %v1826 = vpop.f32.mrf.mxu0
        %v1827 = vadd.f32 %v1689, %v1826
        %v1828 = vpop.f32.mrf.mxu0
        %v1829 = vadd.f32 %v1691, %v1828
        %1830 = vmatmul.bf16.gmra.mxu0 %v1744
        %v1831 = vpop.f32.mrf.mxu0
        %v1832 = vadd.f32 %v1694, %v1831
        %v1833 = vpop.f32.mrf.mxu0
        %v1834 = vadd.f32 %v1696, %v1833
        %1835 = vmatmul.bf16.gmra.mxu0 %v1746
        %v1836 = vpop.f32.mrf.mxu0
        %v1837 = vadd.f32 %v1699, %v1836
        %v1838 = vpop.f32.mrf.mxu0
        %v1839 = vadd.f32 %v1701, %v1838
        %1840 = vmatmul.bf16.gmra.mxu0 %v1748
        %v1841 = vpop.f32.mrf.mxu0
        %v1842 = vadd.f32 %v1704, %v1841
        %v1843 = vpop.f32.mrf.mxu0
        %v1844 = vadd.f32 %v1706, %v1843
        %1845 = vmatmul.bf16.gmra.mxu0 %v1750
        %v1846 = vpop.f32.mrf.mxu0
        %v1847 = vadd.f32 %v1709, %v1846
        %v1848 = vpop.f32.mrf.mxu0
        %v1849 = vadd.f32 %v1711, %v1848
        %1850 = vmatmul.bf16.gmra.mxu0 %v1752
        %v1851 = vpop.f32.mrf.mxu0
        %v1852 = vadd.f32 %v1714, %v1851
        %v1853 = vpop.f32.mrf.mxu0
        %v1854 = vadd.f32 %v1716, %v1853
        %1855 = vdwg.mxu0
        %v1856 = vld [vmem:[#allocation2] sm:$0xe]
        %s1857 = scalar_lea.vmem %s2, 4
        %v1858 = vld [vmem:[%s1857] sm:$0x3]
        %v1860 = vunpack.c.l.b16 %v1856
        %v1861 = vpack.c.b16 %v1356, %v1860
        %vm1862 = vcmask 1046528
        %v1863 = vrot.slane %v1861, 1
        %v1864 = vrot.slane %v1393, 1
        %v1865 = vsel %vm1862, %v1863, %v1864
        %v1866 = vrot.slane %v1394, 1
        %v1867 = vsel %vm1862, %v1864, %v1866
        %v1868 = vrot.slane %v1395, 1
        %v1869 = vsel %vm1862, %v1866, %v1868
        %v1870 = vrot.slane %v1396, 1
        %v1871 = vsel %vm1862, %v1868, %v1870
        %v1872 = vrot.slane %v1397, 1
        %v1873 = vsel %vm1862, %v1870, %v1872
        %v1874 = vrot.slane %v1398, 1
        %v1875 = vsel %vm1862, %v1872, %v1874
        %v1876 = vrot.slane %v1399, 1
        %v1877 = vsel %vm1862, %v1874, %v1876
        %v1878 = vrot.slane %v1400, 1
        %v1879 = vsel %vm1862, %v1876, %v1878
        %v1880 = vrot.slane %v1401, 1
        %v1881 = vsel %vm1862, %v1878, %v1880
        %v1882 = vrot.slane %v1402, 1
        %v1883 = vsel %vm1862, %v1880, %v1882
        %v1884 = vrot.slane %v1403, 1
        %v1885 = vsel %vm1862, %v1882, %v1884
        %v1886 = vrot.slane %v1404, 1
        %v1887 = vsel %vm1862, %v1884, %v1886
        %v1888 = vrot.slane %v1405, 1
        %v1889 = vsel %vm1862, %v1886, %v1888
        %v1890 = vrot.slane %v1406, 1
        %v1891 = vsel %vm1862, %v1888, %v1890
        %v1892 = vrot.slane %v1407, 1
        %v1893 = vsel %vm1862, %v1890, %v1892
        %v1894 = vrot.slane %v1408, 1
        %v1895 = vsel %vm1862, %v1892, %v1894
        %v1896 = vrot.slane %v1409, 1
        %v1897 = vsel %vm1862, %v1894, %v1896
        %v1898 = vrot.slane %v1410, 1
        %v1899 = vsel %vm1862, %v1896, %v1898
        %v1901 = vsel %vm1560, %v1865, 0
        %v1904 = vsel %vm1560, %v1867, 0
        %v1907 = vsel %vm1560, %v1869, 0
        %v1910 = vsel %vm1560, %v1871, 0
        %v1913 = vsel %vm1560, %v1873, 0
        %v1916 = vsel %vm1560, %v1875, 0
        %v1919 = vsel %vm1560, %v1877, 0
        %v1922 = vsel %vm1560, %v1879, 0
        %v1925 = vsel %vm1560, %v1881, 0
        %v1928 = vsel %vm1560, %v1883, 0
        %v1931 = vsel %vm1560, %v1885, 0
        %v1934 = vsel %vm1560, %v1887, 0
        %v1937 = vsel %vm1560, %v1889, 0
        %v1940 = vsel %vm1560, %v1891, 0
        %v1943 = vsel %vm1560, %v1893, 0
        %v1946 = vsel %vm1560, %v1895, 0
        %v1949 = vsel %vm1560, %v1897, 0
        %v1952 = vsel %vm1560, %v1899, 0
        %v1955 = vsel %vm1615, %v1858, 0
        %1957 = vmatpush.bf16.msra.mxu0 0
        %1958 = vmatpush.bf16.msra.mxu0 0
        %1959 = vmatpush.bf16.msra.mxu0 0
        %1960 = vmatpush.bf16.msra.mxu0 0
        %1961 = vmatpush.bf16.msra.mxu0 0
        %1962 = vmatpush.bf16.msra.mxu0 0
        %1963 = vmatpush.bf16.msra.mxu0 0
        %1964 = vmatpush.bf16.msra.mxu0 %v1955
        %1965 = vmatmul.bf16.gmra.mxu0 %v1901
        %v1966 = vpop.f32.mrf.mxu0
        %v1967 = vadd.f32 0.0, %v1966
        %v1968 = vpop.f32.mrf.mxu0
        %v1969 = vadd.f32 0.0, %v1968
        %1970 = vmatmul.bf16.gmra.mxu0 %v1904
        %v1971 = vpop.f32.mrf.mxu0
        %v1972 = vadd.f32 0.0, %v1971
        %v1973 = vpop.f32.mrf.mxu0
        %v1974 = vadd.f32 0.0, %v1973
        %1975 = vmatmul.bf16.gmra.mxu0 %v1907
        %v1976 = vpop.f32.mrf.mxu0
        %v1977 = vadd.f32 0.0, %v1976
        %v1978 = vpop.f32.mrf.mxu0
        %v1979 = vadd.f32 0.0, %v1978
        %1980 = vmatmul.bf16.gmra.mxu0 %v1910
        %v1981 = vpop.f32.mrf.mxu0
        %v1982 = vadd.f32 0.0, %v1981
        %v1983 = vpop.f32.mrf.mxu0
        %v1984 = vadd.f32 0.0, %v1983
        %1985 = vmatmul.bf16.gmra.mxu0 %v1913
        %v1986 = vpop.f32.mrf.mxu0
        %v1987 = vadd.f32 0.0, %v1986
        %v1988 = vpop.f32.mrf.mxu0
        %v1989 = vadd.f32 0.0, %v1988
        %1990 = vmatmul.bf16.gmra.mxu0 %v1916
        %v1991 = vpop.f32.mrf.mxu0
        %v1992 = vadd.f32 0.0, %v1991
        %v1993 = vpop.f32.mrf.mxu0
        %v1994 = vadd.f32 0.0, %v1993
        %1995 = vmatmul.bf16.gmra.mxu0 %v1919
        %v1996 = vpop.f32.mrf.mxu0
        %v1997 = vadd.f32 0.0, %v1996
        %v1998 = vpop.f32.mrf.mxu0
        %v1999 = vadd.f32 0.0, %v1998
        %2000 = vmatmul.bf16.gmra.mxu0 %v1922
        %v2001 = vpop.f32.mrf.mxu0
        %v2002 = vadd.f32 0.0, %v2001
        %v2003 = vpop.f32.mrf.mxu0
        %v2004 = vadd.f32 0.0, %v2003
        %2005 = vmatmul.bf16.gmra.mxu0 %v1925
        %v2006 = vpop.f32.mrf.mxu0
        %v2007 = vadd.f32 0.0, %v2006
        %v2008 = vpop.f32.mrf.mxu0
        %v2009 = vadd.f32 0.0, %v2008
        %2010 = vmatmul.bf16.gmra.mxu0 %v1928
        %v2011 = vpop.f32.mrf.mxu0
        %v2012 = vadd.f32 0.0, %v2011
        %v2013 = vpop.f32.mrf.mxu0
        %v2014 = vadd.f32 0.0, %v2013
        %2015 = vmatmul.bf16.gmra.mxu0 %v1931
        %v2016 = vpop.f32.mrf.mxu0
        %v2017 = vadd.f32 0.0, %v2016
        %v2018 = vpop.f32.mrf.mxu0
        %v2019 = vadd.f32 0.0, %v2018
        %2020 = vmatmul.bf16.gmra.mxu0 %v1934
        %v2021 = vpop.f32.mrf.mxu0
        %v2022 = vadd.f32 0.0, %v2021
        %v2023 = vpop.f32.mrf.mxu0
        %v2024 = vadd.f32 0.0, %v2023
        %2025 = vmatmul.bf16.gmra.mxu0 %v1937
        %v2026 = vpop.f32.mrf.mxu0
        %v2027 = vadd.f32 0.0, %v2026
        %v2028 = vpop.f32.mrf.mxu0
        %v2029 = vadd.f32 0.0, %v2028
        %2030 = vmatmul.bf16.gmra.mxu0 %v1940
        %v2031 = vpop.f32.mrf.mxu0
        %v2032 = vadd.f32 0.0, %v2031
        %v2033 = vpop.f32.mrf.mxu0
        %v2034 = vadd.f32 0.0, %v2033
        %2035 = vmatmul.bf16.gmra.mxu0 %v1943
        %v2036 = vpop.f32.mrf.mxu0
        %v2037 = vadd.f32 0.0, %v2036
        %v2038 = vpop.f32.mrf.mxu0
        %v2039 = vadd.f32 0.0, %v2038
        %2040 = vmatmul.bf16.gmra.mxu0 %v1946
        %v2041 = vpop.f32.mrf.mxu0
        %v2042 = vadd.f32 0.0, %v2041
        %v2043 = vpop.f32.mrf.mxu0
        %v2044 = vadd.f32 0.0, %v2043
        %2045 = vmatmul.bf16.gmra.mxu0 %v1949
        %v2046 = vpop.f32.mrf.mxu0
        %v2047 = vadd.f32 0.0, %v2046
        %v2048 = vpop.f32.mrf.mxu0
        %v2049 = vadd.f32 0.0, %v2048
        %2050 = vmatmul.bf16.gmra.mxu0 %v1952
        %v2051 = vpop.f32.mrf.mxu0
        %v2052 = vadd.f32 0.0, %v2051
        %v2053 = vpop.f32.mrf.mxu0
        %v2054 = vadd.f32 0.0, %v2053
        %2055 = vdwg.mxu0
        %v2056 = vadd.f32 %v1767, %v1967
        %v2057 = vadd.f32 %v1769, %v1969
        %v2058 = vadd.f32 %v1772, %v1972
        %v2059 = vadd.f32 %v1774, %v1974
        %v2060 = vadd.f32 %v1777, %v1977
        %v2061 = vadd.f32 %v1779, %v1979
        %v2062 = vadd.f32 %v1782, %v1982
        %v2063 = vadd.f32 %v1784, %v1984
        %v2064 = vadd.f32 %v1787, %v1987
        %v2065 = vadd.f32 %v1789, %v1989
        %v2066 = vadd.f32 %v1792, %v1992
        %v2067 = vadd.f32 %v1794, %v1994
        %v2068 = vadd.f32 %v1797, %v1997
        %v2069 = vadd.f32 %v1799, %v1999
        %v2070 = vadd.f32 %v1802, %v2002
        %v2071 = vadd.f32 %v1804, %v2004
        %v2072 = vadd.f32 %v1807, %v2007
        %v2073 = vadd.f32 %v1809, %v2009
        %v2074 = vadd.f32 %v1812, %v2012
        %v2075 = vadd.f32 %v1814, %v2014
        %v2076 = vadd.f32 %v1817, %v2017
        %v2077 = vadd.f32 %v1819, %v2019
        %v2078 = vadd.f32 %v1822, %v2022
        %v2079 = vadd.f32 %v1824, %v2024
        %v2080 = vadd.f32 %v1827, %v2027
        %v2081 = vadd.f32 %v1829, %v2029
        %v2082 = vadd.f32 %v1832, %v2032
        %v2083 = vadd.f32 %v1834, %v2034
        %v2084 = vadd.f32 %v1837, %v2037
        %v2085 = vadd.f32 %v1839, %v2039
        %v2086 = vadd.f32 %v1842, %v2042
        %v2087 = vadd.f32 %v1844, %v2044
        %v2088 = vadd.f32 %v1847, %v2047
        %v2089 = vadd.f32 %v1849, %v2049
        %v2090 = vadd.f32 %v1852, %v2052
        %v2091 = vadd.f32 %v1854, %v2054
        %v2092 = vld [vmem:[#allocation2 + $0x8] sm:$0xe]
        %v2093 = vld [vmem:[#allocation2 + $0xc] sm:$0xf]
        %v2094 = vld [vmem:[#allocation2 + $0x10] sm:$0xf]
        %v2095 = vld [vmem:[#allocation2 + $0x14] sm:$0xf]
        %v2096 = vld [vmem:[#allocation2 + $0x18] sm:$0xf]
        %v2097 = vld [vmem:[#allocation2 + $0x1c] sm:$0xf]
        %v2098 = vld [vmem:[#allocation2 + $0x20] sm:$0xf]
        %v2099 = vld [vmem:[#allocation2 + $0x24] sm:$0xf]
        %v2100 = vld [vmem:[#allocation2 + $0x28] sm:$0xf]
        %v2101 = vld [vmem:[#allocation2 + $0x2c] sm:$0xf]
        %v2102 = vld [vmem:[#allocation2 + $0x30] sm:$0xf]
        %v2103 = vld [vmem:[#allocation2 + $0x34] sm:$0xf]
        %v2104 = vld [vmem:[#allocation2 + $0x38] sm:$0xf]
        %v2105 = vld [vmem:[#allocation2 + $0x3c] sm:$0xf]
        %v2106 = vld [vmem:[#allocation2 + $0x40] sm:$0xf]
        %v2107 = vld [vmem:[#allocation2 + $0x44] sm:$0xf]
        %v2108 = vld [vmem:[#allocation2 + $0x48] sm:$0xf]
        %v2109 = vld [vmem:[#allocation2 + $0x4c] sm:$0xf]
        %v2110 = vld [vmem:[#allocation2 + $0x50] sm:$0xf]
        %v2111 = vld [vmem:[#allocation2 + $0x54] sm:$0xf]
        %v2112 = vld [vmem:[#allocation2 + $0x58] sm:$0xf]
        %v2113 = vld [vmem:[#allocation2 + $0x5c] sm:$0xf]
        %v2114 = vld [vmem:[#allocation2 + $0x60] sm:$0xf]
        %v2115 = vld [vmem:[#allocation2 + $0x64] sm:$0xf]
        %v2116 = vld [vmem:[#allocation2 + $0x68] sm:$0xf]
        %v2117 = vld [vmem:[#allocation2 + $0x6c] sm:$0xf]
        %v2118 = vld [vmem:[#allocation2 + $0x70] sm:$0xf]
        %v2119 = vld [vmem:[#allocation2 + $0x74] sm:$0xf]
        %v2120 = vld [vmem:[#allocation2 + $0x78] sm:$0xf]
        %v2121 = vld [vmem:[#allocation2 + $0x7c] sm:$0xf]
        %v2122 = vld [vmem:[#allocation2 + $0x80] sm:$0xf]
        %v2123 = vld [vmem:[#allocation2 + $0x84] sm:$0xf]
        %v2124 = vld [vmem:[#allocation2 + $0x88] sm:$0xf]
        %v2125 = vld [vmem:[#allocation2 + $0x8c] sm:$0xf]
        %v2126 = vld [vmem:[#allocation2 + $0x90] sm:$0xf]
        %v2127 = vld [vmem:[#allocation2 + $0x94] sm:$0xf]
        %v2128 = vld [vmem:[#allocation2 + $0x98] sm:$0x1]
        %s2129 = scalar_lea.vmem %s2, 6
        %v2130 = vld [vmem:[%s2129] sm:$0x3]
        %v2168 = vunpack.c.l.b16 %v2092
        %v2169 = vunpack.c.l.b16 %v2093
        %v2170 = vunpack.c.l.b16 %v2094
        %v2171 = vunpack.c.l.b16 %v2095
        %v2172 = vunpack.c.l.b16 %v2096
        %v2173 = vunpack.c.l.b16 %v2097
        %v2174 = vunpack.c.l.b16 %v2098
        %v2175 = vunpack.c.l.b16 %v2099
        %v2176 = vunpack.c.l.b16 %v2100
        %v2177 = vunpack.c.l.b16 %v2101
        %v2178 = vunpack.c.l.b16 %v2102
        %v2179 = vunpack.c.l.b16 %v2103
        %v2180 = vunpack.c.l.b16 %v2104
        %v2181 = vunpack.c.l.b16 %v2105
        %v2182 = vunpack.c.l.b16 %v2106
        %v2183 = vunpack.c.l.b16 %v2107
        %v2184 = vunpack.c.l.b16 %v2108
        %v2185 = vunpack.c.l.b16 %v2109
        %v2186 = vunpack.c.l.b16 %v2110
        %v2187 = vunpack.c.l.b16 %v2111
        %v2188 = vunpack.c.l.b16 %v2112
        %v2189 = vunpack.c.l.b16 %v2113
        %v2190 = vunpack.c.l.b16 %v2114
        %v2191 = vunpack.c.l.b16 %v2115
        %v2192 = vunpack.c.l.b16 %v2116
        %v2193 = vunpack.c.l.b16 %v2117
        %v2194 = vunpack.c.l.b16 %v2118
        %v2195 = vunpack.c.l.b16 %v2119
        %v2196 = vunpack.c.l.b16 %v2120
        %v2197 = vunpack.c.l.b16 %v2121
        %v2198 = vunpack.c.l.b16 %v2122
        %v2199 = vunpack.c.l.b16 %v2123
        %v2200 = vunpack.c.l.b16 %v2124
        %v2201 = vunpack.c.l.b16 %v2125
        %v2202 = vunpack.c.l.b16 %v2126
        %v2203 = vunpack.c.l.b16 %v2127
        %v2204 = vunpack.c.l.b16 %v2128
        %v2205 = vpack.c.b16 %v2169, %v2168
        %v2206 = vpack.c.b16 %v2171, %v2170
        %v2207 = vpack.c.b16 %v2173, %v2172
        %v2208 = vpack.c.b16 %v2175, %v2174
        %v2209 = vpack.c.b16 %v2177, %v2176
        %v2210 = vpack.c.b16 %v2179, %v2178
        %v2211 = vpack.c.b16 %v2181, %v2180
        %v2212 = vpack.c.b16 %v2183, %v2182
        %v2213 = vpack.c.b16 %v2185, %v2184
        %v2214 = vpack.c.b16 %v2187, %v2186
        %v2215 = vpack.c.b16 %v2189, %v2188
        %v2216 = vpack.c.b16 %v2191, %v2190
        %v2217 = vpack.c.b16 %v2193, %v2192
        %v2218 = vpack.c.b16 %v2195, %v2194
        %v2219 = vpack.c.b16 %v2197, %v2196
        %v2220 = vpack.c.b16 %v2199, %v2198
        %v2221 = vpack.c.b16 %v2201, %v2200
        %v2222 = vpack.c.b16 %v2203, %v2202
        %v2223 = vpack.c.b16 %v2204, %v2204
        %v2224 = vrot.slane %v2205, 1
        %v2225 = vrot.slane %v2206, 1
        %v2226 = vsel %vm1862, %v2224, %v2225
        %v2227 = vrot.slane %v2207, 1
        %v2228 = vsel %vm1862, %v2225, %v2227
        %v2229 = vrot.slane %v2208, 1
        %v2230 = vsel %vm1862, %v2227, %v2229
        %v2231 = vrot.slane %v2209, 1
        %v2232 = vsel %vm1862, %v2229, %v2231
        %v2233 = vrot.slane %v2210, 1
        %v2234 = vsel %vm1862, %v2231, %v2233
        %v2235 = vrot.slane %v2211, 1
        %v2236 = vsel %vm1862, %v2233, %v2235
        %v2237 = vrot.slane %v2212, 1
        %v2238 = vsel %vm1862, %v2235, %v2237
        %v2239 = vrot.slane %v2213, 1
        %v2240 = vsel %vm1862, %v2237, %v2239
        %v2241 = vrot.slane %v2214, 1
        %v2242 = vsel %vm1862, %v2239, %v2241
        %v2243 = vrot.slane %v2215, 1
        %v2244 = vsel %vm1862, %v2241, %v2243
        %v2245 = vrot.slane %v2216, 1
        %v2246 = vsel %vm1862, %v2243, %v2245
        %v2247 = vrot.slane %v2217, 1
        %v2248 = vsel %vm1862, %v2245, %v2247
        %v2249 = vrot.slane %v2218, 1
        %v2250 = vsel %vm1862, %v2247, %v2249
        %v2251 = vrot.slane %v2219, 1
        %v2252 = vsel %vm1862, %v2249, %v2251
        %v2253 = vrot.slane %v2220, 1
        %v2254 = vsel %vm1862, %v2251, %v2253
        %v2255 = vrot.slane %v2221, 1
        %v2256 = vsel %vm1862, %v2253, %v2255
        %v2257 = vrot.slane %v2222, 1
        %v2258 = vsel %vm1862, %v2255, %v2257
        %v2259 = vrot.slane %v2223, 1
        %v2260 = vsel %vm1862, %v2257, %v2259
        %v2262 = vsel %vm1560, %v2226, 0
        %v2265 = vsel %vm1560, %v2228, 0
        %v2268 = vsel %vm1560, %v2230, 0
        %v2271 = vsel %vm1560, %v2232, 0
        %v2274 = vsel %vm1560, %v2234, 0
        %v2277 = vsel %vm1560, %v2236, 0
        %v2280 = vsel %vm1560, %v2238, 0
        %v2283 = vsel %vm1560, %v2240, 0
        %v2286 = vsel %vm1560, %v2242, 0
        %v2289 = vsel %vm1560, %v2244, 0
        %v2292 = vsel %vm1560, %v2246, 0
        %v2295 = vsel %vm1560, %v2248, 0
        %v2298 = vsel %vm1560, %v2250, 0
        %v2301 = vsel %vm1560, %v2252, 0
        %v2304 = vsel %vm1560, %v2254, 0
        %v2307 = vsel %vm1560, %v2256, 0
        %v2310 = vsel %vm1560, %v2258, 0
        %v2313 = vsel %vm1560, %v2260, 0
        %v2316 = vsel %vm1615, %v2130, 0
        %2318 = vmatpush.bf16.msra.mxu0 0
        %2319 = vmatpush.bf16.msra.mxu0 0
        %2320 = vmatpush.bf16.msra.mxu0 0
        %2321 = vmatpush.bf16.msra.mxu0 0
        %2322 = vmatpush.bf16.msra.mxu0 0
        %2323 = vmatpush.bf16.msra.mxu0 0
        %2324 = vmatpush.bf16.msra.mxu0 0
        %2325 = vmatpush.bf16.msra.mxu0 %v2316
        %2326 = vmatmul.bf16.gmra.mxu0 %v2262
        %v2327 = vpop.f32.mrf.mxu0
        %v2328 = vadd.f32 0.0, %v2327
        %v2329 = vpop.f32.mrf.mxu0
        %v2330 = vadd.f32 0.0, %v2329
        %2331 = vmatmul.bf16.gmra.mxu0 %v2265
        %v2332 = vpop.f32.mrf.mxu0
        %v2333 = vadd.f32 0.0, %v2332
        %v2334 = vpop.f32.mrf.mxu0
        %v2335 = vadd.f32 0.0, %v2334
        %2336 = vmatmul.bf16.gmra.mxu0 %v2268
        %v2337 = vpop.f32.mrf.mxu0
        %v2338 = vadd.f32 0.0, %v2337
        %v2339 = vpop.f32.mrf.mxu0
        %v2340 = vadd.f32 0.0, %v2339
        %2341 = vmatmul.bf16.gmra.mxu0 %v2271
        %v2342 = vpop.f32.mrf.mxu0
        %v2343 = vadd.f32 0.0, %v2342
        %v2344 = vpop.f32.mrf.mxu0
        %v2345 = vadd.f32 0.0, %v2344
        %2346 = vmatmul.bf16.gmra.mxu0 %v2274
        %v2347 = vpop.f32.mrf.mxu0
        %v2348 = vadd.f32 0.0, %v2347
        %v2349 = vpop.f32.mrf.mxu0
        %v2350 = vadd.f32 0.0, %v2349
        %2351 = vmatmul.bf16.gmra.mxu0 %v2277
        %v2352 = vpop.f32.mrf.mxu0
        %v2353 = vadd.f32 0.0, %v2352
        %v2354 = vpop.f32.mrf.mxu0
        %v2355 = vadd.f32 0.0, %v2354
        %2356 = vmatmul.bf16.gmra.mxu0 %v2280
        %v2357 = vpop.f32.mrf.mxu0
        %v2358 = vadd.f32 0.0, %v2357
        %v2359 = vpop.f32.mrf.mxu0
        %v2360 = vadd.f32 0.0, %v2359
        %2361 = vmatmul.bf16.gmra.mxu0 %v2283
        %v2362 = vpop.f32.mrf.mxu0
        %v2363 = vadd.f32 0.0, %v2362
        %v2364 = vpop.f32.mrf.mxu0
        %v2365 = vadd.f32 0.0, %v2364
        %2366 = vmatmul.bf16.gmra.mxu0 %v2286
        %v2367 = vpop.f32.mrf.mxu0
        %v2368 = vadd.f32 0.0, %v2367
        %v2369 = vpop.f32.mrf.mxu0
        %v2370 = vadd.f32 0.0, %v2369
        %2371 = vmatmul.bf16.gmra.mxu0 %v2289
        %v2372 = vpop.f32.mrf.mxu0
        %v2373 = vadd.f32 0.0, %v2372
        %v2374 = vpop.f32.mrf.mxu0
        %v2375 = vadd.f32 0.0, %v2374
        %2376 = vmatmul.bf16.gmra.mxu0 %v2292
        %v2377 = vpop.f32.mrf.mxu0
        %v2378 = vadd.f32 0.0, %v2377
        %v2379 = vpop.f32.mrf.mxu0
        %v2380 = vadd.f32 0.0, %v2379
        %2381 = vmatmul.bf16.gmra.mxu0 %v2295
        %v2382 = vpop.f32.mrf.mxu0
        %v2383 = vadd.f32 0.0, %v2382
        %v2384 = vpop.f32.mrf.mxu0
        %v2385 = vadd.f32 0.0, %v2384
        %2386 = vmatmul.bf16.gmra.mxu0 %v2298
        %v2387 = vpop.f32.mrf.mxu0
        %v2388 = vadd.f32 0.0, %v2387
        %v2389 = vpop.f32.mrf.mxu0
        %v2390 = vadd.f32 0.0, %v2389
        %2391 = vmatmul.bf16.gmra.mxu0 %v2301
        %v2392 = vpop.f32.mrf.mxu0
        %v2393 = vadd.f32 0.0, %v2392
        %v2394 = vpop.f32.mrf.mxu0
        %v2395 = vadd.f32 0.0, %v2394
        %2396 = vmatmul.bf16.gmra.mxu0 %v2304
        %v2397 = vpop.f32.mrf.mxu0
        %v2398 = vadd.f32 0.0, %v2397
        %v2399 = vpop.f32.mrf.mxu0
        %v2400 = vadd.f32 0.0, %v2399
        %2401 = vmatmul.bf16.gmra.mxu0 %v2307
        %v2402 = vpop.f32.mrf.mxu0
        %v2403 = vadd.f32 0.0, %v2402
        %v2404 = vpop.f32.mrf.mxu0
        %v2405 = vadd.f32 0.0, %v2404
        %2406 = vmatmul.bf16.gmra.mxu0 %v2310
        %v2407 = vpop.f32.mrf.mxu0
        %v2408 = vadd.f32 0.0, %v2407
        %v2409 = vpop.f32.mrf.mxu0
        %v2410 = vadd.f32 0.0, %v2409
        %2411 = vmatmul.bf16.gmra.mxu0 %v2313
        %v2412 = vpop.f32.mrf.mxu0
        %v2413 = vadd.f32 0.0, %v2412
        %v2414 = vpop.f32.mrf.mxu0
        %v2415 = vadd.f32 0.0, %v2414
        %2416 = vdwg.mxu0
        %v2417 = vadd.f32 %v2056, %v2328
        %v2418 = vadd.f32 %v2057, %v2330
        %v2419 = vadd.f32 %v2058, %v2333
        %v2420 = vadd.f32 %v2059, %v2335
        %v2421 = vadd.f32 %v2060, %v2338
        %v2422 = vadd.f32 %v2061, %v2340
        %v2423 = vadd.f32 %v2062, %v2343
        %v2424 = vadd.f32 %v2063, %v2345
        %v2425 = vadd.f32 %v2064, %v2348
        %v2426 = vadd.f32 %v2065, %v2350
        %v2427 = vadd.f32 %v2066, %v2353
        %v2428 = vadd.f32 %v2067, %v2355
        %v2429 = vadd.f32 %v2068, %v2358
        %v2430 = vadd.f32 %v2069, %v2360
        %v2431 = vadd.f32 %v2070, %v2363
        %v2432 = vadd.f32 %v2071, %v2365
        %v2433 = vadd.f32 %v2072, %v2368
        %v2434 = vadd.f32 %v2073, %v2370
        %v2435 = vadd.f32 %v2074, %v2373
        %v2436 = vadd.f32 %v2075, %v2375
        %v2437 = vadd.f32 %v2076, %v2378
        %v2438 = vadd.f32 %v2077, %v2380
        %v2439 = vadd.f32 %v2078, %v2383
        %v2440 = vadd.f32 %v2079, %v2385
        %v2441 = vadd.f32 %v2080, %v2388
        %v2442 = vadd.f32 %v2081, %v2390
        %v2443 = vadd.f32 %v2082, %v2393
        %v2444 = vadd.f32 %v2083, %v2395
        %v2445 = vadd.f32 %v2084, %v2398
        %v2446 = vadd.f32 %v2085, %v2400
        %v2447 = vadd.f32 %v2086, %v2403
        %v2448 = vadd.f32 %v2087, %v2405
        %v2449 = vadd.f32 %v2088, %v2408
        %v2450 = vadd.f32 %v2089, %v2410
        %v2451 = vadd.f32 %v2090, %v2413
        %v2452 = vadd.f32 %v2091, %v2415
        %v2453 = vld [vmem:[#allocation2 + $0x98] sm:$0x3]
        %s2454 = scalar_lea.vmem %s2, 8
        %v2455 = vld [vmem:[%s2454] sm:$0x3]
        %v2457 = vunpack.c.l.b16 %v2453
        %v2458 = vpack.c.b16 %v2457, %v2457
        %vm2459 = vsmask.f32 6400
        %v2461 = vshrl.u32 %v2205, 16
        %v2463 = vrot.slane %v2461, 1
        %v2464 = vshll.u32 %v2205, 16
        %v2466 = vrot.slane %v2464, 2
        %v2467 = vor.u32 %v2463, %v2466
        %v2469 = vshrl.u32 %v2206, 16
        %v2471 = vrot.slane %v2469, 1
        %v2472 = vshll.u32 %v2206, 16
        %v2474 = vrot.slane %v2472, 2
        %v2475 = vor.u32 %v2471, %v2474
        %v2476 = vsel %vm2459, %v2467, %v2475
        %v2478 = vshrl.u32 %v2207, 16
        %v2480 = vrot.slane %v2478, 1
        %v2481 = vshll.u32 %v2207, 16
        %v2483 = vrot.slane %v2481, 2
        %v2484 = vor.u32 %v2480, %v2483
        %v2485 = vsel %vm2459, %v2475, %v2484
        %v2487 = vshrl.u32 %v2208, 16
        %v2489 = vrot.slane %v2487, 1
        %v2490 = vshll.u32 %v2208, 16
        %v2492 = vrot.slane %v2490, 2
        %v2493 = vor.u32 %v2489, %v2492
        %v2494 = vsel %vm2459, %v2484, %v2493
        %v2496 = vshrl.u32 %v2209, 16
        %v2498 = vrot.slane %v2496, 1
        %v2499 = vshll.u32 %v2209, 16
        %v2501 = vrot.slane %v2499, 2
        %v2502 = vor.u32 %v2498, %v2501
        %v2503 = vsel %vm2459, %v2493, %v2502
        %v2505 = vshrl.u32 %v2210, 16
        %v2507 = vrot.slane %v2505, 1
        %v2508 = vshll.u32 %v2210, 16
        %v2510 = vrot.slane %v2508, 2
        %v2511 = vor.u32 %v2507, %v2510
        %v2512 = vsel %vm2459, %v2502, %v2511
        %v2514 = vshrl.u32 %v2211, 16
        %v2516 = vrot.slane %v2514, 1
        %v2517 = vshll.u32 %v2211, 16
        %v2519 = vrot.slane %v2517, 2
        %v2520 = vor.u32 %v2516, %v2519
        %v2521 = vsel %vm2459, %v2511, %v2520
        %v2523 = vshrl.u32 %v2212, 16
        %v2525 = vrot.slane %v2523, 1
        %v2526 = vshll.u32 %v2212, 16
        %v2528 = vrot.slane %v2526, 2
        %v2529 = vor.u32 %v2525, %v2528
        %v2530 = vsel %vm2459, %v2520, %v2529
        %v2532 = vshrl.u32 %v2213, 16
        %v2534 = vrot.slane %v2532, 1
        %v2535 = vshll.u32 %v2213, 16
        %v2537 = vrot.slane %v2535, 2
        %v2538 = vor.u32 %v2534, %v2537
        %v2539 = vsel %vm2459, %v2529, %v2538
        %v2541 = vshrl.u32 %v2214, 16
        %v2543 = vrot.slane %v2541, 1
        %v2544 = vshll.u32 %v2214, 16
        %v2546 = vrot.slane %v2544, 2
        %v2547 = vor.u32 %v2543, %v2546
        %v2548 = vsel %vm2459, %v2538, %v2547
        %v2550 = vshrl.u32 %v2215, 16
        %v2552 = vrot.slane %v2550, 1
        %v2553 = vshll.u32 %v2215, 16
        %v2555 = vrot.slane %v2553, 2
        %v2556 = vor.u32 %v2552, %v2555
        %v2557 = vsel %vm2459, %v2547, %v2556
        %v2559 = vshrl.u32 %v2216, 16
        %v2561 = vrot.slane %v2559, 1
        %v2562 = vshll.u32 %v2216, 16
        %v2564 = vrot.slane %v2562, 2
        %v2565 = vor.u32 %v2561, %v2564
        %v2566 = vsel %vm2459, %v2556, %v2565
        %v2568 = vshrl.u32 %v2217, 16
        %v2570 = vrot.slane %v2568, 1
        %v2571 = vshll.u32 %v2217, 16
        %v2573 = vrot.slane %v2571, 2
        %v2574 = vor.u32 %v2570, %v2573
        %v2575 = vsel %vm2459, %v2565, %v2574
        %v2577 = vshrl.u32 %v2218, 16
        %v2579 = vrot.slane %v2577, 1
        %v2580 = vshll.u32 %v2218, 16
        %v2582 = vrot.slane %v2580, 2
        %v2583 = vor.u32 %v2579, %v2582
        %v2584 = vsel %vm2459, %v2574, %v2583
        %v2586 = vshrl.u32 %v2219, 16
        %v2588 = vrot.slane %v2586, 1
        %v2589 = vshll.u32 %v2219, 16
        %v2591 = vrot.slane %v2589, 2
        %v2592 = vor.u32 %v2588, %v2591
        %v2593 = vsel %vm2459, %v2583, %v2592
        %v2595 = vshrl.u32 %v2220, 16
        %v2597 = vrot.slane %v2595, 1
        %v2598 = vshll.u32 %v2220, 16
        %v2600 = vrot.slane %v2598, 2
        %v2601 = vor.u32 %v2597, %v2600
        %v2602 = vsel %vm2459, %v2592, %v2601
        %v2604 = vshrl.u32 %v2221, 16
        %v2606 = vrot.slane %v2604, 1
        %v2607 = vshll.u32 %v2221, 16
        %v2609 = vrot.slane %v2607, 2
        %v2610 = vor.u32 %v2606, %v2609
        %v2611 = vsel %vm2459, %v2601, %v2610
        %v2613 = vshrl.u32 %v2222, 16
        %v2615 = vrot.slane %v2613, 1
        %v2616 = vshll.u32 %v2222, 16
        %v2618 = vrot.slane %v2616, 2
        %v2619 = vor.u32 %v2615, %v2618
        %v2620 = vsel %vm2459, %v2610, %v2619
        %v2622 = vshrl.u32 %v2458, 16
        %v2624 = vrot.slane %v2622, 1
        %v2625 = vshll.u32 %v2458, 16
        %v2627 = vrot.slane %v2625, 2
        %v2628 = vor.u32 %v2624, %v2627
        %v2629 = vsel %vm2459, %v2619, %v2628
        %v2631 = vsel %vm1560, %v2476, 0
        %v2634 = vsel %vm1560, %v2485, 0
        %v2637 = vsel %vm1560, %v2494, 0
        %v2640 = vsel %vm1560, %v2503, 0
        %v2643 = vsel %vm1560, %v2512, 0
        %v2646 = vsel %vm1560, %v2521, 0
        %v2649 = vsel %vm1560, %v2530, 0
        %v2652 = vsel %vm1560, %v2539, 0
        %v2655 = vsel %vm1560, %v2548, 0
        %v2658 = vsel %vm1560, %v2557, 0
        %v2661 = vsel %vm1560, %v2566, 0
        %v2664 = vsel %vm1560, %v2575, 0
        %v2667 = vsel %vm1560, %v2584, 0
        %v2670 = vsel %vm1560, %v2593, 0
        %v2673 = vsel %vm1560, %v2602, 0
        %v2676 = vsel %vm1560, %v2611, 0
        %v2679 = vsel %vm1560, %v2620, 0
        %v2682 = vsel %vm1560, %v2629, 0
        %v2685 = vsel %vm1615, %v2455, 0
        %2687 = vmatpush.bf16.msra.mxu0 0
        %2688 = vmatpush.bf16.msra.mxu0 0
        %2689 = vmatpush.bf16.msra.mxu0 0
        %2690 = vmatpush.bf16.msra.mxu0 0
        %2691 = vmatpush.bf16.msra.mxu0 0
        %2692 = vmatpush.bf16.msra.mxu0 0
        %2693 = vmatpush.bf16.msra.mxu0 0
        %2694 = vmatpush.bf16.msra.mxu0 %v2685
        %2695 = vmatmul.bf16.gmra.mxu0 %v2631
        %v2696 = vpop.f32.mrf.mxu0
        %v2697 = vadd.f32 0.0, %v2696
        %v2698 = vpop.f32.mrf.mxu0
        %v2699 = vadd.f32 0.0, %v2698
        %2700 = vmatmul.bf16.gmra.mxu0 %v2634
        %v2701 = vpop.f32.mrf.mxu0
        %v2702 = vadd.f32 0.0, %v2701
        %v2703 = vpop.f32.mrf.mxu0
        %v2704 = vadd.f32 0.0, %v2703
        %2705 = vmatmul.bf16.gmra.mxu0 %v2637
        %v2706 = vpop.f32.mrf.mxu0
        %v2707 = vadd.f32 0.0, %v2706
        %v2708 = vpop.f32.mrf.mxu0
        %v2709 = vadd.f32 0.0, %v2708
        %2710 = vmatmul.bf16.gmra.mxu0 %v2640
        %v2711 = vpop.f32.mrf.mxu0
        %v2712 = vadd.f32 0.0, %v2711
        %v2713 = vpop.f32.mrf.mxu0
        %v2714 = vadd.f32 0.0, %v2713
        %2715 = vmatmul.bf16.gmra.mxu0 %v2643
        %v2716 = vpop.f32.mrf.mxu0
        %v2717 = vadd.f32 0.0, %v2716
        %v2718 = vpop.f32.mrf.mxu0
        %v2719 = vadd.f32 0.0, %v2718
        %2720 = vmatmul.bf16.gmra.mxu0 %v2646
        %v2721 = vpop.f32.mrf.mxu0
        %v2722 = vadd.f32 0.0, %v2721
        %v2723 = vpop.f32.mrf.mxu0
        %v2724 = vadd.f32 0.0, %v2723
        %2725 = vmatmul.bf16.gmra.mxu0 %v2649
        %v2726 = vpop.f32.mrf.mxu0
        %v2727 = vadd.f32 0.0, %v2726
        %v2728 = vpop.f32.mrf.mxu0
        %v2729 = vadd.f32 0.0, %v2728
        %2730 = vmatmul.bf16.gmra.mxu0 %v2652
        %v2731 = vpop.f32.mrf.mxu0
        %v2732 = vadd.f32 0.0, %v2731
        %v2733 = vpop.f32.mrf.mxu0
        %v2734 = vadd.f32 0.0, %v2733
        %2735 = vmatmul.bf16.gmra.mxu0 %v2655
        %v2736 = vpop.f32.mrf.mxu0
        %v2737 = vadd.f32 0.0, %v2736
        %v2738 = vpop.f32.mrf.mxu0
        %v2739 = vadd.f32 0.0, %v2738
        %2740 = vmatmul.bf16.gmra.mxu0 %v2658
        %v2741 = vpop.f32.mrf.mxu0
        %v2742 = vadd.f32 0.0, %v2741
        %v2743 = vpop.f32.mrf.mxu0
        %v2744 = vadd.f32 0.0, %v2743
        %2745 = vmatmul.bf16.gmra.mxu0 %v2661
        %v2746 = vpop.f32.mrf.mxu0
        %v2747 = vadd.f32 0.0, %v2746
        %v2748 = vpop.f32.mrf.mxu0
        %v2749 = vadd.f32 0.0, %v2748
        %2750 = vmatmul.bf16.gmra.mxu0 %v2664
        %v2751 = vpop.f32.mrf.mxu0
        %v2752 = vadd.f32 0.0, %v2751
        %v2753 = vpop.f32.mrf.mxu0
        %v2754 = vadd.f32 0.0, %v2753
        %2755 = vmatmul.bf16.gmra.mxu0 %v2667
        %v2756 = vpop.f32.mrf.mxu0
        %v2757 = vadd.f32 0.0, %v2756
        %v2758 = vpop.f32.mrf.mxu0
        %v2759 = vadd.f32 0.0, %v2758
        %2760 = vmatmul.bf16.gmra.mxu0 %v2670
        %v2761 = vpop.f32.mrf.mxu0
        %v2762 = vadd.f32 0.0, %v2761
        %v2763 = vpop.f32.mrf.mxu0
        %v2764 = vadd.f32 0.0, %v2763
        %2765 = vmatmul.bf16.gmra.mxu0 %v2673
        %v2766 = vpop.f32.mrf.mxu0
        %v2767 = vadd.f32 0.0, %v2766
        %v2768 = vpop.f32.mrf.mxu0
        %v2769 = vadd.f32 0.0, %v2768
        %2770 = vmatmul.bf16.gmra.mxu0 %v2676
        %v2771 = vpop.f32.mrf.mxu0
        %v2772 = vadd.f32 0.0, %v2771
        %v2773 = vpop.f32.mrf.mxu0
        %v2774 = vadd.f32 0.0, %v2773
        %2775 = vmatmul.bf16.gmra.mxu0 %v2679
        %v2776 = vpop.f32.mrf.mxu0
        %v2777 = vadd.f32 0.0, %v2776
        %v2778 = vpop.f32.mrf.mxu0
        %v2779 = vadd.f32 0.0, %v2778
        %2780 = vmatmul.bf16.gmra.mxu0 %v2682
        %v2781 = vpop.f32.mrf.mxu0
        %v2782 = vadd.f32 0.0, %v2781
        %v2783 = vpop.f32.mrf.mxu0
        %v2784 = vadd.f32 0.0, %v2783
        %2785 = vdwg.mxu0
        %v2786 = vadd.f32 %v2417, %v2697
        %v2787 = vadd.f32 %v2418, %v2699
        %v2788 = vadd.f32 %v2419, %v2702
        %v2789 = vadd.f32 %v2420, %v2704
        %v2790 = vadd.f32 %v2421, %v2707
        %v2791 = vadd.f32 %v2422, %v2709
        %v2792 = vadd.f32 %v2423, %v2712
        %v2793 = vadd.f32 %v2424, %v2714
        %v2794 = vadd.f32 %v2425, %v2717
        %v2795 = vadd.f32 %v2426, %v2719
        %v2796 = vadd.f32 %v2427, %v2722
        %v2797 = vadd.f32 %v2428, %v2724
        %v2798 = vadd.f32 %v2429, %v2727
        %v2799 = vadd.f32 %v2430, %v2729
        %v2800 = vadd.f32 %v2431, %v2732
        %v2801 = vadd.f32 %v2432, %v2734
        %v2802 = vadd.f32 %v2433, %v2737
        %v2803 = vadd.f32 %v2434, %v2739
        %v2804 = vadd.f32 %v2435, %v2742
        %v2805 = vadd.f32 %v2436, %v2744
        %v2806 = vadd.f32 %v2437, %v2747
        %v2807 = vadd.f32 %v2438, %v2749
        %v2808 = vadd.f32 %v2439, %v2752
        %v2809 = vadd.f32 %v2440, %v2754
        %v2810 = vadd.f32 %v2441, %v2757
        %v2811 = vadd.f32 %v2442, %v2759
        %v2812 = vadd.f32 %v2443, %v2762
        %v2813 = vadd.f32 %v2444, %v2764
        %v2814 = vadd.f32 %v2445, %v2767
        %v2815 = vadd.f32 %v2446, %v2769
        %v2816 = vadd.f32 %v2447, %v2772
        %v2817 = vadd.f32 %v2448, %v2774
        %v2818 = vadd.f32 %v2449, %v2777
        %v2819 = vadd.f32 %v2450, %v2779
        %v2820 = vadd.f32 %v2451, %v2782
        %v2821 = vadd.f32 %v2452, %v2784
        %v2822 = vld [vmem:[#allocation2 + $0x8] sm:$0xc]
        %s2823 = scalar_lea.vmem %s2, 10
        %v2824 = vld [vmem:[%s2823] sm:$0x3]
        %v2826 = vunpack.c.l.b16 %v2822
        %v2827 = vpack.c.b16 %v2169, %v2826
        %vm2828 = vcmask 1045504
        %v2829 = vrot.slane %v2827, 2
        %v2830 = vrot.slane %v2206, 2
        %v2831 = vsel %vm2828, %v2829, %v2830
        %v2832 = vrot.slane %v2207, 2
        %v2833 = vsel %vm2828, %v2830, %v2832
        %v2834 = vrot.slane %v2208, 2
        %v2835 = vsel %vm2828, %v2832, %v2834
        %v2836 = vrot.slane %v2209, 2
        %v2837 = vsel %vm2828, %v2834, %v2836
        %v2838 = vrot.slane %v2210, 2
        %v2839 = vsel %vm2828, %v2836, %v2838
        %v2840 = vrot.slane %v2211, 2
        %v2841 = vsel %vm2828, %v2838, %v2840
        %v2842 = vrot.slane %v2212, 2
        %v2843 = vsel %vm2828, %v2840, %v2842
        %v2844 = vrot.slane %v2213, 2
        %v2845 = vsel %vm2828, %v2842, %v2844
        %v2846 = vrot.slane %v2214, 2
        %v2847 = vsel %vm2828, %v2844, %v2846
        %v2848 = vrot.slane %v2215, 2
        %v2849 = vsel %vm2828, %v2846, %v2848
        %v2850 = vrot.slane %v2216, 2
        %v2851 = vsel %vm2828, %v2848, %v2850
        %v2852 = vrot.slane %v2217, 2
        %v2853 = vsel %vm2828, %v2850, %v2852
        %v2854 = vrot.slane %v2218, 2
        %v2855 = vsel %vm2828, %v2852, %v2854
        %v2856 = vrot.slane %v2219, 2
        %v2857 = vsel %vm2828, %v2854, %v2856
        %v2858 = vrot.slane %v2220, 2
        %v2859 = vsel %vm2828, %v2856, %v2858
        %v2860 = vrot.slane %v2221, 2
        %v2861 = vsel %vm2828, %v2858, %v2860
        %v2862 = vrot.slane %v2222, 2
        %v2863 = vsel %vm2828, %v2860, %v2862
        %v2864 = vrot.slane %v2458, 2
        %v2865 = vsel %vm2828, %v2862, %v2864
        %v2867 = vsel %vm1560, %v2831, 0
        %v2870 = vsel %vm1560, %v2833, 0
        %v2873 = vsel %vm1560, %v2835, 0
        %v2876 = vsel %vm1560, %v2837, 0
        %v2879 = vsel %vm1560, %v2839, 0
        %v2882 = vsel %vm1560, %v2841, 0
        %v2885 = vsel %vm1560, %v2843, 0
        %v2888 = vsel %vm1560, %v2845, 0
        %v2891 = vsel %vm1560, %v2847, 0
        %v2894 = vsel %vm1560, %v2849, 0
        %v2897 = vsel %vm1560, %v2851, 0
        %v2900 = vsel %vm1560, %v2853, 0
        %v2903 = vsel %vm1560, %v2855, 0
        %v2906 = vsel %vm1560, %v2857, 0
        %v2909 = vsel %vm1560, %v2859, 0
        %v2912 = vsel %vm1560, %v2861, 0
        %v2915 = vsel %vm1560, %v2863, 0
        %v2918 = vsel %vm1560, %v2865, 0
        %v2921 = vsel %vm1615, %v2824, 0
        %2923 = vmatpush.bf16.msra.mxu0 0
        %2924 = vmatpush.bf16.msra.mxu0 0
        %2925 = vmatpush.bf16.msra.mxu0 0
        %2926 = vmatpush.bf16.msra.mxu0 0
        %2927 = vmatpush.bf16.msra.mxu0 0
        %2928 = vmatpush.bf16.msra.mxu0 0
        %2929 = vmatpush.bf16.msra.mxu0 0
        %2930 = vmatpush.bf16.msra.mxu0 %v2921
        %2931 = vmatmul.bf16.gmra.mxu0 %v2867
        %v2932 = vpop.f32.mrf.mxu0
        %v2933 = vadd.f32 0.0, %v2932
        %v2934 = vpop.f32.mrf.mxu0
        %v2935 = vadd.f32 0.0, %v2934
        %2936 = vmatmul.bf16.gmra.mxu0 %v2870
        %v2937 = vpop.f32.mrf.mxu0
        %v2938 = vadd.f32 0.0, %v2937
        %v2939 = vpop.f32.mrf.mxu0
        %v2940 = vadd.f32 0.0, %v2939
        %2941 = vmatmul.bf16.gmra.mxu0 %v2873
        %v2942 = vpop.f32.mrf.mxu0
        %v2943 = vadd.f32 0.0, %v2942
        %v2944 = vpop.f32.mrf.mxu0
        %v2945 = vadd.f32 0.0, %v2944
        %2946 = vmatmul.bf16.gmra.mxu0 %v2876
        %v2947 = vpop.f32.mrf.mxu0
        %v2948 = vadd.f32 0.0, %v2947
        %v2949 = vpop.f32.mrf.mxu0
        %v2950 = vadd.f32 0.0, %v2949
        %2951 = vmatmul.bf16.gmra.mxu0 %v2879
        %v2952 = vpop.f32.mrf.mxu0
        %v2953 = vadd.f32 0.0, %v2952
        %v2954 = vpop.f32.mrf.mxu0
        %v2955 = vadd.f32 0.0, %v2954
        %2956 = vmatmul.bf16.gmra.mxu0 %v2882
        %v2957 = vpop.f32.mrf.mxu0
        %v2958 = vadd.f32 0.0, %v2957
        %v2959 = vpop.f32.mrf.mxu0
        %v2960 = vadd.f32 0.0, %v2959
        %2961 = vmatmul.bf16.gmra.mxu0 %v2885
        %v2962 = vpop.f32.mrf.mxu0
        %v2963 = vadd.f32 0.0, %v2962
        %v2964 = vpop.f32.mrf.mxu0
        %v2965 = vadd.f32 0.0, %v2964
        %2966 = vmatmul.bf16.gmra.mxu0 %v2888
        %v2967 = vpop.f32.mrf.mxu0
        %v2968 = vadd.f32 0.0, %v2967
        %v2969 = vpop.f32.mrf.mxu0
        %v2970 = vadd.f32 0.0, %v2969
        %2971 = vmatmul.bf16.gmra.mxu0 %v2891
        %v2972 = vpop.f32.mrf.mxu0
        %v2973 = vadd.f32 0.0, %v2972
        %v2974 = vpop.f32.mrf.mxu0
        %v2975 = vadd.f32 0.0, %v2974
        %2976 = vmatmul.bf16.gmra.mxu0 %v2894
        %v2977 = vpop.f32.mrf.mxu0
        %v2978 = vadd.f32 0.0, %v2977
        %v2979 = vpop.f32.mrf.mxu0
        %v2980 = vadd.f32 0.0, %v2979
        %2981 = vmatmul.bf16.gmra.mxu0 %v2897
        %v2982 = vpop.f32.mrf.mxu0
        %v2983 = vadd.f32 0.0, %v2982
        %v2984 = vpop.f32.mrf.mxu0
        %v2985 = vadd.f32 0.0, %v2984
        %2986 = vmatmul.bf16.gmra.mxu0 %v2900
        %v2987 = vpop.f32.mrf.mxu0
        %v2988 = vadd.f32 0.0, %v2987
        %v2989 = vpop.f32.mrf.mxu0
        %v2990 = vadd.f32 0.0, %v2989
        %2991 = vmatmul.bf16.gmra.mxu0 %v2903
        %v2992 = vpop.f32.mrf.mxu0
        %v2993 = vadd.f32 0.0, %v2992
        %v2994 = vpop.f32.mrf.mxu0
        %v2995 = vadd.f32 0.0, %v2994
        %2996 = vmatmul.bf16.gmra.mxu0 %v2906
        %v2997 = vpop.f32.mrf.mxu0
        %v2998 = vadd.f32 0.0, %v2997
        %v2999 = vpop.f32.mrf.mxu0
        %v3000 = vadd.f32 0.0, %v2999
        %3001 = vmatmul.bf16.gmra.mxu0 %v2909
        %v3002 = vpop.f32.mrf.mxu0
        %v3003 = vadd.f32 0.0, %v3002
        %v3004 = vpop.f32.mrf.mxu0
        %v3005 = vadd.f32 0.0, %v3004
        %3006 = vmatmul.bf16.gmra.mxu0 %v2912
        %v3007 = vpop.f32.mrf.mxu0
        %v3008 = vadd.f32 0.0, %v3007
        %v3009 = vpop.f32.mrf.mxu0
        %v3010 = vadd.f32 0.0, %v3009
        %3011 = vmatmul.bf16.gmra.mxu0 %v2915
        %v3012 = vpop.f32.mrf.mxu0
        %v3013 = vadd.f32 0.0, %v3012
        %v3014 = vpop.f32.mrf.mxu0
        %v3015 = vadd.f32 0.0, %v3014
        %3016 = vmatmul.bf16.gmra.mxu0 %v2918
        %v3017 = vpop.f32.mrf.mxu0
        %v3018 = vadd.f32 0.0, %v3017
        %v3019 = vpop.f32.mrf.mxu0
        %v3020 = vadd.f32 0.0, %v3019
        %3021 = vdwg.mxu0
        %v3022 = vadd.f32 %v2786, %v2933
        %v3023 = vadd.f32 %v2787, %v2935
        %v3024 = vadd.f32 %v2788, %v2938
        %v3025 = vadd.f32 %v2789, %v2940
        %v3026 = vadd.f32 %v2790, %v2943
        %v3027 = vadd.f32 %v2791, %v2945
        %v3028 = vadd.f32 %v2792, %v2948
        %v3029 = vadd.f32 %v2793, %v2950
        %v3030 = vadd.f32 %v2794, %v2953
        %v3031 = vadd.f32 %v2795, %v2955
        %v3032 = vadd.f32 %v2796, %v2958
        %v3033 = vadd.f32 %v2797, %v2960
        %v3034 = vadd.f32 %v2798, %v2963
        %v3035 = vadd.f32 %v2799, %v2965
        %v3036 = vadd.f32 %v2800, %v2968
        %v3037 = vadd.f32 %v2801, %v2970
        %v3038 = vadd.f32 %v2802, %v2973
        %v3039 = vadd.f32 %v2803, %v2975
        %v3040 = vadd.f32 %v2804, %v2978
        %v3041 = vadd.f32 %v2805, %v2980
        %v3042 = vadd.f32 %v2806, %v2983
        %v3043 = vadd.f32 %v2807, %v2985
        %v3044 = vadd.f32 %v2808, %v2988
        %v3045 = vadd.f32 %v2809, %v2990
        %v3046 = vadd.f32 %v2810, %v2993
        %v3047 = vadd.f32 %v2811, %v2995
        %v3048 = vadd.f32 %v2812, %v2998
        %v3049 = vadd.f32 %v2813, %v3000
        %v3050 = vadd.f32 %v2814, %v3003
        %v3051 = vadd.f32 %v2815, %v3005
        %v3052 = vadd.f32 %v2816, %v3008
        %v3053 = vadd.f32 %v2817, %v3010
        %v3054 = vadd.f32 %v2818, %v3013
        %v3055 = vadd.f32 %v2819, %v3015
        %v3056 = vadd.f32 %v2820, %v3018
        %v3057 = vadd.f32 %v2821, %v3020
        %v3058 = vld [vmem:[#allocation2 + $0x10] sm:$0xc]
        %v3059 = vld [vmem:[#allocation2 + $0x14] sm:$0xf]
        %v3060 = vld [vmem:[#allocation2 + $0x18] sm:$0xf]
        %v3061 = vld [vmem:[#allocation2 + $0x1c] sm:$0xf]
        %v3062 = vld [vmem:[#allocation2 + $0x20] sm:$0xf]
        %v3063 = vld [vmem:[#allocation2 + $0x24] sm:$0xf]
        %v3064 = vld [vmem:[#allocation2 + $0x28] sm:$0xf]
        %v3065 = vld [vmem:[#allocation2 + $0x2c] sm:$0xf]
        %v3066 = vld [vmem:[#allocation2 + $0x30] sm:$0xf]
        %v3067 = vld [vmem:[#allocation2 + $0x34] sm:$0xf]
        %v3068 = vld [vmem:[#allocation2 + $0x38] sm:$0xf]
        %v3069 = vld [vmem:[#allocation2 + $0x3c] sm:$0xf]
        %v3070 = vld [vmem:[#allocation2 + $0x40] sm:$0xf]
        %v3071 = vld [vmem:[#allocation2 + $0x44] sm:$0xf]
        %v3072 = vld [vmem:[#allocation2 + $0x48] sm:$0xf]
        %v3073 = vld [vmem:[#allocation2 + $0x4c] sm:$0xf]
        %v3074 = vld [vmem:[#allocation2 + $0x50] sm:$0xf]
        %v3075 = vld [vmem:[#allocation2 + $0x54] sm:$0xf]
        %v3076 = vld [vmem:[#allocation2 + $0x58] sm:$0xf]
        %v3077 = vld [vmem:[#allocation2 + $0x5c] sm:$0xf]
        %v3078 = vld [vmem:[#allocation2 + $0x60] sm:$0xf]
        %v3079 = vld [vmem:[#allocation2 + $0x64] sm:$0xf]
        %v3080 = vld [vmem:[#allocation2 + $0x68] sm:$0xf]
        %v3081 = vld [vmem:[#allocation2 + $0x6c] sm:$0xf]
        %v3082 = vld [vmem:[#allocation2 + $0x70] sm:$0xf]
        %v3083 = vld [vmem:[#allocation2 + $0x74] sm:$0xf]
        %v3084 = vld [vmem:[#allocation2 + $0x78] sm:$0xf]
        %v3085 = vld [vmem:[#allocation2 + $0x7c] sm:$0xf]
        %v3086 = vld [vmem:[#allocation2 + $0x80] sm:$0xf]
        %v3087 = vld [vmem:[#allocation2 + $0x84] sm:$0xf]
        %v3088 = vld [vmem:[#allocation2 + $0x88] sm:$0xf]
        %v3089 = vld [vmem:[#allocation2 + $0x8c] sm:$0xf]
        %v3090 = vld [vmem:[#allocation2 + $0x90] sm:$0xf]
        %v3091 = vld [vmem:[#allocation2 + $0x94] sm:$0xf]
        %v3092 = vld [vmem:[#allocation2 + $0x98] sm:$0xf]
        %v3093 = vld [vmem:[#allocation2 + $0x9c] sm:$0xf]
        %v3094 = vld [vmem:[#allocation2 + $0xa0] sm:$0x3]
        %s3095 = scalar_lea.vmem %s2, 12
        %v3096 = vld [vmem:[%s3095] sm:$0x3]
        %v3134 = vunpack.c.l.b16 %v3058
        %v3135 = vunpack.c.l.b16 %v3059
        %v3136 = vunpack.c.l.b16 %v3060
        %v3137 = vunpack.c.l.b16 %v3061
        %v3138 = vunpack.c.l.b16 %v3062
        %v3139 = vunpack.c.l.b16 %v3063
        %v3140 = vunpack.c.l.b16 %v3064
        %v3141 = vunpack.c.l.b16 %v3065
        %v3142 = vunpack.c.l.b16 %v3066
        %v3143 = vunpack.c.l.b16 %v3067
        %v3144 = vunpack.c.l.b16 %v3068
        %v3145 = vunpack.c.l.b16 %v3069
        %v3146 = vunpack.c.l.b16 %v3070
        %v3147 = vunpack.c.l.b16 %v3071
        %v3148 = vunpack.c.l.b16 %v3072
        %v3149 = vunpack.c.l.b16 %v3073
        %v3150 = vunpack.c.l.b16 %v3074
        %v3151 = vunpack.c.l.b16 %v3075
        %v3152 = vunpack.c.l.b16 %v3076
        %v3153 = vunpack.c.l.b16 %v3077
        %v3154 = vunpack.c.l.b16 %v3078
        %v3155 = vunpack.c.l.b16 %v3079
        %v3156 = vunpack.c.l.b16 %v3080
        %v3157 = vunpack.c.l.b16 %v3081
        %v3158 = vunpack.c.l.b16 %v3082
        %v3159 = vunpack.c.l.b16 %v3083
        %v3160 = vunpack.c.l.b16 %v3084
        %v3161 = vunpack.c.l.b16 %v3085
        %v3162 = vunpack.c.l.b16 %v3086
        %v3163 = vunpack.c.l.b16 %v3087
        %v3164 = vunpack.c.l.b16 %v3088
        %v3165 = vunpack.c.l.b16 %v3089
        %v3166 = vunpack.c.l.b16 %v3090
        %v3167 = vunpack.c.l.b16 %v3091
        %v3168 = vunpack.c.l.b16 %v3092
        %v3169 = vunpack.c.l.b16 %v3093
        %v3170 = vunpack.c.l.b16 %v3094
        %v3171 = vpack.c.b16 %v3135, %v3134
        %v3172 = vpack.c.b16 %v3137, %v3136
        %v3173 = vpack.c.b16 %v3139, %v3138
        %v3174 = vpack.c.b16 %v3141, %v3140
        %v3175 = vpack.c.b16 %v3143, %v3142
        %v3176 = vpack.c.b16 %v3145, %v3144
        %v3177 = vpack.c.b16 %v3147, %v3146
        %v3178 = vpack.c.b16 %v3149, %v3148
        %v3179 = vpack.c.b16 %v3151, %v3150
        %v3180 = vpack.c.b16 %v3153, %v3152
        %v3181 = vpack.c.b16 %v3155, %v3154
        %v3182 = vpack.c.b16 %v3157, %v3156
        %v3183 = vpack.c.b16 %v3159, %v3158
        %v3184 = vpack.c.b16 %v3161, %v3160
        %v3185 = vpack.c.b16 %v3163, %v3162
        %v3186 = vpack.c.b16 %v3165, %v3164
        %v3187 = vpack.c.b16 %v3167, %v3166
        %v3188 = vpack.c.b16 %v3169, %v3168
        %v3189 = vpack.c.b16 %v3170, %v3170
        %v3190 = vrot.slane %v3171, 2
        %v3191 = vrot.slane %v3172, 2
        %v3192 = vsel %vm2828, %v3190, %v3191
        %v3193 = vrot.slane %v3173, 2
        %v3194 = vsel %vm2828, %v3191, %v3193
        %v3195 = vrot.slane %v3174, 2
        %v3196 = vsel %vm2828, %v3193, %v3195
        %v3197 = vrot.slane %v3175, 2
        %v3198 = vsel %vm2828, %v3195, %v3197
        %v3199 = vrot.slane %v3176, 2
        %v3200 = vsel %vm2828, %v3197, %v3199
        %v3201 = vrot.slane %v3177, 2
        %v3202 = vsel %vm2828, %v3199, %v3201
        %v3203 = vrot.slane %v3178, 2
        %v3204 = vsel %vm2828, %v3201, %v3203
        %v3205 = vrot.slane %v3179, 2
        %v3206 = vsel %vm2828, %v3203, %v3205
        %v3207 = vrot.slane %v3180, 2
        %v3208 = vsel %vm2828, %v3205, %v3207
        %v3209 = vrot.slane %v3181, 2
        %v3210 = vsel %vm2828, %v3207, %v3209
        %v3211 = vrot.slane %v3182, 2
        %v3212 = vsel %vm2828, %v3209, %v3211
        %v3213 = vrot.slane %v3183, 2
        %v3214 = vsel %vm2828, %v3211, %v3213
        %v3215 = vrot.slane %v3184, 2
        %v3216 = vsel %vm2828, %v3213, %v3215
        %v3217 = vrot.slane %v3185, 2
        %v3218 = vsel %vm2828, %v3215, %v3217
        %v3219 = vrot.slane %v3186, 2
        %v3220 = vsel %vm2828, %v3217, %v3219
        %v3221 = vrot.slane %v3187, 2
        %v3222 = vsel %vm2828, %v3219, %v3221
        %v3223 = vrot.slane %v3188, 2
        %v3224 = vsel %vm2828, %v3221, %v3223
        %v3225 = vrot.slane %v3189, 2
        %v3226 = vsel %vm2828, %v3223, %v3225
        %v3228 = vsel %vm1560, %v3192, 0
        %v3231 = vsel %vm1560, %v3194, 0
        %v3234 = vsel %vm1560, %v3196, 0
        %v3237 = vsel %vm1560, %v3198, 0
        %v3240 = vsel %vm1560, %v3200, 0
        %v3243 = vsel %vm1560, %v3202, 0
        %v3246 = vsel %vm1560, %v3204, 0
        %v3249 = vsel %vm1560, %v3206, 0
        %v3252 = vsel %vm1560, %v3208, 0
        %v3255 = vsel %vm1560, %v3210, 0
        %v3258 = vsel %vm1560, %v3212, 0
        %v3261 = vsel %vm1560, %v3214, 0
        %v3264 = vsel %vm1560, %v3216, 0
        %v3267 = vsel %vm1560, %v3218, 0
        %v3270 = vsel %vm1560, %v3220, 0
        %v3273 = vsel %vm1560, %v3222, 0
        %v3276 = vsel %vm1560, %v3224, 0
        %v3279 = vsel %vm1560, %v3226, 0
        %v3282 = vsel %vm1615, %v3096, 0
        %3284 = vmatpush.bf16.msra.mxu0 0
        %3285 = vmatpush.bf16.msra.mxu0 0
        %3286 = vmatpush.bf16.msra.mxu0 0
        %3287 = vmatpush.bf16.msra.mxu0 0
        %3288 = vmatpush.bf16.msra.mxu0 0
        %3289 = vmatpush.bf16.msra.mxu0 0
        %3290 = vmatpush.bf16.msra.mxu0 0
        %3291 = vmatpush.bf16.msra.mxu0 %v3282
        %3292 = vmatmul.bf16.gmra.mxu0 %v3228
        %v3293 = vpop.f32.mrf.mxu0
        %v3294 = vadd.f32 0.0, %v3293
        %v3295 = vpop.f32.mrf.mxu0
        %v3296 = vadd.f32 0.0, %v3295
        %3297 = vmatmul.bf16.gmra.mxu0 %v3231
        %v3298 = vpop.f32.mrf.mxu0
        %v3299 = vadd.f32 0.0, %v3298
        %v3300 = vpop.f32.mrf.mxu0
        %v3301 = vadd.f32 0.0, %v3300
        %3302 = vmatmul.bf16.gmra.mxu0 %v3234
        %v3303 = vpop.f32.mrf.mxu0
        %v3304 = vadd.f32 0.0, %v3303
        %v3305 = vpop.f32.mrf.mxu0
        %v3306 = vadd.f32 0.0, %v3305
        %3307 = vmatmul.bf16.gmra.mxu0 %v3237
        %v3308 = vpop.f32.mrf.mxu0
        %v3309 = vadd.f32 0.0, %v3308
        %v3310 = vpop.f32.mrf.mxu0
        %v3311 = vadd.f32 0.0, %v3310
        %3312 = vmatmul.bf16.gmra.mxu0 %v3240
        %v3313 = vpop.f32.mrf.mxu0
        %v3314 = vadd.f32 0.0, %v3313
        %v3315 = vpop.f32.mrf.mxu0
        %v3316 = vadd.f32 0.0, %v3315
        %3317 = vmatmul.bf16.gmra.mxu0 %v3243
        %v3318 = vpop.f32.mrf.mxu0
        %v3319 = vadd.f32 0.0, %v3318
        %v3320 = vpop.f32.mrf.mxu0
        %v3321 = vadd.f32 0.0, %v3320
        %3322 = vmatmul.bf16.gmra.mxu0 %v3246
        %v3323 = vpop.f32.mrf.mxu0
        %v3324 = vadd.f32 0.0, %v3323
        %v3325 = vpop.f32.mrf.mxu0
        %v3326 = vadd.f32 0.0, %v3325
        %3327 = vmatmul.bf16.gmra.mxu0 %v3249
        %v3328 = vpop.f32.mrf.mxu0
        %v3329 = vadd.f32 0.0, %v3328
        %v3330 = vpop.f32.mrf.mxu0
        %v3331 = vadd.f32 0.0, %v3330
        %3332 = vmatmul.bf16.gmra.mxu0 %v3252
        %v3333 = vpop.f32.mrf.mxu0
        %v3334 = vadd.f32 0.0, %v3333
        %v3335 = vpop.f32.mrf.mxu0
        %v3336 = vadd.f32 0.0, %v3335
        %3337 = vmatmul.bf16.gmra.mxu0 %v3255
        %v3338 = vpop.f32.mrf.mxu0
        %v3339 = vadd.f32 0.0, %v3338
        %v3340 = vpop.f32.mrf.mxu0
        %v3341 = vadd.f32 0.0, %v3340
        %3342 = vmatmul.bf16.gmra.mxu0 %v3258
        %v3343 = vpop.f32.mrf.mxu0
        %v3344 = vadd.f32 0.0, %v3343
        %v3345 = vpop.f32.mrf.mxu0
        %v3346 = vadd.f32 0.0, %v3345
        %3347 = vmatmul.bf16.gmra.mxu0 %v3261
        %v3348 = vpop.f32.mrf.mxu0
        %v3349 = vadd.f32 0.0, %v3348
        %v3350 = vpop.f32.mrf.mxu0
        %v3351 = vadd.f32 0.0, %v3350
        %3352 = vmatmul.bf16.gmra.mxu0 %v3264
        %v3353 = vpop.f32.mrf.mxu0
        %v3354 = vadd.f32 0.0, %v3353
        %v3355 = vpop.f32.mrf.mxu0
        %v3356 = vadd.f32 0.0, %v3355
        %3357 = vmatmul.bf16.gmra.mxu0 %v3267
        %v3358 = vpop.f32.mrf.mxu0
        %v3359 = vadd.f32 0.0, %v3358
        %v3360 = vpop.f32.mrf.mxu0
        %v3361 = vadd.f32 0.0, %v3360
        %3362 = vmatmul.bf16.gmra.mxu0 %v3270
        %v3363 = vpop.f32.mrf.mxu0
        %v3364 = vadd.f32 0.0, %v3363
        %v3365 = vpop.f32.mrf.mxu0
        %v3366 = vadd.f32 0.0, %v3365
        %3367 = vmatmul.bf16.gmra.mxu0 %v3273
        %v3368 = vpop.f32.mrf.mxu0
        %v3369 = vadd.f32 0.0, %v3368
        %v3370 = vpop.f32.mrf.mxu0
        %v3371 = vadd.f32 0.0, %v3370
        %3372 = vmatmul.bf16.gmra.mxu0 %v3276
        %v3373 = vpop.f32.mrf.mxu0
        %v3374 = vadd.f32 0.0, %v3373
        %v3375 = vpop.f32.mrf.mxu0
        %v3376 = vadd.f32 0.0, %v3375
        %3377 = vmatmul.bf16.gmra.mxu0 %v3279
        %v3378 = vpop.f32.mrf.mxu0
        %v3379 = vadd.f32 0.0, %v3378
        %v3380 = vpop.f32.mrf.mxu0
        %v3381 = vadd.f32 0.0, %v3380
        %3382 = vdwg.mxu0
        %v3383 = vadd.f32 %v3022, %v3294
        %v3384 = vadd.f32 %v3023, %v3296
        %v3385 = vadd.f32 %v3024, %v3299
        %v3386 = vadd.f32 %v3025, %v3301
        %v3387 = vadd.f32 %v3026, %v3304
        %v3388 = vadd.f32 %v3027, %v3306
        %v3389 = vadd.f32 %v3028, %v3309
        %v3390 = vadd.f32 %v3029, %v3311
        %v3391 = vadd.f32 %v3030, %v3314
        %v3392 = vadd.f32 %v3031, %v3316
        %v3393 = vadd.f32 %v3032, %v3319
        %v3394 = vadd.f32 %v3033, %v3321
        %v3395 = vadd.f32 %v3034, %v3324
        %v3396 = vadd.f32 %v3035, %v3326
        %v3397 = vadd.f32 %v3036, %v3329
        %v3398 = vadd.f32 %v3037, %v3331
        %v3399 = vadd.f32 %v3038, %v3334
        %v3400 = vadd.f32 %v3039, %v3336
        %v3401 = vadd.f32 %v3040, %v3339
        %v3402 = vadd.f32 %v3041, %v3341
        %v3403 = vadd.f32 %v3042, %v3344
        %v3404 = vadd.f32 %v3043, %v3346
        %v3405 = vadd.f32 %v3044, %v3349
        %v3406 = vadd.f32 %v3045, %v3351
        %v3407 = vadd.f32 %v3046, %v3354
        %v3408 = vadd.f32 %v3047, %v3356
        %v3409 = vadd.f32 %v3048, %v3359
        %v3410 = vadd.f32 %v3049, %v3361
        %v3411 = vadd.f32 %v3050, %v3364
        %v3412 = vadd.f32 %v3051, %v3366
        %v3413 = vadd.f32 %v3052, %v3369
        %v3414 = vadd.f32 %v3053, %v3371
        %v3415 = vadd.f32 %v3054, %v3374
        %v3416 = vadd.f32 %v3055, %v3376
        %v3417 = vadd.f32 %v3056, %v3379
        %v3418 = vadd.f32 %v3057, %v3381
        %v3419 = vld [vmem:[#allocation2 + $0xa0] sm:$0x7]
        %s3420 = scalar_lea.vmem %s2, 14
        %v3421 = vld [vmem:[%s3420] sm:$0x3]
        %v3423 = vunpack.c.l.b16 %v3419
        %v3424 = vpack.c.b16 %v3423, %v3423
        %vm3425 = vsmask.f32 5376
        %v3427 = vshrl.u32 %v3171, 16
        %v3429 = vrot.slane %v3427, 2
        %v3430 = vshll.u32 %v3171, 16
        %v3432 = vrot.slane %v3430, 3
        %v3433 = vor.u32 %v3429, %v3432
        %v3435 = vshrl.u32 %v3172, 16
        %v3437 = vrot.slane %v3435, 2
        %v3438 = vshll.u32 %v3172, 16
        %v3440 = vrot.slane %v3438, 3
        %v3441 = vor.u32 %v3437, %v3440
        %v3442 = vsel %vm3425, %v3433, %v3441
        %v3444 = vshrl.u32 %v3173, 16
        %v3446 = vrot.slane %v3444, 2
        %v3447 = vshll.u32 %v3173, 16
        %v3449 = vrot.slane %v3447, 3
        %v3450 = vor.u32 %v3446, %v3449
        %v3451 = vsel %vm3425, %v3441, %v3450
        %v3453 = vshrl.u32 %v3174, 16
        %v3455 = vrot.slane %v3453, 2
        %v3456 = vshll.u32 %v3174, 16
        %v3458 = vrot.slane %v3456, 3
        %v3459 = vor.u32 %v3455, %v3458
        %v3460 = vsel %vm3425, %v3450, %v3459
        %v3462 = vshrl.u32 %v3175, 16
        %v3464 = vrot.slane %v3462, 2
        %v3465 = vshll.u32 %v3175, 16
        %v3467 = vrot.slane %v3465, 3
        %v3468 = vor.u32 %v3464, %v3467
        %v3469 = vsel %vm3425, %v3459, %v3468
        %v3471 = vshrl.u32 %v3176, 16
        %v3473 = vrot.slane %v3471, 2
        %v3474 = vshll.u32 %v3176, 16
        %v3476 = vrot.slane %v3474, 3
        %v3477 = vor.u32 %v3473, %v3476
        %v3478 = vsel %vm3425, %v3468, %v3477
        %v3480 = vshrl.u32 %v3177, 16
        %v3482 = vrot.slane %v3480, 2
        %v3483 = vshll.u32 %v3177, 16
        %v3485 = vrot.slane %v3483, 3
        %v3486 = vor.u32 %v3482, %v3485
        %v3487 = vsel %vm3425, %v3477, %v3486
        %v3489 = vshrl.u32 %v3178, 16
        %v3491 = vrot.slane %v3489, 2
        %v3492 = vshll.u32 %v3178, 16
        %v3494 = vrot.slane %v3492, 3
        %v3495 = vor.u32 %v3491, %v3494
        %v3496 = vsel %vm3425, %v3486, %v3495
        %v3498 = vshrl.u32 %v3179, 16
        %v3500 = vrot.slane %v3498, 2
        %v3501 = vshll.u32 %v3179, 16
        %v3503 = vrot.slane %v3501, 3
        %v3504 = vor.u32 %v3500, %v3503
        %v3505 = vsel %vm3425, %v3495, %v3504
        %v3507 = vshrl.u32 %v3180, 16
        %v3509 = vrot.slane %v3507, 2
        %v3510 = vshll.u32 %v3180, 16
        %v3512 = vrot.slane %v3510, 3
        %v3513 = vor.u32 %v3509, %v3512
        %v3514 = vsel %vm3425, %v3504, %v3513
        %v3516 = vshrl.u32 %v3181, 16
        %v3518 = vrot.slane %v3516, 2
        %v3519 = vshll.u32 %v3181, 16
        %v3521 = vrot.slane %v3519, 3
        %v3522 = vor.u32 %v3518, %v3521
        %v3523 = vsel %vm3425, %v3513, %v3522
        %v3525 = vshrl.u32 %v3182, 16
        %v3527 = vrot.slane %v3525, 2
        %v3528 = vshll.u32 %v3182, 16
        %v3530 = vrot.slane %v3528, 3
        %v3531 = vor.u32 %v3527, %v3530
        %v3532 = vsel %vm3425, %v3522, %v3531
        %v3534 = vshrl.u32 %v3183, 16
        %v3536 = vrot.slane %v3534, 2
        %v3537 = vshll.u32 %v3183, 16
        %v3539 = vrot.slane %v3537, 3
        %v3540 = vor.u32 %v3536, %v3539
        %v3541 = vsel %vm3425, %v3531, %v3540
        %v3543 = vshrl.u32 %v3184, 16
        %v3545 = vrot.slane %v3543, 2
        %v3546 = vshll.u32 %v3184, 16
        %v3548 = vrot.slane %v3546, 3
        %v3549 = vor.u32 %v3545, %v3548
        %v3550 = vsel %vm3425, %v3540, %v3549
        %v3552 = vshrl.u32 %v3185, 16
        %v3554 = vrot.slane %v3552, 2
        %v3555 = vshll.u32 %v3185, 16
        %v3557 = vrot.slane %v3555, 3
        %v3558 = vor.u32 %v3554, %v3557
        %v3559 = vsel %vm3425, %v3549, %v3558
        %v3561 = vshrl.u32 %v3186, 16
        %v3563 = vrot.slane %v3561, 2
        %v3564 = vshll.u32 %v3186, 16
        %v3566 = vrot.slane %v3564, 3
        %v3567 = vor.u32 %v3563, %v3566
        %v3568 = vsel %vm3425, %v3558, %v3567
        %v3570 = vshrl.u32 %v3187, 16
        %v3572 = vrot.slane %v3570, 2
        %v3573 = vshll.u32 %v3187, 16
        %v3575 = vrot.slane %v3573, 3
        %v3576 = vor.u32 %v3572, %v3575
        %v3577 = vsel %vm3425, %v3567, %v3576
        %v3579 = vshrl.u32 %v3188, 16
        %v3581 = vrot.slane %v3579, 2
        %v3582 = vshll.u32 %v3188, 16
        %v3584 = vrot.slane %v3582, 3
        %v3585 = vor.u32 %v3581, %v3584
        %v3586 = vsel %vm3425, %v3576, %v3585
        %v3588 = vshrl.u32 %v3424, 16
        %v3590 = vrot.slane %v3588, 2
        %v3591 = vshll.u32 %v3424, 16
        %v3593 = vrot.slane %v3591, 3
        %v3594 = vor.u32 %v3590, %v3593
        %v3595 = vsel %vm3425, %v3585, %v3594
        %v3597 = vsel %vm1560, %v3442, 0
        %v3600 = vsel %vm1560, %v3451, 0
        %v3603 = vsel %vm1560, %v3460, 0
        %v3606 = vsel %vm1560, %v3469, 0
        %v3609 = vsel %vm1560, %v3478, 0
        %v3612 = vsel %vm1560, %v3487, 0
        %v3615 = vsel %vm1560, %v3496, 0
        %v3618 = vsel %vm1560, %v3505, 0
        %v3621 = vsel %vm1560, %v3514, 0
        %v3624 = vsel %vm1560, %v3523, 0
        %v3627 = vsel %vm1560, %v3532, 0
        %v3630 = vsel %vm1560, %v3541, 0
        %v3633 = vsel %vm1560, %v3550, 0
        %v3636 = vsel %vm1560, %v3559, 0
        %v3639 = vsel %vm1560, %v3568, 0
        %v3642 = vsel %vm1560, %v3577, 0
        %v3645 = vsel %vm1560, %v3586, 0
        %v3648 = vsel %vm1560, %v3595, 0
        %v3651 = vsel %vm1615, %v3421, 0
        %3653 = vmatpush.bf16.msra.mxu0 0
        %3654 = vmatpush.bf16.msra.mxu0 0
        %3655 = vmatpush.bf16.msra.mxu0 0
        %3656 = vmatpush.bf16.msra.mxu0 0
        %3657 = vmatpush.bf16.msra.mxu0 0
        %3658 = vmatpush.bf16.msra.mxu0 0
        %3659 = vmatpush.bf16.msra.mxu0 0
        %3660 = vmatpush.bf16.msra.mxu0 %v3651
        %3661 = vmatmul.bf16.gmra.mxu0 %v3597
        %v3662 = vpop.f32.mrf.mxu0
        %v3663 = vadd.f32 0.0, %v3662
        %v3664 = vpop.f32.mrf.mxu0
        %v3665 = vadd.f32 0.0, %v3664
        %3666 = vmatmul.bf16.gmra.mxu0 %v3600
        %v3667 = vpop.f32.mrf.mxu0
        %v3668 = vadd.f32 0.0, %v3667
        %v3669 = vpop.f32.mrf.mxu0
        %v3670 = vadd.f32 0.0, %v3669
        %3671 = vmatmul.bf16.gmra.mxu0 %v3603
        %v3672 = vpop.f32.mrf.mxu0
        %v3673 = vadd.f32 0.0, %v3672
        %v3674 = vpop.f32.mrf.mxu0
        %v3675 = vadd.f32 0.0, %v3674
        %3676 = vmatmul.bf16.gmra.mxu0 %v3606
        %v3677 = vpop.f32.mrf.mxu0
        %v3678 = vadd.f32 0.0, %v3677
        %v3679 = vpop.f32.mrf.mxu0
        %v3680 = vadd.f32 0.0, %v3679
        %3681 = vmatmul.bf16.gmra.mxu0 %v3609
        %v3682 = vpop.f32.mrf.mxu0
        %v3683 = vadd.f32 0.0, %v3682
        %v3684 = vpop.f32.mrf.mxu0
        %v3685 = vadd.f32 0.0, %v3684
        %3686 = vmatmul.bf16.gmra.mxu0 %v3612
        %v3687 = vpop.f32.mrf.mxu0
        %v3688 = vadd.f32 0.0, %v3687
        %v3689 = vpop.f32.mrf.mxu0
        %v3690 = vadd.f32 0.0, %v3689
        %3691 = vmatmul.bf16.gmra.mxu0 %v3615
        %v3692 = vpop.f32.mrf.mxu0
        %v3693 = vadd.f32 0.0, %v3692
        %v3694 = vpop.f32.mrf.mxu0
        %v3695 = vadd.f32 0.0, %v3694
        %3696 = vmatmul.bf16.gmra.mxu0 %v3618
        %v3697 = vpop.f32.mrf.mxu0
        %v3698 = vadd.f32 0.0, %v3697
        %v3699 = vpop.f32.mrf.mxu0
        %v3700 = vadd.f32 0.0, %v3699
        %3701 = vmatmul.bf16.gmra.mxu0 %v3621
        %v3702 = vpop.f32.mrf.mxu0
        %v3703 = vadd.f32 0.0, %v3702
        %v3704 = vpop.f32.mrf.mxu0
        %v3705 = vadd.f32 0.0, %v3704
        %3706 = vmatmul.bf16.gmra.mxu0 %v3624
        %v3707 = vpop.f32.mrf.mxu0
        %v3708 = vadd.f32 0.0, %v3707
        %v3709 = vpop.f32.mrf.mxu0
        %v3710 = vadd.f32 0.0, %v3709
        %3711 = vmatmul.bf16.gmra.mxu0 %v3627
        %v3712 = vpop.f32.mrf.mxu0
        %v3713 = vadd.f32 0.0, %v3712
        %v3714 = vpop.f32.mrf.mxu0
        %v3715 = vadd.f32 0.0, %v3714
        %3716 = vmatmul.bf16.gmra.mxu0 %v3630
        %v3717 = vpop.f32.mrf.mxu0
        %v3718 = vadd.f32 0.0, %v3717
        %v3719 = vpop.f32.mrf.mxu0
        %v3720 = vadd.f32 0.0, %v3719
        %3721 = vmatmul.bf16.gmra.mxu0 %v3633
        %v3722 = vpop.f32.mrf.mxu0
        %v3723 = vadd.f32 0.0, %v3722
        %v3724 = vpop.f32.mrf.mxu0
        %v3725 = vadd.f32 0.0, %v3724
        %3726 = vmatmul.bf16.gmra.mxu0 %v3636
        %v3727 = vpop.f32.mrf.mxu0
        %v3728 = vadd.f32 0.0, %v3727
        %v3729 = vpop.f32.mrf.mxu0
        %v3730 = vadd.f32 0.0, %v3729
        %3731 = vmatmul.bf16.gmra.mxu0 %v3639
        %v3732 = vpop.f32.mrf.mxu0
        %v3733 = vadd.f32 0.0, %v3732
        %v3734 = vpop.f32.mrf.mxu0
        %v3735 = vadd.f32 0.0, %v3734
        %3736 = vmatmul.bf16.gmra.mxu0 %v3642
        %v3737 = vpop.f32.mrf.mxu0
        %v3738 = vadd.f32 0.0, %v3737
        %v3739 = vpop.f32.mrf.mxu0
        %v3740 = vadd.f32 0.0, %v3739
        %3741 = vmatmul.bf16.gmra.mxu0 %v3645
        %v3742 = vpop.f32.mrf.mxu0
        %v3743 = vadd.f32 0.0, %v3742
        %v3744 = vpop.f32.mrf.mxu0
        %v3745 = vadd.f32 0.0, %v3744
        %3746 = vmatmul.bf16.gmra.mxu0 %v3648
        %v3747 = vpop.f32.mrf.mxu0
        %v3748 = vadd.f32 0.0, %v3747
        %v3749 = vpop.f32.mrf.mxu0
        %v3750 = vadd.f32 0.0, %v3749
        %3751 = vdwg.mxu0
        %v3752 = vadd.f32 %v3383, %v3663
        %v3753 = vadd.f32 %v3384, %v3665
        %v3754 = vadd.f32 %v3385, %v3668
        %v3755 = vadd.f32 %v3386, %v3670
        %v3756 = vadd.f32 %v3387, %v3673
        %v3757 = vadd.f32 %v3388, %v3675
        %v3758 = vadd.f32 %v3389, %v3678
        %v3759 = vadd.f32 %v3390, %v3680
        %v3760 = vadd.f32 %v3391, %v3683
        %v3761 = vadd.f32 %v3392, %v3685
        %v3762 = vadd.f32 %v3393, %v3688
        %v3763 = vadd.f32 %v3394, %v3690
        %v3764 = vadd.f32 %v3395, %v3693
        %v3765 = vadd.f32 %v3396, %v3695
        %v3766 = vadd.f32 %v3397, %v3698
        %v3767 = vadd.f32 %v3398, %v3700
        %v3768 = vadd.f32 %v3399, %v3703
        %v3769 = vadd.f32 %v3400, %v3705
        %v3770 = vadd.f32 %v3401, %v3708
        %v3771 = vadd.f32 %v3402, %v3710
        %v3772 = vadd.f32 %v3403, %v3713
        %v3773 = vadd.f32 %v3404, %v3715
        %v3774 = vadd.f32 %v3405, %v3718
        %v3775 = vadd.f32 %v3406, %v3720
        %v3776 = vadd.f32 %v3407, %v3723
        %v3777 = vadd.f32 %v3408, %v3725
        %v3778 = vadd.f32 %v3409, %v3728
        %v3779 = vadd.f32 %v3410, %v3730
        %v3780 = vadd.f32 %v3411, %v3733
        %v3781 = vadd.f32 %v3412, %v3735
        %v3782 = vadd.f32 %v3413, %v3738
        %v3783 = vadd.f32 %v3414, %v3740
        %v3784 = vadd.f32 %v3415, %v3743
        %v3785 = vadd.f32 %v3416, %v3745
        %v3786 = vadd.f32 %v3417, %v3748
        %v3787 = vadd.f32 %v3418, %v3750
        %v3788 = vld [vmem:[#allocation2 + $0x10] sm:$0x8]
        %s3789 = scalar_lea.vmem %s2, 16
        %v3790 = vld [vmem:[%s3789] sm:$0x3]
        %v3792 = vunpack.c.l.b16 %v3788
        %v3793 = vpack.c.b16 %v3135, %v3792
        %vm3794 = vcmask 1044480
        %v3795 = vrot.slane %v3793, 3
        %v3796 = vrot.slane %v3172, 3
        %v3797 = vsel %vm3794, %v3795, %v3796
        %v3798 = vrot.slane %v3173, 3
        %v3799 = vsel %vm3794, %v3796, %v3798
        %v3800 = vrot.slane %v3174, 3
        %v3801 = vsel %vm3794, %v3798, %v3800
        %v3802 = vrot.slane %v3175, 3
        %v3803 = vsel %vm3794, %v3800, %v3802
        %v3804 = vrot.slane %v3176, 3
        %v3805 = vsel %vm3794, %v3802, %v3804
        %v3806 = vrot.slane %v3177, 3
        %v3807 = vsel %vm3794, %v3804, %v3806
        %v3808 = vrot.slane %v3178, 3
        %v3809 = vsel %vm3794, %v3806, %v3808
        %v3810 = vrot.slane %v3179, 3
        %v3811 = vsel %vm3794, %v3808, %v3810
        %v3812 = vrot.slane %v3180, 3
        %v3813 = vsel %vm3794, %v3810, %v3812
        %v3814 = vrot.slane %v3181, 3
        %v3815 = vsel %vm3794, %v3812, %v3814
        %v3816 = vrot.slane %v3182, 3
        %v3817 = vsel %vm3794, %v3814, %v3816
        %v3818 = vrot.slane %v3183, 3
        %v3819 = vsel %vm3794, %v3816, %v3818
        %v3820 = vrot.slane %v3184, 3
        %v3821 = vsel %vm3794, %v3818, %v3820
        %v3822 = vrot.slane %v3185, 3
        %v3823 = vsel %vm3794, %v3820, %v3822
        %v3824 = vrot.slane %v3186, 3
        %v3825 = vsel %vm3794, %v3822, %v3824
        %v3826 = vrot.slane %v3187, 3
        %v3827 = vsel %vm3794, %v3824, %v3826
        %v3828 = vrot.slane %v3188, 3
        %v3829 = vsel %vm3794, %v3826, %v3828
        %v3830 = vrot.slane %v3424, 3
        %v3831 = vsel %vm3794, %v3828, %v3830
        %v3833 = vsel %vm1560, %v3797, 0
        %v3836 = vsel %vm1560, %v3799, 0
        %v3839 = vsel %vm1560, %v3801, 0
        %v3842 = vsel %vm1560, %v3803, 0
        %v3845 = vsel %vm1560, %v3805, 0
        %v3848 = vsel %vm1560, %v3807, 0
        %v3851 = vsel %vm1560, %v3809, 0
        %v3854 = vsel %vm1560, %v3811, 0
        %v3857 = vsel %vm1560, %v3813, 0
        %v3860 = vsel %vm1560, %v3815, 0
        %v3863 = vsel %vm1560, %v3817, 0
        %v3866 = vsel %vm1560, %v3819, 0
        %v3869 = vsel %vm1560, %v3821, 0
        %v3872 = vsel %vm1560, %v3823, 0
        %v3875 = vsel %vm1560, %v3825, 0
        %v3878 = vsel %vm1560, %v3827, 0
        %v3881 = vsel %vm1560, %v3829, 0
        %v3884 = vsel %vm1560, %v3831, 0
        %v3887 = vsel %vm1615, %v3790, 0
        %3889 = vmatpush.bf16.msra.mxu0 0
        %3890 = vmatpush.bf16.msra.mxu0 0
        %3891 = vmatpush.bf16.msra.mxu0 0
        %3892 = vmatpush.bf16.msra.mxu0 0
        %3893 = vmatpush.bf16.msra.mxu0 0
        %3894 = vmatpush.bf16.msra.mxu0 0
        %3895 = vmatpush.bf16.msra.mxu0 0
        %3896 = vmatpush.bf16.msra.mxu0 %v3887
        %3897 = vmatmul.bf16.gmra.mxu0 %v3833
        %v3898 = vpop.f32.mrf.mxu0
        %v3899 = vadd.f32 0.0, %v3898
        %v3900 = vpop.f32.mrf.mxu0
        %v3901 = vadd.f32 0.0, %v3900
        %3902 = vmatmul.bf16.gmra.mxu0 %v3836
        %v3903 = vpop.f32.mrf.mxu0
        %v3904 = vadd.f32 0.0, %v3903
        %v3905 = vpop.f32.mrf.mxu0
        %v3906 = vadd.f32 0.0, %v3905
        %3907 = vmatmul.bf16.gmra.mxu0 %v3839
        %v3908 = vpop.f32.mrf.mxu0
        %v3909 = vadd.f32 0.0, %v3908
        %v3910 = vpop.f32.mrf.mxu0
        %v3911 = vadd.f32 0.0, %v3910
        %3912 = vmatmul.bf16.gmra.mxu0 %v3842
        %v3913 = vpop.f32.mrf.mxu0
        %v3914 = vadd.f32 0.0, %v3913
        %v3915 = vpop.f32.mrf.mxu0
        %v3916 = vadd.f32 0.0, %v3915
        %3917 = vmatmul.bf16.gmra.mxu0 %v3845
        %v3918 = vpop.f32.mrf.mxu0
        %v3919 = vadd.f32 0.0, %v3918
        %v3920 = vpop.f32.mrf.mxu0
        %v3921 = vadd.f32 0.0, %v3920
        %3922 = vmatmul.bf16.gmra.mxu0 %v3848
        %v3923 = vpop.f32.mrf.mxu0
        %v3924 = vadd.f32 0.0, %v3923
        %v3925 = vpop.f32.mrf.mxu0
        %v3926 = vadd.f32 0.0, %v3925
        %3927 = vmatmul.bf16.gmra.mxu0 %v3851
        %v3928 = vpop.f32.mrf.mxu0
        %v3929 = vadd.f32 0.0, %v3928
        %v3930 = vpop.f32.mrf.mxu0
        %v3931 = vadd.f32 0.0, %v3930
        %3932 = vmatmul.bf16.gmra.mxu0 %v3854
        %v3933 = vpop.f32.mrf.mxu0
        %v3934 = vadd.f32 0.0, %v3933
        %v3935 = vpop.f32.mrf.mxu0
        %v3936 = vadd.f32 0.0, %v3935
        %3937 = vmatmul.bf16.gmra.mxu0 %v3857
        %v3938 = vpop.f32.mrf.mxu0
        %v3939 = vadd.f32 0.0, %v3938
        %v3940 = vpop.f32.mrf.mxu0
        %v3941 = vadd.f32 0.0, %v3940
        %3942 = vmatmul.bf16.gmra.mxu0 %v3860
        %v3943 = vpop.f32.mrf.mxu0
        %v3944 = vadd.f32 0.0, %v3943
        %v3945 = vpop.f32.mrf.mxu0
        %v3946 = vadd.f32 0.0, %v3945
        %3947 = vmatmul.bf16.gmra.mxu0 %v3863
        %v3948 = vpop.f32.mrf.mxu0
        %v3949 = vadd.f32 0.0, %v3948
        %v3950 = vpop.f32.mrf.mxu0
        %v3951 = vadd.f32 0.0, %v3950
        %3952 = vmatmul.bf16.gmra.mxu0 %v3866
        %v3953 = vpop.f32.mrf.mxu0
        %v3954 = vadd.f32 0.0, %v3953
        %v3955 = vpop.f32.mrf.mxu0
        %v3956 = vadd.f32 0.0, %v3955
        %3957 = vmatmul.bf16.gmra.mxu0 %v3869
        %v3958 = vpop.f32.mrf.mxu0
        %v3959 = vadd.f32 0.0, %v3958
        %v3960 = vpop.f32.mrf.mxu0
        %v3961 = vadd.f32 0.0, %v3960
        %3962 = vmatmul.bf16.gmra.mxu0 %v3872
        %v3963 = vpop.f32.mrf.mxu0
        %v3964 = vadd.f32 0.0, %v3963
        %v3965 = vpop.f32.mrf.mxu0
        %v3966 = vadd.f32 0.0, %v3965
        %3967 = vmatmul.bf16.gmra.mxu0 %v3875
        %v3968 = vpop.f32.mrf.mxu0
        %v3969 = vadd.f32 0.0, %v3968
        %v3970 = vpop.f32.mrf.mxu0
        %v3971 = vadd.f32 0.0, %v3970
        %3972 = vmatmul.bf16.gmra.mxu0 %v3878
        %v3973 = vpop.f32.mrf.mxu0
        %v3974 = vadd.f32 0.0, %v3973
        %v3975 = vpop.f32.mrf.mxu0
        %v3976 = vadd.f32 0.0, %v3975
        %3977 = vmatmul.bf16.gmra.mxu0 %v3881
        %v3978 = vpop.f32.mrf.mxu0
        %v3979 = vadd.f32 0.0, %v3978
        %v3980 = vpop.f32.mrf.mxu0
        %v3981 = vadd.f32 0.0, %v3980
        %3982 = vmatmul.bf16.gmra.mxu0 %v3884
        %v3983 = vpop.f32.mrf.mxu0
        %v3984 = vadd.f32 0.0, %v3983
        %v3985 = vpop.f32.mrf.mxu0
        %v3986 = vadd.f32 0.0, %v3985
        %3987 = vdwg.mxu0
        %v3988 = vadd.f32 %v3752, %v3899
        %v3989 = vadd.f32 %v3753, %v3901
        %v3990 = vadd.f32 %v3754, %v3904
        %v3991 = vadd.f32 %v3755, %v3906
        %v3992 = vadd.f32 %v3756, %v3909
        %v3993 = vadd.f32 %v3757, %v3911
        %v3994 = vadd.f32 %v3758, %v3914
        %v3995 = vadd.f32 %v3759, %v3916
        %v3996 = vadd.f32 %v3760, %v3919
        %v3997 = vadd.f32 %v3761, %v3921
        %v3998 = vadd.f32 %v3762, %v3924
        %v3999 = vadd.f32 %v3763, %v3926
        %v4000 = vadd.f32 %v3764, %v3929
        %v4001 = vadd.f32 %v3765, %v3931
        %v4002 = vadd.f32 %v3766, %v3934
        %v4003 = vadd.f32 %v3767, %v3936
        %v4004 = vadd.f32 %v3768, %v3939
        %v4005 = vadd.f32 %v3769, %v3941
        %v4006 = vadd.f32 %v3770, %v3944
        %v4007 = vadd.f32 %v3771, %v3946
        %v4008 = vadd.f32 %v3772, %v3949
        %v4009 = vadd.f32 %v3773, %v3951
        %v4010 = vadd.f32 %v3774, %v3954
        %v4011 = vadd.f32 %v3775, %v3956
        %v4012 = vadd.f32 %v3776, %v3959
        %v4013 = vadd.f32 %v3777, %v3961
        %v4014 = vadd.f32 %v3778, %v3964
        %v4015 = vadd.f32 %v3779, %v3966
        %v4016 = vadd.f32 %v3780, %v3969
        %v4017 = vadd.f32 %v3781, %v3971
        %v4018 = vadd.f32 %v3782, %v3974
        %v4019 = vadd.f32 %v3783, %v3976
        %v4020 = vadd.f32 %v3784, %v3979
        %v4021 = vadd.f32 %v3785, %v3981
        %v4022 = vadd.f32 %v3786, %v3984
        %v4023 = vadd.f32 %v3787, %v3986
        %v4024 = vld [vmem:[%s3] sm:$0x1]
        %v4026 = vperm.slane %v4024, 0
        %v4028 = vmul.f32 %v3988, %v4026
        %v4029 = vmul.f32 %v3989, %v4026
        %v4030 = vmul.f32 %v3990, %v4026
        %v4031 = vmul.f32 %v3991, %v4026
        %v4032 = vmul.f32 %v3992, %v4026
        %v4033 = vmul.f32 %v3993, %v4026
        %v4034 = vmul.f32 %v3994, %v4026
        %v4035 = vmul.f32 %v3995, %v4026
        %v4036 = vmul.f32 %v3996, %v4026
        %v4037 = vmul.f32 %v3997, %v4026
        %v4038 = vmul.f32 %v3998, %v4026
        %v4039 = vmul.f32 %v3999, %v4026
        %v4040 = vmul.f32 %v4000, %v4026
        %v4041 = vmul.f32 %v4001, %v4026
        %v4042 = vmul.f32 %v4002, %v4026
        %v4043 = vmul.f32 %v4003, %v4026
        %v4044 = vmul.f32 %v4004, %v4026
        %v4045 = vmul.f32 %v4005, %v4026
        %v4046 = vmul.f32 %v4006, %v4026
        %v4047 = vmul.f32 %v4007, %v4026
        %v4048 = vmul.f32 %v4008, %v4026
        %v4049 = vmul.f32 %v4009, %v4026
        %v4050 = vmul.f32 %v4010, %v4026
        %v4051 = vmul.f32 %v4011, %v4026
        %v4052 = vmul.f32 %v4012, %v4026
        %v4053 = vmul.f32 %v4013, %v4026
        %v4054 = vmul.f32 %v4014, %v4026
        %v4055 = vmul.f32 %v4015, %v4026
        %v4056 = vmul.f32 %v4016, %v4026
        %v4057 = vmul.f32 %v4017, %v4026
        %v4058 = vmul.f32 %v4018, %v4026
        %v4059 = vmul.f32 %v4019, %v4026
        %v4060 = vmul.f32 %v4020, %v4026
        %v4061 = vmul.f32 %v4021, %v4026
        %v4062 = vmul.f32 %v4022, %v4026
        %v4063 = vmul.f32 %v4023, %v4026
        %v4064 = vld [vmem:[%s4] sm:$0x1]
        %v4066 = vperm.slane %v4064, 0
        %v4068 = vadd.f32 %v4028, %v4066
        %v4069 = vadd.f32 %v4029, %v4066
        %v4070 = vadd.f32 %v4030, %v4066
        %v4071 = vadd.f32 %v4031, %v4066
        %v4072 = vadd.f32 %v4032, %v4066
        %v4073 = vadd.f32 %v4033, %v4066
        %v4074 = vadd.f32 %v4034, %v4066
        %v4075 = vadd.f32 %v4035, %v4066
        %v4076 = vadd.f32 %v4036, %v4066
        %v4077 = vadd.f32 %v4037, %v4066
        %v4078 = vadd.f32 %v4038, %v4066
        %v4079 = vadd.f32 %v4039, %v4066
        %v4080 = vadd.f32 %v4040, %v4066
        %v4081 = vadd.f32 %v4041, %v4066
        %v4082 = vadd.f32 %v4042, %v4066
        %v4083 = vadd.f32 %v4043, %v4066
        %v4084 = vadd.f32 %v4044, %v4066
        %v4085 = vadd.f32 %v4045, %v4066
        %v4086 = vadd.f32 %v4046, %v4066
        %v4087 = vadd.f32 %v4047, %v4066
        %v4088 = vadd.f32 %v4048, %v4066
        %v4089 = vadd.f32 %v4049, %v4066
        %v4090 = vadd.f32 %v4050, %v4066
        %v4091 = vadd.f32 %v4051, %v4066
        %v4092 = vadd.f32 %v4052, %v4066
        %v4093 = vadd.f32 %v4053, %v4066
        %v4094 = vadd.f32 %v4054, %v4066
        %v4095 = vadd.f32 %v4055, %v4066
        %v4096 = vadd.f32 %v4056, %v4066
        %v4097 = vadd.f32 %v4057, %v4066
        %v4098 = vadd.f32 %v4058, %v4066
        %v4099 = vadd.f32 %v4059, %v4066
        %v4100 = vadd.f32 %v4060, %v4066
        %v4101 = vadd.f32 %v4061, %v4066
        %v4102 = vadd.f32 %v4062, %v4066
        %v4103 = vadd.f32 %v4063, %v4066
        %v4104 = vmax.f32 %v4068, 0.0
        %v4105 = vmax.f32 %v4069, 0.0
        %v4106 = vmax.f32 %v4070, 0.0
        %v4107 = vmax.f32 %v4071, 0.0
        %v4108 = vmax.f32 %v4072, 0.0
        %v4109 = vmax.f32 %v4073, 0.0
        %v4110 = vmax.f32 %v4074, 0.0
        %v4111 = vmax.f32 %v4075, 0.0
        %v4112 = vmax.f32 %v4076, 0.0
        %v4113 = vmax.f32 %v4077, 0.0
        %v4114 = vmax.f32 %v4078, 0.0
        %v4115 = vmax.f32 %v4079, 0.0
        %v4116 = vmax.f32 %v4080, 0.0
        %v4117 = vmax.f32 %v4081, 0.0
        %v4118 = vmax.f32 %v4082, 0.0
        %v4119 = vmax.f32 %v4083, 0.0
        %v4120 = vmax.f32 %v4084, 0.0
        %v4121 = vmax.f32 %v4085, 0.0
        %v4122 = vmax.f32 %v4086, 0.0
        %v4123 = vmax.f32 %v4087, 0.0
        %v4124 = vmax.f32 %v4088, 0.0
        %v4125 = vmax.f32 %v4089, 0.0
        %v4126 = vmax.f32 %v4090, 0.0
        %v4127 = vmax.f32 %v4091, 0.0
        %v4128 = vmax.f32 %v4092, 0.0
        %v4129 = vmax.f32 %v4093, 0.0
        %v4130 = vmax.f32 %v4094, 0.0
        %v4131 = vmax.f32 %v4095, 0.0
        %v4132 = vmax.f32 %v4096, 0.0
        %v4133 = vmax.f32 %v4097, 0.0
        %v4134 = vmax.f32 %v4098, 0.0
        %v4135 = vmax.f32 %v4099, 0.0
        %v4136 = vmax.f32 %v4100, 0.0
        %v4137 = vmax.f32 %v4101, 0.0
        %v4138 = vmax.f32 %v4102, 0.0
        %v4139 = vmax.f32 %v4103, 0.0
        %v4140 = vld [vmem:[%s14] sm:$0xff]
        %v4141 = vld [vmem:[%s14 + $0x8] sm:$0xf]
        %v4142 = vld [vmem:[%s14 + $0xc] sm:$0xff]
        %v4143 = vld [vmem:[%s14 + $0x14] sm:$0xf]
        %v4144 = vld [vmem:[%s14 + $0x18] sm:$0xff]
        %v4145 = vld [vmem:[%s14 + $0x20] sm:$0xf]
        %v4146 = vld [vmem:[%s14 + $0x24] sm:$0xff]
        %v4147 = vld [vmem:[%s14 + $0x2c] sm:$0xf]
        %v4148 = vld [vmem:[%s14 + $0x30] sm:$0xff]
        %v4149 = vld [vmem:[%s14 + $0x38] sm:$0xf]
        %v4150 = vld [vmem:[%s14 + $0x3c] sm:$0xff]
        %v4151 = vld [vmem:[%s14 + $0x44] sm:$0xf]
        %v4152 = vld [vmem:[%s14 + $0x48] sm:$0xff]
        %v4153 = vld [vmem:[%s14 + $0x50] sm:$0xf]
        %v4154 = vld [vmem:[%s14 + $0x54] sm:$0xff]
        %v4155 = vld [vmem:[%s14 + $0x5c] sm:$0xf]
        %v4156 = vld [vmem:[%s14 + $0x60] sm:$0xff]
        %v4157 = vld [vmem:[%s14 + $0x68] sm:$0xf]
        %v4158 = vld [vmem:[%s14 + $0x6c] sm:$0xff]
        %v4159 = vld [vmem:[%s14 + $0x74] sm:$0xf]
        %v4160 = vld [vmem:[%s14 + $0x78] sm:$0xff]
        %v4161 = vld [vmem:[%s14 + $0x80] sm:$0xf]
        %v4162 = vld [vmem:[%s14 + $0x84] sm:$0xff]
        %v4163 = vld [vmem:[%s14 + $0x8c] sm:$0xf]
        %v4164 = vld [vmem:[%s14 + $0x90] sm:$0x77]
        %v4165 = vld [vmem:[%s14 + $0x98] sm:$0x7]
        %v4166 = vpack.c.bf16 %v4105, %v4104
        %v4167 = vpack.c.bf16 %v4107, %v4106
        %v4168 = vpack.c.bf16 %v4109, %v4108
        %v4169 = vpack.c.bf16 %v4111, %v4110
        %v4170 = vpack.c.bf16 %v4113, %v4112
        %v4171 = vpack.c.bf16 %v4115, %v4114
        %v4172 = vpack.c.bf16 %v4117, %v4116
        %v4173 = vpack.c.bf16 %v4119, %v4118
        %v4174 = vpack.c.bf16 %v4121, %v4120
        %v4175 = vpack.c.bf16 %v4123, %v4122
        %v4176 = vpack.c.bf16 %v4125, %v4124
        %v4177 = vpack.c.bf16 %v4127, %v4126
        %v4178 = vpack.c.bf16 %v4129, %v4128
        %v4179 = vpack.c.bf16 %v4131, %v4130
        %v4180 = vpack.c.bf16 %v4133, %v4132
        %v4181 = vpack.c.bf16 %v4135, %v4134
        %v4182 = vpack.c.bf16 %v4137, %v4136
        %v4183 = vpack.c.bf16 %v4139, %v4138
        %v4210 = vunpack.c.l.b16 %v4140
        %v4211 = vunpack.c.h.b16 %v4140
        %v4212 = vunpack.c.l.b16 %v4141
        %v4213 = vunpack.c.l.b16 %v4142
        %v4214 = vunpack.c.h.b16 %v4142
        %v4215 = vunpack.c.l.b16 %v4143
        %v4216 = vunpack.c.l.b16 %v4144
        %v4217 = vunpack.c.h.b16 %v4144
        %v4218 = vunpack.c.l.b16 %v4145
        %v4219 = vunpack.c.l.b16 %v4146
        %v4220 = vunpack.c.h.b16 %v4146
        %v4221 = vunpack.c.l.b16 %v4147
        %v4222 = vunpack.c.l.b16 %v4148
        %v4223 = vunpack.c.h.b16 %v4148
        %v4224 = vunpack.c.l.b16 %v4149
        %v4225 = vunpack.c.l.b16 %v4150
        %v4226 = vunpack.c.h.b16 %v4150
        %v4227 = vunpack.c.l.b16 %v4151
        %v4228 = vunpack.c.l.b16 %v4152
        %v4229 = vunpack.c.h.b16 %v4152
        %v4230 = vunpack.c.l.b16 %v4153
        %v4231 = vunpack.c.l.b16 %v4154
        %v4232 = vunpack.c.h.b16 %v4154
        %v4233 = vunpack.c.l.b16 %v4155
        %v4234 = vunpack.c.l.b16 %v4156
        %v4235 = vunpack.c.h.b16 %v4156
        %v4236 = vunpack.c.l.b16 %v4157
        %v4237 = vunpack.c.l.b16 %v4158
        %v4238 = vunpack.c.h.b16 %v4158
        %v4239 = vunpack.c.l.b16 %v4159
        %v4240 = vunpack.c.l.b16 %v4160
        %v4241 = vunpack.c.h.b16 %v4160
        %v4242 = vunpack.c.l.b16 %v4161
        %v4243 = vunpack.c.l.b16 %v4162
        %v4244 = vunpack.c.h.b16 %v4162
        %v4245 = vunpack.c.l.b16 %v4163
        %v4246 = vunpack.c.l.b16 %v4164
        %v4247 = vunpack.c.h.b16 %v4164
        %v4248 = vunpack.c.l.b16 %v4165
        %v4249 = vpack.c.b16 %v4213, %v4210
        %v4250 = vpack.c.b16 %v4214, %v4211
        %v4251 = vpack.c.b16 %v4215, %v4212
        %v4252 = vpack.c.b16 %v4219, %v4216
        %v4253 = vpack.c.b16 %v4220, %v4217
        %v4254 = vpack.c.b16 %v4221, %v4218
        %v4255 = vpack.c.b16 %v4225, %v4222
        %v4256 = vpack.c.b16 %v4226, %v4223
        %v4257 = vpack.c.b16 %v4227, %v4224
        %v4258 = vpack.c.b16 %v4231, %v4228
        %v4259 = vpack.c.b16 %v4232, %v4229
        %v4260 = vpack.c.b16 %v4233, %v4230
        %v4261 = vpack.c.b16 %v4237, %v4234
        %v4262 = vpack.c.b16 %v4238, %v4235
        %v4263 = vpack.c.b16 %v4239, %v4236
        %v4264 = vpack.c.b16 %v4243, %v4240
        %v4265 = vpack.c.b16 %v4244, %v4241
        %v4266 = vpack.c.b16 %v4245, %v4242
        %v4267 = vpack.c.b16 %v4246, %v4246
        %v4268 = vpack.c.b16 %v4247, %v4247
        %v4269 = vpack.c.b16 %v4248, %v4248
        %vm4284 = vcmask 261120
        %v4286 = vsel %vm4284, %v4251, 0
        %v4289 = vsel %vm4284, %v4254, 0
        %v4292 = vsel %vm4284, %v4257, 0
        %v4295 = vsel %vm4284, %v4260, 0
        %v4298 = vsel %vm4284, %v4263, 0
        %v4301 = vsel %vm4284, %v4266, 0
        %v4304 = vsel %vm4284, %v4269, 0
        %4306 = vmatpush.bf16.msra.mxu0 %v4173
        %4307 = vmatpush.bf16.msra.mxu0 %v4172
        %4308 = vmatpush.bf16.msra.mxu0 %v4171
        %4309 = vmatpush.bf16.msra.mxu0 %v4170
        %4310 = vmatpush.bf16.msra.mxu0 %v4169
        %4311 = vmatpush.bf16.msra.mxu0 %v4168
        %4312 = vmatpush.bf16.msra.mxu0 %v4167
        %4313 = vmatpush.bf16.msra.mxu0 %v4166
        %4314 = vmatmul.bf16.gmra.mxu0 %v4249
        %v4315 = vpop.f32.mrf.mxu0
        %v4316 = vadd.f32 0.0, %v4315
        %v4317 = vpop.f32.mrf.mxu0
        %v4318 = vadd.f32 0.0, %v4317
        %4319 = vmatmul.bf16.gmra.mxu0 %v4252
        %v4320 = vpop.f32.mrf.mxu0
        %v4321 = vadd.f32 0.0, %v4320
        %v4322 = vpop.f32.mrf.mxu0
        %v4323 = vadd.f32 0.0, %v4322
        %4324 = vmatmul.bf16.gmra.mxu0 %v4255
        %v4325 = vpop.f32.mrf.mxu0
        %v4326 = vadd.f32 0.0, %v4325
        %v4327 = vpop.f32.mrf.mxu0
        %v4328 = vadd.f32 0.0, %v4327
        %4329 = vmatmul.bf16.gmra.mxu0 %v4258
        %v4330 = vpop.f32.mrf.mxu0
        %v4331 = vadd.f32 0.0, %v4330
        %v4332 = vpop.f32.mrf.mxu0
        %v4333 = vadd.f32 0.0, %v4332
        %4334 = vmatmul.bf16.gmra.mxu0 %v4261
        %v4335 = vpop.f32.mrf.mxu0
        %v4336 = vadd.f32 0.0, %v4335
        %v4337 = vpop.f32.mrf.mxu0
        %v4338 = vadd.f32 0.0, %v4337
        %4339 = vmatmul.bf16.gmra.mxu0 %v4264
        %v4340 = vpop.f32.mrf.mxu0
        %v4341 = vadd.f32 0.0, %v4340
        %v4342 = vpop.f32.mrf.mxu0
        %v4343 = vadd.f32 0.0, %v4342
        %4344 = vmatmul.bf16.gmra.mxu0 %v4267
        %v4345 = vpop.f32.mrf.mxu0
        %v4346 = vadd.f32 0.0, %v4345
        %v4347 = vpop.f32.mrf.mxu0
        %4348 = vdwg.mxu0
        %4349 = vmatpush.bf16.msra.mxu0 %v4181
        %4350 = vmatpush.bf16.msra.mxu0 %v4180
        %4351 = vmatpush.bf16.msra.mxu0 %v4179
        %4352 = vmatpush.bf16.msra.mxu0 %v4178
        %4353 = vmatpush.bf16.msra.mxu0 %v4177
        %4354 = vmatpush.bf16.msra.mxu0 %v4176
        %4355 = vmatpush.bf16.msra.mxu0 %v4175
        %4356 = vmatpush.bf16.msra.mxu0 %v4174
        %4357 = vmatmul.bf16.gmra.mxu0 %v4250
        %v4358 = vpop.f32.mrf.mxu0
        %v4359 = vadd.f32 %v4316, %v4358
        %v4360 = vpop.f32.mrf.mxu0
        %v4361 = vadd.f32 %v4318, %v4360
        %4362 = vmatmul.bf16.gmra.mxu0 %v4253
        %v4363 = vpop.f32.mrf.mxu0
        %v4364 = vadd.f32 %v4321, %v4363
        %v4365 = vpop.f32.mrf.mxu0
        %v4366 = vadd.f32 %v4323, %v4365
        %4367 = vmatmul.bf16.gmra.mxu0 %v4256
        %v4368 = vpop.f32.mrf.mxu0
        %v4369 = vadd.f32 %v4326, %v4368
        %v4370 = vpop.f32.mrf.mxu0
        %v4371 = vadd.f32 %v4328, %v4370
        %4372 = vmatmul.bf16.gmra.mxu0 %v4259
        %v4373 = vpop.f32.mrf.mxu0
        %v4374 = vadd.f32 %v4331, %v4373
        %v4375 = vpop.f32.mrf.mxu0
        %v4376 = vadd.f32 %v4333, %v4375
        %4377 = vmatmul.bf16.gmra.mxu0 %v4262
        %v4378 = vpop.f32.mrf.mxu0
        %v4379 = vadd.f32 %v4336, %v4378
        %v4380 = vpop.f32.mrf.mxu0
        %v4381 = vadd.f32 %v4338, %v4380
        %4382 = vmatmul.bf16.gmra.mxu0 %v4265
        %v4383 = vpop.f32.mrf.mxu0
        %v4384 = vadd.f32 %v4341, %v4383
        %v4385 = vpop.f32.mrf.mxu0
        %v4386 = vadd.f32 %v4343, %v4385
        %4387 = vmatmul.bf16.gmra.mxu0 %v4268
        %v4388 = vpop.f32.mrf.mxu0
        %v4389 = vadd.f32 %v4346, %v4388
        %v4390 = vpop.f32.mrf.mxu0
        %4391 = vdwg.mxu0
        %4392 = vmatpush.bf16.msra.mxu0 0
        %4393 = vmatpush.bf16.msra.mxu0 0
        %4394 = vmatpush.bf16.msra.mxu0 0
        %4395 = vmatpush.bf16.msra.mxu0 0
        %4396 = vmatpush.bf16.msra.mxu0 0
        %4397 = vmatpush.bf16.msra.mxu0 0
        %4398 = vmatpush.bf16.msra.mxu0 %v4183
        %4399 = vmatpush.bf16.msra.mxu0 %v4182
        %4400 = vmatmul.bf16.gmra.mxu0 %v4286
        %v4401 = vpop.f32.mrf.mxu0
        %v4402 = vadd.f32 %v4359, %v4401
        %v4403 = vpop.f32.mrf.mxu0
        %v4404 = vadd.f32 %v4361, %v4403
        %4405 = vmatmul.bf16.gmra.mxu0 %v4289
        %v4406 = vpop.f32.mrf.mxu0
        %v4407 = vadd.f32 %v4364, %v4406
        %v4408 = vpop.f32.mrf.mxu0
        %v4409 = vadd.f32 %v4366, %v4408
        %4410 = vmatmul.bf16.gmra.mxu0 %v4292
        %v4411 = vpop.f32.mrf.mxu0
        %v4412 = vadd.f32 %v4369, %v4411
        %v4413 = vpop.f32.mrf.mxu0
        %v4414 = vadd.f32 %v4371, %v4413
        %4415 = vmatmul.bf16.gmra.mxu0 %v4295
        %v4416 = vpop.f32.mrf.mxu0
        %v4417 = vadd.f32 %v4374, %v4416
        %v4418 = vpop.f32.mrf.mxu0
        %v4419 = vadd.f32 %v4376, %v4418
        %4420 = vmatmul.bf16.gmra.mxu0 %v4298
        %v4421 = vpop.f32.mrf.mxu0
        %v4422 = vadd.f32 %v4379, %v4421
        %v4423 = vpop.f32.mrf.mxu0
        %v4424 = vadd.f32 %v4381, %v4423
        %4425 = vmatmul.bf16.gmra.mxu0 %v4301
        %v4426 = vpop.f32.mrf.mxu0
        %v4427 = vadd.f32 %v4384, %v4426
        %v4428 = vpop.f32.mrf.mxu0
        %v4429 = vadd.f32 %v4386, %v4428
        %4430 = vmatmul.bf16.gmra.mxu0 %v4304
        %v4431 = vpop.f32.mrf.mxu0
        %v4432 = vadd.f32 %v4389, %v4431
        %v4433 = vpop.f32.mrf.mxu0
        %4434 = vdwg.mxu0
        %v4435 = vpack.c.bf16 %v4402, %v4402
        %v4436 = vpack.c.bf16 %v4404, %v4404
        %v4437 = vpack.c.bf16 %v4407, %v4407
        %v4438 = vpack.c.bf16 %v4409, %v4409
        %v4439 = vpack.c.bf16 %v4412, %v4412
        %v4440 = vpack.c.bf16 %v4414, %v4414
        %v4441 = vpack.c.bf16 %v4417, %v4417
        %v4442 = vpack.c.bf16 %v4419, %v4419
        %v4443 = vpack.c.bf16 %v4422, %v4422
        %v4444 = vpack.c.bf16 %v4424, %v4424
        %v4445 = vpack.c.bf16 %v4427, %v4427
        %v4446 = vpack.c.bf16 %v4429, %v4429
        %v4447 = vpack.c.bf16 %v4432, %v4432
        %vm4448 = vcmask 519168
        %4449 = vst.msk [vmem:[#allocation3] sm:$0xf] %vm4448, %v4435
        %4450 = vst.msk [vmem:[#allocation3 + $0x4] sm:$0xf] %vm4448, %v4436
        %4451 = vst.msk [vmem:[#allocation3 + $0x8] sm:$0xf] %vm4448, %v4437
        %4452 = vst.msk [vmem:[#allocation3 + $0xc] sm:$0xf] %vm4448, %v4438
        %4453 = vst.msk [vmem:[#allocation3 + $0x10] sm:$0xf] %vm4448, %v4439
        %4454 = vst.msk [vmem:[#allocation3 + $0x14] sm:$0xf] %vm4448, %v4440
        %4455 = vst.msk [vmem:[#allocation3 + $0x18] sm:$0xf] %vm4448, %v4441
        %4456 = vst.msk [vmem:[#allocation3 + $0x1c] sm:$0xf] %vm4448, %v4442
        %4457 = vst.msk [vmem:[#allocation3 + $0x20] sm:$0xf] %vm4448, %v4443
        %4458 = vst.msk [vmem:[#allocation3 + $0x24] sm:$0xf] %vm4448, %v4444
        %4459 = vst.msk [vmem:[#allocation3 + $0x28] sm:$0xf] %vm4448, %v4445
        %4460 = vst.msk [vmem:[#allocation3 + $0x2c] sm:$0xf] %vm4448, %v4446
        %vm4461 = vcmask 518144
        %4462 = vst.msk [vmem:[#allocation3 + $0x30] sm:$0x7] %vm4461, %v4447
        %v4463 = vld [vmem:[#allocation3] sm:$0xf]
        %v4464 = vld [vmem:[#allocation3 + $0x4] sm:$0xf]
        %v4465 = vld [vmem:[#allocation3 + $0x8] sm:$0xf]
        %v4466 = vld [vmem:[#allocation3 + $0xc] sm:$0xf]
        %v4467 = vld [vmem:[#allocation3 + $0x10] sm:$0xf]
        %v4468 = vld [vmem:[#allocation3 + $0x14] sm:$0xf]
        %v4469 = vld [vmem:[#allocation3 + $0x18] sm:$0xf]
        %v4470 = vld [vmem:[#allocation3 + $0x1c] sm:$0xf]
        %v4471 = vld [vmem:[#allocation3 + $0x20] sm:$0xf]
        %v4472 = vld [vmem:[#allocation3 + $0x24] sm:$0xf]
        %v4473 = vld [vmem:[#allocation6] sm:$0xf]
        %v4474 = vld [vmem:[#allocation6 + $0x4] sm:$0xf]
        %v4475 = vld [vmem:[#allocation6 + $0x8] sm:$0xf]
        %v4476 = vld [vmem:[#allocation6 + $0xc] sm:$0xf]
        %v4477 = vld [vmem:[#allocation6 + $0x10] sm:$0xf]
        %v4478 = vld [vmem:[#allocation6 + $0x14] sm:$0xf]
        %v4479 = vld [vmem:[#allocation6 + $0x18] sm:$0xf]
        %v4480 = vld [vmem:[#allocation6 + $0x1c] sm:$0xf]
        %v4481 = vld [vmem:[#allocation3 + $0x28] sm:$0x1]
        %s4482 = scalar_lea.vmem [#allocation6], 32
        %v4483 = vld [vmem:[%s4482] sm:$0xf]
        %v4484 = vld [vmem:[%s4482 + $0x4] sm:$0xf]
        %v4485 = vld [vmem:[%s4482 + $0x8] sm:$0xf]
        %v4486 = vld [vmem:[%s4482 + $0xc] sm:$0xf]
        %v4487 = vld [vmem:[%s4482 + $0x10] sm:$0xf]
        %v4488 = vld [vmem:[%s4482 + $0x14] sm:$0xf]
        %v4489 = vld [vmem:[%s4482 + $0x18] sm:$0xf]
        %v4490 = vld [vmem:[%s4482 + $0x1c] sm:$0xf]
        %v4502 = vunpack.c.l.b16 %v4463
        %v4503 = vunpack.c.l.b16 %v4464
        %v4504 = vunpack.c.l.b16 %v4465
        %v4505 = vunpack.c.l.b16 %v4466
        %v4506 = vunpack.c.l.b16 %v4467
        %v4507 = vunpack.c.l.b16 %v4468
        %v4508 = vunpack.c.l.b16 %v4469
        %v4509 = vunpack.c.l.b16 %v4470
        %v4510 = vunpack.c.l.b16 %v4471
        %v4511 = vunpack.c.l.b16 %v4472
        %v4512 = vunpack.c.l.b16 %v4481
        %v4513 = vpack.c.b16 %v4503, %v4502
        %v4514 = vpack.c.b16 %v4505, %v4504
        %v4515 = vpack.c.b16 %v4507, %v4506
        %v4516 = vpack.c.b16 %v4509, %v4508
        %v4517 = vpack.c.b16 %v4511, %v4510
        %v4518 = vpack.c.b16 %v4512, %v4512
        %v4520 = vshrl.u32 %v4513, 16
        %v4522 = vshll.u32 %v4513, 16
        %v4524 = vrot.slane %v4522, 1
        %v4525 = vor.u32 %v4520, %v4524
        %v4527 = vshll.u32 %v4514, 16
        %v4529 = vrot.slane %v4527, 1
        %v4530 = vsel %vm1411, %v4525, %v4529
        %v4531 = vshrl.u32 %v4514, 16
        %v4533 = vor.u32 %v4531, %v4529
        %v4535 = vshll.u32 %v4515, 16
        %v4537 = vrot.slane %v4535, 1
        %v4538 = vsel %vm1411, %v4533, %v4537
        %v4539 = vshrl.u32 %v4515, 16
        %v4541 = vor.u32 %v4539, %v4537
        %v4543 = vshll.u32 %v4516, 16
        %v4545 = vrot.slane %v4543, 1
        %v4546 = vsel %vm1411, %v4541, %v4545
        %v4547 = vshrl.u32 %v4516, 16
        %v4549 = vor.u32 %v4547, %v4545
        %v4551 = vshll.u32 %v4517, 16
        %v4553 = vrot.slane %v4551, 1
        %v4554 = vsel %vm1411, %v4549, %v4553
        %v4555 = vshrl.u32 %v4517, 16
        %v4557 = vor.u32 %v4555, %v4553
        %v4559 = vshll.u32 %v4518, 16
        %v4561 = vrot.slane %v4559, 1
        %v4562 = vsel %vm1411, %v4557, %v4561
        %v4571 = vunpack.c.l.b16 %v4483
        %v4572 = vunpack.c.l.b16 %v4484
        %v4573 = vunpack.c.l.b16 %v4485
        %v4574 = vunpack.c.l.b16 %v4486
        %v4575 = vunpack.c.l.b16 %v4487
        %v4576 = vunpack.c.l.b16 %v4488
        %v4577 = vunpack.c.l.b16 %v4489
        %v4578 = vunpack.c.l.b16 %v4490
        %v4579 = vpack.c.b16 %v4572, %v4571
        %v4580 = vpack.c.b16 %v4574, %v4573
        %v4581 = vpack.c.b16 %v4576, %v4575
        %v4582 = vpack.c.b16 %v4578, %v4577
        %vm4587 = vcmask 523264
        %v4589 = vsel %vm4587, %v4530, 0
        %v4592 = vsel %vm4587, %v4538, 0
        %v4595 = vsel %vm4587, %v4546, 0
        %v4598 = vsel %vm4587, %v4554, 0
        %v4601 = vsel %vm4587, %v4562, 0
        %4603 = vmatpush.bf16.msra.mxu0 0
        %4604 = vmatpush.bf16.msra.mxu0 0
        %4605 = vmatpush.bf16.msra.mxu0 0
        %4606 = vmatpush.bf16.msra.mxu0 0
        %4607 = vmatpush.bf16.msra.mxu0 %v4582
        %4608 = vmatpush.bf16.msra.mxu0 %v4581
        %4609 = vmatpush.bf16.msra.mxu0 %v4580
        %4610 = vmatpush.bf16.msra.mxu0 %v4579
        %4611 = vmatmul.bf16.gmra.mxu0 %v4589
        %v4612 = vpop.f32.mrf.mxu0
        %v4613 = vadd.f32 0.0, %v4612
        %v4614 = vpop.f32.mrf.mxu0
        %v4615 = vadd.f32 0.0, %v4614
        %4616 = vmatmul.bf16.gmra.mxu0 %v4592
        %v4617 = vpop.f32.mrf.mxu0
        %v4618 = vadd.f32 0.0, %v4617
        %v4619 = vpop.f32.mrf.mxu0
        %v4620 = vadd.f32 0.0, %v4619
        %4621 = vmatmul.bf16.gmra.mxu0 %v4595
        %v4622 = vpop.f32.mrf.mxu0
        %v4623 = vadd.f32 0.0, %v4622
        %v4624 = vpop.f32.mrf.mxu0
        %v4625 = vadd.f32 0.0, %v4624
        %4626 = vmatmul.bf16.gmra.mxu0 %v4598
        %v4627 = vpop.f32.mrf.mxu0
        %v4628 = vadd.f32 0.0, %v4627
        %v4629 = vpop.f32.mrf.mxu0
        %v4630 = vadd.f32 0.0, %v4629
        %4631 = vmatmul.bf16.gmra.mxu0 %v4601
        %v4632 = vpop.f32.mrf.mxu0
        %v4633 = vadd.f32 0.0, %v4632
        %v4634 = vpop.f32.mrf.mxu0
        %v4635 = vadd.f32 0.0, %v4634
        %4636 = vdwg.mxu0
        %v4645 = vunpack.c.l.b16 %v4473
        %v4646 = vunpack.c.l.b16 %v4474
        %v4647 = vunpack.c.l.b16 %v4475
        %v4648 = vunpack.c.l.b16 %v4476
        %v4649 = vunpack.c.l.b16 %v4477
        %v4650 = vunpack.c.l.b16 %v4478
        %v4651 = vunpack.c.l.b16 %v4479
        %v4652 = vunpack.c.l.b16 %v4480
        %v4653 = vpack.c.b16 %v4646, %v4645
        %v4654 = vpack.c.b16 %v4648, %v4647
        %v4655 = vpack.c.b16 %v4650, %v4649
        %v4656 = vpack.c.b16 %v4652, %v4651
        %v4661 = vsel %vm4587, %v4513, 0
        %v4663 = vsel %vm4587, %v4514, 0
        %v4665 = vsel %vm4587, %v4515, 0
        %v4667 = vsel %vm4587, %v4516, 0
        %v4669 = vsel %vm4587, %v4517, 0
        %4671 = vmatpush.bf16.msra.mxu0 0
        %4672 = vmatpush.bf16.msra.mxu0 0
        %4673 = vmatpush.bf16.msra.mxu0 0
        %4674 = vmatpush.bf16.msra.mxu0 0
        %4675 = vmatpush.bf16.msra.mxu0 %v4656
        %4676 = vmatpush.bf16.msra.mxu0 %v4655
        %4677 = vmatpush.bf16.msra.mxu0 %v4654
        %4678 = vmatpush.bf16.msra.mxu0 %v4653
        %4679 = vmatmul.bf16.gmra.mxu0 %v4661
        %v4680 = vpop.f32.mrf.mxu0
        %v4681 = vadd.f32 %v4613, %v4680
        %v4682 = vpop.f32.mrf.mxu0
        %v4683 = vadd.f32 %v4615, %v4682
        %4684 = vmatmul.bf16.gmra.mxu0 %v4663
        %v4685 = vpop.f32.mrf.mxu0
        %v4686 = vadd.f32 %v4618, %v4685
        %v4687 = vpop.f32.mrf.mxu0
        %v4688 = vadd.f32 %v4620, %v4687
        %4689 = vmatmul.bf16.gmra.mxu0 %v4665
        %v4690 = vpop.f32.mrf.mxu0
        %v4691 = vadd.f32 %v4623, %v4690
        %v4692 = vpop.f32.mrf.mxu0
        %v4693 = vadd.f32 %v4625, %v4692
        %4694 = vmatmul.bf16.gmra.mxu0 %v4667
        %v4695 = vpop.f32.mrf.mxu0
        %v4696 = vadd.f32 %v4628, %v4695
        %v4697 = vpop.f32.mrf.mxu0
        %v4698 = vadd.f32 %v4630, %v4697
        %4699 = vmatmul.bf16.gmra.mxu0 %v4669
        %v4700 = vpop.f32.mrf.mxu0
        %v4701 = vadd.f32 %v4633, %v4700
        %v4702 = vpop.f32.mrf.mxu0
        %v4703 = vadd.f32 %v4635, %v4702
        %4704 = vdwg.mxu0
        %v4705 = vld [vmem:[#allocation3] sm:$0xe]
        %s4706 = scalar_lea.vmem [#allocation6], 64
        %v4707 = vld [vmem:[%s4706] sm:$0xf]
        %v4708 = vld [vmem:[%s4706 + $0x4] sm:$0xf]
        %v4709 = vld [vmem:[%s4706 + $0x8] sm:$0xf]
        %v4710 = vld [vmem:[%s4706 + $0xc] sm:$0xf]
        %v4711 = vld [vmem:[%s4706 + $0x10] sm:$0xf]
        %v4712 = vld [vmem:[%s4706 + $0x14] sm:$0xf]
        %v4713 = vld [vmem:[%s4706 + $0x18] sm:$0xf]
        %v4714 = vld [vmem:[%s4706 + $0x1c] sm:$0xf]
        %v4716 = vunpack.c.l.b16 %v4705
        %v4717 = vpack.c.b16 %v4503, %v4716
        %v4718 = vrot.slane %v4717, 1
        %v4719 = vrot.slane %v4514, 1
        %v4720 = vsel %vm1862, %v4718, %v4719
        %v4721 = vrot.slane %v4515, 1
        %v4722 = vsel %vm1862, %v4719, %v4721
        %v4723 = vrot.slane %v4516, 1
        %v4724 = vsel %vm1862, %v4721, %v4723
        %v4725 = vrot.slane %v4517, 1
        %v4726 = vsel %vm1862, %v4723, %v4725
        %v4727 = vrot.slane %v4518, 1
        %v4728 = vsel %vm1862, %v4725, %v4727
        %v4737 = vunpack.c.l.b16 %v4707
        %v4738 = vunpack.c.l.b16 %v4708
        %v4739 = vunpack.c.l.b16 %v4709
        %v4740 = vunpack.c.l.b16 %v4710
        %v4741 = vunpack.c.l.b16 %v4711
        %v4742 = vunpack.c.l.b16 %v4712
        %v4743 = vunpack.c.l.b16 %v4713
        %v4744 = vunpack.c.l.b16 %v4714
        %v4745 = vpack.c.b16 %v4738, %v4737
        %v4746 = vpack.c.b16 %v4740, %v4739
        %v4747 = vpack.c.b16 %v4742, %v4741
        %v4748 = vpack.c.b16 %v4744, %v4743
        %v4754 = vsel %vm4587, %v4720, 0
        %v4757 = vsel %vm4587, %v4722, 0
        %v4760 = vsel %vm4587, %v4724, 0
        %v4763 = vsel %vm4587, %v4726, 0
        %v4766 = vsel %vm4587, %v4728, 0
        %4768 = vmatpush.bf16.msra.mxu0 0
        %4769 = vmatpush.bf16.msra.mxu0 0
        %4770 = vmatpush.bf16.msra.mxu0 0
        %4771 = vmatpush.bf16.msra.mxu0 0
        %4772 = vmatpush.bf16.msra.mxu0 %v4748
        %4773 = vmatpush.bf16.msra.mxu0 %v4747
        %4774 = vmatpush.bf16.msra.mxu0 %v4746
        %4775 = vmatpush.bf16.msra.mxu0 %v4745
        %4776 = vmatmul.bf16.gmra.mxu0 %v4754
        %v4777 = vpop.f32.mrf.mxu0
        %v4778 = vadd.f32 0.0, %v4777
        %v4779 = vpop.f32.mrf.mxu0
        %v4780 = vadd.f32 0.0, %v4779
        %4781 = vmatmul.bf16.gmra.mxu0 %v4757
        %v4782 = vpop.f32.mrf.mxu0
        %v4783 = vadd.f32 0.0, %v4782
        %v4784 = vpop.f32.mrf.mxu0
        %v4785 = vadd.f32 0.0, %v4784
        %4786 = vmatmul.bf16.gmra.mxu0 %v4760
        %v4787 = vpop.f32.mrf.mxu0
        %v4788 = vadd.f32 0.0, %v4787
        %v4789 = vpop.f32.mrf.mxu0
        %v4790 = vadd.f32 0.0, %v4789
        %4791 = vmatmul.bf16.gmra.mxu0 %v4763
        %v4792 = vpop.f32.mrf.mxu0
        %v4793 = vadd.f32 0.0, %v4792
        %v4794 = vpop.f32.mrf.mxu0
        %v4795 = vadd.f32 0.0, %v4794
        %4796 = vmatmul.bf16.gmra.mxu0 %v4766
        %v4797 = vpop.f32.mrf.mxu0
        %v4798 = vadd.f32 0.0, %v4797
        %v4799 = vpop.f32.mrf.mxu0
        %v4800 = vadd.f32 0.0, %v4799
        %4801 = vdwg.mxu0
        %v4802 = vadd.f32 %v4681, %v4778
        %v4803 = vadd.f32 %v4683, %v4780
        %v4804 = vadd.f32 %v4686, %v4783
        %v4805 = vadd.f32 %v4688, %v4785
        %v4806 = vadd.f32 %v4691, %v4788
        %v4807 = vadd.f32 %v4693, %v4790
        %v4808 = vadd.f32 %v4696, %v4793
        %v4809 = vadd.f32 %v4698, %v4795
        %v4810 = vadd.f32 %v4701, %v4798
        %v4811 = vadd.f32 %v4703, %v4800
        %v4812 = vld [vmem:[#allocation3 + $0x4] sm:$0xe]
        %v4813 = vld [vmem:[#allocation3 + $0x8] sm:$0xf]
        %v4814 = vld [vmem:[#allocation3 + $0xc] sm:$0xf]
        %v4815 = vld [vmem:[#allocation3 + $0x10] sm:$0xf]
        %v4816 = vld [vmem:[#allocation3 + $0x14] sm:$0xf]
        %v4817 = vld [vmem:[#allocation3 + $0x18] sm:$0xf]
        %v4818 = vld [vmem:[#allocation3 + $0x1c] sm:$0xf]
        %v4819 = vld [vmem:[#allocation3 + $0x20] sm:$0xf]
        %v4820 = vld [vmem:[#allocation3 + $0x24] sm:$0xf]
        %v4821 = vld [vmem:[#allocation3 + $0x28] sm:$0xf]
        %v4822 = vld [vmem:[#allocation3 + $0x2c] sm:$0x1]
        %s4823 = scalar_lea.vmem [#allocation6], 96
        %v4824 = vld [vmem:[%s4823] sm:$0xf]
        %v4825 = vld [vmem:[%s4823 + $0x4] sm:$0xf]
        %v4826 = vld [vmem:[%s4823 + $0x8] sm:$0xf]
        %v4827 = vld [vmem:[%s4823 + $0xc] sm:$0xf]
        %v4828 = vld [vmem:[%s4823 + $0x10] sm:$0xf]
        %v4829 = vld [vmem:[%s4823 + $0x14] sm:$0xf]
        %v4830 = vld [vmem:[%s4823 + $0x18] sm:$0xf]
        %v4831 = vld [vmem:[%s4823 + $0x1c] sm:$0xf]
        %v4843 = vunpack.c.l.b16 %v4812
        %v4844 = vunpack.c.l.b16 %v4813
        %v4845 = vunpack.c.l.b16 %v4814
        %v4846 = vunpack.c.l.b16 %v4815
        %v4847 = vunpack.c.l.b16 %v4816
        %v4848 = vunpack.c.l.b16 %v4817
        %v4849 = vunpack.c.l.b16 %v4818
        %v4850 = vunpack.c.l.b16 %v4819
        %v4851 = vunpack.c.l.b16 %v4820
        %v4852 = vunpack.c.l.b16 %v4821
        %v4853 = vunpack.c.l.b16 %v4822
        %v4854 = vpack.c.b16 %v4844, %v4843
        %v4855 = vpack.c.b16 %v4846, %v4845
        %v4856 = vpack.c.b16 %v4848, %v4847
        %v4857 = vpack.c.b16 %v4850, %v4849
        %v4858 = vpack.c.b16 %v4852, %v4851
        %v4859 = vpack.c.b16 %v4853, %v4853
        %v4860 = vrot.slane %v4854, 1
        %v4861 = vrot.slane %v4855, 1
        %v4862 = vsel %vm1862, %v4860, %v4861
        %v4863 = vrot.slane %v4856, 1
        %v4864 = vsel %vm1862, %v4861, %v4863
        %v4865 = vrot.slane %v4857, 1
        %v4866 = vsel %vm1862, %v4863, %v4865
        %v4867 = vrot.slane %v4858, 1
        %v4868 = vsel %vm1862, %v4865, %v4867
        %v4869 = vrot.slane %v4859, 1
        %v4870 = vsel %vm1862, %v4867, %v4869
        %v4879 = vunpack.c.l.b16 %v4824
        %v4880 = vunpack.c.l.b16 %v4825
        %v4881 = vunpack.c.l.b16 %v4826
        %v4882 = vunpack.c.l.b16 %v4827
        %v4883 = vunpack.c.l.b16 %v4828
        %v4884 = vunpack.c.l.b16 %v4829
        %v4885 = vunpack.c.l.b16 %v4830
        %v4886 = vunpack.c.l.b16 %v4831
        %v4887 = vpack.c.b16 %v4880, %v4879
        %v4888 = vpack.c.b16 %v4882, %v4881
        %v4889 = vpack.c.b16 %v4884, %v4883
        %v4890 = vpack.c.b16 %v4886, %v4885
        %v4896 = vsel %vm4587, %v4862, 0
        %v4899 = vsel %vm4587, %v4864, 0
        %v4902 = vsel %vm4587, %v4866, 0
        %v4905 = vsel %vm4587, %v4868, 0
        %v4908 = vsel %vm4587, %v4870, 0
        %4910 = vmatpush.bf16.msra.mxu0 0
        %4911 = vmatpush.bf16.msra.mxu0 0
        %4912 = vmatpush.bf16.msra.mxu0 0
        %4913 = vmatpush.bf16.msra.mxu0 0
        %4914 = vmatpush.bf16.msra.mxu0 %v4890
        %4915 = vmatpush.bf16.msra.mxu0 %v4889
        %4916 = vmatpush.bf16.msra.mxu0 %v4888
        %4917 = vmatpush.bf16.msra.mxu0 %v4887
        %4918 = vmatmul.bf16.gmra.mxu0 %v4896
        %v4919 = vpop.f32.mrf.mxu0
        %v4920 = vadd.f32 0.0, %v4919
        %v4921 = vpop.f32.mrf.mxu0
        %v4922 = vadd.f32 0.0, %v4921
        %4923 = vmatmul.bf16.gmra.mxu0 %v4899
        %v4924 = vpop.f32.mrf.mxu0
        %v4925 = vadd.f32 0.0, %v4924
        %v4926 = vpop.f32.mrf.mxu0
        %v4927 = vadd.f32 0.0, %v4926
        %4928 = vmatmul.bf16.gmra.mxu0 %v4902
        %v4929 = vpop.f32.mrf.mxu0
        %v4930 = vadd.f32 0.0, %v4929
        %v4931 = vpop.f32.mrf.mxu0
        %v4932 = vadd.f32 0.0, %v4931
        %4933 = vmatmul.bf16.gmra.mxu0 %v4905
        %v4934 = vpop.f32.mrf.mxu0
        %v4935 = vadd.f32 0.0, %v4934
        %v4936 = vpop.f32.mrf.mxu0
        %v4937 = vadd.f32 0.0, %v4936
        %4938 = vmatmul.bf16.gmra.mxu0 %v4908
        %v4939 = vpop.f32.mrf.mxu0
        %v4940 = vadd.f32 0.0, %v4939
        %v4941 = vpop.f32.mrf.mxu0
        %v4942 = vadd.f32 0.0, %v4941
        %4943 = vdwg.mxu0
        %v4944 = vadd.f32 %v4802, %v4920
        %v4945 = vadd.f32 %v4803, %v4922
        %v4946 = vadd.f32 %v4804, %v4925
        %v4947 = vadd.f32 %v4805, %v4927
        %v4948 = vadd.f32 %v4806, %v4930
        %v4949 = vadd.f32 %v4807, %v4932
        %v4950 = vadd.f32 %v4808, %v4935
        %v4951 = vadd.f32 %v4809, %v4937
        %v4952 = vadd.f32 %v4810, %v4940
        %v4953 = vadd.f32 %v4811, %v4942
        %v4954 = vld [vmem:[#allocation3 + $0x2c] sm:$0x3]
        %s4955 = scalar_lea.vmem [#allocation6], 128
        %v4956 = vld [vmem:[%s4955] sm:$0xf]
        %v4957 = vld [vmem:[%s4955 + $0x4] sm:$0xf]
        %v4958 = vld [vmem:[%s4955 + $0x8] sm:$0xf]
        %v4959 = vld [vmem:[%s4955 + $0xc] sm:$0xf]
        %v4960 = vld [vmem:[%s4955 + $0x10] sm:$0xf]
        %v4961 = vld [vmem:[%s4955 + $0x14] sm:$0xf]
        %v4962 = vld [vmem:[%s4955 + $0x18] sm:$0xf]
        %v4963 = vld [vmem:[%s4955 + $0x1c] sm:$0xf]
        %v4965 = vunpack.c.l.b16 %v4954
        %v4966 = vpack.c.b16 %v4965, %v4965
        %v4968 = vshrl.u32 %v4854, 16
        %v4970 = vrot.slane %v4968, 1
        %v4971 = vshll.u32 %v4854, 16
        %v4973 = vrot.slane %v4971, 2
        %v4974 = vor.u32 %v4970, %v4973
        %v4976 = vshrl.u32 %v4855, 16
        %v4978 = vrot.slane %v4976, 1
        %v4979 = vshll.u32 %v4855, 16
        %v4981 = vrot.slane %v4979, 2
        %v4982 = vor.u32 %v4978, %v4981
        %v4983 = vsel %vm2459, %v4974, %v4982
        %v4985 = vshrl.u32 %v4856, 16
        %v4987 = vrot.slane %v4985, 1
        %v4988 = vshll.u32 %v4856, 16
        %v4990 = vrot.slane %v4988, 2
        %v4991 = vor.u32 %v4987, %v4990
        %v4992 = vsel %vm2459, %v4982, %v4991
        %v4994 = vshrl.u32 %v4857, 16
        %v4996 = vrot.slane %v4994, 1
        %v4997 = vshll.u32 %v4857, 16
        %v4999 = vrot.slane %v4997, 2
        %v5000 = vor.u32 %v4996, %v4999
        %v5001 = vsel %vm2459, %v4991, %v5000
        %v5003 = vshrl.u32 %v4858, 16
        %v5005 = vrot.slane %v5003, 1
        %v5006 = vshll.u32 %v4858, 16
        %v5008 = vrot.slane %v5006, 2
        %v5009 = vor.u32 %v5005, %v5008
        %v5010 = vsel %vm2459, %v5000, %v5009
        %v5012 = vshrl.u32 %v4966, 16
        %v5014 = vrot.slane %v5012, 1
        %v5015 = vshll.u32 %v4966, 16
        %v5017 = vrot.slane %v5015, 2
        %v5018 = vor.u32 %v5014, %v5017
        %v5019 = vsel %vm2459, %v5009, %v5018
        %v5028 = vunpack.c.l.b16 %v4956
        %v5029 = vunpack.c.l.b16 %v4957
        %v5030 = vunpack.c.l.b16 %v4958
        %v5031 = vunpack.c.l.b16 %v4959
        %v5032 = vunpack.c.l.b16 %v4960
        %v5033 = vunpack.c.l.b16 %v4961
        %v5034 = vunpack.c.l.b16 %v4962
        %v5035 = vunpack.c.l.b16 %v4963
        %v5036 = vpack.c.b16 %v5029, %v5028
        %v5037 = vpack.c.b16 %v5031, %v5030
        %v5038 = vpack.c.b16 %v5033, %v5032
        %v5039 = vpack.c.b16 %v5035, %v5034
        %v5045 = vsel %vm4587, %v4983, 0
        %v5048 = vsel %vm4587, %v4992, 0
        %v5051 = vsel %vm4587, %v5001, 0
        %v5054 = vsel %vm4587, %v5010, 0
        %v5057 = vsel %vm4587, %v5019, 0
        %5059 = vmatpush.bf16.msra.mxu0 0
        %5060 = vmatpush.bf16.msra.mxu0 0
        %5061 = vmatpush.bf16.msra.mxu0 0
        %5062 = vmatpush.bf16.msra.mxu0 0
        %5063 = vmatpush.bf16.msra.mxu0 %v5039
        %5064 = vmatpush.bf16.msra.mxu0 %v5038
        %5065 = vmatpush.bf16.msra.mxu0 %v5037
        %5066 = vmatpush.bf16.msra.mxu0 %v5036
        %5067 = vmatmul.bf16.gmra.mxu0 %v5045
        %v5068 = vpop.f32.mrf.mxu0
        %v5069 = vadd.f32 0.0, %v5068
        %v5070 = vpop.f32.mrf.mxu0
        %v5071 = vadd.f32 0.0, %v5070
        %5072 = vmatmul.bf16.gmra.mxu0 %v5048
        %v5073 = vpop.f32.mrf.mxu0
        %v5074 = vadd.f32 0.0, %v5073
        %v5075 = vpop.f32.mrf.mxu0
        %v5076 = vadd.f32 0.0, %v5075
        %5077 = vmatmul.bf16.gmra.mxu0 %v5051
        %v5078 = vpop.f32.mrf.mxu0
        %v5079 = vadd.f32 0.0, %v5078
        %v5080 = vpop.f32.mrf.mxu0
        %v5081 = vadd.f32 0.0, %v5080
        %5082 = vmatmul.bf16.gmra.mxu0 %v5054
        %v5083 = vpop.f32.mrf.mxu0
        %v5084 = vadd.f32 0.0, %v5083
        %v5085 = vpop.f32.mrf.mxu0
        %v5086 = vadd.f32 0.0, %v5085
        %5087 = vmatmul.bf16.gmra.mxu0 %v5057
        %v5088 = vpop.f32.mrf.mxu0
        %v5089 = vadd.f32 0.0, %v5088
        %v5090 = vpop.f32.mrf.mxu0
        %v5091 = vadd.f32 0.0, %v5090
        %5092 = vdwg.mxu0
        %v5093 = vadd.f32 %v4944, %v5069
        %v5094 = vadd.f32 %v4945, %v5071
        %v5095 = vadd.f32 %v4946, %v5074
        %v5096 = vadd.f32 %v4947, %v5076
        %v5097 = vadd.f32 %v4948, %v5079
        %v5098 = vadd.f32 %v4949, %v5081
        %v5099 = vadd.f32 %v4950, %v5084
        %v5100 = vadd.f32 %v4951, %v5086
        %v5101 = vadd.f32 %v4952, %v5089
        %v5102 = vadd.f32 %v4953, %v5091
        %v5103 = vld [vmem:[#allocation3 + $0x4] sm:$0xc]
        %s5104 = scalar_lea.vmem [#allocation6], 160
        %v5105 = vld [vmem:[%s5104] sm:$0xf]
        %v5106 = vld [vmem:[%s5104 + $0x4] sm:$0xf]
        %v5107 = vld [vmem:[%s5104 + $0x8] sm:$0xf]
        %v5108 = vld [vmem:[%s5104 + $0xc] sm:$0xf]
        %v5109 = vld [vmem:[%s5104 + $0x10] sm:$0xf]
        %v5110 = vld [vmem:[%s5104 + $0x14] sm:$0xf]
        %v5111 = vld [vmem:[%s5104 + $0x18] sm:$0xf]
        %v5112 = vld [vmem:[%s5104 + $0x1c] sm:$0xf]
        %v5114 = vunpack.c.l.b16 %v5103
        %v5115 = vpack.c.b16 %v4844, %v5114
        %v5116 = vrot.slane %v5115, 2
        %v5117 = vrot.slane %v4855, 2
        %v5118 = vsel %vm2828, %v5116, %v5117
        %v5119 = vrot.slane %v4856, 2
        %v5120 = vsel %vm2828, %v5117, %v5119
        %v5121 = vrot.slane %v4857, 2
        %v5122 = vsel %vm2828, %v5119, %v5121
        %v5123 = vrot.slane %v4858, 2
        %v5124 = vsel %vm2828, %v5121, %v5123
        %v5125 = vrot.slane %v4966, 2
        %v5126 = vsel %vm2828, %v5123, %v5125
        %v5135 = vunpack.c.l.b16 %v5105
        %v5136 = vunpack.c.l.b16 %v5106
        %v5137 = vunpack.c.l.b16 %v5107
        %v5138 = vunpack.c.l.b16 %v5108
        %v5139 = vunpack.c.l.b16 %v5109
        %v5140 = vunpack.c.l.b16 %v5110
        %v5141 = vunpack.c.l.b16 %v5111
        %v5142 = vunpack.c.l.b16 %v5112
        %v5143 = vpack.c.b16 %v5136, %v5135
        %v5144 = vpack.c.b16 %v5138, %v5137
        %v5145 = vpack.c.b16 %v5140, %v5139
        %v5146 = vpack.c.b16 %v5142, %v5141
        %v5152 = vsel %vm4587, %v5118, 0
        %v5155 = vsel %vm4587, %v5120, 0
        %v5158 = vsel %vm4587, %v5122, 0
        %v5161 = vsel %vm4587, %v5124, 0
        %v5164 = vsel %vm4587, %v5126, 0
        %5166 = vmatpush.bf16.msra.mxu0 0
        %5167 = vmatpush.bf16.msra.mxu0 0
        %5168 = vmatpush.bf16.msra.mxu0 0
        %5169 = vmatpush.bf16.msra.mxu0 0
        %5170 = vmatpush.bf16.msra.mxu0 %v5146
        %5171 = vmatpush.bf16.msra.mxu0 %v5145
        %5172 = vmatpush.bf16.msra.mxu0 %v5144
        %5173 = vmatpush.bf16.msra.mxu0 %v5143
        %5174 = vmatmul.bf16.gmra.mxu0 %v5152
        %v5175 = vpop.f32.mrf.mxu0
        %v5176 = vadd.f32 0.0, %v5175
        %v5177 = vpop.f32.mrf.mxu0
        %v5178 = vadd.f32 0.0, %v5177
        %5179 = vmatmul.bf16.gmra.mxu0 %v5155
        %v5180 = vpop.f32.mrf.mxu0
        %v5181 = vadd.f32 0.0, %v5180
        %v5182 = vpop.f32.mrf.mxu0
        %v5183 = vadd.f32 0.0, %v5182
        %5184 = vmatmul.bf16.gmra.mxu0 %v5158
        %v5185 = vpop.f32.mrf.mxu0
        %v5186 = vadd.f32 0.0, %v5185
        %v5187 = vpop.f32.mrf.mxu0
        %v5188 = vadd.f32 0.0, %v5187
        %5189 = vmatmul.bf16.gmra.mxu0 %v5161
        %v5190 = vpop.f32.mrf.mxu0
        %v5191 = vadd.f32 0.0, %v5190
        %v5192 = vpop.f32.mrf.mxu0
        %v5193 = vadd.f32 0.0, %v5192
        %5194 = vmatmul.bf16.gmra.mxu0 %v5164
        %v5195 = vpop.f32.mrf.mxu0
        %v5196 = vadd.f32 0.0, %v5195
        %v5197 = vpop.f32.mrf.mxu0
        %v5198 = vadd.f32 0.0, %v5197
        %5199 = vdwg.mxu0
        %v5200 = vadd.f32 %v5093, %v5176
        %v5201 = vadd.f32 %v5094, %v5178
        %v5202 = vadd.f32 %v5095, %v5181
        %v5203 = vadd.f32 %v5096, %v5183
        %v5204 = vadd.f32 %v5097, %v5186
        %v5205 = vadd.f32 %v5098, %v5188
        %v5206 = vadd.f32 %v5099, %v5191
        %v5207 = vadd.f32 %v5100, %v5193
        %v5208 = vadd.f32 %v5101, %v5196
        %v5209 = vadd.f32 %v5102, %v5198
        %v5210 = vld [vmem:[#allocation3 + $0x8] sm:$0xc]
        %v5211 = vld [vmem:[#allocation3 + $0xc] sm:$0xf]
        %v5212 = vld [vmem:[#allocation3 + $0x10] sm:$0xf]
        %v5213 = vld [vmem:[#allocation3 + $0x14] sm:$0xf]
        %v5214 = vld [vmem:[#allocation3 + $0x18] sm:$0xf]
        %v5215 = vld [vmem:[#allocation3 + $0x1c] sm:$0xf]
        %v5216 = vld [vmem:[#allocation3 + $0x20] sm:$0xf]
        %v5217 = vld [vmem:[#allocation3 + $0x24] sm:$0xf]
        %v5218 = vld [vmem:[#allocation3 + $0x28] sm:$0xf]
        %v5219 = vld [vmem:[#allocation3 + $0x2c] sm:$0xf]
        %v5220 = vld [vmem:[#allocation3 + $0x30] sm:$0x3]
        %s5221 = scalar_lea.vmem [#allocation6], 192
        %v5222 = vld [vmem:[%s5221] sm:$0xf]
        %v5223 = vld [vmem:[%s5221 + $0x4] sm:$0xf]
        %v5224 = vld [vmem:[%s5221 + $0x8] sm:$0xf]
        %v5225 = vld [vmem:[%s5221 + $0xc] sm:$0xf]
        %v5226 = vld [vmem:[%s5221 + $0x10] sm:$0xf]
        %v5227 = vld [vmem:[%s5221 + $0x14] sm:$0xf]
        %v5228 = vld [vmem:[%s5221 + $0x18] sm:$0xf]
        %v5229 = vld [vmem:[%s5221 + $0x1c] sm:$0xf]
        %v5241 = vunpack.c.l.b16 %v5210
        %v5242 = vunpack.c.l.b16 %v5211
        %v5243 = vunpack.c.l.b16 %v5212
        %v5244 = vunpack.c.l.b16 %v5213
        %v5245 = vunpack.c.l.b16 %v5214
        %v5246 = vunpack.c.l.b16 %v5215
        %v5247 = vunpack.c.l.b16 %v5216
        %v5248 = vunpack.c.l.b16 %v5217
        %v5249 = vunpack.c.l.b16 %v5218
        %v5250 = vunpack.c.l.b16 %v5219
        %v5251 = vunpack.c.l.b16 %v5220
        %v5252 = vpack.c.b16 %v5242, %v5241
        %v5253 = vpack.c.b16 %v5244, %v5243
        %v5254 = vpack.c.b16 %v5246, %v5245
        %v5255 = vpack.c.b16 %v5248, %v5247
        %v5256 = vpack.c.b16 %v5250, %v5249
        %v5257 = vpack.c.b16 %v5251, %v5251
        %v5258 = vrot.slane %v5252, 2
        %v5259 = vrot.slane %v5253, 2
        %v5260 = vsel %vm2828, %v5258, %v5259
        %v5261 = vrot.slane %v5254, 2
        %v5262 = vsel %vm2828, %v5259, %v5261
        %v5263 = vrot.slane %v5255, 2
        %v5264 = vsel %vm2828, %v5261, %v5263
        %v5265 = vrot.slane %v5256, 2
        %v5266 = vsel %vm2828, %v5263, %v5265
        %v5267 = vrot.slane %v5257, 2
        %v5268 = vsel %vm2828, %v5265, %v5267
        %v5277 = vunpack.c.l.b16 %v5222
        %v5278 = vunpack.c.l.b16 %v5223
        %v5279 = vunpack.c.l.b16 %v5224
        %v5280 = vunpack.c.l.b16 %v5225
        %v5281 = vunpack.c.l.b16 %v5226
        %v5282 = vunpack.c.l.b16 %v5227
        %v5283 = vunpack.c.l.b16 %v5228
        %v5284 = vunpack.c.l.b16 %v5229
        %v5285 = vpack.c.b16 %v5278, %v5277
        %v5286 = vpack.c.b16 %v5280, %v5279
        %v5287 = vpack.c.b16 %v5282, %v5281
        %v5288 = vpack.c.b16 %v5284, %v5283
        %v5294 = vsel %vm4587, %v5260, 0
        %v5297 = vsel %vm4587, %v5262, 0
        %v5300 = vsel %vm4587, %v5264, 0
        %v5303 = vsel %vm4587, %v5266, 0
        %v5306 = vsel %vm4587, %v5268, 0
        %5308 = vmatpush.bf16.msra.mxu0 0
        %5309 = vmatpush.bf16.msra.mxu0 0
        %5310 = vmatpush.bf16.msra.mxu0 0
        %5311 = vmatpush.bf16.msra.mxu0 0
        %5312 = vmatpush.bf16.msra.mxu0 %v5288
        %5313 = vmatpush.bf16.msra.mxu0 %v5287
        %5314 = vmatpush.bf16.msra.mxu0 %v5286
        %5315 = vmatpush.bf16.msra.mxu0 %v5285
        %5316 = vmatmul.bf16.gmra.mxu0 %v5294
        %v5317 = vpop.f32.mrf.mxu0
        %v5318 = vadd.f32 0.0, %v5317
        %v5319 = vpop.f32.mrf.mxu0
        %v5320 = vadd.f32 0.0, %v5319
        %5321 = vmatmul.bf16.gmra.mxu0 %v5297
        %v5322 = vpop.f32.mrf.mxu0
        %v5323 = vadd.f32 0.0, %v5322
        %v5324 = vpop.f32.mrf.mxu0
        %v5325 = vadd.f32 0.0, %v5324
        %5326 = vmatmul.bf16.gmra.mxu0 %v5300
        %v5327 = vpop.f32.mrf.mxu0
        %v5328 = vadd.f32 0.0, %v5327
        %v5329 = vpop.f32.mrf.mxu0
        %v5330 = vadd.f32 0.0, %v5329
        %5331 = vmatmul.bf16.gmra.mxu0 %v5303
        %v5332 = vpop.f32.mrf.mxu0
        %v5333 = vadd.f32 0.0, %v5332
        %v5334 = vpop.f32.mrf.mxu0
        %v5335 = vadd.f32 0.0, %v5334
        %5336 = vmatmul.bf16.gmra.mxu0 %v5306
        %v5337 = vpop.f32.mrf.mxu0
        %v5338 = vadd.f32 0.0, %v5337
        %v5339 = vpop.f32.mrf.mxu0
        %v5340 = vadd.f32 0.0, %v5339
        %5341 = vdwg.mxu0
        %v5342 = vadd.f32 %v5200, %v5318
        %v5343 = vadd.f32 %v5201, %v5320
        %v5344 = vadd.f32 %v5202, %v5323
        %v5345 = vadd.f32 %v5203, %v5325
        %v5346 = vadd.f32 %v5204, %v5328
        %v5347 = vadd.f32 %v5205, %v5330
        %v5348 = vadd.f32 %v5206, %v5333
        %v5349 = vadd.f32 %v5207, %v5335
        %v5350 = vadd.f32 %v5208, %v5338
        %v5351 = vadd.f32 %v5209, %v5340
        %v5352 = vld [vmem:[#allocation3 + $0x30] sm:$0x7]
        %s5353 = scalar_lea.vmem [#allocation6], 224
        %v5354 = vld [vmem:[%s5353] sm:$0xf]
        %v5355 = vld [vmem:[%s5353 + $0x4] sm:$0xf]
        %v5356 = vld [vmem:[%s5353 + $0x8] sm:$0xf]
        %v5357 = vld [vmem:[%s5353 + $0xc] sm:$0xf]
        %v5358 = vld [vmem:[%s5353 + $0x10] sm:$0xf]
        %v5359 = vld [vmem:[%s5353 + $0x14] sm:$0xf]
        %v5360 = vld [vmem:[%s5353 + $0x18] sm:$0xf]
        %v5361 = vld [vmem:[%s5353 + $0x1c] sm:$0xf]
        %v5363 = vunpack.c.l.b16 %v5352
        %v5364 = vpack.c.b16 %v5363, %v5363
        %v5366 = vshrl.u32 %v5252, 16
        %v5368 = vrot.slane %v5366, 2
        %v5369 = vshll.u32 %v5252, 16
        %v5371 = vrot.slane %v5369, 3
        %v5372 = vor.u32 %v5368, %v5371
        %v5374 = vshrl.u32 %v5253, 16
        %v5376 = vrot.slane %v5374, 2
        %v5377 = vshll.u32 %v5253, 16
        %v5379 = vrot.slane %v5377, 3
        %v5380 = vor.u32 %v5376, %v5379
        %v5381 = vsel %vm3425, %v5372, %v5380
        %v5383 = vshrl.u32 %v5254, 16
        %v5385 = vrot.slane %v5383, 2
        %v5386 = vshll.u32 %v5254, 16
        %v5388 = vrot.slane %v5386, 3
        %v5389 = vor.u32 %v5385, %v5388
        %v5390 = vsel %vm3425, %v5380, %v5389
        %v5392 = vshrl.u32 %v5255, 16
        %v5394 = vrot.slane %v5392, 2
        %v5395 = vshll.u32 %v5255, 16
        %v5397 = vrot.slane %v5395, 3
        %v5398 = vor.u32 %v5394, %v5397
        %v5399 = vsel %vm3425, %v5389, %v5398
        %v5401 = vshrl.u32 %v5256, 16
        %v5403 = vrot.slane %v5401, 2
        %v5404 = vshll.u32 %v5256, 16
        %v5406 = vrot.slane %v5404, 3
        %v5407 = vor.u32 %v5403, %v5406
        %v5408 = vsel %vm3425, %v5398, %v5407
        %v5410 = vshrl.u32 %v5364, 16
        %v5412 = vrot.slane %v5410, 2
        %v5413 = vshll.u32 %v5364, 16
        %v5415 = vrot.slane %v5413, 3
        %v5416 = vor.u32 %v5412, %v5415
        %v5417 = vsel %vm3425, %v5407, %v5416
        %v5426 = vunpack.c.l.b16 %v5354
        %v5427 = vunpack.c.l.b16 %v5355
        %v5428 = vunpack.c.l.b16 %v5356
        %v5429 = vunpack.c.l.b16 %v5357
        %v5430 = vunpack.c.l.b16 %v5358
        %v5431 = vunpack.c.l.b16 %v5359
        %v5432 = vunpack.c.l.b16 %v5360
        %v5433 = vunpack.c.l.b16 %v5361
        %v5434 = vpack.c.b16 %v5427, %v5426
        %v5435 = vpack.c.b16 %v5429, %v5428
        %v5436 = vpack.c.b16 %v5431, %v5430
        %v5437 = vpack.c.b16 %v5433, %v5432
        %v5443 = vsel %vm4587, %v5381, 0
        %v5446 = vsel %vm4587, %v5390, 0
        %v5449 = vsel %vm4587, %v5399, 0
        %v5452 = vsel %vm4587, %v5408, 0
        %v5455 = vsel %vm4587, %v5417, 0
        %5457 = vmatpush.bf16.msra.mxu0 0
        %5458 = vmatpush.bf16.msra.mxu0 0
        %5459 = vmatpush.bf16.msra.mxu0 0
        %5460 = vmatpush.bf16.msra.mxu0 0
        %5461 = vmatpush.bf16.msra.mxu0 %v5437
        %5462 = vmatpush.bf16.msra.mxu0 %v5436
        %5463 = vmatpush.bf16.msra.mxu0 %v5435
        %5464 = vmatpush.bf16.msra.mxu0 %v5434
        %5465 = vmatmul.bf16.gmra.mxu0 %v5443
        %v5466 = vpop.f32.mrf.mxu0
        %v5467 = vadd.f32 0.0, %v5466
        %v5468 = vpop.f32.mrf.mxu0
        %v5469 = vadd.f32 0.0, %v5468
        %5470 = vmatmul.bf16.gmra.mxu0 %v5446
        %v5471 = vpop.f32.mrf.mxu0
        %v5472 = vadd.f32 0.0, %v5471
        %v5473 = vpop.f32.mrf.mxu0
        %v5474 = vadd.f32 0.0, %v5473
        %5475 = vmatmul.bf16.gmra.mxu0 %v5449
        %v5476 = vpop.f32.mrf.mxu0
        %v5477 = vadd.f32 0.0, %v5476
        %v5478 = vpop.f32.mrf.mxu0
        %v5479 = vadd.f32 0.0, %v5478
        %5480 = vmatmul.bf16.gmra.mxu0 %v5452
        %v5481 = vpop.f32.mrf.mxu0
        %v5482 = vadd.f32 0.0, %v5481
        %v5483 = vpop.f32.mrf.mxu0
        %v5484 = vadd.f32 0.0, %v5483
        %5485 = vmatmul.bf16.gmra.mxu0 %v5455
        %v5486 = vpop.f32.mrf.mxu0
        %v5487 = vadd.f32 0.0, %v5486
        %v5488 = vpop.f32.mrf.mxu0
        %v5489 = vadd.f32 0.0, %v5488
        %5490 = vdwg.mxu0
        %v5491 = vadd.f32 %v5342, %v5467
        %v5492 = vadd.f32 %v5343, %v5469
        %v5493 = vadd.f32 %v5344, %v5472
        %v5494 = vadd.f32 %v5345, %v5474
        %v5495 = vadd.f32 %v5346, %v5477
        %v5496 = vadd.f32 %v5347, %v5479
        %v5497 = vadd.f32 %v5348, %v5482
        %v5498 = vadd.f32 %v5349, %v5484
        %v5499 = vadd.f32 %v5350, %v5487
        %v5500 = vadd.f32 %v5351, %v5489
        %v5501 = vld [vmem:[#allocation3 + $0x8] sm:$0x8]
        %s5502 = scalar_lea.vmem [#allocation6], 256
        %v5503 = vld [vmem:[%s5502] sm:$0xf]
        %v5504 = vld [vmem:[%s5502 + $0x4] sm:$0xf]
        %v5505 = vld [vmem:[%s5502 + $0x8] sm:$0xf]
        %v5506 = vld [vmem:[%s5502 + $0xc] sm:$0xf]
        %v5507 = vld [vmem:[%s5502 + $0x10] sm:$0xf]
        %v5508 = vld [vmem:[%s5502 + $0x14] sm:$0xf]
        %v5509 = vld [vmem:[%s5502 + $0x18] sm:$0xf]
        %v5510 = vld [vmem:[%s5502 + $0x1c] sm:$0xf]
        %v5512 = vunpack.c.l.b16 %v5501
        %v5513 = vpack.c.b16 %v5242, %v5512
        %v5514 = vrot.slane %v5513, 3
        %v5515 = vrot.slane %v5253, 3
        %v5516 = vsel %vm3794, %v5514, %v5515
        %v5517 = vrot.slane %v5254, 3
        %v5518 = vsel %vm3794, %v5515, %v5517
        %v5519 = vrot.slane %v5255, 3
        %v5520 = vsel %vm3794, %v5517, %v5519
        %v5521 = vrot.slane %v5256, 3
        %v5522 = vsel %vm3794, %v5519, %v5521
        %v5523 = vrot.slane %v5364, 3
        %v5524 = vsel %vm3794, %v5521, %v5523
        %v5533 = vunpack.c.l.b16 %v5503
        %v5534 = vunpack.c.l.b16 %v5504
        %v5535 = vunpack.c.l.b16 %v5505
        %v5536 = vunpack.c.l.b16 %v5506
        %v5537 = vunpack.c.l.b16 %v5507
        %v5538 = vunpack.c.l.b16 %v5508
        %v5539 = vunpack.c.l.b16 %v5509
        %v5540 = vunpack.c.l.b16 %v5510
        %v5541 = vpack.c.b16 %v5534, %v5533
        %v5542 = vpack.c.b16 %v5536, %v5535
        %v5543 = vpack.c.b16 %v5538, %v5537
        %v5544 = vpack.c.b16 %v5540, %v5539
        %v5550 = vsel %vm4587, %v5516, 0
        %v5553 = vsel %vm4587, %v5518, 0
        %v5556 = vsel %vm4587, %v5520, 0
        %v5559 = vsel %vm4587, %v5522, 0
        %v5562 = vsel %vm4587, %v5524, 0
        %5564 = vmatpush.bf16.msra.mxu0 0
        %5565 = vmatpush.bf16.msra.mxu0 0
        %5566 = vmatpush.bf16.msra.mxu0 0
        %5567 = vmatpush.bf16.msra.mxu0 0
        %5568 = vmatpush.bf16.msra.mxu0 %v5544
        %5569 = vmatpush.bf16.msra.mxu0 %v5543
        %5570 = vmatpush.bf16.msra.mxu0 %v5542
        %5571 = vmatpush.bf16.msra.mxu0 %v5541
        %5572 = vmatmul.bf16.gmra.mxu0 %v5550
        %v5573 = vpop.f32.mrf.mxu0
        %v5574 = vadd.f32 0.0, %v5573
        %v5575 = vpop.f32.mrf.mxu0
        %v5576 = vadd.f32 0.0, %v5575
        %5577 = vmatmul.bf16.gmra.mxu0 %v5553
        %v5578 = vpop.f32.mrf.mxu0
        %v5579 = vadd.f32 0.0, %v5578
        %v5580 = vpop.f32.mrf.mxu0
        %v5581 = vadd.f32 0.0, %v5580
        %5582 = vmatmul.bf16.gmra.mxu0 %v5556
        %v5583 = vpop.f32.mrf.mxu0
        %v5584 = vadd.f32 0.0, %v5583
        %v5585 = vpop.f32.mrf.mxu0
        %v5586 = vadd.f32 0.0, %v5585
        %5587 = vmatmul.bf16.gmra.mxu0 %v5559
        %v5588 = vpop.f32.mrf.mxu0
        %v5589 = vadd.f32 0.0, %v5588
        %v5590 = vpop.f32.mrf.mxu0
        %v5591 = vadd.f32 0.0, %v5590
        %5592 = vmatmul.bf16.gmra.mxu0 %v5562
        %v5593 = vpop.f32.mrf.mxu0
        %v5594 = vadd.f32 0.0, %v5593
        %v5595 = vpop.f32.mrf.mxu0
        %v5596 = vadd.f32 0.0, %v5595
        %5597 = vdwg.mxu0
        %v5598 = vadd.f32 %v5491, %v5574
        %v5599 = vadd.f32 %v5492, %v5576
        %v5600 = vadd.f32 %v5493, %v5579
        %v5601 = vadd.f32 %v5494, %v5581
        %v5602 = vadd.f32 %v5495, %v5584
        %v5603 = vadd.f32 %v5496, %v5586
        %v5604 = vadd.f32 %v5497, %v5589
        %v5605 = vadd.f32 %v5498, %v5591
        %v5606 = vadd.f32 %v5499, %v5594
        %v5607 = vadd.f32 %v5500, %v5596
        %v5608 = vld [vmem:[%s6] sm:$0x1]
        %v5610 = vperm.slane %v5608, 0
        %v5612 = vmul.f32 %v5598, %v5610
        %v5613 = vmul.f32 %v5599, %v5610
        %v5614 = vmul.f32 %v5600, %v5610
        %v5615 = vmul.f32 %v5601, %v5610
        %v5616 = vmul.f32 %v5602, %v5610
        %v5617 = vmul.f32 %v5603, %v5610
        %v5618 = vmul.f32 %v5604, %v5610
        %v5619 = vmul.f32 %v5605, %v5610
        %v5620 = vmul.f32 %v5606, %v5610
        %v5621 = vmul.f32 %v5607, %v5610
        %v5622 = vld [vmem:[%s7] sm:$0x1]
        %v5624 = vperm.slane %v5622, 0
        %v5626 = vadd.f32 %v5612, %v5624
        %v5627 = vadd.f32 %v5613, %v5624
        %v5628 = vadd.f32 %v5614, %v5624
        %v5629 = vadd.f32 %v5615, %v5624
        %v5630 = vadd.f32 %v5616, %v5624
        %v5631 = vadd.f32 %v5617, %v5624
        %v5632 = vadd.f32 %v5618, %v5624
        %v5633 = vadd.f32 %v5619, %v5624
        %v5634 = vadd.f32 %v5620, %v5624
        %v5635 = vadd.f32 %v5621, %v5624
        %v5636 = vmax.f32 %v5626, 0.0
        %v5637 = vmax.f32 %v5627, 0.0
        %v5638 = vmax.f32 %v5628, 0.0
        %v5639 = vmax.f32 %v5629, 0.0
        %v5640 = vmax.f32 %v5630, 0.0
        %v5641 = vmax.f32 %v5631, 0.0
        %v5642 = vmax.f32 %v5632, 0.0
        %v5643 = vmax.f32 %v5633, 0.0
        %v5644 = vmax.f32 %v5634, 0.0
        %v5645 = vmax.f32 %v5635, 0.0
        %v5646 = vld [vmem:[%s15] sm:$0xf]
        %v5647 = vld [vmem:[%s15 + $0x4] sm:$0xf]
        %v5648 = vld [vmem:[%s15 + $0x8] sm:$0xf]
        %v5649 = vld [vmem:[%s15 + $0xc] sm:$0xf]
        %v5650 = vld [vmem:[%s15 + $0x10] sm:$0x7]
        %v5651 = vpack.c.bf16 %v5637, %v5636
        %v5652 = vpack.c.bf16 %v5639, %v5638
        %v5653 = vpack.c.bf16 %v5641, %v5640
        %v5654 = vpack.c.bf16 %v5643, %v5642
        %v5655 = vpack.c.bf16 %v5645, %v5644
        %v5661 = vunpack.c.l.b16 %v5646
        %v5662 = vunpack.c.l.b16 %v5647
        %v5663 = vunpack.c.l.b16 %v5648
        %v5664 = vunpack.c.l.b16 %v5649
        %v5665 = vunpack.c.l.b16 %v5650
        %v5666 = vpack.c.b16 %v5662, %v5661
        %v5667 = vpack.c.b16 %v5664, %v5663
        %v5668 = vpack.c.b16 %v5665, %v5665
        %vm5669 = vcmask 654336
        %v5671 = vsel %vm5669, %v5666, 0
        %v5674 = vsel %vm5669, %v5667, 0
        %v5677 = vsel %vm5669, %v5668, 0
        %5679 = vmatpush.bf16.msra.mxu0 0
        %5680 = vmatpush.bf16.msra.mxu0 0
        %5681 = vmatpush.bf16.msra.mxu0 0
        %5682 = vmatpush.bf16.msra.mxu0 %v5655
        %5683 = vmatpush.bf16.msra.mxu0 %v5654
        %5684 = vmatpush.bf16.msra.mxu0 %v5653
        %5685 = vmatpush.bf16.msra.mxu0 %v5652
        %5686 = vmatpush.bf16.msra.mxu0 %v5651
        %5687 = vmatmul.bf16.gmra.mxu0 %v5671
        %v5688 = vpop.f32.mrf.mxu0
        %v5689 = vadd.f32 0.0, %v5688
        %v5690 = vpop.f32.mrf.mxu0
        %v5691 = vadd.f32 0.0, %v5690
        %5692 = vmatmul.bf16.gmra.mxu0 %v5674
        %v5693 = vpop.f32.mrf.mxu0
        %v5694 = vadd.f32 0.0, %v5693
        %v5695 = vpop.f32.mrf.mxu0
        %v5696 = vadd.f32 0.0, %v5695
        %5697 = vmatmul.bf16.gmra.mxu0 %v5677
        %v5698 = vpop.f32.mrf.mxu0
        %v5699 = vadd.f32 0.0, %v5698
        %v5700 = vpop.f32.mrf.mxu0
        %5701 = vdwg.mxu0
        %v5702 = vpack.c.bf16 %v5689, %v5689
        %v5703 = vpack.c.bf16 %v5691, %v5691
        %v5704 = vpack.c.bf16 %v5694, %v5694
        %v5705 = vpack.c.bf16 %v5696, %v5696
        %v5706 = vpack.c.bf16 %v5699, %v5699
        %5707 = vst [vmem:[#allocation4] sm:$0xf] %v5702
        %5708 = vst [vmem:[#allocation4 + $0x4] sm:$0xf] %v5703
        %5709 = vst [vmem:[#allocation4 + $0x8] sm:$0xf] %v5704
        %5710 = vst [vmem:[#allocation4 + $0xc] sm:$0xf] %v5705
        %5711 = vst [vmem:[#allocation4 + $0x10] sm:$0x7] %v5706
        %v5712 = vld [vmem:[#allocation4] sm:$0xf]
        %v5713 = vld [vmem:[#allocation4 + $0x4] sm:$0xf]
        %v5714 = vld [vmem:[#allocation4 + $0x8] sm:$0xf]
        %v5715 = vld [vmem:[%s8] sm:$0xff]
        %v5716 = vld [vmem:[%s8 + $0x8] sm:$0xff]
        %v5717 = vld [vmem:[%s8 + $0x10] sm:$0xff]
        %v5718 = vld [vmem:[%s8 + $0x18] sm:$0xff]
        %v5719 = vld [vmem:[%s8 + $0x20] sm:$0xff]
        %v5720 = vld [vmem:[%s8 + $0x28] sm:$0xff]
        %v5721 = vld [vmem:[%s8 + $0x30] sm:$0xff]
        %v5722 = vld [vmem:[%s8 + $0x38] sm:$0xff]
        %v5723 = vld [vmem:[%s8 + $0x40] sm:$0xff]
        %v5724 = vld [vmem:[%s8 + $0x48] sm:$0xff]
        %v5725 = vld [vmem:[%s8 + $0x50] sm:$0xff]
        %v5726 = vld [vmem:[%s8 + $0x58] sm:$0xff]
        %v5727 = vld [vmem:[%s8 + $0x60] sm:$0xff]
        %v5728 = vld [vmem:[%s8 + $0x68] sm:$0xff]
        %v5729 = vld [vmem:[%s8 + $0x70] sm:$0xff]
        %v5730 = vld [vmem:[%s8 + $0x78] sm:$0xff]
        %v5731 = vld [vmem:[#allocation4 + $0xc] sm:$0x1]
        %s5732 = scalar_lea.vmem %s8, 128
        %v5733 = vld [vmem:[%s5732] sm:$0xff]
        %v5734 = vld [vmem:[%s5732 + $0x8] sm:$0xff]
        %v5735 = vld [vmem:[%s5732 + $0x10] sm:$0xff]
        %v5736 = vld [vmem:[%s5732 + $0x18] sm:$0xff]
        %v5737 = vld [vmem:[%s5732 + $0x20] sm:$0xff]
        %v5738 = vld [vmem:[%s5732 + $0x28] sm:$0xff]
        %v5739 = vld [vmem:[%s5732 + $0x30] sm:$0xff]
        %v5740 = vld [vmem:[%s5732 + $0x38] sm:$0xff]
        %v5741 = vld [vmem:[%s5732 + $0x40] sm:$0xff]
        %v5742 = vld [vmem:[%s5732 + $0x48] sm:$0xff]
        %v5743 = vld [vmem:[%s5732 + $0x50] sm:$0xff]
        %v5744 = vld [vmem:[%s5732 + $0x58] sm:$0xff]
        %v5745 = vld [vmem:[%s5732 + $0x60] sm:$0xff]
        %v5746 = vld [vmem:[%s5732 + $0x68] sm:$0xff]
        %v5747 = vld [vmem:[%s5732 + $0x70] sm:$0xff]
        %v5748 = vld [vmem:[%s5732 + $0x78] sm:$0xff]
        %v5753 = vunpack.c.l.b16 %v5712
        %v5754 = vunpack.c.l.b16 %v5713
        %v5755 = vunpack.c.l.b16 %v5714
        %v5756 = vunpack.c.l.b16 %v5731
        %v5757 = vpack.c.b16 %v5754, %v5753
        %v5758 = vpack.c.b16 %v5756, %v5755
        %v5760 = vshrl.u32 %v5757, 16
        %v5762 = vshll.u32 %v5757, 16
        %v5764 = vrot.slane %v5762, 1
        %v5765 = vor.u32 %v5760, %v5764
        %v5767 = vshll.u32 %v5758, 16
        %v5769 = vrot.slane %v5767, 1
        %v5770 = vsel %vm1411, %v5765, %v5769
        %v5771 = vshrl.u32 %v5758, 16
        %v5773 = vor.u32 %v5771, %v5769
        %v5792 = vunpack.c.l.b16 %v5733
        %v5793 = vunpack.c.h.b16 %v5733
        %v5794 = vunpack.c.l.b16 %v5734
        %v5795 = vunpack.c.h.b16 %v5734
        %v5796 = vunpack.c.l.b16 %v5735
        %v5797 = vunpack.c.h.b16 %v5735
        %v5798 = vunpack.c.l.b16 %v5736
        %v5799 = vunpack.c.h.b16 %v5736
        %v5800 = vunpack.c.l.b16 %v5737
        %v5801 = vunpack.c.h.b16 %v5737
        %v5802 = vunpack.c.l.b16 %v5738
        %v5803 = vunpack.c.h.b16 %v5738
        %v5804 = vunpack.c.l.b16 %v5739
        %v5805 = vunpack.c.h.b16 %v5739
        %v5806 = vunpack.c.l.b16 %v5740
        %v5807 = vunpack.c.h.b16 %v5740
        %v5808 = vunpack.c.l.b16 %v5741
        %v5809 = vunpack.c.h.b16 %v5741
        %v5810 = vunpack.c.l.b16 %v5742
        %v5811 = vunpack.c.h.b16 %v5742
        %v5812 = vunpack.c.l.b16 %v5743
        %v5813 = vunpack.c.h.b16 %v5743
        %v5814 = vunpack.c.l.b16 %v5744
        %v5815 = vunpack.c.h.b16 %v5744
        %v5816 = vunpack.c.l.b16 %v5745
        %v5817 = vunpack.c.h.b16 %v5745
        %v5818 = vunpack.c.l.b16 %v5746
        %v5819 = vunpack.c.h.b16 %v5746
        %v5820 = vunpack.c.l.b16 %v5747
        %v5821 = vunpack.c.h.b16 %v5747
        %v5822 = vunpack.c.l.b16 %v5748
        %v5823 = vunpack.c.h.b16 %v5748
        %v5824 = vpack.c.b16 %v5794, %v5792
        %v5825 = vpack.c.b16 %v5795, %v5793
        %v5826 = vpack.c.b16 %v5798, %v5796
        %v5827 = vpack.c.b16 %v5799, %v5797
        %v5828 = vpack.c.b16 %v5802, %v5800
        %v5829 = vpack.c.b16 %v5803, %v5801
        %v5830 = vpack.c.b16 %v5806, %v5804
        %v5831 = vpack.c.b16 %v5807, %v5805
        %v5832 = vpack.c.b16 %v5810, %v5808
        %v5833 = vpack.c.b16 %v5811, %v5809
        %v5834 = vpack.c.b16 %v5814, %v5812
        %v5835 = vpack.c.b16 %v5815, %v5813
        %v5836 = vpack.c.b16 %v5818, %v5816
        %v5837 = vpack.c.b16 %v5819, %v5817
        %v5838 = vpack.c.b16 %v5822, %v5820
        %v5839 = vpack.c.b16 %v5823, %v5821
        %5856 = vmatpush.bf16.msra.mxu0 %v5838
        %5857 = vmatpush.bf16.msra.mxu0 %v5836
        %5858 = vmatpush.bf16.msra.mxu0 %v5834
        %5859 = vmatpush.bf16.msra.mxu0 %v5832
        %5860 = vmatpush.bf16.msra.mxu0 %v5830
        %5861 = vmatpush.bf16.msra.mxu0 %v5828
        %5862 = vmatpush.bf16.msra.mxu0 %v5826
        %5863 = vmatpush.bf16.msra.mxu0 %v5824
        %5864 = vmatmul.bf16.gmra.mxu0 %v5770
        %v5865 = vpop.f32.mrf.mxu0
        %v5866 = vadd.f32 0.0, %v5865
        %v5867 = vpop.f32.mrf.mxu0
        %v5868 = vadd.f32 0.0, %v5867
        %5869 = vmatmul.bf16.gmra.mxu0 %v5773
        %v5870 = vpop.f32.mrf.mxu0
        %v5871 = vadd.f32 0.0, %v5870
        %v5872 = vpop.f32.mrf.mxu0
        %5873 = vdwg.mxu0
        %5874 = vmatpush.bf16.msra.mxu0 %v5839
        %5875 = vmatpush.bf16.msra.mxu0 %v5837
        %5876 = vmatpush.bf16.msra.mxu0 %v5835
        %5877 = vmatpush.bf16.msra.mxu0 %v5833
        %5878 = vmatpush.bf16.msra.mxu0 %v5831
        %5879 = vmatpush.bf16.msra.mxu0 %v5829
        %5880 = vmatpush.bf16.msra.mxu0 %v5827
        %5881 = vmatpush.bf16.msra.mxu0 %v5825
        %5882 = vmatmul.bf16.gmra.mxu0 %v5770
        %v5883 = vpop.f32.mrf.mxu0
        %v5884 = vadd.f32 0.0, %v5883
        %v5885 = vpop.f32.mrf.mxu0
        %v5886 = vadd.f32 0.0, %v5885
        %5887 = vmatmul.bf16.gmra.mxu0 %v5773
        %v5888 = vpop.f32.mrf.mxu0
        %v5889 = vadd.f32 0.0, %v5888
        %v5890 = vpop.f32.mrf.mxu0
        %5891 = vdwg.mxu0
        %v5892 = vpack.c.b16 %v5755, %v5755
        %v5911 = vunpack.c.l.b16 %v5715
        %v5912 = vunpack.c.h.b16 %v5715
        %v5913 = vunpack.c.l.b16 %v5716
        %v5914 = vunpack.c.h.b16 %v5716
        %v5915 = vunpack.c.l.b16 %v5717
        %v5916 = vunpack.c.h.b16 %v5717
        %v5917 = vunpack.c.l.b16 %v5718
        %v5918 = vunpack.c.h.b16 %v5718
        %v5919 = vunpack.c.l.b16 %v5719
        %v5920 = vunpack.c.h.b16 %v5719
        %v5921 = vunpack.c.l.b16 %v5720
        %v5922 = vunpack.c.h.b16 %v5720
        %v5923 = vunpack.c.l.b16 %v5721
        %v5924 = vunpack.c.h.b16 %v5721
        %v5925 = vunpack.c.l.b16 %v5722
        %v5926 = vunpack.c.h.b16 %v5722
        %v5927 = vunpack.c.l.b16 %v5723
        %v5928 = vunpack.c.h.b16 %v5723
        %v5929 = vunpack.c.l.b16 %v5724
        %v5930 = vunpack.c.h.b16 %v5724
        %v5931 = vunpack.c.l.b16 %v5725
        %v5932 = vunpack.c.h.b16 %v5725
        %v5933 = vunpack.c.l.b16 %v5726
        %v5934 = vunpack.c.h.b16 %v5726
        %v5935 = vunpack.c.l.b16 %v5727
        %v5936 = vunpack.c.h.b16 %v5727
        %v5937 = vunpack.c.l.b16 %v5728
        %v5938 = vunpack.c.h.b16 %v5728
        %v5939 = vunpack.c.l.b16 %v5729
        %v5940 = vunpack.c.h.b16 %v5729
        %v5941 = vunpack.c.l.b16 %v5730
        %v5942 = vunpack.c.h.b16 %v5730
        %v5943 = vpack.c.b16 %v5913, %v5911
        %v5944 = vpack.c.b16 %v5914, %v5912
        %v5945 = vpack.c.b16 %v5917, %v5915
        %v5946 = vpack.c.b16 %v5918, %v5916
        %v5947 = vpack.c.b16 %v5921, %v5919
        %v5948 = vpack.c.b16 %v5922, %v5920
        %v5949 = vpack.c.b16 %v5925, %v5923
        %v5950 = vpack.c.b16 %v5926, %v5924
        %v5951 = vpack.c.b16 %v5929, %v5927
        %v5952 = vpack.c.b16 %v5930, %v5928
        %v5953 = vpack.c.b16 %v5933, %v5931
        %v5954 = vpack.c.b16 %v5934, %v5932
        %v5955 = vpack.c.b16 %v5937, %v5935
        %v5956 = vpack.c.b16 %v5938, %v5936
        %v5957 = vpack.c.b16 %v5941, %v5939
        %v5958 = vpack.c.b16 %v5942, %v5940
        %5975 = vmatpush.bf16.msra.mxu0 %v5957
        %5976 = vmatpush.bf16.msra.mxu0 %v5955
        %5977 = vmatpush.bf16.msra.mxu0 %v5953
        %5978 = vmatpush.bf16.msra.mxu0 %v5951
        %5979 = vmatpush.bf16.msra.mxu0 %v5949
        %5980 = vmatpush.bf16.msra.mxu0 %v5947
        %5981 = vmatpush.bf16.msra.mxu0 %v5945
        %5982 = vmatpush.bf16.msra.mxu0 %v5943
        %5983 = vmatmul.bf16.gmra.mxu0 %v5757
        %v5984 = vpop.f32.mrf.mxu0
        %v5985 = vadd.f32 %v5866, %v5984
        %v5986 = vpop.f32.mrf.mxu0
        %v5987 = vadd.f32 %v5868, %v5986
        %5988 = vmatmul.bf16.gmra.mxu0 %v5892
        %v5989 = vpop.f32.mrf.mxu0
        %v5990 = vadd.f32 %v5871, %v5989
        %v5991 = vpop.f32.mrf.mxu0
        %5992 = vdwg.mxu0
        %5993 = vmatpush.bf16.msra.mxu0 %v5958
        %5994 = vmatpush.bf16.msra.mxu0 %v5956
        %5995 = vmatpush.bf16.msra.mxu0 %v5954
        %5996 = vmatpush.bf16.msra.mxu0 %v5952
        %5997 = vmatpush.bf16.msra.mxu0 %v5950
        %5998 = vmatpush.bf16.msra.mxu0 %v5948
        %5999 = vmatpush.bf16.msra.mxu0 %v5946
        %6000 = vmatpush.bf16.msra.mxu0 %v5944
        %6001 = vmatmul.bf16.gmra.mxu0 %v5757
        %v6002 = vpop.f32.mrf.mxu0
        %v6003 = vadd.f32 %v5884, %v6002
        %v6004 = vpop.f32.mrf.mxu0
        %v6005 = vadd.f32 %v5886, %v6004
        %6006 = vmatmul.bf16.gmra.mxu0 %v5892
        %v6007 = vpop.f32.mrf.mxu0
        %v6008 = vadd.f32 %v5889, %v6007
        %v6009 = vpop.f32.mrf.mxu0
        %6010 = vdwg.mxu0
        %v6011 = vld [vmem:[#allocation4] sm:$0xe]
        %s6012 = scalar_lea.vmem %s8, 256
        %v6013 = vld [vmem:[%s6012] sm:$0xff]
        %v6014 = vld [vmem:[%s6012 + $0x8] sm:$0xff]
        %v6015 = vld [vmem:[%s6012 + $0x10] sm:$0xff]
        %v6016 = vld [vmem:[%s6012 + $0x18] sm:$0xff]
        %v6017 = vld [vmem:[%s6012 + $0x20] sm:$0xff]
        %v6018 = vld [vmem:[%s6012 + $0x28] sm:$0xff]
        %v6019 = vld [vmem:[%s6012 + $0x30] sm:$0xff]
        %v6020 = vld [vmem:[%s6012 + $0x38] sm:$0xff]
        %v6021 = vld [vmem:[%s6012 + $0x40] sm:$0xff]
        %v6022 = vld [vmem:[%s6012 + $0x48] sm:$0xff]
        %v6023 = vld [vmem:[%s6012 + $0x50] sm:$0xff]
        %v6024 = vld [vmem:[%s6012 + $0x58] sm:$0xff]
        %v6025 = vld [vmem:[%s6012 + $0x60] sm:$0xff]
        %v6026 = vld [vmem:[%s6012 + $0x68] sm:$0xff]
        %v6027 = vld [vmem:[%s6012 + $0x70] sm:$0xff]
        %v6028 = vld [vmem:[%s6012 + $0x78] sm:$0xff]
        %v6030 = vunpack.c.l.b16 %v6011
        %v6031 = vpack.c.b16 %v5754, %v6030
        %v6032 = vrot.slane %v6031, 1
        %v6033 = vrot.slane %v5758, 1
        %v6034 = vsel %vm1862, %v6032, %v6033
        %v6053 = vunpack.c.l.b16 %v6013
        %v6054 = vunpack.c.h.b16 %v6013
        %v6055 = vunpack.c.l.b16 %v6014
        %v6056 = vunpack.c.h.b16 %v6014
        %v6057 = vunpack.c.l.b16 %v6015
        %v6058 = vunpack.c.h.b16 %v6015
        %v6059 = vunpack.c.l.b16 %v6016
        %v6060 = vunpack.c.h.b16 %v6016
        %v6061 = vunpack.c.l.b16 %v6017
        %v6062 = vunpack.c.h.b16 %v6017
        %v6063 = vunpack.c.l.b16 %v6018
        %v6064 = vunpack.c.h.b16 %v6018
        %v6065 = vunpack.c.l.b16 %v6019
        %v6066 = vunpack.c.h.b16 %v6019
        %v6067 = vunpack.c.l.b16 %v6020
        %v6068 = vunpack.c.h.b16 %v6020
        %v6069 = vunpack.c.l.b16 %v6021
        %v6070 = vunpack.c.h.b16 %v6021
        %v6071 = vunpack.c.l.b16 %v6022
        %v6072 = vunpack.c.h.b16 %v6022
        %v6073 = vunpack.c.l.b16 %v6023
        %v6074 = vunpack.c.h.b16 %v6023
        %v6075 = vunpack.c.l.b16 %v6024
        %v6076 = vunpack.c.h.b16 %v6024
        %v6077 = vunpack.c.l.b16 %v6025
        %v6078 = vunpack.c.h.b16 %v6025
        %v6079 = vunpack.c.l.b16 %v6026
        %v6080 = vunpack.c.h.b16 %v6026
        %v6081 = vunpack.c.l.b16 %v6027
        %v6082 = vunpack.c.h.b16 %v6027
        %v6083 = vunpack.c.l.b16 %v6028
        %v6084 = vunpack.c.h.b16 %v6028
        %v6085 = vpack.c.b16 %v6055, %v6053
        %v6086 = vpack.c.b16 %v6056, %v6054
        %v6087 = vpack.c.b16 %v6059, %v6057
        %v6088 = vpack.c.b16 %v6060, %v6058
        %v6089 = vpack.c.b16 %v6063, %v6061
        %v6090 = vpack.c.b16 %v6064, %v6062
        %v6091 = vpack.c.b16 %v6067, %v6065
        %v6092 = vpack.c.b16 %v6068, %v6066
        %v6093 = vpack.c.b16 %v6071, %v6069
        %v6094 = vpack.c.b16 %v6072, %v6070
        %v6095 = vpack.c.b16 %v6075, %v6073
        %v6096 = vpack.c.b16 %v6076, %v6074
        %v6097 = vpack.c.b16 %v6079, %v6077
        %v6098 = vpack.c.b16 %v6080, %v6078
        %v6099 = vpack.c.b16 %v6083, %v6081
        %v6100 = vpack.c.b16 %v6084, %v6082
        %6117 = vmatpush.bf16.msra.mxu0 %v6099
        %6118 = vmatpush.bf16.msra.mxu0 %v6097
        %6119 = vmatpush.bf16.msra.mxu0 %v6095
        %6120 = vmatpush.bf16.msra.mxu0 %v6093
        %6121 = vmatpush.bf16.msra.mxu0 %v6091
        %6122 = vmatpush.bf16.msra.mxu0 %v6089
        %6123 = vmatpush.bf16.msra.mxu0 %v6087
        %6124 = vmatpush.bf16.msra.mxu0 %v6085
        %6125 = vmatmul.bf16.gmra.mxu0 %v6034
        %v6126 = vpop.f32.mrf.mxu0
        %v6127 = vadd.f32 0.0, %v6126
        %v6128 = vpop.f32.mrf.mxu0
        %v6129 = vadd.f32 0.0, %v6128
        %6130 = vmatmul.bf16.gmra.mxu0 %v6033
        %v6131 = vpop.f32.mrf.mxu0
        %v6132 = vadd.f32 0.0, %v6131
        %v6133 = vpop.f32.mrf.mxu0
        %6134 = vdwg.mxu0
        %6135 = vmatpush.bf16.msra.mxu0 %v6100
        %6136 = vmatpush.bf16.msra.mxu0 %v6098
        %6137 = vmatpush.bf16.msra.mxu0 %v6096
        %6138 = vmatpush.bf16.msra.mxu0 %v6094
        %6139 = vmatpush.bf16.msra.mxu0 %v6092
        %6140 = vmatpush.bf16.msra.mxu0 %v6090
        %6141 = vmatpush.bf16.msra.mxu0 %v6088
        %6142 = vmatpush.bf16.msra.mxu0 %v6086
        %6143 = vmatmul.bf16.gmra.mxu0 %v6034
        %v6144 = vpop.f32.mrf.mxu0
        %v6145 = vadd.f32 0.0, %v6144
        %v6146 = vpop.f32.mrf.mxu0
        %v6147 = vadd.f32 0.0, %v6146
        %6148 = vmatmul.bf16.gmra.mxu0 %v6033
        %v6149 = vpop.f32.mrf.mxu0
        %v6150 = vadd.f32 0.0, %v6149
        %v6151 = vpop.f32.mrf.mxu0
        %6152 = vdwg.mxu0
        %v6153 = vadd.f32 %v5985, %v6127
        %v6154 = vadd.f32 %v6003, %v6145
        %v6155 = vadd.f32 %v5987, %v6129
        %v6156 = vadd.f32 %v6005, %v6147
        %v6157 = vadd.f32 %v5990, %v6132
        %v6158 = vadd.f32 %v6008, %v6150
        %v6159 = vld [vmem:[#allocation4] sm:$0x8]
        %v6160 = vld [vmem:[#allocation4 + $0xc] sm:$0x7]
        %s6161 = scalar_lea.vmem %s8, 384
        %v6162 = vld [vmem:[%s6161] sm:$0xff]
        %v6163 = vld [vmem:[%s6161 + $0x8] sm:$0xff]
        %v6164 = vld [vmem:[%s6161 + $0x10] sm:$0xff]
        %v6165 = vld [vmem:[%s6161 + $0x18] sm:$0xff]
        %v6166 = vld [vmem:[%s6161 + $0x20] sm:$0xff]
        %v6167 = vld [vmem:[%s6161 + $0x28] sm:$0xff]
        %v6168 = vld [vmem:[%s6161 + $0x30] sm:$0xff]
        %v6169 = vld [vmem:[%s6161 + $0x38] sm:$0xff]
        %v6170 = vld [vmem:[%s6161 + $0x40] sm:$0xff]
        %v6171 = vld [vmem:[%s6161 + $0x48] sm:$0xff]
        %v6172 = vld [vmem:[%s6161 + $0x50] sm:$0xff]
        %v6173 = vld [vmem:[%s6161 + $0x58] sm:$0xff]
        %v6174 = vld [vmem:[%s6161 + $0x60] sm:$0xff]
        %v6175 = vld [vmem:[%s6161 + $0x68] sm:$0xff]
        %v6176 = vld [vmem:[%s6161 + $0x70] sm:$0xff]
        %v6177 = vld [vmem:[%s6161 + $0x78] sm:$0xff]
        %v6180 = vunpack.c.l.b16 %v6159
        %v6181 = vunpack.c.l.b16 %v6160
        %v6182 = vpack.c.b16 %v5754, %v6180
        %v6183 = vpack.c.b16 %v6181, %v5755
        %v6184 = vrot.slane %v6182, 3
        %v6185 = vrot.slane %v6183, 3
        %v6186 = vsel %vm3794, %v6184, %v6185
        %v6205 = vunpack.c.l.b16 %v6162
        %v6206 = vunpack.c.h.b16 %v6162
        %v6207 = vunpack.c.l.b16 %v6163
        %v6208 = vunpack.c.h.b16 %v6163
        %v6209 = vunpack.c.l.b16 %v6164
        %v6210 = vunpack.c.h.b16 %v6164
        %v6211 = vunpack.c.l.b16 %v6165
        %v6212 = vunpack.c.h.b16 %v6165
        %v6213 = vunpack.c.l.b16 %v6166
        %v6214 = vunpack.c.h.b16 %v6166
        %v6215 = vunpack.c.l.b16 %v6167
        %v6216 = vunpack.c.h.b16 %v6167
        %v6217 = vunpack.c.l.b16 %v6168
        %v6218 = vunpack.c.h.b16 %v6168
        %v6219 = vunpack.c.l.b16 %v6169
        %v6220 = vunpack.c.h.b16 %v6169
        %v6221 = vunpack.c.l.b16 %v6170
        %v6222 = vunpack.c.h.b16 %v6170
        %v6223 = vunpack.c.l.b16 %v6171
        %v6224 = vunpack.c.h.b16 %v6171
        %v6225 = vunpack.c.l.b16 %v6172
        %v6226 = vunpack.c.h.b16 %v6172
        %v6227 = vunpack.c.l.b16 %v6173
        %v6228 = vunpack.c.h.b16 %v6173
        %v6229 = vunpack.c.l.b16 %v6174
        %v6230 = vunpack.c.h.b16 %v6174
        %v6231 = vunpack.c.l.b16 %v6175
        %v6232 = vunpack.c.h.b16 %v6175
        %v6233 = vunpack.c.l.b16 %v6176
        %v6234 = vunpack.c.h.b16 %v6176
        %v6235 = vunpack.c.l.b16 %v6177
        %v6236 = vunpack.c.h.b16 %v6177
        %v6237 = vpack.c.b16 %v6207, %v6205
        %v6238 = vpack.c.b16 %v6208, %v6206
        %v6239 = vpack.c.b16 %v6211, %v6209
        %v6240 = vpack.c.b16 %v6212, %v6210
        %v6241 = vpack.c.b16 %v6215, %v6213
        %v6242 = vpack.c.b16 %v6216, %v6214
        %v6243 = vpack.c.b16 %v6219, %v6217
        %v6244 = vpack.c.b16 %v6220, %v6218
        %v6245 = vpack.c.b16 %v6223, %v6221
        %v6246 = vpack.c.b16 %v6224, %v6222
        %v6247 = vpack.c.b16 %v6227, %v6225
        %v6248 = vpack.c.b16 %v6228, %v6226
        %v6249 = vpack.c.b16 %v6231, %v6229
        %v6250 = vpack.c.b16 %v6232, %v6230
        %v6251 = vpack.c.b16 %v6235, %v6233
        %v6252 = vpack.c.b16 %v6236, %v6234
        %6269 = vmatpush.bf16.msra.mxu0 %v6251
        %6270 = vmatpush.bf16.msra.mxu0 %v6249
        %6271 = vmatpush.bf16.msra.mxu0 %v6247
        %6272 = vmatpush.bf16.msra.mxu0 %v6245
        %6273 = vmatpush.bf16.msra.mxu0 %v6243
        %6274 = vmatpush.bf16.msra.mxu0 %v6241
        %6275 = vmatpush.bf16.msra.mxu0 %v6239
        %6276 = vmatpush.bf16.msra.mxu0 %v6237
        %6277 = vmatmul.bf16.gmra.mxu0 %v6186
        %v6278 = vpop.f32.mrf.mxu0
        %v6279 = vadd.f32 0.0, %v6278
        %v6280 = vpop.f32.mrf.mxu0
        %v6281 = vadd.f32 0.0, %v6280
        %6282 = vmatmul.bf16.gmra.mxu0 %v6185
        %v6283 = vpop.f32.mrf.mxu0
        %v6284 = vadd.f32 0.0, %v6283
        %v6285 = vpop.f32.mrf.mxu0
        %6286 = vdwg.mxu0
        %6287 = vmatpush.bf16.msra.mxu0 %v6252
        %6288 = vmatpush.bf16.msra.mxu0 %v6250
        %6289 = vmatpush.bf16.msra.mxu0 %v6248
        %6290 = vmatpush.bf16.msra.mxu0 %v6246
        %6291 = vmatpush.bf16.msra.mxu0 %v6244
        %6292 = vmatpush.bf16.msra.mxu0 %v6242
        %6293 = vmatpush.bf16.msra.mxu0 %v6240
        %6294 = vmatpush.bf16.msra.mxu0 %v6238
        %6295 = vmatmul.bf16.gmra.mxu0 %v6186
        %v6296 = vpop.f32.mrf.mxu0
        %v6297 = vadd.f32 0.0, %v6296
        %v6298 = vpop.f32.mrf.mxu0
        %v6299 = vadd.f32 0.0, %v6298
        %6300 = vmatmul.bf16.gmra.mxu0 %v6185
        %v6301 = vpop.f32.mrf.mxu0
        %v6302 = vadd.f32 0.0, %v6301
        %v6303 = vpop.f32.mrf.mxu0
        %6304 = vdwg.mxu0
        %v6305 = vadd.f32 %v6153, %v6279
        %v6306 = vadd.f32 %v6154, %v6297
        %v6307 = vadd.f32 %v6155, %v6281
        %v6308 = vadd.f32 %v6156, %v6299
        %v6309 = vadd.f32 %v6157, %v6284
        %v6310 = vadd.f32 %v6158, %v6302
        %v6311 = vld [vmem:[#allocation4 + $0xc] sm:$0xf]
        %s6312 = scalar_lea.vmem %s8, 512
        %v6313 = vld [vmem:[%s6312] sm:$0xff]
        %v6314 = vld [vmem:[%s6312 + $0x8] sm:$0xff]
        %v6315 = vld [vmem:[%s6312 + $0x10] sm:$0xff]
        %v6316 = vld [vmem:[%s6312 + $0x18] sm:$0xff]
        %v6317 = vld [vmem:[%s6312 + $0x20] sm:$0xff]
        %v6318 = vld [vmem:[%s6312 + $0x28] sm:$0xff]
        %v6319 = vld [vmem:[%s6312 + $0x30] sm:$0xff]
        %v6320 = vld [vmem:[%s6312 + $0x38] sm:$0xff]
        %v6321 = vld [vmem:[%s6312 + $0x40] sm:$0xff]
        %v6322 = vld [vmem:[%s6312 + $0x48] sm:$0xff]
        %v6323 = vld [vmem:[%s6312 + $0x50] sm:$0xff]
        %v6324 = vld [vmem:[%s6312 + $0x58] sm:$0xff]
        %v6325 = vld [vmem:[%s6312 + $0x60] sm:$0xff]
        %v6326 = vld [vmem:[%s6312 + $0x68] sm:$0xff]
        %v6327 = vld [vmem:[%s6312 + $0x70] sm:$0xff]
        %v6328 = vld [vmem:[%s6312 + $0x78] sm:$0xff]
        %v6330 = vunpack.c.l.b16 %v6311
        %v6331 = vpack.c.b16 %v6330, %v5755
        %vm6332 = vsmask.f32 4352
        %v6334 = vshrl.u32 %v6182, 16
        %v6336 = vrot.slane %v6334, 3
        %v6337 = vshll.u32 %v6182, 16
        %v6339 = vrot.slane %v6337, 4
        %v6340 = vor.u32 %v6336, %v6339
        %v6342 = vshrl.u32 %v6331, 16
        %v6344 = vrot.slane %v6342, 3
        %v6345 = vshll.u32 %v6331, 16
        %v6347 = vrot.slane %v6345, 4
        %v6348 = vor.u32 %v6344, %v6347
        %v6349 = vsel %vm6332, %v6340, %v6348
        %v6368 = vunpack.c.l.b16 %v6313
        %v6369 = vunpack.c.h.b16 %v6313
        %v6370 = vunpack.c.l.b16 %v6314
        %v6371 = vunpack.c.h.b16 %v6314
        %v6372 = vunpack.c.l.b16 %v6315
        %v6373 = vunpack.c.h.b16 %v6315
        %v6374 = vunpack.c.l.b16 %v6316
        %v6375 = vunpack.c.h.b16 %v6316
        %v6376 = vunpack.c.l.b16 %v6317
        %v6377 = vunpack.c.h.b16 %v6317
        %v6378 = vunpack.c.l.b16 %v6318
        %v6379 = vunpack.c.h.b16 %v6318
        %v6380 = vunpack.c.l.b16 %v6319
        %v6381 = vunpack.c.h.b16 %v6319
        %v6382 = vunpack.c.l.b16 %v6320
        %v6383 = vunpack.c.h.b16 %v6320
        %v6384 = vunpack.c.l.b16 %v6321
        %v6385 = vunpack.c.h.b16 %v6321
        %v6386 = vunpack.c.l.b16 %v6322
        %v6387 = vunpack.c.h.b16 %v6322
        %v6388 = vunpack.c.l.b16 %v6323
        %v6389 = vunpack.c.h.b16 %v6323
        %v6390 = vunpack.c.l.b16 %v6324
        %v6391 = vunpack.c.h.b16 %v6324
        %v6392 = vunpack.c.l.b16 %v6325
        %v6393 = vunpack.c.h.b16 %v6325
        %v6394 = vunpack.c.l.b16 %v6326
        %v6395 = vunpack.c.h.b16 %v6326
        %v6396 = vunpack.c.l.b16 %v6327
        %v6397 = vunpack.c.h.b16 %v6327
        %v6398 = vunpack.c.l.b16 %v6328
        %v6399 = vunpack.c.h.b16 %v6328
        %v6400 = vpack.c.b16 %v6370, %v6368
        %v6401 = vpack.c.b16 %v6371, %v6369
        %v6402 = vpack.c.b16 %v6374, %v6372
        %v6403 = vpack.c.b16 %v6375, %v6373
        %v6404 = vpack.c.b16 %v6378, %v6376
        %v6405 = vpack.c.b16 %v6379, %v6377
        %v6406 = vpack.c.b16 %v6382, %v6380
        %v6407 = vpack.c.b16 %v6383, %v6381
        %v6408 = vpack.c.b16 %v6386, %v6384
        %v6409 = vpack.c.b16 %v6387, %v6385
        %v6410 = vpack.c.b16 %v6390, %v6388
        %v6411 = vpack.c.b16 %v6391, %v6389
        %v6412 = vpack.c.b16 %v6394, %v6392
        %v6413 = vpack.c.b16 %v6395, %v6393
        %v6414 = vpack.c.b16 %v6398, %v6396
        %v6415 = vpack.c.b16 %v6399, %v6397
        %6432 = vmatpush.bf16.msra.mxu0 %v6414
        %6433 = vmatpush.bf16.msra.mxu0 %v6412
        %6434 = vmatpush.bf16.msra.mxu0 %v6410
        %6435 = vmatpush.bf16.msra.mxu0 %v6408
        %6436 = vmatpush.bf16.msra.mxu0 %v6406
        %6437 = vmatpush.bf16.msra.mxu0 %v6404
        %6438 = vmatpush.bf16.msra.mxu0 %v6402
        %6439 = vmatpush.bf16.msra.mxu0 %v6400
        %6440 = vmatmul.bf16.gmra.mxu0 %v6349
        %v6441 = vpop.f32.mrf.mxu0
        %v6442 = vadd.f32 0.0, %v6441
        %v6443 = vpop.f32.mrf.mxu0
        %v6444 = vadd.f32 0.0, %v6443
        %6445 = vmatmul.bf16.gmra.mxu0 %v6348
        %v6446 = vpop.f32.mrf.mxu0
        %v6447 = vadd.f32 0.0, %v6446
        %v6448 = vpop.f32.mrf.mxu0
        %6449 = vdwg.mxu0
        %6450 = vmatpush.bf16.msra.mxu0 %v6415
        %6451 = vmatpush.bf16.msra.mxu0 %v6413
        %6452 = vmatpush.bf16.msra.mxu0 %v6411
        %6453 = vmatpush.bf16.msra.mxu0 %v6409
        %6454 = vmatpush.bf16.msra.mxu0 %v6407
        %6455 = vmatpush.bf16.msra.mxu0 %v6405
        %6456 = vmatpush.bf16.msra.mxu0 %v6403
        %6457 = vmatpush.bf16.msra.mxu0 %v6401
        %6458 = vmatmul.bf16.gmra.mxu0 %v6349
        %v6459 = vpop.f32.mrf.mxu0
        %v6460 = vadd.f32 0.0, %v6459
        %v6461 = vpop.f32.mrf.mxu0
        %v6462 = vadd.f32 0.0, %v6461
        %6463 = vmatmul.bf16.gmra.mxu0 %v6348
        %v6464 = vpop.f32.mrf.mxu0
        %v6465 = vadd.f32 0.0, %v6464
        %v6466 = vpop.f32.mrf.mxu0
        %6467 = vdwg.mxu0
        %v6468 = vadd.f32 %v6305, %v6442
        %v6469 = vadd.f32 %v6306, %v6460
        %v6470 = vadd.f32 %v6307, %v6444
        %v6471 = vadd.f32 %v6308, %v6462
        %v6472 = vadd.f32 %v6309, %v6447
        %v6473 = vadd.f32 %v6310, %v6465
        %s6474 = scalar_lea.vmem %s8, 640
        %v6475 = vld [vmem:[%s6474] sm:$0xff]
        %v6476 = vld [vmem:[%s6474 + $0x8] sm:$0xff]
        %v6477 = vld [vmem:[%s6474 + $0x10] sm:$0xff]
        %v6478 = vld [vmem:[%s6474 + $0x18] sm:$0xff]
        %v6479 = vld [vmem:[%s6474 + $0x20] sm:$0xff]
        %v6480 = vld [vmem:[%s6474 + $0x28] sm:$0xff]
        %v6481 = vld [vmem:[%s6474 + $0x30] sm:$0xff]
        %v6482 = vld [vmem:[%s6474 + $0x38] sm:$0xff]
        %v6483 = vld [vmem:[%s6474 + $0x40] sm:$0xff]
        %v6484 = vld [vmem:[%s6474 + $0x48] sm:$0xff]
        %v6485 = vld [vmem:[%s6474 + $0x50] sm:$0xff]
        %v6486 = vld [vmem:[%s6474 + $0x58] sm:$0xff]
        %v6487 = vld [vmem:[%s6474 + $0x60] sm:$0xff]
        %v6488 = vld [vmem:[%s6474 + $0x68] sm:$0xff]
        %v6489 = vld [vmem:[%s6474 + $0x70] sm:$0xff]
        %v6490 = vld [vmem:[%s6474 + $0x78] sm:$0xff]
        %v6491 = vpack.c.b16 %v5755, %v5754
        %v6492 = vpack.c.b16 %v6330, %v6330
        %v6511 = vunpack.c.l.b16 %v6475
        %v6512 = vunpack.c.h.b16 %v6475
        %v6513 = vunpack.c.l.b16 %v6476
        %v6514 = vunpack.c.h.b16 %v6476
        %v6515 = vunpack.c.l.b16 %v6477
        %v6516 = vunpack.c.h.b16 %v6477
        %v6517 = vunpack.c.l.b16 %v6478
        %v6518 = vunpack.c.h.b16 %v6478
        %v6519 = vunpack.c.l.b16 %v6479
        %v6520 = vunpack.c.h.b16 %v6479
        %v6521 = vunpack.c.l.b16 %v6480
        %v6522 = vunpack.c.h.b16 %v6480
        %v6523 = vunpack.c.l.b16 %v6481
        %v6524 = vunpack.c.h.b16 %v6481
        %v6525 = vunpack.c.l.b16 %v6482
        %v6526 = vunpack.c.h.b16 %v6482
        %v6527 = vunpack.c.l.b16 %v6483
        %v6528 = vunpack.c.h.b16 %v6483
        %v6529 = vunpack.c.l.b16 %v6484
        %v6530 = vunpack.c.h.b16 %v6484
        %v6531 = vunpack.c.l.b16 %v6485
        %v6532 = vunpack.c.h.b16 %v6485
        %v6533 = vunpack.c.l.b16 %v6486
        %v6534 = vunpack.c.h.b16 %v6486
        %v6535 = vunpack.c.l.b16 %v6487
        %v6536 = vunpack.c.h.b16 %v6487
        %v6537 = vunpack.c.l.b16 %v6488
        %v6538 = vunpack.c.h.b16 %v6488
        %v6539 = vunpack.c.l.b16 %v6489
        %v6540 = vunpack.c.h.b16 %v6489
        %v6541 = vunpack.c.l.b16 %v6490
        %v6542 = vunpack.c.h.b16 %v6490
        %v6543 = vpack.c.b16 %v6513, %v6511
        %v6544 = vpack.c.b16 %v6514, %v6512
        %v6545 = vpack.c.b16 %v6517, %v6515
        %v6546 = vpack.c.b16 %v6518, %v6516
        %v6547 = vpack.c.b16 %v6521, %v6519
        %v6548 = vpack.c.b16 %v6522, %v6520
        %v6549 = vpack.c.b16 %v6525, %v6523
        %v6550 = vpack.c.b16 %v6526, %v6524
        %v6551 = vpack.c.b16 %v6529, %v6527
        %v6552 = vpack.c.b16 %v6530, %v6528
        %v6553 = vpack.c.b16 %v6533, %v6531
        %v6554 = vpack.c.b16 %v6534, %v6532
        %v6555 = vpack.c.b16 %v6537, %v6535
        %v6556 = vpack.c.b16 %v6538, %v6536
        %v6557 = vpack.c.b16 %v6541, %v6539
        %v6558 = vpack.c.b16 %v6542, %v6540
        %6575 = vmatpush.bf16.msra.mxu0 %v6557
        %6576 = vmatpush.bf16.msra.mxu0 %v6555
        %6577 = vmatpush.bf16.msra.mxu0 %v6553
        %6578 = vmatpush.bf16.msra.mxu0 %v6551
        %6579 = vmatpush.bf16.msra.mxu0 %v6549
        %6580 = vmatpush.bf16.msra.mxu0 %v6547
        %6581 = vmatpush.bf16.msra.mxu0 %v6545
        %6582 = vmatpush.bf16.msra.mxu0 %v6543
        %6583 = vmatmul.bf16.gmra.mxu0 %v6491
        %v6584 = vpop.f32.mrf.mxu0
        %v6585 = vadd.f32 0.0, %v6584
        %v6586 = vpop.f32.mrf.mxu0
        %v6587 = vadd.f32 0.0, %v6586
        %6588 = vmatmul.bf16.gmra.mxu0 %v6492
        %v6589 = vpop.f32.mrf.mxu0
        %v6590 = vadd.f32 0.0, %v6589
        %v6591 = vpop.f32.mrf.mxu0
        %6592 = vdwg.mxu0
        %6593 = vmatpush.bf16.msra.mxu0 %v6558
        %6594 = vmatpush.bf16.msra.mxu0 %v6556
        %6595 = vmatpush.bf16.msra.mxu0 %v6554
        %6596 = vmatpush.bf16.msra.mxu0 %v6552
        %6597 = vmatpush.bf16.msra.mxu0 %v6550
        %6598 = vmatpush.bf16.msra.mxu0 %v6548
        %6599 = vmatpush.bf16.msra.mxu0 %v6546
        %6600 = vmatpush.bf16.msra.mxu0 %v6544
        %6601 = vmatmul.bf16.gmra.mxu0 %v6491
        %v6602 = vpop.f32.mrf.mxu0
        %v6603 = vadd.f32 0.0, %v6602
        %v6604 = vpop.f32.mrf.mxu0
        %v6605 = vadd.f32 0.0, %v6604
        %6606 = vmatmul.bf16.gmra.mxu0 %v6492
        %v6607 = vpop.f32.mrf.mxu0
        %v6608 = vadd.f32 0.0, %v6607
        %v6609 = vpop.f32.mrf.mxu0
        %6610 = vdwg.mxu0
        %v6611 = vadd.f32 %v6468, %v6585
        %v6612 = vadd.f32 %v6469, %v6603
        %v6613 = vadd.f32 %v6470, %v6587
        %v6614 = vadd.f32 %v6471, %v6605
        %v6615 = vadd.f32 %v6472, %v6590
        %v6616 = vadd.f32 %v6473, %v6608
        %v6617 = vld [vmem:[#allocation4 + $0x4] sm:$0xc]
        %v6618 = vld [vmem:[#allocation4 + $0x8] sm:$0xf]
        %v6619 = vld [vmem:[#allocation4 + $0xc] sm:$0xf]
        %v6620 = vld [vmem:[#allocation4 + $0x10] sm:$0x3]
        %s6621 = scalar_lea.vmem %s8, 768
        %v6622 = vld [vmem:[%s6621] sm:$0xff]
        %v6623 = vld [vmem:[%s6621 + $0x8] sm:$0xff]
        %v6624 = vld [vmem:[%s6621 + $0x10] sm:$0xff]
        %v6625 = vld [vmem:[%s6621 + $0x18] sm:$0xff]
        %v6626 = vld [vmem:[%s6621 + $0x20] sm:$0xff]
        %v6627 = vld [vmem:[%s6621 + $0x28] sm:$0xff]
        %v6628 = vld [vmem:[%s6621 + $0x30] sm:$0xff]
        %v6629 = vld [vmem:[%s6621 + $0x38] sm:$0xff]
        %v6630 = vld [vmem:[%s6621 + $0x40] sm:$0xff]
        %v6631 = vld [vmem:[%s6621 + $0x48] sm:$0xff]
        %v6632 = vld [vmem:[%s6621 + $0x50] sm:$0xff]
        %v6633 = vld [vmem:[%s6621 + $0x58] sm:$0xff]
        %v6634 = vld [vmem:[%s6621 + $0x60] sm:$0xff]
        %v6635 = vld [vmem:[%s6621 + $0x68] sm:$0xff]
        %v6636 = vld [vmem:[%s6621 + $0x70] sm:$0xff]
        %v6637 = vld [vmem:[%s6621 + $0x78] sm:$0xff]
        %v6642 = vunpack.c.l.b16 %v6617
        %v6643 = vunpack.c.l.b16 %v6618
        %v6644 = vunpack.c.l.b16 %v6619
        %v6645 = vunpack.c.l.b16 %v6620
        %v6646 = vpack.c.b16 %v6643, %v6642
        %v6647 = vpack.c.b16 %v6645, %v6644
        %v6648 = vrot.slane %v6646, 2
        %v6649 = vrot.slane %v6647, 2
        %v6650 = vsel %vm2828, %v6648, %v6649
        %v6669 = vunpack.c.l.b16 %v6622
        %v6670 = vunpack.c.h.b16 %v6622
        %v6671 = vunpack.c.l.b16 %v6623
        %v6672 = vunpack.c.h.b16 %v6623
        %v6673 = vunpack.c.l.b16 %v6624
        %v6674 = vunpack.c.h.b16 %v6624
        %v6675 = vunpack.c.l.b16 %v6625
        %v6676 = vunpack.c.h.b16 %v6625
        %v6677 = vunpack.c.l.b16 %v6626
        %v6678 = vunpack.c.h.b16 %v6626
        %v6679 = vunpack.c.l.b16 %v6627
        %v6680 = vunpack.c.h.b16 %v6627
        %v6681 = vunpack.c.l.b16 %v6628
        %v6682 = vunpack.c.h.b16 %v6628
        %v6683 = vunpack.c.l.b16 %v6629
        %v6684 = vunpack.c.h.b16 %v6629
        %v6685 = vunpack.c.l.b16 %v6630
        %v6686 = vunpack.c.h.b16 %v6630
        %v6687 = vunpack.c.l.b16 %v6631
        %v6688 = vunpack.c.h.b16 %v6631
        %v6689 = vunpack.c.l.b16 %v6632
        %v6690 = vunpack.c.h.b16 %v6632
        %v6691 = vunpack.c.l.b16 %v6633
        %v6692 = vunpack.c.h.b16 %v6633
        %v6693 = vunpack.c.l.b16 %v6634
        %v6694 = vunpack.c.h.b16 %v6634
        %v6695 = vunpack.c.l.b16 %v6635
        %v6696 = vunpack.c.h.b16 %v6635
        %v6697 = vunpack.c.l.b16 %v6636
        %v6698 = vunpack.c.h.b16 %v6636
        %v6699 = vunpack.c.l.b16 %v6637
        %v6700 = vunpack.c.h.b16 %v6637
        %v6701 = vpack.c.b16 %v6671, %v6669
        %v6702 = vpack.c.b16 %v6672, %v6670
        %v6703 = vpack.c.b16 %v6675, %v6673
        %v6704 = vpack.c.b16 %v6676, %v6674
        %v6705 = vpack.c.b16 %v6679, %v6677
        %v6706 = vpack.c.b16 %v6680, %v6678
        %v6707 = vpack.c.b16 %v6683, %v6681
        %v6708 = vpack.c.b16 %v6684, %v6682
        %v6709 = vpack.c.b16 %v6687, %v6685
        %v6710 = vpack.c.b16 %v6688, %v6686
        %v6711 = vpack.c.b16 %v6691, %v6689
        %v6712 = vpack.c.b16 %v6692, %v6690
        %v6713 = vpack.c.b16 %v6695, %v6693
        %v6714 = vpack.c.b16 %v6696, %v6694
        %v6715 = vpack.c.b16 %v6699, %v6697
        %v6716 = vpack.c.b16 %v6700, %v6698
        %6733 = vmatpush.bf16.msra.mxu0 %v6715
        %6734 = vmatpush.bf16.msra.mxu0 %v6713
        %6735 = vmatpush.bf16.msra.mxu0 %v6711
        %6736 = vmatpush.bf16.msra.mxu0 %v6709
        %6737 = vmatpush.bf16.msra.mxu0 %v6707
        %6738 = vmatpush.bf16.msra.mxu0 %v6705
        %6739 = vmatpush.bf16.msra.mxu0 %v6703
        %6740 = vmatpush.bf16.msra.mxu0 %v6701
        %6741 = vmatmul.bf16.gmra.mxu0 %v6650
        %v6742 = vpop.f32.mrf.mxu0
        %v6743 = vadd.f32 0.0, %v6742
        %v6744 = vpop.f32.mrf.mxu0
        %v6745 = vadd.f32 0.0, %v6744
        %6746 = vmatmul.bf16.gmra.mxu0 %v6649
        %v6747 = vpop.f32.mrf.mxu0
        %v6748 = vadd.f32 0.0, %v6747
        %v6749 = vpop.f32.mrf.mxu0
        %6750 = vdwg.mxu0
        %6751 = vmatpush.bf16.msra.mxu0 %v6716
        %6752 = vmatpush.bf16.msra.mxu0 %v6714
        %6753 = vmatpush.bf16.msra.mxu0 %v6712
        %6754 = vmatpush.bf16.msra.mxu0 %v6710
        %6755 = vmatpush.bf16.msra.mxu0 %v6708
        %6756 = vmatpush.bf16.msra.mxu0 %v6706
        %6757 = vmatpush.bf16.msra.mxu0 %v6704
        %6758 = vmatpush.bf16.msra.mxu0 %v6702
        %6759 = vmatmul.bf16.gmra.mxu0 %v6650
        %v6760 = vpop.f32.mrf.mxu0
        %v6761 = vadd.f32 0.0, %v6760
        %v6762 = vpop.f32.mrf.mxu0
        %v6763 = vadd.f32 0.0, %v6762
        %6764 = vmatmul.bf16.gmra.mxu0 %v6649
        %v6765 = vpop.f32.mrf.mxu0
        %v6766 = vadd.f32 0.0, %v6765
        %v6767 = vpop.f32.mrf.mxu0
        %6768 = vdwg.mxu0
        %v6769 = vadd.f32 %v6611, %v6743
        %v6770 = vadd.f32 %v6612, %v6761
        %v6771 = vadd.f32 %v6613, %v6745
        %v6772 = vadd.f32 %v6614, %v6763
        %v6773 = vadd.f32 %v6615, %v6748
        %v6774 = vadd.f32 %v6616, %v6766
        %v6775 = vld [vmem:[#allocation4 + $0x10] sm:$0x7]
        %s6776 = scalar_lea.vmem %s8, 896
        %v6777 = vld [vmem:[%s6776] sm:$0xff]
        %v6778 = vld [vmem:[%s6776 + $0x8] sm:$0xff]
        %v6779 = vld [vmem:[%s6776 + $0x10] sm:$0xff]
        %v6780 = vld [vmem:[%s6776 + $0x18] sm:$0xff]
        %v6781 = vld [vmem:[%s6776 + $0x20] sm:$0xff]
        %v6782 = vld [vmem:[%s6776 + $0x28] sm:$0xff]
        %v6783 = vld [vmem:[%s6776 + $0x30] sm:$0xff]
        %v6784 = vld [vmem:[%s6776 + $0x38] sm:$0xff]
        %v6785 = vld [vmem:[%s6776 + $0x40] sm:$0xff]
        %v6786 = vld [vmem:[%s6776 + $0x48] sm:$0xff]
        %v6787 = vld [vmem:[%s6776 + $0x50] sm:$0xff]
        %v6788 = vld [vmem:[%s6776 + $0x58] sm:$0xff]
        %v6789 = vld [vmem:[%s6776 + $0x60] sm:$0xff]
        %v6790 = vld [vmem:[%s6776 + $0x68] sm:$0xff]
        %v6791 = vld [vmem:[%s6776 + $0x70] sm:$0xff]
        %v6792 = vld [vmem:[%s6776 + $0x78] sm:$0xff]
        %v6794 = vunpack.c.l.b16 %v6775
        %v6795 = vpack.c.b16 %v6794, %v6644
        %v6797 = vshrl.u32 %v6646, 16
        %v6799 = vrot.slane %v6797, 2
        %v6800 = vshll.u32 %v6646, 16
        %v6802 = vrot.slane %v6800, 3
        %v6803 = vor.u32 %v6799, %v6802
        %v6805 = vshrl.u32 %v6795, 16
        %v6807 = vrot.slane %v6805, 2
        %v6808 = vshll.u32 %v6795, 16
        %v6810 = vrot.slane %v6808, 3
        %v6811 = vor.u32 %v6807, %v6810
        %v6812 = vsel %vm3425, %v6803, %v6811
        %v6831 = vunpack.c.l.b16 %v6777
        %v6832 = vunpack.c.h.b16 %v6777
        %v6833 = vunpack.c.l.b16 %v6778
        %v6834 = vunpack.c.h.b16 %v6778
        %v6835 = vunpack.c.l.b16 %v6779
        %v6836 = vunpack.c.h.b16 %v6779
        %v6837 = vunpack.c.l.b16 %v6780
        %v6838 = vunpack.c.h.b16 %v6780
        %v6839 = vunpack.c.l.b16 %v6781
        %v6840 = vunpack.c.h.b16 %v6781
        %v6841 = vunpack.c.l.b16 %v6782
        %v6842 = vunpack.c.h.b16 %v6782
        %v6843 = vunpack.c.l.b16 %v6783
        %v6844 = vunpack.c.h.b16 %v6783
        %v6845 = vunpack.c.l.b16 %v6784
        %v6846 = vunpack.c.h.b16 %v6784
        %v6847 = vunpack.c.l.b16 %v6785
        %v6848 = vunpack.c.h.b16 %v6785
        %v6849 = vunpack.c.l.b16 %v6786
        %v6850 = vunpack.c.h.b16 %v6786
        %v6851 = vunpack.c.l.b16 %v6787
        %v6852 = vunpack.c.h.b16 %v6787
        %v6853 = vunpack.c.l.b16 %v6788
        %v6854 = vunpack.c.h.b16 %v6788
        %v6855 = vunpack.c.l.b16 %v6789
        %v6856 = vunpack.c.h.b16 %v6789
        %v6857 = vunpack.c.l.b16 %v6790
        %v6858 = vunpack.c.h.b16 %v6790
        %v6859 = vunpack.c.l.b16 %v6791
        %v6860 = vunpack.c.h.b16 %v6791
        %v6861 = vunpack.c.l.b16 %v6792
        %v6862 = vunpack.c.h.b16 %v6792
        %v6863 = vpack.c.b16 %v6833, %v6831
        %v6864 = vpack.c.b16 %v6834, %v6832
        %v6865 = vpack.c.b16 %v6837, %v6835
        %v6866 = vpack.c.b16 %v6838, %v6836
        %v6867 = vpack.c.b16 %v6841, %v6839
        %v6868 = vpack.c.b16 %v6842, %v6840
        %v6869 = vpack.c.b16 %v6845, %v6843
        %v6870 = vpack.c.b16 %v6846, %v6844
        %v6871 = vpack.c.b16 %v6849, %v6847
        %v6872 = vpack.c.b16 %v6850, %v6848
        %v6873 = vpack.c.b16 %v6853, %v6851
        %v6874 = vpack.c.b16 %v6854, %v6852
        %v6875 = vpack.c.b16 %v6857, %v6855
        %v6876 = vpack.c.b16 %v6858, %v6856
        %v6877 = vpack.c.b16 %v6861, %v6859
        %v6878 = vpack.c.b16 %v6862, %v6860
        %6895 = vmatpush.bf16.msra.mxu0 %v6877
        %6896 = vmatpush.bf16.msra.mxu0 %v6875
        %6897 = vmatpush.bf16.msra.mxu0 %v6873
        %6898 = vmatpush.bf16.msra.mxu0 %v6871
        %6899 = vmatpush.bf16.msra.mxu0 %v6869
        %6900 = vmatpush.bf16.msra.mxu0 %v6867
        %6901 = vmatpush.bf16.msra.mxu0 %v6865
        %6902 = vmatpush.bf16.msra.mxu0 %v6863
        %6903 = vmatmul.bf16.gmra.mxu0 %v6812
        %v6904 = vpop.f32.mrf.mxu0
        %v6905 = vadd.f32 0.0, %v6904
        %v6906 = vpop.f32.mrf.mxu0
        %v6907 = vadd.f32 0.0, %v6906
        %6908 = vmatmul.bf16.gmra.mxu0 %v6811
        %v6909 = vpop.f32.mrf.mxu0
        %v6910 = vadd.f32 0.0, %v6909
        %v6911 = vpop.f32.mrf.mxu0
        %6912 = vdwg.mxu0
        %6913 = vmatpush.bf16.msra.mxu0 %v6878
        %6914 = vmatpush.bf16.msra.mxu0 %v6876
        %6915 = vmatpush.bf16.msra.mxu0 %v6874
        %6916 = vmatpush.bf16.msra.mxu0 %v6872
        %6917 = vmatpush.bf16.msra.mxu0 %v6870
        %6918 = vmatpush.bf16.msra.mxu0 %v6868
        %6919 = vmatpush.bf16.msra.mxu0 %v6866
        %6920 = vmatpush.bf16.msra.mxu0 %v6864
        %6921 = vmatmul.bf16.gmra.mxu0 %v6812
        %v6922 = vpop.f32.mrf.mxu0
        %v6923 = vadd.f32 0.0, %v6922
        %v6924 = vpop.f32.mrf.mxu0
        %v6925 = vadd.f32 0.0, %v6924
        %6926 = vmatmul.bf16.gmra.mxu0 %v6811
        %v6927 = vpop.f32.mrf.mxu0
        %v6928 = vadd.f32 0.0, %v6927
        %v6929 = vpop.f32.mrf.mxu0
        %6930 = vdwg.mxu0
        %v6931 = vadd.f32 %v6769, %v6905
        %v6932 = vadd.f32 %v6770, %v6923
        %v6933 = vadd.f32 %v6771, %v6907
        %v6934 = vadd.f32 %v6772, %v6925
        %v6935 = vadd.f32 %v6773, %v6910
        %v6936 = vadd.f32 %v6774, %v6928
        %v6937 = vld [vmem:[#allocation4 + $0x4] sm:$0x8]
        %s6938 = scalar_lea.vmem %s8, 1024
        %v6939 = vld [vmem:[%s6938] sm:$0xff]
        %v6940 = vld [vmem:[%s6938 + $0x8] sm:$0xff]
        %v6941 = vld [vmem:[%s6938 + $0x10] sm:$0xff]
        %v6942 = vld [vmem:[%s6938 + $0x18] sm:$0xff]
        %v6943 = vld [vmem:[%s6938 + $0x20] sm:$0xff]
        %v6944 = vld [vmem:[%s6938 + $0x28] sm:$0xff]
        %v6945 = vld [vmem:[%s6938 + $0x30] sm:$0xff]
        %v6946 = vld [vmem:[%s6938 + $0x38] sm:$0xff]
        %v6947 = vld [vmem:[%s6938 + $0x40] sm:$0xff]
        %v6948 = vld [vmem:[%s6938 + $0x48] sm:$0xff]
        %v6949 = vld [vmem:[%s6938 + $0x50] sm:$0xff]
        %v6950 = vld [vmem:[%s6938 + $0x58] sm:$0xff]
        %v6951 = vld [vmem:[%s6938 + $0x60] sm:$0xff]
        %v6952 = vld [vmem:[%s6938 + $0x68] sm:$0xff]
        %v6953 = vld [vmem:[%s6938 + $0x70] sm:$0xff]
        %v6954 = vld [vmem:[%s6938 + $0x78] sm:$0xff]
        %v6956 = vunpack.c.l.b16 %v6937
        %v6957 = vpack.c.b16 %v6643, %v6956
        %v6958 = vrot.slane %v6957, 3
        %v6959 = vrot.slane %v6795, 3
        %v6960 = vsel %vm3794, %v6958, %v6959
        %v6979 = vunpack.c.l.b16 %v6939
        %v6980 = vunpack.c.h.b16 %v6939
        %v6981 = vunpack.c.l.b16 %v6940
        %v6982 = vunpack.c.h.b16 %v6940
        %v6983 = vunpack.c.l.b16 %v6941
        %v6984 = vunpack.c.h.b16 %v6941
        %v6985 = vunpack.c.l.b16 %v6942
        %v6986 = vunpack.c.h.b16 %v6942
        %v6987 = vunpack.c.l.b16 %v6943
        %v6988 = vunpack.c.h.b16 %v6943
        %v6989 = vunpack.c.l.b16 %v6944
        %v6990 = vunpack.c.h.b16 %v6944
        %v6991 = vunpack.c.l.b16 %v6945
        %v6992 = vunpack.c.h.b16 %v6945
        %v6993 = vunpack.c.l.b16 %v6946
        %v6994 = vunpack.c.h.b16 %v6946
        %v6995 = vunpack.c.l.b16 %v6947
        %v6996 = vunpack.c.h.b16 %v6947
        %v6997 = vunpack.c.l.b16 %v6948
        %v6998 = vunpack.c.h.b16 %v6948
        %v6999 = vunpack.c.l.b16 %v6949
        %v7000 = vunpack.c.h.b16 %v6949
        %v7001 = vunpack.c.l.b16 %v6950
        %v7002 = vunpack.c.h.b16 %v6950
        %v7003 = vunpack.c.l.b16 %v6951
        %v7004 = vunpack.c.h.b16 %v6951
        %v7005 = vunpack.c.l.b16 %v6952
        %v7006 = vunpack.c.h.b16 %v6952
        %v7007 = vunpack.c.l.b16 %v6953
        %v7008 = vunpack.c.h.b16 %v6953
        %v7009 = vunpack.c.l.b16 %v6954
        %v7010 = vunpack.c.h.b16 %v6954
        %v7011 = vpack.c.b16 %v6981, %v6979
        %v7012 = vpack.c.b16 %v6982, %v6980
        %v7013 = vpack.c.b16 %v6985, %v6983
        %v7014 = vpack.c.b16 %v6986, %v6984
        %v7015 = vpack.c.b16 %v6989, %v6987
        %v7016 = vpack.c.b16 %v6990, %v6988
        %v7017 = vpack.c.b16 %v6993, %v6991
        %v7018 = vpack.c.b16 %v6994, %v6992
        %v7019 = vpack.c.b16 %v6997, %v6995
        %v7020 = vpack.c.b16 %v6998, %v6996
        %v7021 = vpack.c.b16 %v7001, %v6999
        %v7022 = vpack.c.b16 %v7002, %v7000
        %v7023 = vpack.c.b16 %v7005, %v7003
        %v7024 = vpack.c.b16 %v7006, %v7004
        %v7025 = vpack.c.b16 %v7009, %v7007
        %v7026 = vpack.c.b16 %v7010, %v7008
        %7043 = vmatpush.bf16.msra.mxu0 %v7025
        %7044 = vmatpush.bf16.msra.mxu0 %v7023
        %7045 = vmatpush.bf16.msra.mxu0 %v7021
        %7046 = vmatpush.bf16.msra.mxu0 %v7019
        %7047 = vmatpush.bf16.msra.mxu0 %v7017
        %7048 = vmatpush.bf16.msra.mxu0 %v7015
        %7049 = vmatpush.bf16.msra.mxu0 %v7013
        %7050 = vmatpush.bf16.msra.mxu0 %v7011
        %7051 = vmatmul.bf16.gmra.mxu0 %v6960
        %v7052 = vpop.f32.mrf.mxu0
        %v7053 = vadd.f32 0.0, %v7052
        %v7054 = vpop.f32.mrf.mxu0
        %v7055 = vadd.f32 0.0, %v7054
        %7056 = vmatmul.bf16.gmra.mxu0 %v6959
        %v7057 = vpop.f32.mrf.mxu0
        %v7058 = vadd.f32 0.0, %v7057
        %v7059 = vpop.f32.mrf.mxu0
        %7060 = vdwg.mxu0
        %7061 = vmatpush.bf16.msra.mxu0 %v7026
        %7062 = vmatpush.bf16.msra.mxu0 %v7024
        %7063 = vmatpush.bf16.msra.mxu0 %v7022
        %7064 = vmatpush.bf16.msra.mxu0 %v7020
        %7065 = vmatpush.bf16.msra.mxu0 %v7018
        %7066 = vmatpush.bf16.msra.mxu0 %v7016
        %7067 = vmatpush.bf16.msra.mxu0 %v7014
        %7068 = vmatpush.bf16.msra.mxu0 %v7012
        %7069 = vmatmul.bf16.gmra.mxu0 %v6960
        %v7070 = vpop.f32.mrf.mxu0
        %v7071 = vadd.f32 0.0, %v7070
        %v7072 = vpop.f32.mrf.mxu0
        %v7073 = vadd.f32 0.0, %v7072
        %7074 = vmatmul.bf16.gmra.mxu0 %v6959
        %v7075 = vpop.f32.mrf.mxu0
        %v7076 = vadd.f32 0.0, %v7075
        %v7077 = vpop.f32.mrf.mxu0
        %7078 = vdwg.mxu0
        %v7079 = vadd.f32 %v6931, %v7053
        %v7080 = vadd.f32 %v6932, %v7071
        %v7081 = vadd.f32 %v6933, %v7055
        %v7082 = vadd.f32 %v6934, %v7073
        %v7083 = vadd.f32 %v6935, %v7058
        %v7084 = vadd.f32 %v6936, %v7076
        %v7085 = vld [vmem:[%s9] sm:$0x3]
        %v7087 = vperm.slane %v7085, 0
        %v7088 = vperm.slane %v7085, 1
        %v7091 = vmul.f32 %v7079, %v7087
        %v7092 = vmul.f32 %v7080, %v7088
        %v7093 = vmul.f32 %v7081, %v7087
        %v7094 = vmul.f32 %v7082, %v7088
        %v7095 = vmul.f32 %v7083, %v7087
        %v7096 = vmul.f32 %v7084, %v7088
        %v7097 = vld [vmem:[%s10] sm:$0x3]
        %v7099 = vperm.slane %v7097, 0
        %v7100 = vperm.slane %v7097, 1
        %v7103 = vadd.f32 %v7091, %v7099
        %v7104 = vadd.f32 %v7092, %v7100
        %v7105 = vadd.f32 %v7093, %v7099
        %v7106 = vadd.f32 %v7094, %v7100
        %v7107 = vadd.f32 %v7095, %v7099
        %v7108 = vadd.f32 %v7096, %v7100
        %v7109 = vmax.f32 %v7103, 0.0
        %v7110 = vmax.f32 %v7104, 0.0
        %v7111 = vmax.f32 %v7105, 0.0
        %v7112 = vmax.f32 %v7106, 0.0
        %v7113 = vmax.f32 %v7107, 0.0
        %v7114 = vmax.f32 %v7108, 0.0
        %v7115 = vld [vmem:[%s16] sm:$0xf]
        %v7116 = vld [vmem:[%s16 + $0x4] sm:$0xf]
        %v7117 = vld [vmem:[%s16 + $0x8] sm:$0x1]
        %v7118 = vpack.c.bf16 %v7111, %v7109
        %v7119 = vpack.c.bf16 %v7112, %v7110
        %v7120 = vpack.c.bf16 %v7113, %v7113
        %v7121 = vpack.c.bf16 %v7114, %v7114
        %v7125 = vunpack.c.l.b16 %v7115
        %v7126 = vunpack.c.l.b16 %v7116
        %v7127 = vunpack.c.l.b16 %v7117
        %v7128 = vpack.c.b16 %v7126, %v7125
        %v7129 = vpack.c.b16 %v7127, %v7127
        %vm7130 = vcmask 195584
        %v7132 = vsel %vm7130, %v7128, 0
        %v7135 = vsel %vm7130, %v7129, 0
        %vm7137 = vcmask 1043456
        %v7139 = vsel %vm7137, %v7120, 0
        %v7142 = vsel %vm7137, %v7121, 0
        %7144 = vmatpush.bf16.msra.mxu0 0
        %7145 = vmatpush.bf16.msra.mxu0 0
        %7146 = vmatpush.bf16.msra.mxu0 0
        %7147 = vmatpush.bf16.msra.mxu0 0
        %7148 = vmatpush.bf16.msra.mxu0 0
        %7149 = vmatpush.bf16.msra.mxu0 0
        %7150 = vmatpush.bf16.msra.mxu0 %v7139
        %7151 = vmatpush.bf16.msra.mxu0 %v7118
        %7152 = vmatmul.bf16.gmra.mxu0 %v7132
        %v7153 = vpop.f32.mrf.mxu0
        %v7154 = vadd.f32 0.0, %v7153
        %v7155 = vpop.f32.mrf.mxu0
        %v7156 = vadd.f32 0.0, %v7155
        %7157 = vmatmul.bf16.gmra.mxu0 %v7135
        %v7158 = vpop.f32.mrf.mxu0
        %v7159 = vadd.f32 0.0, %v7158
        %v7160 = vpop.f32.mrf.mxu0
        %7161 = vdwg.mxu0
        %7162 = vmatpush.bf16.msra.mxu0 0
        %7163 = vmatpush.bf16.msra.mxu0 0
        %7164 = vmatpush.bf16.msra.mxu0 0
        %7165 = vmatpush.bf16.msra.mxu0 0
        %7166 = vmatpush.bf16.msra.mxu0 0
        %7167 = vmatpush.bf16.msra.mxu0 0
        %7168 = vmatpush.bf16.msra.mxu0 %v7142
        %7169 = vmatpush.bf16.msra.mxu0 %v7119
        %7170 = vmatmul.bf16.gmra.mxu0 %v7132
        %v7171 = vpop.f32.mrf.mxu0
        %v7172 = vadd.f32 0.0, %v7171
        %v7173 = vpop.f32.mrf.mxu0
        %v7174 = vadd.f32 0.0, %v7173
        %7175 = vmatmul.bf16.gmra.mxu0 %v7135
        %v7176 = vpop.f32.mrf.mxu0
        %v7177 = vadd.f32 0.0, %v7176
        %v7178 = vpop.f32.mrf.mxu0
        %7179 = vdwg.mxu0
        %v7180 = vpack.c.bf16 %v7172, %v7154
        %v7181 = vpack.c.bf16 %v7174, %v7156
        %v7182 = vpack.c.bf16 %v7177, %v7159
        %7183 = vst [vmem:[#allocation5] sm:$0xff] %v7180
        %7184 = vst [vmem:[#allocation5 + $0x8] sm:$0xff] %v7181
        %7185 = vst [vmem:[#allocation5 + $0x10] sm:$0x11] %v7182
        %v7186 = vld [vmem:[#allocation5] sm:$0xff]
        %v7187 = vld [vmem:[%s11] sm:$0xf]
        %v7188 = vld [vmem:[%s11 + $0x4] sm:$0xf]
        %v7189 = vld [vmem:[%s11 + $0x8] sm:$0xf]
        %v7190 = vld [vmem:[%s11 + $0xc] sm:$0xf]
        %v7191 = vld [vmem:[%s11 + $0x10] sm:$0xf]
        %v7192 = vld [vmem:[%s11 + $0x14] sm:$0xf]
        %v7193 = vld [vmem:[%s11 + $0x18] sm:$0xf]
        %v7194 = vld [vmem:[%s11 + $0x1c] sm:$0xf]
        %v7195 = vld [vmem:[%s11 + $0x20] sm:$0xf]
        %v7196 = vld [vmem:[%s11 + $0x24] sm:$0xf]
        %v7197 = vld [vmem:[%s11 + $0x28] sm:$0xf]
        %v7198 = vld [vmem:[%s11 + $0x2c] sm:$0xf]
        %v7199 = vld [vmem:[%s11 + $0x30] sm:$0xf]
        %v7200 = vld [vmem:[%s11 + $0x34] sm:$0xf]
        %v7201 = vld [vmem:[%s11 + $0x38] sm:$0xf]
        %v7202 = vld [vmem:[%s11 + $0x3c] sm:$0xf]
        %v7203 = vld [vmem:[%s11 + $0x40] sm:$0xf]
        %v7204 = vld [vmem:[%s11 + $0x44] sm:$0xf]
        %v7205 = vld [vmem:[%s11 + $0x48] sm:$0xf]
        %v7206 = vld [vmem:[%s11 + $0x4c] sm:$0xf]
        %v7207 = vld [vmem:[%s11 + $0x50] sm:$0xf]
        %v7208 = vld [vmem:[%s11 + $0x54] sm:$0xf]
        %v7209 = vld [vmem:[%s11 + $0x58] sm:$0xf]
        %v7210 = vld [vmem:[%s11 + $0x5c] sm:$0xf]
        %v7211 = vld [vmem:[%s11 + $0x60] sm:$0xf]
        %v7212 = vld [vmem:[%s11 + $0x64] sm:$0xf]
        %v7213 = vld [vmem:[%s11 + $0x68] sm:$0xf]
        %v7214 = vld [vmem:[%s11 + $0x6c] sm:$0xf]
        %v7215 = vld [vmem:[%s11 + $0x70] sm:$0xf]
        %v7216 = vld [vmem:[%s11 + $0x74] sm:$0xf]
        %v7217 = vld [vmem:[%s11 + $0x78] sm:$0xf]
        %v7218 = vld [vmem:[%s11 + $0x7c] sm:$0xf]
        %v7219 = vld [vmem:[#allocation5 + $0x8] sm:$0x11]
        %s7220 = scalar_lea.vmem %s11, 128
        %v7221 = vld [vmem:[%s7220] sm:$0xf]
        %v7222 = vld [vmem:[%s7220 + $0x4] sm:$0xf]
        %v7223 = vld [vmem:[%s7220 + $0x8] sm:$0xf]
        %v7224 = vld [vmem:[%s7220 + $0xc] sm:$0xf]
        %v7225 = vld [vmem:[%s7220 + $0x10] sm:$0xf]
        %v7226 = vld [vmem:[%s7220 + $0x14] sm:$0xf]
        %v7227 = vld [vmem:[%s7220 + $0x18] sm:$0xf]
        %v7228 = vld [vmem:[%s7220 + $0x1c] sm:$0xf]
        %v7229 = vld [vmem:[%s7220 + $0x20] sm:$0xf]
        %v7230 = vld [vmem:[%s7220 + $0x24] sm:$0xf]
        %v7231 = vld [vmem:[%s7220 + $0x28] sm:$0xf]
        %v7232 = vld [vmem:[%s7220 + $0x2c] sm:$0xf]
        %v7233 = vld [vmem:[%s7220 + $0x30] sm:$0xf]
        %v7234 = vld [vmem:[%s7220 + $0x34] sm:$0xf]
        %v7235 = vld [vmem:[%s7220 + $0x38] sm:$0xf]
        %v7236 = vld [vmem:[%s7220 + $0x3c] sm:$0xf]
        %v7237 = vld [vmem:[%s7220 + $0x40] sm:$0xf]
        %v7238 = vld [vmem:[%s7220 + $0x44] sm:$0xf]
        %v7239 = vld [vmem:[%s7220 + $0x48] sm:$0xf]
        %v7240 = vld [vmem:[%s7220 + $0x4c] sm:$0xf]
        %v7241 = vld [vmem:[%s7220 + $0x50] sm:$0xf]
        %v7242 = vld [vmem:[%s7220 + $0x54] sm:$0xf]
        %v7243 = vld [vmem:[%s7220 + $0x58] sm:$0xf]
        %v7244 = vld [vmem:[%s7220 + $0x5c] sm:$0xf]
        %v7245 = vld [vmem:[%s7220 + $0x60] sm:$0xf]
        %v7246 = vld [vmem:[%s7220 + $0x64] sm:$0xf]
        %v7247 = vld [vmem:[%s7220 + $0x68] sm:$0xf]
        %v7248 = vld [vmem:[%s7220 + $0x6c] sm:$0xf]
        %v7249 = vld [vmem:[%s7220 + $0x70] sm:$0xf]
        %v7250 = vld [vmem:[%s7220 + $0x74] sm:$0xf]
        %v7251 = vld [vmem:[%s7220 + $0x78] sm:$0xf]
        %v7252 = vld [vmem:[%s7220 + $0x7c] sm:$0xf]
        %v7255 = vunpack.c.l.b16 %v7186
        %v7256 = vunpack.c.h.b16 %v7186
        %v7257 = vunpack.c.l.b16 %v7219
        %v7258 = vunpack.c.h.b16 %v7219
        %v7259 = vpack.c.b16 %v7257, %v7255
        %v7260 = vpack.c.b16 %v7258, %v7256
        %v7262 = vshrl.u32 %v7259, 16
        %v7264 = vshll.u32 %v7259, 16
        %v7266 = vrot.slane %v7264, 1
        %v7267 = vor.u32 %v7262, %v7266
        %v7269 = vshrl.u32 %v7260, 16
        %v7271 = vshll.u32 %v7260, 16
        %v7273 = vrot.slane %v7271, 1
        %v7274 = vor.u32 %v7269, %v7273
        %v7309 = vunpack.c.l.b16 %v7221
        %v7310 = vunpack.c.l.b16 %v7222
        %v7311 = vunpack.c.l.b16 %v7223
        %v7312 = vunpack.c.l.b16 %v7224
        %v7313 = vunpack.c.l.b16 %v7225
        %v7314 = vunpack.c.l.b16 %v7226
        %v7315 = vunpack.c.l.b16 %v7227
        %v7316 = vunpack.c.l.b16 %v7228
        %v7317 = vunpack.c.l.b16 %v7229
        %v7318 = vunpack.c.l.b16 %v7230
        %v7319 = vunpack.c.l.b16 %v7231
        %v7320 = vunpack.c.l.b16 %v7232
        %v7321 = vunpack.c.l.b16 %v7233
        %v7322 = vunpack.c.l.b16 %v7234
        %v7323 = vunpack.c.l.b16 %v7235
        %v7324 = vunpack.c.l.b16 %v7236
        %v7325 = vunpack.c.l.b16 %v7237
        %v7326 = vunpack.c.l.b16 %v7238
        %v7327 = vunpack.c.l.b16 %v7239
        %v7328 = vunpack.c.l.b16 %v7240
        %v7329 = vunpack.c.l.b16 %v7241
        %v7330 = vunpack.c.l.b16 %v7242
        %v7331 = vunpack.c.l.b16 %v7243
        %v7332 = vunpack.c.l.b16 %v7244
        %v7333 = vunpack.c.l.b16 %v7245
        %v7334 = vunpack.c.l.b16 %v7246
        %v7335 = vunpack.c.l.b16 %v7247
        %v7336 = vunpack.c.l.b16 %v7248
        %v7337 = vunpack.c.l.b16 %v7249
        %v7338 = vunpack.c.l.b16 %v7250
        %v7339 = vunpack.c.l.b16 %v7251
        %v7340 = vunpack.c.l.b16 %v7252
        %v7341 = vpack.c.b16 %v7310, %v7309
        %v7342 = vpack.c.b16 %v7312, %v7311
        %v7343 = vpack.c.b16 %v7314, %v7313
        %v7344 = vpack.c.b16 %v7316, %v7315
        %v7345 = vpack.c.b16 %v7318, %v7317
        %v7346 = vpack.c.b16 %v7320, %v7319
        %v7347 = vpack.c.b16 %v7322, %v7321
        %v7348 = vpack.c.b16 %v7324, %v7323
        %v7349 = vpack.c.b16 %v7326, %v7325
        %v7350 = vpack.c.b16 %v7328, %v7327
        %v7351 = vpack.c.b16 %v7330, %v7329
        %v7352 = vpack.c.b16 %v7332, %v7331
        %v7353 = vpack.c.b16 %v7334, %v7333
        %v7354 = vpack.c.b16 %v7336, %v7335
        %v7355 = vpack.c.b16 %v7338, %v7337
        %v7356 = vpack.c.b16 %v7340, %v7339
        %7373 = vmatpush.bf16.msra.mxu0 %v7348
        %7374 = vmatpush.bf16.msra.mxu0 %v7347
        %7375 = vmatpush.bf16.msra.mxu0 %v7346
        %7376 = vmatpush.bf16.msra.mxu0 %v7345
        %7377 = vmatpush.bf16.msra.mxu0 %v7344
        %7378 = vmatpush.bf16.msra.mxu0 %v7343
        %7379 = vmatpush.bf16.msra.mxu0 %v7342
        %7380 = vmatpush.bf16.msra.mxu0 %v7341
        %7381 = vmatmul.bf16.gmra.mxu0 %v7267
        %v7382 = vpop.f32.mrf.mxu0
        %v7383 = vadd.f32 0.0, %v7382
        %v7384 = vpop.f32.mrf.mxu0
        %7385 = vdwg.mxu0
        %7386 = vmatpush.bf16.msra.mxu0 %v7356
        %7387 = vmatpush.bf16.msra.mxu0 %v7355
        %7388 = vmatpush.bf16.msra.mxu0 %v7354
        %7389 = vmatpush.bf16.msra.mxu0 %v7353
        %7390 = vmatpush.bf16.msra.mxu0 %v7352
        %7391 = vmatpush.bf16.msra.mxu0 %v7351
        %7392 = vmatpush.bf16.msra.mxu0 %v7350
        %7393 = vmatpush.bf16.msra.mxu0 %v7349
        %7394 = vmatmul.bf16.gmra.mxu0 %v7274
        %v7395 = vpop.f32.mrf.mxu0
        %v7396 = vadd.f32 %v7383, %v7395
        %v7397 = vpop.f32.mrf.mxu0
        %7398 = vdwg.mxu0
        %v7399 = vpack.c.b16 %v7255, %v7255
        %v7400 = vpack.c.b16 %v7256, %v7256
        %v7435 = vunpack.c.l.b16 %v7187
        %v7436 = vunpack.c.l.b16 %v7188
        %v7437 = vunpack.c.l.b16 %v7189
        %v7438 = vunpack.c.l.b16 %v7190
        %v7439 = vunpack.c.l.b16 %v7191
        %v7440 = vunpack.c.l.b16 %v7192
        %v7441 = vunpack.c.l.b16 %v7193
        %v7442 = vunpack.c.l.b16 %v7194
        %v7443 = vunpack.c.l.b16 %v7195
        %v7444 = vunpack.c.l.b16 %v7196
        %v7445 = vunpack.c.l.b16 %v7197
        %v7446 = vunpack.c.l.b16 %v7198
        %v7447 = vunpack.c.l.b16 %v7199
        %v7448 = vunpack.c.l.b16 %v7200
        %v7449 = vunpack.c.l.b16 %v7201
        %v7450 = vunpack.c.l.b16 %v7202
        %v7451 = vunpack.c.l.b16 %v7203
        %v7452 = vunpack.c.l.b16 %v7204
        %v7453 = vunpack.c.l.b16 %v7205
        %v7454 = vunpack.c.l.b16 %v7206
        %v7455 = vunpack.c.l.b16 %v7207
        %v7456 = vunpack.c.l.b16 %v7208
        %v7457 = vunpack.c.l.b16 %v7209
        %v7458 = vunpack.c.l.b16 %v7210
        %v7459 = vunpack.c.l.b16 %v7211
        %v7460 = vunpack.c.l.b16 %v7212
        %v7461 = vunpack.c.l.b16 %v7213
        %v7462 = vunpack.c.l.b16 %v7214
        %v7463 = vunpack.c.l.b16 %v7215
        %v7464 = vunpack.c.l.b16 %v7216
        %v7465 = vunpack.c.l.b16 %v7217
        %v7466 = vunpack.c.l.b16 %v7218
        %v7467 = vpack.c.b16 %v7436, %v7435
        %v7468 = vpack.c.b16 %v7438, %v7437
        %v7469 = vpack.c.b16 %v7440, %v7439
        %v7470 = vpack.c.b16 %v7442, %v7441
        %v7471 = vpack.c.b16 %v7444, %v7443
        %v7472 = vpack.c.b16 %v7446, %v7445
        %v7473 = vpack.c.b16 %v7448, %v7447
        %v7474 = vpack.c.b16 %v7450, %v7449
        %v7475 = vpack.c.b16 %v7452, %v7451
        %v7476 = vpack.c.b16 %v7454, %v7453
        %v7477 = vpack.c.b16 %v7456, %v7455
        %v7478 = vpack.c.b16 %v7458, %v7457
        %v7479 = vpack.c.b16 %v7460, %v7459
        %v7480 = vpack.c.b16 %v7462, %v7461
        %v7481 = vpack.c.b16 %v7464, %v7463
        %v7482 = vpack.c.b16 %v7466, %v7465
        %7499 = vmatpush.bf16.msra.mxu0 %v7474
        %7500 = vmatpush.bf16.msra.mxu0 %v7473
        %7501 = vmatpush.bf16.msra.mxu0 %v7472
        %7502 = vmatpush.bf16.msra.mxu0 %v7471
        %7503 = vmatpush.bf16.msra.mxu0 %v7470
        %7504 = vmatpush.bf16.msra.mxu0 %v7469
        %7505 = vmatpush.bf16.msra.mxu0 %v7468
        %7506 = vmatpush.bf16.msra.mxu0 %v7467
        %7507 = vmatmul.bf16.gmra.mxu0 %v7399
        %v7508 = vpop.f32.mrf.mxu0
        %v7509 = vadd.f32 %v7396, %v7508
        %v7510 = vpop.f32.mrf.mxu0
        %7511 = vdwg.mxu0
        %7512 = vmatpush.bf16.msra.mxu0 %v7482
        %7513 = vmatpush.bf16.msra.mxu0 %v7481
        %7514 = vmatpush.bf16.msra.mxu0 %v7480
        %7515 = vmatpush.bf16.msra.mxu0 %v7479
        %7516 = vmatpush.bf16.msra.mxu0 %v7478
        %7517 = vmatpush.bf16.msra.mxu0 %v7477
        %7518 = vmatpush.bf16.msra.mxu0 %v7476
        %7519 = vmatpush.bf16.msra.mxu0 %v7475
        %7520 = vmatmul.bf16.gmra.mxu0 %v7400
        %v7521 = vpop.f32.mrf.mxu0
        %v7522 = vadd.f32 %v7509, %v7521
        %v7523 = vpop.f32.mrf.mxu0
        %7524 = vdwg.mxu0
        %v7525 = vld [vmem:[#allocation5] sm:$0xee]
        %s7526 = scalar_lea.vmem %s11, 256
        %v7527 = vld [vmem:[%s7526] sm:$0xf]
        %v7528 = vld [vmem:[%s7526 + $0x4] sm:$0xf]
        %v7529 = vld [vmem:[%s7526 + $0x8] sm:$0xf]
        %v7530 = vld [vmem:[%s7526 + $0xc] sm:$0xf]
        %v7531 = vld [vmem:[%s7526 + $0x10] sm:$0xf]
        %v7532 = vld [vmem:[%s7526 + $0x14] sm:$0xf]
        %v7533 = vld [vmem:[%s7526 + $0x18] sm:$0xf]
        %v7534 = vld [vmem:[%s7526 + $0x1c] sm:$0xf]
        %v7535 = vld [vmem:[%s7526 + $0x20] sm:$0xf]
        %v7536 = vld [vmem:[%s7526 + $0x24] sm:$0xf]
        %v7537 = vld [vmem:[%s7526 + $0x28] sm:$0xf]
        %v7538 = vld [vmem:[%s7526 + $0x2c] sm:$0xf]
        %v7539 = vld [vmem:[%s7526 + $0x30] sm:$0xf]
        %v7540 = vld [vmem:[%s7526 + $0x34] sm:$0xf]
        %v7541 = vld [vmem:[%s7526 + $0x38] sm:$0xf]
        %v7542 = vld [vmem:[%s7526 + $0x3c] sm:$0xf]
        %v7543 = vld [vmem:[%s7526 + $0x40] sm:$0xf]
        %v7544 = vld [vmem:[%s7526 + $0x44] sm:$0xf]
        %v7545 = vld [vmem:[%s7526 + $0x48] sm:$0xf]
        %v7546 = vld [vmem:[%s7526 + $0x4c] sm:$0xf]
        %v7547 = vld [vmem:[%s7526 + $0x50] sm:$0xf]
        %v7548 = vld [vmem:[%s7526 + $0x54] sm:$0xf]
        %v7549 = vld [vmem:[%s7526 + $0x58] sm:$0xf]
        %v7550 = vld [vmem:[%s7526 + $0x5c] sm:$0xf]
        %v7551 = vld [vmem:[%s7526 + $0x60] sm:$0xf]
        %v7552 = vld [vmem:[%s7526 + $0x64] sm:$0xf]
        %v7553 = vld [vmem:[%s7526 + $0x68] sm:$0xf]
        %v7554 = vld [vmem:[%s7526 + $0x6c] sm:$0xf]
        %v7555 = vld [vmem:[%s7526 + $0x70] sm:$0xf]
        %v7556 = vld [vmem:[%s7526 + $0x74] sm:$0xf]
        %v7557 = vld [vmem:[%s7526 + $0x78] sm:$0xf]
        %v7558 = vld [vmem:[%s7526 + $0x7c] sm:$0xf]
        %v7560 = vunpack.c.l.b16 %v7525
        %v7561 = vunpack.c.h.b16 %v7525
        %v7562 = vpack.c.b16 %v7257, %v7560
        %v7563 = vpack.c.b16 %v7258, %v7561
        %v7564 = vrot.slane %v7562, 1
        %v7565 = vrot.slane %v7563, 1
        %v7600 = vunpack.c.l.b16 %v7527
        %v7601 = vunpack.c.l.b16 %v7528
        %v7602 = vunpack.c.l.b16 %v7529
        %v7603 = vunpack.c.l.b16 %v7530
        %v7604 = vunpack.c.l.b16 %v7531
        %v7605 = vunpack.c.l.b16 %v7532
        %v7606 = vunpack.c.l.b16 %v7533
        %v7607 = vunpack.c.l.b16 %v7534
        %v7608 = vunpack.c.l.b16 %v7535
        %v7609 = vunpack.c.l.b16 %v7536
        %v7610 = vunpack.c.l.b16 %v7537
        %v7611 = vunpack.c.l.b16 %v7538
        %v7612 = vunpack.c.l.b16 %v7539
        %v7613 = vunpack.c.l.b16 %v7540
        %v7614 = vunpack.c.l.b16 %v7541
        %v7615 = vunpack.c.l.b16 %v7542
        %v7616 = vunpack.c.l.b16 %v7543
        %v7617 = vunpack.c.l.b16 %v7544
        %v7618 = vunpack.c.l.b16 %v7545
        %v7619 = vunpack.c.l.b16 %v7546
        %v7620 = vunpack.c.l.b16 %v7547
        %v7621 = vunpack.c.l.b16 %v7548
        %v7622 = vunpack.c.l.b16 %v7549
        %v7623 = vunpack.c.l.b16 %v7550
        %v7624 = vunpack.c.l.b16 %v7551
        %v7625 = vunpack.c.l.b16 %v7552
        %v7626 = vunpack.c.l.b16 %v7553
        %v7627 = vunpack.c.l.b16 %v7554
        %v7628 = vunpack.c.l.b16 %v7555
        %v7629 = vunpack.c.l.b16 %v7556
        %v7630 = vunpack.c.l.b16 %v7557
        %v7631 = vunpack.c.l.b16 %v7558
        %v7632 = vpack.c.b16 %v7601, %v7600
        %v7633 = vpack.c.b16 %v7603, %v7602
        %v7634 = vpack.c.b16 %v7605, %v7604
        %v7635 = vpack.c.b16 %v7607, %v7606
        %v7636 = vpack.c.b16 %v7609, %v7608
        %v7637 = vpack.c.b16 %v7611, %v7610
        %v7638 = vpack.c.b16 %v7613, %v7612
        %v7639 = vpack.c.b16 %v7615, %v7614
        %v7640 = vpack.c.b16 %v7617, %v7616
        %v7641 = vpack.c.b16 %v7619, %v7618
        %v7642 = vpack.c.b16 %v7621, %v7620
        %v7643 = vpack.c.b16 %v7623, %v7622
        %v7644 = vpack.c.b16 %v7625, %v7624
        %v7645 = vpack.c.b16 %v7627, %v7626
        %v7646 = vpack.c.b16 %v7629, %v7628
        %v7647 = vpack.c.b16 %v7631, %v7630
        %7664 = vmatpush.bf16.msra.mxu0 %v7639
        %7665 = vmatpush.bf16.msra.mxu0 %v7638
        %7666 = vmatpush.bf16.msra.mxu0 %v7637
        %7667 = vmatpush.bf16.msra.mxu0 %v7636
        %7668 = vmatpush.bf16.msra.mxu0 %v7635
        %7669 = vmatpush.bf16.msra.mxu0 %v7634
        %7670 = vmatpush.bf16.msra.mxu0 %v7633
        %7671 = vmatpush.bf16.msra.mxu0 %v7632
        %7672 = vmatmul.bf16.gmra.mxu0 %v7564
        %v7673 = vpop.f32.mrf.mxu0
        %v7674 = vadd.f32 0.0, %v7673
        %v7675 = vpop.f32.mrf.mxu0
        %7676 = vdwg.mxu0
        %7677 = vmatpush.bf16.msra.mxu0 %v7647
        %7678 = vmatpush.bf16.msra.mxu0 %v7646
        %7679 = vmatpush.bf16.msra.mxu0 %v7645
        %7680 = vmatpush.bf16.msra.mxu0 %v7644
        %7681 = vmatpush.bf16.msra.mxu0 %v7643
        %7682 = vmatpush.bf16.msra.mxu0 %v7642
        %7683 = vmatpush.bf16.msra.mxu0 %v7641
        %7684 = vmatpush.bf16.msra.mxu0 %v7640
        %7685 = vmatmul.bf16.gmra.mxu0 %v7565
        %v7686 = vpop.f32.mrf.mxu0
        %v7687 = vadd.f32 %v7674, %v7686
        %v7688 = vpop.f32.mrf.mxu0
        %7689 = vdwg.mxu0
        %v7690 = vadd.f32 %v7522, %v7687
        %v7691 = vld [vmem:[#allocation5] sm:$0xcc]
        %v7692 = vld [vmem:[#allocation5 + $0x8] sm:$0x33]
        %s7693 = scalar_lea.vmem %s11, 384
        %v7694 = vld [vmem:[%s7693] sm:$0xf]
        %v7695 = vld [vmem:[%s7693 + $0x4] sm:$0xf]
        %v7696 = vld [vmem:[%s7693 + $0x8] sm:$0xf]
        %v7697 = vld [vmem:[%s7693 + $0xc] sm:$0xf]
        %v7698 = vld [vmem:[%s7693 + $0x10] sm:$0xf]
        %v7699 = vld [vmem:[%s7693 + $0x14] sm:$0xf]
        %v7700 = vld [vmem:[%s7693 + $0x18] sm:$0xf]
        %v7701 = vld [vmem:[%s7693 + $0x1c] sm:$0xf]
        %v7702 = vld [vmem:[%s7693 + $0x20] sm:$0xf]
        %v7703 = vld [vmem:[%s7693 + $0x24] sm:$0xf]
        %v7704 = vld [vmem:[%s7693 + $0x28] sm:$0xf]
        %v7705 = vld [vmem:[%s7693 + $0x2c] sm:$0xf]
        %v7706 = vld [vmem:[%s7693 + $0x30] sm:$0xf]
        %v7707 = vld [vmem:[%s7693 + $0x34] sm:$0xf]
        %v7708 = vld [vmem:[%s7693 + $0x38] sm:$0xf]
        %v7709 = vld [vmem:[%s7693 + $0x3c] sm:$0xf]
        %v7710 = vld [vmem:[%s7693 + $0x40] sm:$0xf]
        %v7711 = vld [vmem:[%s7693 + $0x44] sm:$0xf]
        %v7712 = vld [vmem:[%s7693 + $0x48] sm:$0xf]
        %v7713 = vld [vmem:[%s7693 + $0x4c] sm:$0xf]
        %v7714 = vld [vmem:[%s7693 + $0x50] sm:$0xf]
        %v7715 = vld [vmem:[%s7693 + $0x54] sm:$0xf]
        %v7716 = vld [vmem:[%s7693 + $0x58] sm:$0xf]
        %v7717 = vld [vmem:[%s7693 + $0x5c] sm:$0xf]
        %v7718 = vld [vmem:[%s7693 + $0x60] sm:$0xf]
        %v7719 = vld [vmem:[%s7693 + $0x64] sm:$0xf]
        %v7720 = vld [vmem:[%s7693 + $0x68] sm:$0xf]
        %v7721 = vld [vmem:[%s7693 + $0x6c] sm:$0xf]
        %v7722 = vld [vmem:[%s7693 + $0x70] sm:$0xf]
        %v7723 = vld [vmem:[%s7693 + $0x74] sm:$0xf]
        %v7724 = vld [vmem:[%s7693 + $0x78] sm:$0xf]
        %v7725 = vld [vmem:[%s7693 + $0x7c] sm:$0xf]
        %v7728 = vunpack.c.l.b16 %v7691
        %v7729 = vunpack.c.h.b16 %v7691
        %v7730 = vunpack.c.l.b16 %v7692
        %v7731 = vunpack.c.h.b16 %v7692
        %v7732 = vpack.c.b16 %v7730, %v7728
        %v7733 = vpack.c.b16 %v7731, %v7729
        %v7734 = vrot.slane %v7732, 2
        %v7735 = vrot.slane %v7733, 2
        %v7770 = vunpack.c.l.b16 %v7694
        %v7771 = vunpack.c.l.b16 %v7695
        %v7772 = vunpack.c.l.b16 %v7696
        %v7773 = vunpack.c.l.b16 %v7697
        %v7774 = vunpack.c.l.b16 %v7698
        %v7775 = vunpack.c.l.b16 %v7699
        %v7776 = vunpack.c.l.b16 %v7700
        %v7777 = vunpack.c.l.b16 %v7701
        %v7778 = vunpack.c.l.b16 %v7702
        %v7779 = vunpack.c.l.b16 %v7703
        %v7780 = vunpack.c.l.b16 %v7704
        %v7781 = vunpack.c.l.b16 %v7705
        %v7782 = vunpack.c.l.b16 %v7706
        %v7783 = vunpack.c.l.b16 %v7707
        %v7784 = vunpack.c.l.b16 %v7708
        %v7785 = vunpack.c.l.b16 %v7709
        %v7786 = vunpack.c.l.b16 %v7710
        %v7787 = vunpack.c.l.b16 %v7711
        %v7788 = vunpack.c.l.b16 %v7712
        %v7789 = vunpack.c.l.b16 %v7713
        %v7790 = vunpack.c.l.b16 %v7714
        %v7791 = vunpack.c.l.b16 %v7715
        %v7792 = vunpack.c.l.b16 %v7716
        %v7793 = vunpack.c.l.b16 %v7717
        %v7794 = vunpack.c.l.b16 %v7718
        %v7795 = vunpack.c.l.b16 %v7719
        %v7796 = vunpack.c.l.b16 %v7720
        %v7797 = vunpack.c.l.b16 %v7721
        %v7798 = vunpack.c.l.b16 %v7722
        %v7799 = vunpack.c.l.b16 %v7723
        %v7800 = vunpack.c.l.b16 %v7724
        %v7801 = vunpack.c.l.b16 %v7725
        %v7802 = vpack.c.b16 %v7771, %v7770
        %v7803 = vpack.c.b16 %v7773, %v7772
        %v7804 = vpack.c.b16 %v7775, %v7774
        %v7805 = vpack.c.b16 %v7777, %v7776
        %v7806 = vpack.c.b16 %v7779, %v7778
        %v7807 = vpack.c.b16 %v7781, %v7780
        %v7808 = vpack.c.b16 %v7783, %v7782
        %v7809 = vpack.c.b16 %v7785, %v7784
        %v7810 = vpack.c.b16 %v7787, %v7786
        %v7811 = vpack.c.b16 %v7789, %v7788
        %v7812 = vpack.c.b16 %v7791, %v7790
        %v7813 = vpack.c.b16 %v7793, %v7792
        %v7814 = vpack.c.b16 %v7795, %v7794
        %v7815 = vpack.c.b16 %v7797, %v7796
        %v7816 = vpack.c.b16 %v7799, %v7798
        %v7817 = vpack.c.b16 %v7801, %v7800
        %7834 = vmatpush.bf16.msra.mxu0 %v7809
        %7835 = vmatpush.bf16.msra.mxu0 %v7808
        %7836 = vmatpush.bf16.msra.mxu0 %v7807
        %7837 = vmatpush.bf16.msra.mxu0 %v7806
        %7838 = vmatpush.bf16.msra.mxu0 %v7805
        %7839 = vmatpush.bf16.msra.mxu0 %v7804
        %7840 = vmatpush.bf16.msra.mxu0 %v7803
        %7841 = vmatpush.bf16.msra.mxu0 %v7802
        %7842 = vmatmul.bf16.gmra.mxu0 %v7734
        %v7843 = vpop.f32.mrf.mxu0
        %v7844 = vadd.f32 0.0, %v7843
        %v7845 = vpop.f32.mrf.mxu0
        %7846 = vdwg.mxu0
        %7847 = vmatpush.bf16.msra.mxu0 %v7817
        %7848 = vmatpush.bf16.msra.mxu0 %v7816
        %7849 = vmatpush.bf16.msra.mxu0 %v7815
        %7850 = vmatpush.bf16.msra.mxu0 %v7814
        %7851 = vmatpush.bf16.msra.mxu0 %v7813
        %7852 = vmatpush.bf16.msra.mxu0 %v7812
        %7853 = vmatpush.bf16.msra.mxu0 %v7811
        %7854 = vmatpush.bf16.msra.mxu0 %v7810
        %7855 = vmatmul.bf16.gmra.mxu0 %v7735
        %v7856 = vpop.f32.mrf.mxu0
        %v7857 = vadd.f32 %v7844, %v7856
        %v7858 = vpop.f32.mrf.mxu0
        %7859 = vdwg.mxu0
        %v7860 = vadd.f32 %v7690, %v7857
        %v7861 = vld [vmem:[#allocation5 + $0x8] sm:$0x77]
        %s7862 = scalar_lea.vmem %s11, 512
        %v7863 = vld [vmem:[%s7862] sm:$0xf]
        %v7864 = vld [vmem:[%s7862 + $0x4] sm:$0xf]
        %v7865 = vld [vmem:[%s7862 + $0x8] sm:$0xf]
        %v7866 = vld [vmem:[%s7862 + $0xc] sm:$0xf]
        %v7867 = vld [vmem:[%s7862 + $0x10] sm:$0xf]
        %v7868 = vld [vmem:[%s7862 + $0x14] sm:$0xf]
        %v7869 = vld [vmem:[%s7862 + $0x18] sm:$0xf]
        %v7870 = vld [vmem:[%s7862 + $0x1c] sm:$0xf]
        %v7871 = vld [vmem:[%s7862 + $0x20] sm:$0xf]
        %v7872 = vld [vmem:[%s7862 + $0x24] sm:$0xf]
        %v7873 = vld [vmem:[%s7862 + $0x28] sm:$0xf]
        %v7874 = vld [vmem:[%s7862 + $0x2c] sm:$0xf]
        %v7875 = vld [vmem:[%s7862 + $0x30] sm:$0xf]
        %v7876 = vld [vmem:[%s7862 + $0x34] sm:$0xf]
        %v7877 = vld [vmem:[%s7862 + $0x38] sm:$0xf]
        %v7878 = vld [vmem:[%s7862 + $0x3c] sm:$0xf]
        %v7879 = vld [vmem:[%s7862 + $0x40] sm:$0xf]
        %v7880 = vld [vmem:[%s7862 + $0x44] sm:$0xf]
        %v7881 = vld [vmem:[%s7862 + $0x48] sm:$0xf]
        %v7882 = vld [vmem:[%s7862 + $0x4c] sm:$0xf]
        %v7883 = vld [vmem:[%s7862 + $0x50] sm:$0xf]
        %v7884 = vld [vmem:[%s7862 + $0x54] sm:$0xf]
        %v7885 = vld [vmem:[%s7862 + $0x58] sm:$0xf]
        %v7886 = vld [vmem:[%s7862 + $0x5c] sm:$0xf]
        %v7887 = vld [vmem:[%s7862 + $0x60] sm:$0xf]
        %v7888 = vld [vmem:[%s7862 + $0x64] sm:$0xf]
        %v7889 = vld [vmem:[%s7862 + $0x68] sm:$0xf]
        %v7890 = vld [vmem:[%s7862 + $0x6c] sm:$0xf]
        %v7891 = vld [vmem:[%s7862 + $0x70] sm:$0xf]
        %v7892 = vld [vmem:[%s7862 + $0x74] sm:$0xf]
        %v7893 = vld [vmem:[%s7862 + $0x78] sm:$0xf]
        %v7894 = vld [vmem:[%s7862 + $0x7c] sm:$0xf]
        %v7896 = vunpack.c.l.b16 %v7861
        %v7897 = vunpack.c.h.b16 %v7861
        %v7898 = vpack.c.b16 %v7896, %v7728
        %v7899 = vpack.c.b16 %v7897, %v7729
        %v7901 = vshrl.u32 %v7898, 16
        %v7903 = vrot.slane %v7901, 2
        %v7904 = vshll.u32 %v7898, 16
        %v7906 = vrot.slane %v7904, 3
        %v7907 = vor.u32 %v7903, %v7906
        %v7909 = vshrl.u32 %v7899, 16
        %v7911 = vrot.slane %v7909, 2
        %v7912 = vshll.u32 %v7899, 16
        %v7914 = vrot.slane %v7912, 3
        %v7915 = vor.u32 %v7911, %v7914
        %v7950 = vunpack.c.l.b16 %v7863
        %v7951 = vunpack.c.l.b16 %v7864
        %v7952 = vunpack.c.l.b16 %v7865
        %v7953 = vunpack.c.l.b16 %v7866
        %v7954 = vunpack.c.l.b16 %v7867
        %v7955 = vunpack.c.l.b16 %v7868
        %v7956 = vunpack.c.l.b16 %v7869
        %v7957 = vunpack.c.l.b16 %v7870
        %v7958 = vunpack.c.l.b16 %v7871
        %v7959 = vunpack.c.l.b16 %v7872
        %v7960 = vunpack.c.l.b16 %v7873
        %v7961 = vunpack.c.l.b16 %v7874
        %v7962 = vunpack.c.l.b16 %v7875
        %v7963 = vunpack.c.l.b16 %v7876
        %v7964 = vunpack.c.l.b16 %v7877
        %v7965 = vunpack.c.l.b16 %v7878
        %v7966 = vunpack.c.l.b16 %v7879
        %v7967 = vunpack.c.l.b16 %v7880
        %v7968 = vunpack.c.l.b16 %v7881
        %v7969 = vunpack.c.l.b16 %v7882
        %v7970 = vunpack.c.l.b16 %v7883
        %v7971 = vunpack.c.l.b16 %v7884
        %v7972 = vunpack.c.l.b16 %v7885
        %v7973 = vunpack.c.l.b16 %v7886
        %v7974 = vunpack.c.l.b16 %v7887
        %v7975 = vunpack.c.l.b16 %v7888
        %v7976 = vunpack.c.l.b16 %v7889
        %v7977 = vunpack.c.l.b16 %v7890
        %v7978 = vunpack.c.l.b16 %v7891
        %v7979 = vunpack.c.l.b16 %v7892
        %v7980 = vunpack.c.l.b16 %v7893
        %v7981 = vunpack.c.l.b16 %v7894
        %v7982 = vpack.c.b16 %v7951, %v7950
        %v7983 = vpack.c.b16 %v7953, %v7952
        %v7984 = vpack.c.b16 %v7955, %v7954
        %v7985 = vpack.c.b16 %v7957, %v7956
        %v7986 = vpack.c.b16 %v7959, %v7958
        %v7987 = vpack.c.b16 %v7961, %v7960
        %v7988 = vpack.c.b16 %v7963, %v7962
        %v7989 = vpack.c.b16 %v7965, %v7964
        %v7990 = vpack.c.b16 %v7967, %v7966
        %v7991 = vpack.c.b16 %v7969, %v7968
        %v7992 = vpack.c.b16 %v7971, %v7970
        %v7993 = vpack.c.b16 %v7973, %v7972
        %v7994 = vpack.c.b16 %v7975, %v7974
        %v7995 = vpack.c.b16 %v7977, %v7976
        %v7996 = vpack.c.b16 %v7979, %v7978
        %v7997 = vpack.c.b16 %v7981, %v7980
        %8014 = vmatpush.bf16.msra.mxu0 %v7989
        %8015 = vmatpush.bf16.msra.mxu0 %v7988
        %8016 = vmatpush.bf16.msra.mxu0 %v7987
        %8017 = vmatpush.bf16.msra.mxu0 %v7986
        %8018 = vmatpush.bf16.msra.mxu0 %v7985
        %8019 = vmatpush.bf16.msra.mxu0 %v7984
        %8020 = vmatpush.bf16.msra.mxu0 %v7983
        %8021 = vmatpush.bf16.msra.mxu0 %v7982
        %8022 = vmatmul.bf16.gmra.mxu0 %v7907
        %v8023 = vpop.f32.mrf.mxu0
        %v8024 = vadd.f32 0.0, %v8023
        %v8025 = vpop.f32.mrf.mxu0
        %8026 = vdwg.mxu0
        %8027 = vmatpush.bf16.msra.mxu0 %v7997
        %8028 = vmatpush.bf16.msra.mxu0 %v7996
        %8029 = vmatpush.bf16.msra.mxu0 %v7995
        %8030 = vmatpush.bf16.msra.mxu0 %v7994
        %8031 = vmatpush.bf16.msra.mxu0 %v7993
        %8032 = vmatpush.bf16.msra.mxu0 %v7992
        %8033 = vmatpush.bf16.msra.mxu0 %v7991
        %8034 = vmatpush.bf16.msra.mxu0 %v7990
        %8035 = vmatmul.bf16.gmra.mxu0 %v7915
        %v8036 = vpop.f32.mrf.mxu0
        %v8037 = vadd.f32 %v8024, %v8036
        %v8038 = vpop.f32.mrf.mxu0
        %8039 = vdwg.mxu0
        %v8040 = vadd.f32 %v7860, %v8037
        %v8041 = vld [vmem:[#allocation5] sm:$0x88]
        %s8042 = scalar_lea.vmem %s11, 640
        %v8043 = vld [vmem:[%s8042] sm:$0xf]
        %v8044 = vld [vmem:[%s8042 + $0x4] sm:$0xf]
        %v8045 = vld [vmem:[%s8042 + $0x8] sm:$0xf]
        %v8046 = vld [vmem:[%s8042 + $0xc] sm:$0xf]
        %v8047 = vld [vmem:[%s8042 + $0x10] sm:$0xf]
        %v8048 = vld [vmem:[%s8042 + $0x14] sm:$0xf]
        %v8049 = vld [vmem:[%s8042 + $0x18] sm:$0xf]
        %v8050 = vld [vmem:[%s8042 + $0x1c] sm:$0xf]
        %v8051 = vld [vmem:[%s8042 + $0x20] sm:$0xf]
        %v8052 = vld [vmem:[%s8042 + $0x24] sm:$0xf]
        %v8053 = vld [vmem:[%s8042 + $0x28] sm:$0xf]
        %v8054 = vld [vmem:[%s8042 + $0x2c] sm:$0xf]
        %v8055 = vld [vmem:[%s8042 + $0x30] sm:$0xf]
        %v8056 = vld [vmem:[%s8042 + $0x34] sm:$0xf]
        %v8057 = vld [vmem:[%s8042 + $0x38] sm:$0xf]
        %v8058 = vld [vmem:[%s8042 + $0x3c] sm:$0xf]
        %v8059 = vld [vmem:[%s8042 + $0x40] sm:$0xf]
        %v8060 = vld [vmem:[%s8042 + $0x44] sm:$0xf]
        %v8061 = vld [vmem:[%s8042 + $0x48] sm:$0xf]
        %v8062 = vld [vmem:[%s8042 + $0x4c] sm:$0xf]
        %v8063 = vld [vmem:[%s8042 + $0x50] sm:$0xf]
        %v8064 = vld [vmem:[%s8042 + $0x54] sm:$0xf]
        %v8065 = vld [vmem:[%s8042 + $0x58] sm:$0xf]
        %v8066 = vld [vmem:[%s8042 + $0x5c] sm:$0xf]
        %v8067 = vld [vmem:[%s8042 + $0x60] sm:$0xf]
        %v8068 = vld [vmem:[%s8042 + $0x64] sm:$0xf]
        %v8069 = vld [vmem:[%s8042 + $0x68] sm:$0xf]
        %v8070 = vld [vmem:[%s8042 + $0x6c] sm:$0xf]
        %v8071 = vld [vmem:[%s8042 + $0x70] sm:$0xf]
        %v8072 = vld [vmem:[%s8042 + $0x74] sm:$0xf]
        %v8073 = vld [vmem:[%s8042 + $0x78] sm:$0xf]
        %v8074 = vld [vmem:[%s8042 + $0x7c] sm:$0xf]
        %v8076 = vunpack.c.l.b16 %v8041
        %v8077 = vunpack.c.h.b16 %v8041
        %v8078 = vpack.c.b16 %v7896, %v8076
        %v8079 = vpack.c.b16 %v7897, %v8077
        %v8080 = vrot.slane %v8078, 3
        %v8081 = vrot.slane %v8079, 3
        %v8116 = vunpack.c.l.b16 %v8043
        %v8117 = vunpack.c.l.b16 %v8044
        %v8118 = vunpack.c.l.b16 %v8045
        %v8119 = vunpack.c.l.b16 %v8046
        %v8120 = vunpack.c.l.b16 %v8047
        %v8121 = vunpack.c.l.b16 %v8048
        %v8122 = vunpack.c.l.b16 %v8049
        %v8123 = vunpack.c.l.b16 %v8050
        %v8124 = vunpack.c.l.b16 %v8051
        %v8125 = vunpack.c.l.b16 %v8052
        %v8126 = vunpack.c.l.b16 %v8053
        %v8127 = vunpack.c.l.b16 %v8054
        %v8128 = vunpack.c.l.b16 %v8055
        %v8129 = vunpack.c.l.b16 %v8056
        %v8130 = vunpack.c.l.b16 %v8057
        %v8131 = vunpack.c.l.b16 %v8058
        %v8132 = vunpack.c.l.b16 %v8059
        %v8133 = vunpack.c.l.b16 %v8060
        %v8134 = vunpack.c.l.b16 %v8061
        %v8135 = vunpack.c.l.b16 %v8062
        %v8136 = vunpack.c.l.b16 %v8063
        %v8137 = vunpack.c.l.b16 %v8064
        %v8138 = vunpack.c.l.b16 %v8065
        %v8139 = vunpack.c.l.b16 %v8066
        %v8140 = vunpack.c.l.b16 %v8067
        %v8141 = vunpack.c.l.b16 %v8068
        %v8142 = vunpack.c.l.b16 %v8069
        %v8143 = vunpack.c.l.b16 %v8070
        %v8144 = vunpack.c.l.b16 %v8071
        %v8145 = vunpack.c.l.b16 %v8072
        %v8146 = vunpack.c.l.b16 %v8073
        %v8147 = vunpack.c.l.b16 %v8074
        %v8148 = vpack.c.b16 %v8117, %v8116
        %v8149 = vpack.c.b16 %v8119, %v8118
        %v8150 = vpack.c.b16 %v8121, %v8120
        %v8151 = vpack.c.b16 %v8123, %v8122
        %v8152 = vpack.c.b16 %v8125, %v8124
        %v8153 = vpack.c.b16 %v8127, %v8126
        %v8154 = vpack.c.b16 %v8129, %v8128
        %v8155 = vpack.c.b16 %v8131, %v8130
        %v8156 = vpack.c.b16 %v8133, %v8132
        %v8157 = vpack.c.b16 %v8135, %v8134
        %v8158 = vpack.c.b16 %v8137, %v8136
        %v8159 = vpack.c.b16 %v8139, %v8138
        %v8160 = vpack.c.b16 %v8141, %v8140
        %v8161 = vpack.c.b16 %v8143, %v8142
        %v8162 = vpack.c.b16 %v8145, %v8144
        %v8163 = vpack.c.b16 %v8147, %v8146
        %8180 = vmatpush.bf16.msra.mxu0 %v8155
        %8181 = vmatpush.bf16.msra.mxu0 %v8154
        %8182 = vmatpush.bf16.msra.mxu0 %v8153
        %8183 = vmatpush.bf16.msra.mxu0 %v8152
        %8184 = vmatpush.bf16.msra.mxu0 %v8151
        %8185 = vmatpush.bf16.msra.mxu0 %v8150
        %8186 = vmatpush.bf16.msra.mxu0 %v8149
        %8187 = vmatpush.bf16.msra.mxu0 %v8148
        %8188 = vmatmul.bf16.gmra.mxu0 %v8080
        %v8189 = vpop.f32.mrf.mxu0
        %v8190 = vadd.f32 0.0, %v8189
        %v8191 = vpop.f32.mrf.mxu0
        %8192 = vdwg.mxu0
        %8193 = vmatpush.bf16.msra.mxu0 %v8163
        %8194 = vmatpush.bf16.msra.mxu0 %v8162
        %8195 = vmatpush.bf16.msra.mxu0 %v8161
        %8196 = vmatpush.bf16.msra.mxu0 %v8160
        %8197 = vmatpush.bf16.msra.mxu0 %v8159
        %8198 = vmatpush.bf16.msra.mxu0 %v8158
        %8199 = vmatpush.bf16.msra.mxu0 %v8157
        %8200 = vmatpush.bf16.msra.mxu0 %v8156
        %8201 = vmatmul.bf16.gmra.mxu0 %v8081
        %v8202 = vpop.f32.mrf.mxu0
        %v8203 = vadd.f32 %v8190, %v8202
        %v8204 = vpop.f32.mrf.mxu0
        %8205 = vdwg.mxu0
        %v8206 = vadd.f32 %v8040, %v8203
        %v8207 = vld [vmem:[#allocation5 + $0x8] sm:$0xff]
        %s8208 = scalar_lea.vmem %s11, 768
        %v8209 = vld [vmem:[%s8208] sm:$0xf]
        %v8210 = vld [vmem:[%s8208 + $0x4] sm:$0xf]
        %v8211 = vld [vmem:[%s8208 + $0x8] sm:$0xf]
        %v8212 = vld [vmem:[%s8208 + $0xc] sm:$0xf]
        %v8213 = vld [vmem:[%s8208 + $0x10] sm:$0xf]
        %v8214 = vld [vmem:[%s8208 + $0x14] sm:$0xf]
        %v8215 = vld [vmem:[%s8208 + $0x18] sm:$0xf]
        %v8216 = vld [vmem:[%s8208 + $0x1c] sm:$0xf]
        %v8217 = vld [vmem:[%s8208 + $0x20] sm:$0xf]
        %v8218 = vld [vmem:[%s8208 + $0x24] sm:$0xf]
        %v8219 = vld [vmem:[%s8208 + $0x28] sm:$0xf]
        %v8220 = vld [vmem:[%s8208 + $0x2c] sm:$0xf]
        %v8221 = vld [vmem:[%s8208 + $0x30] sm:$0xf]
        %v8222 = vld [vmem:[%s8208 + $0x34] sm:$0xf]
        %v8223 = vld [vmem:[%s8208 + $0x38] sm:$0xf]
        %v8224 = vld [vmem:[%s8208 + $0x3c] sm:$0xf]
        %v8225 = vld [vmem:[%s8208 + $0x40] sm:$0xf]
        %v8226 = vld [vmem:[%s8208 + $0x44] sm:$0xf]
        %v8227 = vld [vmem:[%s8208 + $0x48] sm:$0xf]
        %v8228 = vld [vmem:[%s8208 + $0x4c] sm:$0xf]
        %v8229 = vld [vmem:[%s8208 + $0x50] sm:$0xf]
        %v8230 = vld [vmem:[%s8208 + $0x54] sm:$0xf]
        %v8231 = vld [vmem:[%s8208 + $0x58] sm:$0xf]
        %v8232 = vld [vmem:[%s8208 + $0x5c] sm:$0xf]
        %v8233 = vld [vmem:[%s8208 + $0x60] sm:$0xf]
        %v8234 = vld [vmem:[%s8208 + $0x64] sm:$0xf]
        %v8235 = vld [vmem:[%s8208 + $0x68] sm:$0xf]
        %v8236 = vld [vmem:[%s8208 + $0x6c] sm:$0xf]
        %v8237 = vld [vmem:[%s8208 + $0x70] sm:$0xf]
        %v8238 = vld [vmem:[%s8208 + $0x74] sm:$0xf]
        %v8239 = vld [vmem:[%s8208 + $0x78] sm:$0xf]
        %v8240 = vld [vmem:[%s8208 + $0x7c] sm:$0xf]
        %v8242 = vunpack.c.l.b16 %v8207
        %v8243 = vunpack.c.h.b16 %v8207
        %v8244 = vpack.c.b16 %v8242, %v8242
        %v8245 = vpack.c.b16 %v8243, %v8243
        %v8280 = vunpack.c.l.b16 %v8209
        %v8281 = vunpack.c.l.b16 %v8210
        %v8282 = vunpack.c.l.b16 %v8211
        %v8283 = vunpack.c.l.b16 %v8212
        %v8284 = vunpack.c.l.b16 %v8213
        %v8285 = vunpack.c.l.b16 %v8214
        %v8286 = vunpack.c.l.b16 %v8215
        %v8287 = vunpack.c.l.b16 %v8216
        %v8288 = vunpack.c.l.b16 %v8217
        %v8289 = vunpack.c.l.b16 %v8218
        %v8290 = vunpack.c.l.b16 %v8219
        %v8291 = vunpack.c.l.b16 %v8220
        %v8292 = vunpack.c.l.b16 %v8221
        %v8293 = vunpack.c.l.b16 %v8222
        %v8294 = vunpack.c.l.b16 %v8223
        %v8295 = vunpack.c.l.b16 %v8224
        %v8296 = vunpack.c.l.b16 %v8225
        %v8297 = vunpack.c.l.b16 %v8226
        %v8298 = vunpack.c.l.b16 %v8227
        %v8299 = vunpack.c.l.b16 %v8228
        %v8300 = vunpack.c.l.b16 %v8229
        %v8301 = vunpack.c.l.b16 %v8230
        %v8302 = vunpack.c.l.b16 %v8231
        %v8303 = vunpack.c.l.b16 %v8232
        %v8304 = vunpack.c.l.b16 %v8233
        %v8305 = vunpack.c.l.b16 %v8234
        %v8306 = vunpack.c.l.b16 %v8235
        %v8307 = vunpack.c.l.b16 %v8236
        %v8308 = vunpack.c.l.b16 %v8237
        %v8309 = vunpack.c.l.b16 %v8238
        %v8310 = vunpack.c.l.b16 %v8239
        %v8311 = vunpack.c.l.b16 %v8240
        %v8312 = vpack.c.b16 %v8281, %v8280
        %v8313 = vpack.c.b16 %v8283, %v8282
        %v8314 = vpack.c.b16 %v8285, %v8284
        %v8315 = vpack.c.b16 %v8287, %v8286
        %v8316 = vpack.c.b16 %v8289, %v8288
        %v8317 = vpack.c.b16 %v8291, %v8290
        %v8318 = vpack.c.b16 %v8293, %v8292
        %v8319 = vpack.c.b16 %v8295, %v8294
        %v8320 = vpack.c.b16 %v8297, %v8296
        %v8321 = vpack.c.b16 %v8299, %v8298
        %v8322 = vpack.c.b16 %v8301, %v8300
        %v8323 = vpack.c.b16 %v8303, %v8302
        %v8324 = vpack.c.b16 %v8305, %v8304
        %v8325 = vpack.c.b16 %v8307, %v8306
        %v8326 = vpack.c.b16 %v8309, %v8308
        %v8327 = vpack.c.b16 %v8311, %v8310
        %8344 = vmatpush.bf16.msra.mxu0 %v8319
        %8345 = vmatpush.bf16.msra.mxu0 %v8318
        %8346 = vmatpush.bf16.msra.mxu0 %v8317
        %8347 = vmatpush.bf16.msra.mxu0 %v8316
        %8348 = vmatpush.bf16.msra.mxu0 %v8315
        %8349 = vmatpush.bf16.msra.mxu0 %v8314
        %8350 = vmatpush.bf16.msra.mxu0 %v8313
        %8351 = vmatpush.bf16.msra.mxu0 %v8312
        %8352 = vmatmul.bf16.gmra.mxu0 %v8244
        %v8353 = vpop.f32.mrf.mxu0
        %v8354 = vadd.f32 0.0, %v8353
        %v8355 = vpop.f32.mrf.mxu0
        %8356 = vdwg.mxu0
        %8357 = vmatpush.bf16.msra.mxu0 %v8327
        %8358 = vmatpush.bf16.msra.mxu0 %v8326
        %8359 = vmatpush.bf16.msra.mxu0 %v8325
        %8360 = vmatpush.bf16.msra.mxu0 %v8324
        %8361 = vmatpush.bf16.msra.mxu0 %v8323
        %8362 = vmatpush.bf16.msra.mxu0 %v8322
        %8363 = vmatpush.bf16.msra.mxu0 %v8321
        %8364 = vmatpush.bf16.msra.mxu0 %v8320
        %8365 = vmatmul.bf16.gmra.mxu0 %v8245
        %v8366 = vpop.f32.mrf.mxu0
        %v8367 = vadd.f32 %v8354, %v8366
        %v8368 = vpop.f32.mrf.mxu0
        %8369 = vdwg.mxu0
        %v8370 = vadd.f32 %v8206, %v8367
        %v8371 = vld [vmem:[#allocation5 + $0x8] sm:$0xff]
        %v8372 = vld [vmem:[#allocation5 + $0x10] sm:$0x11]
        %s8373 = scalar_lea.vmem %s11, 896
        %v8374 = vld [vmem:[%s8373] sm:$0xf]
        %v8375 = vld [vmem:[%s8373 + $0x4] sm:$0xf]
        %v8376 = vld [vmem:[%s8373 + $0x8] sm:$0xf]
        %v8377 = vld [vmem:[%s8373 + $0xc] sm:$0xf]
        %v8378 = vld [vmem:[%s8373 + $0x10] sm:$0xf]
        %v8379 = vld [vmem:[%s8373 + $0x14] sm:$0xf]
        %v8380 = vld [vmem:[%s8373 + $0x18] sm:$0xf]
        %v8381 = vld [vmem:[%s8373 + $0x1c] sm:$0xf]
        %v8382 = vld [vmem:[%s8373 + $0x20] sm:$0xf]
        %v8383 = vld [vmem:[%s8373 + $0x24] sm:$0xf]
        %v8384 = vld [vmem:[%s8373 + $0x28] sm:$0xf]
        %v8385 = vld [vmem:[%s8373 + $0x2c] sm:$0xf]
        %v8386 = vld [vmem:[%s8373 + $0x30] sm:$0xf]
        %v8387 = vld [vmem:[%s8373 + $0x34] sm:$0xf]
        %v8388 = vld [vmem:[%s8373 + $0x38] sm:$0xf]
        %v8389 = vld [vmem:[%s8373 + $0x3c] sm:$0xf]
        %v8390 = vld [vmem:[%s8373 + $0x40] sm:$0xf]
        %v8391 = vld [vmem:[%s8373 + $0x44] sm:$0xf]
        %v8392 = vld [vmem:[%s8373 + $0x48] sm:$0xf]
        %v8393 = vld [vmem:[%s8373 + $0x4c] sm:$0xf]
        %v8394 = vld [vmem:[%s8373 + $0x50] sm:$0xf]
        %v8395 = vld [vmem:[%s8373 + $0x54] sm:$0xf]
        %v8396 = vld [vmem:[%s8373 + $0x58] sm:$0xf]
        %v8397 = vld [vmem:[%s8373 + $0x5c] sm:$0xf]
        %v8398 = vld [vmem:[%s8373 + $0x60] sm:$0xf]
        %v8399 = vld [vmem:[%s8373 + $0x64] sm:$0xf]
        %v8400 = vld [vmem:[%s8373 + $0x68] sm:$0xf]
        %v8401 = vld [vmem:[%s8373 + $0x6c] sm:$0xf]
        %v8402 = vld [vmem:[%s8373 + $0x70] sm:$0xf]
        %v8403 = vld [vmem:[%s8373 + $0x74] sm:$0xf]
        %v8404 = vld [vmem:[%s8373 + $0x78] sm:$0xf]
        %v8405 = vld [vmem:[%s8373 + $0x7c] sm:$0xf]
        %v8408 = vunpack.c.l.b16 %v8371
        %v8409 = vunpack.c.h.b16 %v8371
        %v8410 = vunpack.c.l.b16 %v8372
        %v8411 = vunpack.c.h.b16 %v8372
        %v8412 = vpack.c.b16 %v8410, %v8408
        %v8413 = vpack.c.b16 %v8411, %v8409
        %v8415 = vshrl.u32 %v8412, 16
        %v8417 = vshll.u32 %v8412, 16
        %v8419 = vrot.slane %v8417, 1
        %v8420 = vor.u32 %v8415, %v8419
        %v8422 = vshrl.u32 %v8413, 16
        %v8424 = vshll.u32 %v8413, 16
        %v8426 = vrot.slane %v8424, 1
        %v8427 = vor.u32 %v8422, %v8426
        %v8462 = vunpack.c.l.b16 %v8374
        %v8463 = vunpack.c.l.b16 %v8375
        %v8464 = vunpack.c.l.b16 %v8376
        %v8465 = vunpack.c.l.b16 %v8377
        %v8466 = vunpack.c.l.b16 %v8378
        %v8467 = vunpack.c.l.b16 %v8379
        %v8468 = vunpack.c.l.b16 %v8380
        %v8469 = vunpack.c.l.b16 %v8381
        %v8470 = vunpack.c.l.b16 %v8382
        %v8471 = vunpack.c.l.b16 %v8383
        %v8472 = vunpack.c.l.b16 %v8384
        %v8473 = vunpack.c.l.b16 %v8385
        %v8474 = vunpack.c.l.b16 %v8386
        %v8475 = vunpack.c.l.b16 %v8387
        %v8476 = vunpack.c.l.b16 %v8388
        %v8477 = vunpack.c.l.b16 %v8389
        %v8478 = vunpack.c.l.b16 %v8390
        %v8479 = vunpack.c.l.b16 %v8391
        %v8480 = vunpack.c.l.b16 %v8392
        %v8481 = vunpack.c.l.b16 %v8393
        %v8482 = vunpack.c.l.b16 %v8394
        %v8483 = vunpack.c.l.b16 %v8395
        %v8484 = vunpack.c.l.b16 %v8396
        %v8485 = vunpack.c.l.b16 %v8397
        %v8486 = vunpack.c.l.b16 %v8398
        %v8487 = vunpack.c.l.b16 %v8399
        %v8488 = vunpack.c.l.b16 %v8400
        %v8489 = vunpack.c.l.b16 %v8401
        %v8490 = vunpack.c.l.b16 %v8402
        %v8491 = vunpack.c.l.b16 %v8403
        %v8492 = vunpack.c.l.b16 %v8404
        %v8493 = vunpack.c.l.b16 %v8405
        %v8494 = vpack.c.b16 %v8463, %v8462
        %v8495 = vpack.c.b16 %v8465, %v8464
        %v8496 = vpack.c.b16 %v8467, %v8466
        %v8497 = vpack.c.b16 %v8469, %v8468
        %v8498 = vpack.c.b16 %v8471, %v8470
        %v8499 = vpack.c.b16 %v8473, %v8472
        %v8500 = vpack.c.b16 %v8475, %v8474
        %v8501 = vpack.c.b16 %v8477, %v8476
        %v8502 = vpack.c.b16 %v8479, %v8478
        %v8503 = vpack.c.b16 %v8481, %v8480
        %v8504 = vpack.c.b16 %v8483, %v8482
        %v8505 = vpack.c.b16 %v8485, %v8484
        %v8506 = vpack.c.b16 %v8487, %v8486
        %v8507 = vpack.c.b16 %v8489, %v8488
        %v8508 = vpack.c.b16 %v8491, %v8490
        %v8509 = vpack.c.b16 %v8493, %v8492
        %8526 = vmatpush.bf16.msra.mxu0 %v8501
        %8527 = vmatpush.bf16.msra.mxu0 %v8500
        %8528 = vmatpush.bf16.msra.mxu0 %v8499
        %8529 = vmatpush.bf16.msra.mxu0 %v8498
        %8530 = vmatpush.bf16.msra.mxu0 %v8497
        %8531 = vmatpush.bf16.msra.mxu0 %v8496
        %8532 = vmatpush.bf16.msra.mxu0 %v8495
        %8533 = vmatpush.bf16.msra.mxu0 %v8494
        %8534 = vmatmul.bf16.gmra.mxu0 %v8420
        %v8535 = vpop.f32.mrf.mxu0
        %v8536 = vadd.f32 0.0, %v8535
        %v8537 = vpop.f32.mrf.mxu0
        %8538 = vdwg.mxu0
        %8539 = vmatpush.bf16.msra.mxu0 %v8509
        %8540 = vmatpush.bf16.msra.mxu0 %v8508
        %8541 = vmatpush.bf16.msra.mxu0 %v8507
        %8542 = vmatpush.bf16.msra.mxu0 %v8506
        %8543 = vmatpush.bf16.msra.mxu0 %v8505
        %8544 = vmatpush.bf16.msra.mxu0 %v8504
        %8545 = vmatpush.bf16.msra.mxu0 %v8503
        %8546 = vmatpush.bf16.msra.mxu0 %v8502
        %8547 = vmatmul.bf16.gmra.mxu0 %v8427
        %v8548 = vpop.f32.mrf.mxu0
        %v8549 = vadd.f32 %v8536, %v8548
        %v8550 = vpop.f32.mrf.mxu0
        %8551 = vdwg.mxu0
        %v8552 = vadd.f32 %v8370, %v8549
        %v8553 = vld [vmem:[#allocation5 + $0x8] sm:$0xee]
        %s8554 = scalar_lea.vmem %s11, 1024
        %v8555 = vld [vmem:[%s8554] sm:$0xf]
        %v8556 = vld [vmem:[%s8554 + $0x4] sm:$0xf]
        %v8557 = vld [vmem:[%s8554 + $0x8] sm:$0xf]
        %v8558 = vld [vmem:[%s8554 + $0xc] sm:$0xf]
        %v8559 = vld [vmem:[%s8554 + $0x10] sm:$0xf]
        %v8560 = vld [vmem:[%s8554 + $0x14] sm:$0xf]
        %v8561 = vld [vmem:[%s8554 + $0x18] sm:$0xf]
        %v8562 = vld [vmem:[%s8554 + $0x1c] sm:$0xf]
        %v8563 = vld [vmem:[%s8554 + $0x20] sm:$0xf]
        %v8564 = vld [vmem:[%s8554 + $0x24] sm:$0xf]
        %v8565 = vld [vmem:[%s8554 + $0x28] sm:$0xf]
        %v8566 = vld [vmem:[%s8554 + $0x2c] sm:$0xf]
        %v8567 = vld [vmem:[%s8554 + $0x30] sm:$0xf]
        %v8568 = vld [vmem:[%s8554 + $0x34] sm:$0xf]
        %v8569 = vld [vmem:[%s8554 + $0x38] sm:$0xf]
        %v8570 = vld [vmem:[%s8554 + $0x3c] sm:$0xf]
        %v8571 = vld [vmem:[%s8554 + $0x40] sm:$0xf]
        %v8572 = vld [vmem:[%s8554 + $0x44] sm:$0xf]
        %v8573 = vld [vmem:[%s8554 + $0x48] sm:$0xf]
        %v8574 = vld [vmem:[%s8554 + $0x4c] sm:$0xf]
        %v8575 = vld [vmem:[%s8554 + $0x50] sm:$0xf]
        %v8576 = vld [vmem:[%s8554 + $0x54] sm:$0xf]
        %v8577 = vld [vmem:[%s8554 + $0x58] sm:$0xf]
        %v8578 = vld [vmem:[%s8554 + $0x5c] sm:$0xf]
        %v8579 = vld [vmem:[%s8554 + $0x60] sm:$0xf]
        %v8580 = vld [vmem:[%s8554 + $0x64] sm:$0xf]
        %v8581 = vld [vmem:[%s8554 + $0x68] sm:$0xf]
        %v8582 = vld [vmem:[%s8554 + $0x6c] sm:$0xf]
        %v8583 = vld [vmem:[%s8554 + $0x70] sm:$0xf]
        %v8584 = vld [vmem:[%s8554 + $0x74] sm:$0xf]
        %v8585 = vld [vmem:[%s8554 + $0x78] sm:$0xf]
        %v8586 = vld [vmem:[%s8554 + $0x7c] sm:$0xf]
        %v8588 = vunpack.c.l.b16 %v8553
        %v8589 = vunpack.c.h.b16 %v8553
        %v8590 = vpack.c.b16 %v8410, %v8588
        %v8591 = vpack.c.b16 %v8411, %v8589
        %v8592 = vrot.slane %v8590, 1
        %v8593 = vrot.slane %v8591, 1
        %v8628 = vunpack.c.l.b16 %v8555
        %v8629 = vunpack.c.l.b16 %v8556
        %v8630 = vunpack.c.l.b16 %v8557
        %v8631 = vunpack.c.l.b16 %v8558
        %v8632 = vunpack.c.l.b16 %v8559
        %v8633 = vunpack.c.l.b16 %v8560
        %v8634 = vunpack.c.l.b16 %v8561
        %v8635 = vunpack.c.l.b16 %v8562
        %v8636 = vunpack.c.l.b16 %v8563
        %v8637 = vunpack.c.l.b16 %v8564
        %v8638 = vunpack.c.l.b16 %v8565
        %v8639 = vunpack.c.l.b16 %v8566
        %v8640 = vunpack.c.l.b16 %v8567
        %v8641 = vunpack.c.l.b16 %v8568
        %v8642 = vunpack.c.l.b16 %v8569
        %v8643 = vunpack.c.l.b16 %v8570
        %v8644 = vunpack.c.l.b16 %v8571
        %v8645 = vunpack.c.l.b16 %v8572
        %v8646 = vunpack.c.l.b16 %v8573
        %v8647 = vunpack.c.l.b16 %v8574
        %v8648 = vunpack.c.l.b16 %v8575
        %v8649 = vunpack.c.l.b16 %v8576
        %v8650 = vunpack.c.l.b16 %v8577
        %v8651 = vunpack.c.l.b16 %v8578
        %v8652 = vunpack.c.l.b16 %v8579
        %v8653 = vunpack.c.l.b16 %v8580
        %v8654 = vunpack.c.l.b16 %v8581
        %v8655 = vunpack.c.l.b16 %v8582
        %v8656 = vunpack.c.l.b16 %v8583
        %v8657 = vunpack.c.l.b16 %v8584
        %v8658 = vunpack.c.l.b16 %v8585
        %v8659 = vunpack.c.l.b16 %v8586
        %v8660 = vpack.c.b16 %v8629, %v8628
        %v8661 = vpack.c.b16 %v8631, %v8630
        %v8662 = vpack.c.b16 %v8633, %v8632
        %v8663 = vpack.c.b16 %v8635, %v8634
        %v8664 = vpack.c.b16 %v8637, %v8636
        %v8665 = vpack.c.b16 %v8639, %v8638
        %v8666 = vpack.c.b16 %v8641, %v8640
        %v8667 = vpack.c.b16 %v8643, %v8642
        %v8668 = vpack.c.b16 %v8645, %v8644
        %v8669 = vpack.c.b16 %v8647, %v8646
        %v8670 = vpack.c.b16 %v8649, %v8648
        %v8671 = vpack.c.b16 %v8651, %v8650
        %v8672 = vpack.c.b16 %v8653, %v8652
        %v8673 = vpack.c.b16 %v8655, %v8654
        %v8674 = vpack.c.b16 %v8657, %v8656
        %v8675 = vpack.c.b16 %v8659, %v8658
        %8692 = vmatpush.bf16.msra.mxu0 %v8667
        %8693 = vmatpush.bf16.msra.mxu0 %v8666
        %8694 = vmatpush.bf16.msra.mxu0 %v8665
        %8695 = vmatpush.bf16.msra.mxu0 %v8664
        %8696 = vmatpush.bf16.msra.mxu0 %v8663
        %8697 = vmatpush.bf16.msra.mxu0 %v8662
        %8698 = vmatpush.bf16.msra.mxu0 %v8661
        %8699 = vmatpush.bf16.msra.mxu0 %v8660
        %8700 = vmatmul.bf16.gmra.mxu0 %v8592
        %v8701 = vpop.f32.mrf.mxu0
        %v8702 = vadd.f32 0.0, %v8701
        %v8703 = vpop.f32.mrf.mxu0
        %8704 = vdwg.mxu0
        %8705 = vmatpush.bf16.msra.mxu0 %v8675
        %8706 = vmatpush.bf16.msra.mxu0 %v8674
        %8707 = vmatpush.bf16.msra.mxu0 %v8673
        %8708 = vmatpush.bf16.msra.mxu0 %v8672
        %8709 = vmatpush.bf16.msra.mxu0 %v8671
        %8710 = vmatpush.bf16.msra.mxu0 %v8670
        %8711 = vmatpush.bf16.msra.mxu0 %v8669
        %8712 = vmatpush.bf16.msra.mxu0 %v8668
        %8713 = vmatmul.bf16.gmra.mxu0 %v8593
        %v8714 = vpop.f32.mrf.mxu0
        %v8715 = vadd.f32 %v8702, %v8714
        %v8716 = vpop.f32.mrf.mxu0
        %8717 = vdwg.mxu0
        %v8718 = vadd.f32 %v8552, %v8715
        %v8719 = vld [vmem:[%s12] sm:$0x1]
        %v8721 = vperm.slane %v8719, 0
        %v8723 = vmul.f32 %v8718, %v8721
        %v8724 = vld [vmem:[%s13] sm:$0x1]
        %v8726 = vperm.slane %v8724, 0
        %v8728 = vadd.f32 %v8723, %v8726
        %v8729 = vmax.f32 %v8728, 0.0
        %v8730 = vld [vmem:[%s17] sm:$0xf]
        %vm8731 = vcmask 64512
        %v8733 = vsel %vm8731, %v8730, 0
        %8735 = vmatpush.msra.mxu0 0.0
        %8736 = vmatpush.msra.mxu0 0.0
        %8737 = vmatpush.msra.mxu0 0.0
        %8738 = vmatpush.msra.mxu0 0.0
        %8739 = vmatpush.msra.mxu0 0.0
        %8740 = vmatpush.msra.mxu0 0.0
        %8741 = vmatpush.msra.mxu0 0.0
        %8742 = vmatpush.msra.mxu0 0.0
        %8743 = vmatpush.msra.mxu0 0.0
        %8744 = vmatpush.msra.mxu0 0.0
        %8745 = vmatpush.msra.mxu0 0.0
        %8746 = vmatpush.msra.mxu0 0.0
        %8747 = vmatpush.msra.mxu0 0.0
        %8748 = vmatpush.msra.mxu0 0.0
        %8749 = vmatpush.msra.mxu0 0.0
        %8750 = vmatpush.msra.mxu0 %v8729
        %8751 = vmatmul.f32.gmra.mxu0 %v8733
        %v8752 = vpop.f32.mrf.mxu0
        %v8753 = vadd.f32 0.0, %v8752
        %8754 = vdwg.mxu0
        %vm8755 = vcmask 257024
        %8756 = vst.msk [vmem:[%s585] sm:$0xf] %vm8755, %v8753
        %s8757 = sand.u32 %s424, 1
        %s8758 = scalar_lea.sflag [#allocation8], %s8757
        %s8759 = sand.u32 %s424, 1
        %s8760 = smul.addr %s8759, 4
        %s8761 = scalar_lea.vmem [#allocation9], %s8760
        // Predicated region
        $region97: #{tpu_custom_call.1} parent=91 // pred_check
          %p8762 = pneg %p434
        $region98: #{tpu_custom_call.1} parent=91 // pred_check_branch
          %8764 = sbr.rel (%p8762) target = $region100
        $region99: #{tpu_custom_call.1} parent=91 // pred_region
          %8766 = vsyncadd %s8758, 0
          %s8767 = smul.addr %s33, 4
          %s8768 = scalar_lea.hbm %s18, %s8767
          %s8770 = sshll.u32 %s8761, 4
          %s8771 = int_to_ptr.vmem [resolvable:$true] %s8770
          %s8772 = sshll.u32 %s8768, 4
          %s8773 = int_to_ptr.hbm [resolvable:$true] %s8772
          %8775 = dma.vmem_to_hbm [thread:$0]  %s8771, 64, %s8773, %s8758
        $region100: #{tpu_custom_call.1} parent=91 // pred_fallthru
          _
      $region92: #{tpu_custom_call.1} parent=5 // pred_fallthru
        _
      %p8776 = scmp.le.s32.totalorder 2, %s28
      // Predicated region
      $region101: #{tpu_custom_call.1} parent=5 // pred_check
        %p8777 = pneg %p8776
      $region102: #{tpu_custom_call.1} parent=5 // pred_check_branch
        %8779 = sbr.rel (%p8777) target = $region104
      $region103: #{tpu_custom_call.1} parent=5 // pred_region
        %s8780 = ssub.s32 %s28, 2
        // Predicated region
        $region105: #{tpu_custom_call.1} parent=103 // pred_check
          %p8781 = pneg %p440
        $region106: #{tpu_custom_call.1} parent=103 // pred_check_branch
          %8783 = sbr.rel (%p8781) target = $region108
        $region107: #{tpu_custom_call.1} parent=103 // pred_region
          %s8784 = sand.u32 %s425, 1
          %s8785 = scalar_lea.sflag [#allocation8], %s8784
          %s8786 = sand.u32 %s425, 1
          %s8787 = smul.addr %s8786, 4
          %s8788 = scalar_lea.vmem [#allocation9], %s8787
          %8790 = dma.done %s8785, 64
        $region108: #{tpu_custom_call.1} parent=103 // pred_fallthru
          _
      $region104: #{tpu_custom_call.1} parent=5 // pred_fallthru
        _
    $region6: #{tpu_custom_call.1} parent=1 // loop_footer
      %s32 = sadd.s32 1, %s28
    $region7: #{tpu_custom_call.1} parent=1 // loop_footer_branch
      %27 = sbr.rel target = $region3
    $region8: #{tpu_custom_call.1} parent=1 // loop_exit
      _
    %8791 = vsyncpa [#allocation7], 1
    %s8792 = scalar_lea.sflag [#allocation7], 1
    %8793 = vsyncpa %s8792, 1
    %8794 = vsyncpa [#allocation8], 1
    %s8795 = scalar_lea.sflag [#allocation8], 1
    %8796 = vsyncpa %s8795, 1

</llo_original>
